<compile_context>
chip_gen: v7x
topology: tpu7x:2x2x1
jax: 0.10.0
libtpu: 0.0.40
codegen_flags: <defaults>
</compile_context>

<pallas_src>
import functools

import jax
import jax.numpy as jnp
from jax.experimental import pallas as pl
from jax.experimental.pallas import tpu as pltpu


def _round_up(x, m):
    return (x + m - 1) // m * m


# ----------------------------------------------------------------------------
# Pallas kernels: tiled matmul with fused per-channel shift + activation.
# (BatchNorm scale is already folded into the weight matrix.)
# ----------------------------------------------------------------------------
def _epilogue(y, t, act):
    y = y + t                                   # f32 epilogue (v5e-safe)
    if act == "leaky":
        y = jnp.where(y > 0, y, 0.2 * y)
    elif act == "relu":
        y = jnp.maximum(y, 0.0)
    elif act == "tanh":
        y = jnp.tanh(y)
    return y


def _mm_kernel_fullk(a_ref, b_ref, t_ref, o_ref, *, act):
    # Single K block: no accumulator scratch, no reduction grid axis.
    y = jnp.dot(a_ref[...], b_ref[...], preferred_element_type=jnp.float32)
    o_ref[...] = _epilogue(y, t_ref[...], act).astype(o_ref.dtype)


def _mm_kernel_ktiled(a_ref, b_ref, t_ref, o_ref, acc_ref, *, act):
    # Large-K fallback: direct assign at k == 0 (no zero-init store).
    k = pl.program_id(2)
    part = jnp.dot(a_ref[...], b_ref[...], preferred_element_type=jnp.float32)

    @pl.when(k == 0)
    def _():
        acc_ref[...] = part

    @pl.when(k > 0)
    def _():
        acc_ref[...] += part

    @pl.when(k == pl.num_programs(2) - 1)
    def _():
        o_ref[...] = _epilogue(acc_ref[...], t_ref[...], act).astype(o_ref.dtype)


_FULLK_VMEM_BUDGET = 24 * 1024 * 1024


def _pick_tm(mp):
    # Cap at 256 so large-M layers split into >=2 blocks (megacore sharding).
    for t in (256, 128, 64, 32, 16):
        if mp >= t and mp % t == 0:
            return t
    return mp


def matmul_fused(a, b, shift, act, out_dtype):
    """act((a @ b) + shift); a:(M,K) bf16, b:(K,N) bf16, shift:(1,N) f32.

    N is a multiple of 128 (padded at parameter-build time) so output stores
    are lane-dense.  Returns (M, N) in out_dtype.
    """
    m, k = a.shape
    kb, n = b.shape
    assert k == kb and n % 128 == 0

    mp = _round_up(m, 16)                       # bf16 sublane packing
    if mp != m:
        a = jnp.pad(a, ((0, mp - m), (0, 0)))

    tm = _pick_tm(mp)
    tn = n if n <= 256 else (256 if n % 256 == 0 else 128)
    out_bytes = jnp.dtype(out_dtype).itemsize

    def vmem_bytes(tk):                         # double-buffered working set
        return 2 * (tm * tk * 2 + tk * tn * 2 + tm * tn * out_bytes) + 2 * tn * 4

    if vmem_bytes(k) <= _FULLK_VMEM_BUDGET:
        limit = int(min(max(vmem_bytes(k) + (4 << 20), 8 << 20), 64 << 20))
        out = pl.pallas_call(
            functools.partial(_mm_kernel_fullk, act=act),
            out_shape=jax.ShapeDtypeStruct((mp, n), out_dtype),
            grid_spec=pltpu.PrefetchScalarGridSpec(
                num_scalar_prefetch=0,
                grid=(mp // tm, n // tn),
                in_specs=[
                    pl.BlockSpec((tm, k), lambda i, j: (i, 0)),
                    pl.BlockSpec((k, tn), lambda i, j: (0, j)),
                    pl.BlockSpec((1, tn), lambda i, j: (0, j)),
                ],
                out_specs=pl.BlockSpec((tm, tn), lambda i, j: (i, j)),
            ),
            compiler_params=pltpu.CompilerParams(
                dimension_semantics=("parallel", "parallel"),
                vmem_limit_bytes=limit),
        )(a, b, shift)
    else:
        # Not reached at the sizes in this script; kept for larger feature counts.
        tk = k
        while tk > 1024 and vmem_bytes(tk) > _FULLK_VMEM_BUDGET:
            tk = (tk + 1) // 2
        tk = _round_up(tk, 256)
        kp = _round_up(k, tk)
        if kp != k:
            a = jnp.pad(a, ((0, 0), (0, kp - k)))
            b = jnp.pad(b, ((0, kp - k), (0, 0)))
        limit = int(min(max(vmem_bytes(tk) + (4 << 20), 8 << 20), 64 << 20))
        out = pl.pallas_call(
            functools.partial(_mm_kernel_ktiled, act=act),
            out_shape=jax.ShapeDtypeStruct((mp, n), out_dtype),
            grid_spec=pltpu.PrefetchScalarGridSpec(
                num_scalar_prefetch=0,
                grid=(mp // tm, n // tn, kp // tk),
                in_specs=[
                    pl.BlockSpec((tm, tk), lambda i, j, kk: (i, kk)),
                    pl.BlockSpec((tk, tn), lambda i, j, kk: (kk, j)),
                    pl.BlockSpec((1, tn), lambda i, j, kk: (0, j)),
                ],
                out_specs=pl.BlockSpec((tm, tn), lambda i, j, kk: (i, j)),
                scratch_shapes=[pltpu.VMEM((tm, tn), jnp.float32)],
            ),
            compiler_params=pltpu.CompilerParams(
                dimension_semantics=("parallel", "parallel", "arbitrary"),
                vmem_limit_bytes=limit),
        )(a, b, shift)

    return out[:m] if mp != m else out


# ----------------------------------------------------------------------------
# Conv lowerings (JAX glue around the Pallas matmul).
# ----------------------------------------------------------------------------
def _conv_down(x, layer):
    # Conv2d(k=4, stride=2, pad=1, padding_mode='reflect', bias=False); x NHWC bf16.
    n, h, w, cin = x.shape
    cout = layer["cout"]
    ho, wo = h // 2, w // 2
    xp = jnp.pad(x, ((0, 0), (1, 1), (1, 1), (0, 0)), mode="reflect")
    cols = [xp[:, kh:kh + 2 * ho:2, kw:kw + 2 * wo:2, :]
            for kh in range(4) for kw in range(4)]
    a = jnp.stack(cols, axis=3).reshape(n * ho * wo, 16 * cin)
    out = matmul_fused(a, layer["b"], layer["shift"], layer["act"],
                       layer["out_dtype"])
    return out[:, :cout].reshape(n, ho, wo, cout)


def _conv_up(x, layer):
    # ConvTranspose2d(k=4, stride=2, pad=1) as ONE matmul: 3x3 (9-tap) patches
    # on the (pad-1) input against a (9*Cin, 4*Cout) weight whose columns hold
    # the 4 sub-pixel output phases (lane-dense output, no phase grid axis).
    n, h, w, cin = x.shape
    cout = layer["cout"]
    xp = jnp.pad(x, ((0, 0), (1, 1), (1, 1), (0, 0)))
    cols = [xp[:, da:da + h, db:db + w, :] for da in range(3) for db in range(3)]
    a = jnp.stack(cols, axis=3).reshape(n * h * w, 9 * cin)
    out = matmul_fused(a, layer["b"], layer["shift"], layer["act"],
                       layer["out_dtype"])
    out = out[:, :4 * cout].reshape(n, h, w, 2, 2, cout)
    # (n, i, j, r, s, c) -> (n, 2h, 2w, c); pure XLA relayout.
    return jnp.transpose(out, (0, 1, 3, 2, 4, 5)).reshape(n, 2 * h, 2 * w, cout)


def apply_block(x, layer):
    return _conv_down(x, layer) if layer["kind"] == "down" else _conv_up(x, layer)


# ----------------------------------------------------------------------------
# Deterministic parameter construction with BN/phase folding (synthetic).
# ----------------------------------------------------------------------------
def build_params(key, in_ch=6, features=8):
    eps = 1e-5
    state = {"key": key}

    def nxt():
        state["key"], k = jax.random.split(state["key"])
        return k

    def bn_fold(c):
        gamma = 1.0 + 0.1 * jax.random.normal(nxt(), (c,), jnp.float32)
        beta = 0.1 * jax.random.normal(nxt(), (c,), jnp.float32)
        mean = 0.1 * jax.random.normal(nxt(), (c,), jnp.float32)
        var = jax.random.uniform(nxt(), (c,), jnp.float32, 0.5, 1.5)
        scale = gamma * jax.lax.rsqrt(var + eps)
        return scale, beta - mean * scale

    def pad_n(b, shift):
        # Zero-pad the output-channel dim up to a multiple of 128 (lane-dense).
        ncols = b.shape[1]
        npad = _round_up(max(ncols, 128), 128)
        if npad != ncols:
            b = jnp.pad(b, ((0, 0), (0, npad - ncols)))
            shift = jnp.pad(shift, (0, npad - ncols))
        return b.astype(jnp.bfloat16), shift.reshape(1, -1).astype(jnp.float32)

    def down_layer(cin, cout, bn=True, act="leaky"):
        w = 0.05 * jax.random.normal(nxt(), (cout, cin, 4, 4), jnp.float32)
        if bn:
            scale, shift = bn_fold(cout)
        else:
            scale, shift = jnp.ones((cout,), jnp.float32), jnp.zeros((cout,), jnp.float32)
        b = jnp.transpose(w, (2, 3, 1, 0)).reshape(16 * cin, cout) * scale[None, :]
        b, shift = pad_n(b, shift)
        return {"kind": "down", "b": b, "shift": shift, "cout": cout,
                "act": act, "out_dtype": jnp.bfloat16}

    def up_layer(cin, cout, bn=True, act="relu", bias=False):
        w = 0.05 * jax.random.normal(nxt(), (cin, cout, 4, 4), jnp.float32)
        if bn:
            scale, shift = bn_fold(cout)
        else:
            scale = jnp.ones((cout,), jnp.float32)
            shift = (0.1 * jax.random.normal(nxt(), (cout,), jnp.float32)
                     if bias else jnp.zeros((cout,), jnp.float32))
        # Sub-pixel phase (r, s) uses kernel tap W[:, :, r+3-2*da, s+3-2*db] on
        # input offset (da-1, db-1); out-of-range taps are structural zeros.
        b = jnp.zeros((9, cin, 4, cout), jnp.float32)
        for da in range(3):
            for db in range(3):
                for r in range(2):
                    for s in range(2):
                        kh, kw = r + 3 - 2 * da, s + 3 - 2 * db
                        if 0 <= kh < 4 and 0 <= kw < 4:
                            b = b.at[da * 3 + db, :, r * 2 + s, :].set(w[:, :, kh, kw])
        b = (b * scale[None, None, None, :]).reshape(9 * cin, 4 * cout)
        b, shift = pad_n(b, jnp.tile(shift, 4))
        return {"kind": "up", "b": b, "shift": shift, "cout": cout, "act": act,
                "out_dtype": jnp.float32 if act == "tanh" else jnp.bfloat16}

    F = features
    p = {}
    p["initial_down"] = down_layer(in_ch, F, bn=False)
    p["down1"] = down_layer(F, 2 * F)
    p["down2"] = down_layer(2 * F, 4 * F)
    p["down3"] = down_layer(4 * F, 8 * F)
    p["down4"] = down_layer(8 * F, 8 * F)
    p["bottleneck"] = down_layer(8 * F, 8 * F, bn=False)
    p["up1"] = up_layer(8 * F, 8 * F)          # Dropout(0.5) == identity (eval)
    p["up4"] = up_layer(16 * F, 8 * F)
    p["up5"] = up_layer(16 * F, 4 * F)
    p["up6"] = up_layer(8 * F, 2 * F)
    p["up7"] = up_layer(4 * F, F)
    p["final_up"] = up_layer(2 * F, 3, bn=False, act="tanh", bias=True)
    return p


# ----------------------------------------------------------------------------
# Full UNet forward (mirrors UNetGenerator.forward exactly).
# ----------------------------------------------------------------------------
def unet_forward(params, x_nchw):
    x = jnp.transpose(x_nchw, (0, 2, 3, 1)).astype(jnp.bfloat16)   # NCHW -> NHWC
    d1 = apply_block(x, params["initial_down"])
    d2 = apply_block(d1, params["down1"])
    d3 = apply_block(d2, params["down2"])
    d4 = apply_block(d3, params["down3"])
    d5 = apply_block(d4, params["down4"])
    bott = apply_block(d5, params["bottleneck"])
    up1 = apply_block(bott, params["up1"])
    up2 = apply_block(jnp.concatenate([up1, d5], -1), params["up4"])
    up5 = apply_block(jnp.concatenate([up2, d4], -1), params["up5"])
    up6 = apply_block(jnp.concatenate([up5, d3], -1), params["up6"])
    up7 = apply_block(jnp.concatenate([up6, d2], -1), params["up7"])
    out = apply_block(jnp.concatenate([up7, d1], -1), params["final_up"])
    return jnp.transpose(out, (0, 3, 1, 2)).astype(jnp.float32)     # NHWC -> NCHW


if __name__ == "__main__":
    key = jax.random.PRNGKey(0)
    k_param, k_x = jax.random.split(key)

    # Smallest spatial size compatible with 6 stride-2 downsamples is 64.
    N, C_IN, H, W = 2, 6, 64, 64
    FEATURES = 8

    params = build_params(k_param, in_ch=C_IN, features=FEATURES)
    x = jax.random.normal(k_x, (N, C_IN, H, W), jnp.float32)

    fwd = jax.jit(functools.partial(unet_forward, params))
    y = fwd(x)
    jax.block_until_ready(y)

    assert y.shape == (N, 3, H, W), y.shape
    assert bool(jnp.all(jnp.isfinite(y)))
    assert bool(jnp.all(jnp.abs(y) <= 1.0 + 1e-6))      # tanh output range
    print("KERNEL_OK")
</pallas_src>

<mosaic_0001>
module attributes {stable_mosaic.version = 11 : i64} {
  func.func @_mm_kernel_fullk(%arg0: i32, %arg1: i32, %arg2: memref<256x96xbf16, #tpu.memory_space<vmem>>, %arg3: memref<96x128xbf16, #tpu.memory_space<vmem>>, %arg4: memref<1x128xf32, #tpu.memory_space<vmem>>, %arg5: memref<256x128xbf16, #tpu.memory_space<vmem>>) attributes {dimension_semantics = [#tpu.dimension_semantics<parallel>, #tpu.dimension_semantics<parallel>], iteration_bounds = array<i64: 8, 1>, scalar_prefetch = 0 : i64, scratch_operands = 0 : i64, tpu.core_type = #tpu.core_type<tc>, window_params = [{transform_indices = @transform_0, window_bounds = array<i64: 256, 96>}, {transform_indices = @transform_1, window_bounds = array<i64: 96, 128>}, {transform_indices = @transform_2, window_bounds = array<i64: 1, 128>}, {transform_indices = @transform_3, window_bounds = array<i64: 256, 128>}]} {
    %c0 = arith.constant 0 : index
    %c0_0 = arith.constant 0 : index
    %0 = vector.load %arg2[%c0, %c0_0] : memref<256x96xbf16, #tpu.memory_space<vmem>>, vector<256x96xbf16>
    %c0_1 = arith.constant 0 : index
    %c0_2 = arith.constant 0 : index
    %1 = vector.load %arg3[%c0_1, %c0_2] : memref<96x128xbf16, #tpu.memory_space<vmem>>, vector<96x128xbf16>
    %cst = arith.constant dense<0.000000e+00> : vector<256x128xf32>
    %2 = tpu.matmul %0, %1, %cst {dimension_numbers = #tpu.dot_dimension_numbers<[1], [0], [0], [1], [0, 0, 1, 1], [], []>} : vector<256x96xbf16>, vector<96x128xbf16>, vector<256x128xf32> -> vector<256x128xf32>
    %c0_3 = arith.constant 0 : index
    %c0_4 = arith.constant 0 : index
    %3 = vector.load %arg4[%c0_3, %c0_4] : memref<1x128xf32, #tpu.memory_space<vmem>>, vector<1x128xf32>
    %4 = vector.broadcast %3 : vector<1x128xf32> to vector<256x128xf32>
    %5 = arith.addf %2, %4 : vector<256x128xf32>
    %cst_5 = arith.constant 0.000000e+00 : f32
    %6 = vector.broadcast %cst_5 : f32 to vector<256x128xf32>
    %7 = arith.cmpf ogt, %5, %6 : vector<256x128xf32>
    %cst_6 = arith.constant 2.000000e-01 : f32
    %8 = vector.broadcast %cst_6 : f32 to vector<256x128xf32>
    %9 = arith.mulf %8, %5 : vector<256x128xf32>
    %10 = arith.select %7, %5, %9 : vector<256x128xi1>, vector<256x128xf32>
    %11 = arith.truncf %10 : vector<256x128xf32> to vector<256x128xbf16>
    %c0_7 = arith.constant 0 : index
    %c0_8 = arith.constant 0 : index
    %12 = vector.load %arg5[%c0_7, %c0_8] : memref<256x128xbf16, #tpu.memory_space<vmem>>, vector<256x128xbf16>
    tpu.vector_store %arg5[%c0_7, %c0_8], %11 {strides = array<i32>} : memref<256x128xbf16, #tpu.memory_space<vmem>>, vector<256x128xbf16>,
    return
  }
  func.func @transform_0(%arg0: i32, %arg1: i32) -> (i32, i32) {
    %c0_i32 = arith.constant 0 : i32
    %c0_i32_0 = arith.constant 0 : i32
    return %arg0, %c0_i32 : i32, i32
  }
  func.func @transform_1(%arg0: i32, %arg1: i32) -> (i32, i32) {
    %c0_i32 = arith.constant 0 : i32
    %c0_i32_0 = arith.constant 0 : i32
    return %c0_i32, %arg1 : i32, i32
  }
  func.func @transform_2(%arg0: i32, %arg1: i32) -> (i32, i32) {
    %c0_i32 = arith.constant 0 : i32
    %c0_i32_0 = arith.constant 0 : i32
    return %c0_i32, %arg1 : i32, i32
  }
  func.func @transform_3(%arg0: i32, %arg1: i32) -> (i32, i32) {
    %c0_i32 = arith.constant 0 : i32
    return %arg0, %arg1 : i32, i32
  }
}

module attributes {stable_mosaic.version = 11 : i64} {
  func.func @_mm_kernel_fullk(%arg0: i32, %arg1: i32, %arg2: memref<256x128xbf16, #tpu.memory_space<vmem>>, %arg3: memref<128x128xbf16, #tpu.memory_space<vmem>>, %arg4: memref<1x128xf32, #tpu.memory_space<vmem>>, %arg5: memref<256x128xbf16, #tpu.memory_space<vmem>>) attributes {dimension_semantics = [#tpu.dimension_semantics<parallel>, #tpu.dimension_semantics<parallel>], iteration_bounds = array<i64: 2, 1>, scalar_prefetch = 0 : i64, scratch_operands = 0 : i64, tpu.core_type = #tpu.core_type<tc>, window_params = [{transform_indices = @transform_0, window_bounds = array<i64: 256, 128>}, {transform_indices = @transform_1, window_bounds = array<i64: 128, 128>}, {transform_indices = @transform_2, window_bounds = array<i64: 1, 128>}, {transform_indices = @transform_3, window_bounds = array<i64: 256, 128>}]} {
    %c0 = arith.constant 0 : index
    %c0_0 = arith.constant 0 : index
    %0 = vector.load %arg2[%c0, %c0_0] : memref<256x128xbf16, #tpu.memory_space<vmem>>, vector<256x128xbf16>
    %c0_1 = arith.constant 0 : index
    %c0_2 = arith.constant 0 : index
    %1 = vector.load %arg3[%c0_1, %c0_2] : memref<128x128xbf16, #tpu.memory_space<vmem>>, vector<128x128xbf16>
    %cst = arith.constant dense<0.000000e+00> : vector<256x128xf32>
    %2 = tpu.matmul %0, %1, %cst {dimension_numbers = #tpu.dot_dimension_numbers<[1], [0], [0], [1], [0, 0, 1, 1], [], []>} : vector<256x128xbf16>, vector<128x128xbf16>, vector<256x128xf32> -> vector<256x128xf32>
    %c0_3 = arith.constant 0 : index
    %c0_4 = arith.constant 0 : index
    %3 = vector.load %arg4[%c0_3, %c0_4] : memref<1x128xf32, #tpu.memory_space<vmem>>, vector<1x128xf32>
    %4 = vector.broadcast %3 : vector<1x128xf32> to vector<256x128xf32>
    %5 = arith.addf %2, %4 : vector<256x128xf32>
    %cst_5 = arith.constant 0.000000e+00 : f32
    %6 = vector.broadcast %cst_5 : f32 to vector<256x128xf32>
    %7 = arith.cmpf ogt, %5, %6 : vector<256x128xf32>
    %cst_6 = arith.constant 2.000000e-01 : f32
    %8 = vector.broadcast %cst_6 : f32 to vector<256x128xf32>
    %9 = arith.mulf %8, %5 : vector<256x128xf32>
    %10 = arith.select %7, %5, %9 : vector<256x128xi1>, vector<256x128xf32>
    %11 = arith.truncf %10 : vector<256x128xf32> to vector<256x128xbf16>
    %c0_7 = arith.constant 0 : index
    %c0_8 = arith.constant 0 : index
    %12 = vector.load %arg5[%c0_7, %c0_8] : memref<256x128xbf16, #tpu.memory_space<vmem>>, vector<256x128xbf16>
    tpu.vector_store %arg5[%c0_7, %c0_8], %11 {strides = array<i32>} : memref<256x128xbf16, #tpu.memory_space<vmem>>, vector<256x128xbf16>,
    return
  }
  func.func @transform_0(%arg0: i32, %arg1: i32) -> (i32, i32) {
    %c0_i32 = arith.constant 0 : i32
    %c0_i32_0 = arith.constant 0 : i32
    return %arg0, %c0_i32 : i32, i32
  }
  func.func @transform_1(%arg0: i32, %arg1: i32) -> (i32, i32) {
    %c0_i32 = arith.constant 0 : i32
    %c0_i32_0 = arith.constant 0 : i32
    return %c0_i32, %arg1 : i32, i32
  }
  func.func @transform_2(%arg0: i32, %arg1: i32) -> (i32, i32) {
    %c0_i32 = arith.constant 0 : i32
    %c0_i32_0 = arith.constant 0 : i32
    return %c0_i32, %arg1 : i32, i32
  }
  func.func @transform_3(%arg0: i32, %arg1: i32) -> (i32, i32) {
    %c0_i32 = arith.constant 0 : i32
    return %arg0, %arg1 : i32, i32
  }
}

module attributes {stable_mosaic.version = 11 : i64} {
  func.func @_mm_kernel_fullk(%arg0: i32, %arg1: i32, %arg2: memref<128x256xbf16, #tpu.memory_space<vmem>>, %arg3: memref<256x128xbf16, #tpu.memory_space<vmem>>, %arg4: memref<1x128xf32, #tpu.memory_space<vmem>>, %arg5: memref<128x128xbf16, #tpu.memory_space<vmem>>) attributes {dimension_semantics = [#tpu.dimension_semantics<parallel>, #tpu.dimension_semantics<parallel>], iteration_bounds = array<i64: 1, 1>, scalar_prefetch = 0 : i64, scratch_operands = 0 : i64, tpu.core_type = #tpu.core_type<tc>, window_params = [{transform_indices = @transform_0, window_bounds = array<i64: 128, 256>}, {transform_indices = @transform_1, window_bounds = array<i64: 256, 128>}, {transform_indices = @transform_2, window_bounds = array<i64: 1, 128>}, {transform_indices = @transform_3, window_bounds = array<i64: 128, 128>}]} {
    %c0 = arith.constant 0 : index
    %c0_0 = arith.constant 0 : index
    %0 = vector.load %arg2[%c0, %c0_0] : memref<128x256xbf16, #tpu.memory_space<vmem>>, vector<128x256xbf16>
    %c0_1 = arith.constant 0 : index
    %c0_2 = arith.constant 0 : index
    %1 = vector.load %arg3[%c0_1, %c0_2] : memref<256x128xbf16, #tpu.memory_space<vmem>>, vector<256x128xbf16>
    %cst = arith.constant dense<0.000000e+00> : vector<128x128xf32>
    %2 = tpu.matmul %0, %1, %cst {dimension_numbers = #tpu.dot_dimension_numbers<[1], [0], [0], [1], [0, 0, 1, 1], [], []>} : vector<128x256xbf16>, vector<256x128xbf16>, vector<128x128xf32> -> vector<128x128xf32>
    %c0_3 = arith.constant 0 : index
    %c0_4 = arith.constant 0 : index
    %3 = vector.load %arg4[%c0_3, %c0_4] : memref<1x128xf32, #tpu.memory_space<vmem>>, vector<1x128xf32>
    %4 = vector.broadcast %3 : vector<1x128xf32> to vector<128x128xf32>
    %5 = arith.addf %2, %4 : vector<128x128xf32>
    %cst_5 = arith.constant 0.000000e+00 : f32
    %6 = vector.broadcast %cst_5 : f32 to vector<128x128xf32>
    %7 = arith.cmpf ogt, %5, %6 : vector<128x128xf32>
    %cst_6 = arith.constant 2.000000e-01 : f32
    %8 = vector.broadcast %cst_6 : f32 to vector<128x128xf32>
    %9 = arith.mulf %8, %5 : vector<128x128xf32>
    %10 = arith.select %7, %5, %9 : vector<128x128xi1>, vector<128x128xf32>
    %11 = arith.truncf %10 : vector<128x128xf32> to vector<128x128xbf16>
    %c0_7 = arith.constant 0 : index
    %c0_8 = arith.constant 0 : index
    %12 = vector.load %arg5[%c0_7, %c0_8] : memref<128x128xbf16, #tpu.memory_space<vmem>>, vector<128x128xbf16>
    tpu.vector_store %arg5[%c0_7, %c0_8], %11 {strides = array<i32>} : memref<128x128xbf16, #tpu.memory_space<vmem>>, vector<128x128xbf16>,
    return
  }
  func.func @transform_0(%arg0: i32, %arg1: i32) -> (i32, i32) {
    %c0_i32 = arith.constant 0 : i32
    %c0_i32_0 = arith.constant 0 : i32
    return %arg0, %c0_i32 : i32, i32
  }
  func.func @transform_1(%arg0: i32, %arg1: i32) -> (i32, i32) {
    %c0_i32 = arith.constant 0 : i32
    %c0_i32_0 = arith.constant 0 : i32
    return %c0_i32, %arg1 : i32, i32
  }
  func.func @transform_2(%arg0: i32, %arg1: i32) -> (i32, i32) {
    %c0_i32 = arith.constant 0 : i32
    %c0_i32_0 = arith.constant 0 : i32
    return %c0_i32, %arg1 : i32, i32
  }
  func.func @transform_3(%arg0: i32, %arg1: i32) -> (i32, i32) {
    %c0_i32 = arith.constant 0 : i32
    return %arg0, %arg1 : i32, i32
  }
}

module attributes {stable_mosaic.version = 11 : i64} {
  func.func @_mm_kernel_fullk(%arg0: i32, %arg1: i32, %arg2: memref<32x512xbf16, #tpu.memory_space<vmem>>, %arg3: memref<512x128xbf16, #tpu.memory_space<vmem>>, %arg4: memref<1x128xf32, #tpu.memory_space<vmem>>, %arg5: memref<32x128xbf16, #tpu.memory_space<vmem>>) attributes {dimension_semantics = [#tpu.dimension_semantics<parallel>, #tpu.dimension_semantics<parallel>], iteration_bounds = array<i64: 1, 1>, scalar_prefetch = 0 : i64, scratch_operands = 0 : i64, tpu.core_type = #tpu.core_type<tc>, window_params = [{transform_indices = @transform_0, window_bounds = array<i64: 32, 512>}, {transform_indices = @transform_1, window_bounds = array<i64: 512, 128>}, {transform_indices = @transform_2, window_bounds = array<i64: 1, 128>}, {transform_indices = @transform_3, window_bounds = array<i64: 32, 128>}]} {
    %c0 = arith.constant 0 : index
    %c0_0 = arith.constant 0 : index
    %0 = vector.load %arg2[%c0, %c0_0] : memref<32x512xbf16, #tpu.memory_space<vmem>>, vector<32x512xbf16>
    %c0_1 = arith.constant 0 : index
    %c0_2 = arith.constant 0 : index
    %1 = vector.load %arg3[%c0_1, %c0_2] : memref<512x128xbf16, #tpu.memory_space<vmem>>, vector<512x128xbf16>
    %cst = arith.constant dense<0.000000e+00> : vector<32x128xf32>
    %2 = tpu.matmul %0, %1, %cst {dimension_numbers = #tpu.dot_dimension_numbers<[1], [0], [0], [1], [0, 0, 1, 1], [], []>} : vector<32x512xbf16>, vector<512x128xbf16>, vector<32x128xf32> -> vector<32x128xf32>
    %c0_3 = arith.constant 0 : index
    %c0_4 = arith.constant 0 : index
    %3 = vector.load %arg4[%c0_3, %c0_4] : memref<1x128xf32, #tpu.memory_space<vmem>>, vector<1x128xf32>
    %4 = vector.broadcast %3 : vector<1x128xf32> to vector<32x128xf32>
    %5 = arith.addf %2, %4 : vector<32x128xf32>
    %cst_5 = arith.constant 0.000000e+00 : f32
    %6 = vector.broadcast %cst_5 : f32 to vector<32x128xf32>
    %7 = arith.cmpf ogt, %5, %6 : vector<32x128xf32>
    %cst_6 = arith.constant 2.000000e-01 : f32
    %8 = vector.broadcast %cst_6 : f32 to vector<32x128xf32>
    %9 = arith.mulf %8, %5 : vector<32x128xf32>
    %10 = arith.select %7, %5, %9 : vector<32x128xi1>, vector<32x128xf32>
    %11 = arith.truncf %10 : vector<32x128xf32> to vector<32x128xbf16>
    %c0_7 = arith.constant 0 : index
    %c0_8 = arith.constant 0 : index
    %12 = vector.load %arg5[%c0_7, %c0_8] : memref<32x128xbf16, #tpu.memory_space<vmem>>, vector<32x128xbf16>
    tpu.vector_store %arg5[%c0_7, %c0_8], %11 {strides = array<i32>} : memref<32x128xbf16, #tpu.memory_space<vmem>>, vector<32x128xbf16>,
    return
  }
  func.func @transform_0(%arg0: i32, %arg1: i32) -> (i32, i32) {
    %c0_i32 = arith.constant 0 : i32
    %c0_i32_0 = arith.constant 0 : i32
    return %arg0, %c0_i32 : i32, i32
  }
  func.func @transform_1(%arg0: i32, %arg1: i32) -> (i32, i32) {
    %c0_i32 = arith.constant 0 : i32
    %c0_i32_0 = arith.constant 0 : i32
    return %c0_i32, %arg1 : i32, i32
  }
  func.func @transform_2(%arg0: i32, %arg1: i32) -> (i32, i32) {
    %c0_i32 = arith.constant 0 : i32
    %c0_i32_0 = arith.constant 0 : i32
    return %c0_i32, %arg1 : i32, i32
  }
  func.func @transform_3(%arg0: i32, %arg1: i32) -> (i32, i32) {
    %c0_i32 = arith.constant 0 : i32
    return %arg0, %arg1 : i32, i32
  }
}

module attributes {stable_mosaic.version = 11 : i64} {
  func.func @_mm_kernel_fullk(%arg0: i32, %arg1: i32, %arg2: memref<16x1024xbf16, #tpu.memory_space<vmem>>, %arg3: memref<1024x128xbf16, #tpu.memory_space<vmem>>, %arg4: memref<1x128xf32, #tpu.memory_space<vmem>>, %arg5: memref<16x128xbf16, #tpu.memory_space<vmem>>) attributes {dimension_semantics = [#tpu.dimension_semantics<parallel>, #tpu.dimension_semantics<parallel>], iteration_bounds = array<i64: 1, 1>, scalar_prefetch = 0 : i64, scratch_operands = 0 : i64, tpu.core_type = #tpu.core_type<tc>, window_params = [{transform_indices = @transform_0, window_bounds = array<i64: 16, 1024>}, {transform_indices = @transform_1, window_bounds = array<i64: 1024, 128>}, {transform_indices = @transform_2, window_bounds = array<i64: 1, 128>}, {transform_indices = @transform_3, window_bounds = array<i64: 16, 128>}]} {
    %c0 = arith.constant 0 : index
    %c0_0 = arith.constant 0 : index
    %0 = vector.load %arg2[%c0, %c0_0] : memref<16x1024xbf16, #tpu.memory_space<vmem>>, vector<16x1024xbf16>
    %c0_1 = arith.constant 0 : index
    %c0_2 = arith.constant 0 : index
    %1 = vector.load %arg3[%c0_1, %c0_2] : memref<1024x128xbf16, #tpu.memory_space<vmem>>, vector<1024x128xbf16>
    %cst = arith.constant dense<0.000000e+00> : vector<16x128xf32>
    %2 = tpu.matmul %0, %1, %cst {dimension_numbers = #tpu.dot_dimension_numbers<[1], [0], [0], [1], [0, 0, 1, 1], [], []>} : vector<16x1024xbf16>, vector<1024x128xbf16>, vector<16x128xf32> -> vector<16x128xf32>
    %c0_3 = arith.constant 0 : index
    %c0_4 = arith.constant 0 : index
    %3 = vector.load %arg4[%c0_3, %c0_4] : memref<1x128xf32, #tpu.memory_space<vmem>>, vector<1x128xf32>
    %4 = vector.broadcast %3 : vector<1x128xf32> to vector<16x128xf32>
    %5 = arith.addf %2, %4 : vector<16x128xf32>
    %cst_5 = arith.constant 0.000000e+00 : f32
    %6 = vector.broadcast %cst_5 : f32 to vector<16x128xf32>
    %7 = arith.cmpf ogt, %5, %6 : vector<16x128xf32>
    %cst_6 = arith.constant 2.000000e-01 : f32
    %8 = vector.broadcast %cst_6 : f32 to vector<16x128xf32>
    %9 = arith.mulf %8, %5 : vector<16x128xf32>
    %10 = arith.select %7, %5, %9 : vector<16x128xi1>, vector<16x128xf32>
    %11 = arith.truncf %10 : vector<16x128xf32> to vector<16x128xbf16>
    %c0_7 = arith.constant 0 : index
    %c0_8 = arith.constant 0 : index
    %12 = vector.load %arg5[%c0_7, %c0_8] : memref<16x128xbf16, #tpu.memory_space<vmem>>, vector<16x128xbf16>
    tpu.vector_store %arg5[%c0_7, %c0_8], %11 {strides = array<i32>} : memref<16x128xbf16, #tpu.memory_space<vmem>>, vector<16x128xbf16>,
    return
  }
  func.func @transform_0(%arg0: i32, %arg1: i32) -> (i32, i32) {
    %c0_i32 = arith.constant 0 : i32
    %c0_i32_0 = arith.constant 0 : i32
    return %arg0, %c0_i32 : i32, i32
  }
  func.func @transform_1(%arg0: i32, %arg1: i32) -> (i32, i32) {
    %c0_i32 = arith.constant 0 : i32
    %c0_i32_0 = arith.constant 0 : i32
    return %c0_i32, %arg1 : i32, i32
  }
  func.func @transform_2(%arg0: i32, %arg1: i32) -> (i32, i32) {
    %c0_i32 = arith.constant 0 : i32
    %c0_i32_0 = arith.constant 0 : i32
    return %c0_i32, %arg1 : i32, i32
  }
  func.func @transform_3(%arg0: i32, %arg1: i32) -> (i32, i32) {
    %c0_i32 = arith.constant 0 : i32
    return %arg0, %arg1 : i32, i32
  }
}

module attributes {stable_mosaic.version = 11 : i64} {
  func.func @_mm_kernel_fullk(%arg0: i32, %arg1: i32, %arg2: memref<16x576xbf16, #tpu.memory_space<vmem>>, %arg3: memref<576x256xbf16, #tpu.memory_space<vmem>>, %arg4: memref<1x256xf32, #tpu.memory_space<vmem>>, %arg5: memref<16x256xbf16, #tpu.memory_space<vmem>>) attributes {dimension_semantics = [#tpu.dimension_semantics<parallel>, #tpu.dimension_semantics<parallel>], iteration_bounds = array<i64: 1, 1>, scalar_prefetch = 0 : i64, scratch_operands = 0 : i64, tpu.core_type = #tpu.core_type<tc>, window_params = [{transform_indices = @transform_0, window_bounds = array<i64: 16, 576>}, {transform_indices = @transform_1, window_bounds = array<i64: 576, 256>}, {transform_indices = @transform_2, window_bounds = array<i64: 1, 256>}, {transform_indices = @transform_3, window_bounds = array<i64: 16, 256>}]} {
    %c0 = arith.constant 0 : index
    %c0_0 = arith.constant 0 : index
    %0 = vector.load %arg2[%c0, %c0_0] : memref<16x576xbf16, #tpu.memory_space<vmem>>, vector<16x576xbf16>
    %c0_1 = arith.constant 0 : index
    %c0_2 = arith.constant 0 : index
    %1 = vector.load %arg3[%c0_1, %c0_2] : memref<576x256xbf16, #tpu.memory_space<vmem>>, vector<576x256xbf16>
    %cst = arith.constant dense<0.000000e+00> : vector<16x256xf32>
    %2 = tpu.matmul %0, %1, %cst {dimension_numbers = #tpu.dot_dimension_numbers<[1], [0], [0], [1], [0, 0, 1, 1], [], []>} : vector<16x576xbf16>, vector<576x256xbf16>, vector<16x256xf32> -> vector<16x256xf32>
    %c0_3 = arith.constant 0 : index
    %c0_4 = arith.constant 0 : index
    %3 = vector.load %arg4[%c0_3, %c0_4] : memref<1x256xf32, #tpu.memory_space<vmem>>, vector<1x256xf32>
    %4 = vector.broadcast %3 : vector<1x256xf32> to vector<16x256xf32>
    %5 = arith.addf %2, %4 : vector<16x256xf32>
    %cst_5 = arith.constant 0.000000e+00 : f32
    %6 = vector.broadcast %cst_5 : f32 to vector<16x256xf32>
    %7 = arith.maximumf %5, %6 : vector<16x256xf32>
    %8 = arith.truncf %7 : vector<16x256xf32> to vector<16x256xbf16>
    %c0_6 = arith.constant 0 : index
    %c0_7 = arith.constant 0 : index
    %9 = vector.load %arg5[%c0_6, %c0_7] : memref<16x256xbf16, #tpu.memory_space<vmem>>, vector<16x256xbf16>
    tpu.vector_store %arg5[%c0_6, %c0_7], %8 {strides = array<i32>} : memref<16x256xbf16, #tpu.memory_space<vmem>>, vector<16x256xbf16>,
    return
  }
  func.func @transform_0(%arg0: i32, %arg1: i32) -> (i32, i32) {
    %c0_i32 = arith.constant 0 : i32
    %c0_i32_0 = arith.constant 0 : i32
    return %arg0, %c0_i32 : i32, i32
  }
  func.func @transform_1(%arg0: i32, %arg1: i32) -> (i32, i32) {
    %c0_i32 = arith.constant 0 : i32
    %c0_i32_0 = arith.constant 0 : i32
    return %c0_i32, %arg1 : i32, i32
  }
  func.func @transform_2(%arg0: i32, %arg1: i32) -> (i32, i32) {
    %c0_i32 = arith.constant 0 : i32
    %c0_i32_0 = arith.constant 0 : i32
    return %c0_i32, %arg1 : i32, i32
  }
  func.func @transform_3(%arg0: i32, %arg1: i32) -> (i32, i32) {
    %c0_i32 = arith.constant 0 : i32
    return %arg0, %arg1 : i32, i32
  }
}

module attributes {stable_mosaic.version = 11 : i64} {
  func.func @_mm_kernel_fullk(%arg0: i32, %arg1: i32, %arg2: memref<16x1152xbf16, #tpu.memory_space<vmem>>, %arg3: memref<1152x256xbf16, #tpu.memory_space<vmem>>, %arg4: memref<1x256xf32, #tpu.memory_space<vmem>>, %arg5: memref<16x256xbf16, #tpu.memory_space<vmem>>) attributes {dimension_semantics = [#tpu.dimension_semantics<parallel>, #tpu.dimension_semantics<parallel>], iteration_bounds = array<i64: 1, 1>, scalar_prefetch = 0 : i64, scratch_operands = 0 : i64, tpu.core_type = #tpu.core_type<tc>, window_params = [{transform_indices = @transform_0, window_bounds = array<i64: 16, 1152>}, {transform_indices = @transform_1, window_bounds = array<i64: 1152, 256>}, {transform_indices = @transform_2, window_bounds = array<i64: 1, 256>}, {transform_indices = @transform_3, window_bounds = array<i64: 16, 256>}]} {
    %c0 = arith.constant 0 : index
    %c0_0 = arith.constant 0 : index
    %0 = vector.load %arg2[%c0, %c0_0] : memref<16x1152xbf16, #tpu.memory_space<vmem>>, vector<16x1152xbf16>
    %c0_1 = arith.constant 0 : index
    %c0_2 = arith.constant 0 : index
    %1 = vector.load %arg3[%c0_1, %c0_2] : memref<1152x256xbf16, #tpu.memory_space<vmem>>, vector<1152x256xbf16>
    %cst = arith.constant dense<0.000000e+00> : vector<16x256xf32>
    %2 = tpu.matmul %0, %1, %cst {dimension_numbers = #tpu.dot_dimension_numbers<[1], [0], [0], [1], [0, 0, 1, 1], [], []>} : vector<16x1152xbf16>, vector<1152x256xbf16>, vector<16x256xf32> -> vector<16x256xf32>
    %c0_3 = arith.constant 0 : index
    %c0_4 = arith.constant 0 : index
    %3 = vector.load %arg4[%c0_3, %c0_4] : memref<1x256xf32, #tpu.memory_space<vmem>>, vector<1x256xf32>
    %4 = vector.broadcast %3 : vector<1x256xf32> to vector<16x256xf32>
    %5 = arith.addf %2, %4 : vector<16x256xf32>
    %cst_5 = arith.constant 0.000000e+00 : f32
    %6 = vector.broadcast %cst_5 : f32 to vector<16x256xf32>
    %7 = arith.maximumf %5, %6 : vector<16x256xf32>
    %8 = arith.truncf %7 : vector<16x256xf32> to vector<16x256xbf16>
    %c0_6 = arith.constant 0 : index
    %c0_7 = arith.constant 0 : index
    %9 = vector.load %arg5[%c0_6, %c0_7] : memref<16x256xbf16, #tpu.memory_space<vmem>>, vector<16x256xbf16>
    tpu.vector_store %arg5[%c0_6, %c0_7], %8 {strides = array<i32>} : memref<16x256xbf16, #tpu.memory_space<vmem>>, vector<16x256xbf16>,
    return
  }
  func.func @transform_0(%arg0: i32, %arg1: i32) -> (i32, i32) {
    %c0_i32 = arith.constant 0 : i32
    %c0_i32_0 = arith.constant 0 : i32
    return %arg0, %c0_i32 : i32, i32
  }
  func.func @transform_1(%arg0: i32, %arg1: i32) -> (i32, i32) {
    %c0_i32 = arith.constant 0 : i32
    %c0_i32_0 = arith.constant 0 : i32
    return %c0_i32, %arg1 : i32, i32
  }
  func.func @transform_2(%arg0: i32, %arg1: i32) -> (i32, i32) {
    %c0_i32 = arith.constant 0 : i32
    %c0_i32_0 = arith.constant 0 : i32
    return %c0_i32, %arg1 : i32, i32
  }
  func.func @transform_3(%arg0: i32, %arg1: i32) -> (i32, i32) {
    %c0_i32 = arith.constant 0 : i32
    return %arg0, %arg1 : i32, i32
  }
}

module attributes {stable_mosaic.version = 11 : i64} {
  func.func @_mm_kernel_fullk(%arg0: i32, %arg1: i32, %arg2: memref<32x1152xbf16, #tpu.memory_space<vmem>>, %arg3: memref<1152x128xbf16, #tpu.memory_space<vmem>>, %arg4: memref<1x128xf32, #tpu.memory_space<vmem>>, %arg5: memref<32x128xbf16, #tpu.memory_space<vmem>>) attributes {dimension_semantics = [#tpu.dimension_semantics<parallel>, #tpu.dimension_semantics<parallel>], iteration_bounds = array<i64: 1, 1>, scalar_prefetch = 0 : i64, scratch_operands = 0 : i64, tpu.core_type = #tpu.core_type<tc>, window_params = [{transform_indices = @transform_0, window_bounds = array<i64: 32, 1152>}, {transform_indices = @transform_1, window_bounds = array<i64: 1152, 128>}, {transform_indices = @transform_2, window_bounds = array<i64: 1, 128>}, {transform_indices = @transform_3, window_bounds = array<i64: 32, 128>}]} {
    %c0 = arith.constant 0 : index
    %c0_0 = arith.constant 0 : index
    %0 = vector.load %arg2[%c0, %c0_0] : memref<32x1152xbf16, #tpu.memory_space<vmem>>, vector<32x1152xbf16>
    %c0_1 = arith.constant 0 : index
    %c0_2 = arith.constant 0 : index
    %1 = vector.load %arg3[%c0_1, %c0_2] : memref<1152x128xbf16, #tpu.memory_space<vmem>>, vector<1152x128xbf16>
    %cst = arith.constant dense<0.000000e+00> : vector<32x128xf32>
    %2 = tpu.matmul %0, %1, %cst {dimension_numbers = #tpu.dot_dimension_numbers<[1], [0], [0], [1], [0, 0, 1, 1], [], []>} : vector<32x1152xbf16>, vector<1152x128xbf16>, vector<32x128xf32> -> vector<32x128xf32>
    %c0_3 = arith.constant 0 : index
    %c0_4 = arith.constant 0 : index
    %3 = vector.load %arg4[%c0_3, %c0_4] : memref<1x128xf32, #tpu.memory_space<vmem>>, vector<1x128xf32>
    %4 = vector.broadcast %3 : vector<1x128xf32> to vector<32x128xf32>
    %5 = arith.addf %2, %4 : vector<32x128xf32>
    %cst_5 = arith.constant 0.000000e+00 : f32
    %6 = vector.broadcast %cst_5 : f32 to vector<32x128xf32>
    %7 = arith.maximumf %5, %6 : vector<32x128xf32>
    %8 = arith.truncf %7 : vector<32x128xf32> to vector<32x128xbf16>
    %c0_6 = arith.constant 0 : index
    %c0_7 = arith.constant 0 : index
    %9 = vector.load %arg5[%c0_6, %c0_7] : memref<32x128xbf16, #tpu.memory_space<vmem>>, vector<32x128xbf16>
    tpu.vector_store %arg5[%c0_6, %c0_7], %8 {strides = array<i32>} : memref<32x128xbf16, #tpu.memory_space<vmem>>, vector<32x128xbf16>,
    return
  }
  func.func @transform_0(%arg0: i32, %arg1: i32) -> (i32, i32) {
    %c0_i32 = arith.constant 0 : i32
    %c0_i32_0 = arith.constant 0 : i32
    return %arg0, %c0_i32 : i32, i32
  }
  func.func @transform_1(%arg0: i32, %arg1: i32) -> (i32, i32) {
    %c0_i32 = arith.constant 0 : i32
    %c0_i32_0 = arith.constant 0 : i32
    return %c0_i32, %arg1 : i32, i32
  }
  func.func @transform_2(%arg0: i32, %arg1: i32) -> (i32, i32) {
    %c0_i32 = arith.constant 0 : i32
    %c0_i32_0 = arith.constant 0 : i32
    return %c0_i32, %arg1 : i32, i32
  }
  func.func @transform_3(%arg0: i32, %arg1: i32) -> (i32, i32) {
    %c0_i32 = arith.constant 0 : i32
    return %arg0, %arg1 : i32, i32
  }
}

module attributes {stable_mosaic.version = 11 : i64} {
  func.func @_mm_kernel_fullk(%arg0: i32, %arg1: i32, %arg2: memref<128x576xbf16, #tpu.memory_space<vmem>>, %arg3: memref<576x128xbf16, #tpu.memory_space<vmem>>, %arg4: memref<1x128xf32, #tpu.memory_space<vmem>>, %arg5: memref<128x128xbf16, #tpu.memory_space<vmem>>) attributes {dimension_semantics = [#tpu.dimension_semantics<parallel>, #tpu.dimension_semantics<parallel>], iteration_bounds = array<i64: 1, 1>, scalar_prefetch = 0 : i64, scratch_operands = 0 : i64, tpu.core_type = #tpu.core_type<tc>, window_params = [{transform_indices = @transform_0, window_bounds = array<i64: 128, 576>}, {transform_indices = @transform_1, window_bounds = array<i64: 576, 128>}, {transform_indices = @transform_2, window_bounds = array<i64: 1, 128>}, {transform_indices = @transform_3, window_bounds = array<i64: 128, 128>}]} {
    %c0 = arith.constant 0 : index
    %c0_0 = arith.constant 0 : index
    %0 = vector.load %arg2[%c0, %c0_0] : memref<128x576xbf16, #tpu.memory_space<vmem>>, vector<128x576xbf16>
    %c0_1 = arith.constant 0 : index
    %c0_2 = arith.constant 0 : index
    %1 = vector.load %arg3[%c0_1, %c0_2] : memref<576x128xbf16, #tpu.memory_space<vmem>>, vector<576x128xbf16>
    %cst = arith.constant dense<0.000000e+00> : vector<128x128xf32>
    %2 = tpu.matmul %0, %1, %cst {dimension_numbers = #tpu.dot_dimension_numbers<[1], [0], [0], [1], [0, 0, 1, 1], [], []>} : vector<128x576xbf16>, vector<576x128xbf16>, vector<128x128xf32> -> vector<128x128xf32>
    %c0_3 = arith.constant 0 : index
    %c0_4 = arith.constant 0 : index
    %3 = vector.load %arg4[%c0_3, %c0_4] : memref<1x128xf32, #tpu.memory_space<vmem>>, vector<1x128xf32>
    %4 = vector.broadcast %3 : vector<1x128xf32> to vector<128x128xf32>
    %5 = arith.addf %2, %4 : vector<128x128xf32>
    %cst_5 = arith.constant 0.000000e+00 : f32
    %6 = vector.broadcast %cst_5 : f32 to vector<128x128xf32>
    %7 = arith.maximumf %5, %6 : vector<128x128xf32>
    %8 = arith.truncf %7 : vector<128x128xf32> to vector<128x128xbf16>
    %c0_6 = arith.constant 0 : index
    %c0_7 = arith.constant 0 : index
    %9 = vector.load %arg5[%c0_6, %c0_7] : memref<128x128xbf16, #tpu.memory_space<vmem>>, vector<128x128xbf16>
    tpu.vector_store %arg5[%c0_6, %c0_7], %8 {strides = array<i32>} : memref<128x128xbf16, #tpu.memory_space<vmem>>, vector<128x128xbf16>,
    return
  }
  func.func @transform_0(%arg0: i32, %arg1: i32) -> (i32, i32) {
    %c0_i32 = arith.constant 0 : i32
    %c0_i32_0 = arith.constant 0 : i32
    return %arg0, %c0_i32 : i32, i32
  }
  func.func @transform_1(%arg0: i32, %arg1: i32) -> (i32, i32) {
    %c0_i32 = arith.constant 0 : i32
    %c0_i32_0 = arith.constant 0 : i32
    return %c0_i32, %arg1 : i32, i32
  }
  func.func @transform_2(%arg0: i32, %arg1: i32) -> (i32, i32) {
    %c0_i32 = arith.constant 0 : i32
    %c0_i32_0 = arith.constant 0 : i32
    return %c0_i32, %arg1 : i32, i32
  }
  func.func @transform_3(%arg0: i32, %arg1: i32) -> (i32, i32) {
    %c0_i32 = arith.constant 0 : i32
    return %arg0, %arg1 : i32, i32
  }
}

module attributes {stable_mosaic.version = 11 : i64} {
  func.func @_mm_kernel_fullk(%arg0: i32, %arg1: i32, %arg2: memref<256x288xbf16, #tpu.memory_space<vmem>>, %arg3: memref<288x128xbf16, #tpu.memory_space<vmem>>, %arg4: memref<1x128xf32, #tpu.memory_space<vmem>>, %arg5: memref<256x128xbf16, #tpu.memory_space<vmem>>) attributes {dimension_semantics = [#tpu.dimension_semantics<parallel>, #tpu.dimension_semantics<parallel>], iteration_bounds = array<i64: 2, 1>, scalar_prefetch = 0 : i64, scratch_operands = 0 : i64, tpu.core_type = #tpu.core_type<tc>, window_params = [{transform_indices = @transform_0, window_bounds = array<i64: 256, 288>}, {transform_indices = @transform_1, window_bounds = array<i64: 288, 128>}, {transform_indices = @transform_2, window_bounds = array<i64: 1, 128>}, {transform_indices = @transform_3, window_bounds = array<i64: 256, 128>}]} {
    %c0 = arith.constant 0 : index
    %c0_0 = arith.constant 0 : index
    %0 = vector.load %arg2[%c0, %c0_0] : memref<256x288xbf16, #tpu.memory_space<vmem>>, vector<256x288xbf16>
    %c0_1 = arith.constant 0 : index
    %c0_2 = arith.constant 0 : index
    %1 = vector.load %arg3[%c0_1, %c0_2] : memref<288x128xbf16, #tpu.memory_space<vmem>>, vector<288x128xbf16>
    %cst = arith.constant dense<0.000000e+00> : vector<256x128xf32>
    %2 = tpu.matmul %0, %1, %cst {dimension_numbers = #tpu.dot_dimension_numbers<[1], [0], [0], [1], [0, 0, 1, 1], [], []>} : vector<256x288xbf16>, vector<288x128xbf16>, vector<256x128xf32> -> vector<256x128xf32>
    %c0_3 = arith.constant 0 : index
    %c0_4 = arith.constant 0 : index
    %3 = vector.load %arg4[%c0_3, %c0_4] : memref<1x128xf32, #tpu.memory_space<vmem>>, vector<1x128xf32>
    %4 = vector.broadcast %3 : vector<1x128xf32> to vector<256x128xf32>
    %5 = arith.addf %2, %4 : vector<256x128xf32>
    %cst_5 = arith.constant 0.000000e+00 : f32
    %6 = vector.broadcast %cst_5 : f32 to vector<256x128xf32>
    %7 = arith.maximumf %5, %6 : vector<256x128xf32>
    %8 = arith.truncf %7 : vector<256x128xf32> to vector<256x128xbf16>
    %c0_6 = arith.constant 0 : index
    %c0_7 = arith.constant 0 : index
    %9 = vector.load %arg5[%c0_6, %c0_7] : memref<256x128xbf16, #tpu.memory_space<vmem>>, vector<256x128xbf16>
    tpu.vector_store %arg5[%c0_6, %c0_7], %8 {strides = array<i32>} : memref<256x128xbf16, #tpu.memory_space<vmem>>, vector<256x128xbf16>,
    return
  }
  func.func @transform_0(%arg0: i32, %arg1: i32) -> (i32, i32) {
    %c0_i32 = arith.constant 0 : i32
    %c0_i32_0 = arith.constant 0 : i32
    return %arg0, %c0_i32 : i32, i32
  }
  func.func @transform_1(%arg0: i32, %arg1: i32) -> (i32, i32) {
    %c0_i32 = arith.constant 0 : i32
    %c0_i32_0 = arith.constant 0 : i32
    return %c0_i32, %arg1 : i32, i32
  }
  func.func @transform_2(%arg0: i32, %arg1: i32) -> (i32, i32) {
    %c0_i32 = arith.constant 0 : i32
    %c0_i32_0 = arith.constant 0 : i32
    return %c0_i32, %arg1 : i32, i32
  }
  func.func @transform_3(%arg0: i32, %arg1: i32) -> (i32, i32) {
    %c0_i32 = arith.constant 0 : i32
    return %arg0, %arg1 : i32, i32
  }
}

module attributes {stable_mosaic.version = 11 : i64} {
  func.func @_mm_kernel_fullk(%arg0: i32, %arg1: i32, %arg2: memref<256x144xbf16, #tpu.memory_space<vmem>>, %arg3: memref<144x128xbf16, #tpu.memory_space<vmem>>, %arg4: memref<1x128xf32, #tpu.memory_space<vmem>>, %arg5: memref<256x128xf32, #tpu.memory_space<vmem>>) attributes {dimension_semantics = [#tpu.dimension_semantics<parallel>, #tpu.dimension_semantics<parallel>], iteration_bounds = array<i64: 8, 1>, scalar_prefetch = 0 : i64, scratch_operands = 0 : i64, tpu.core_type = #tpu.core_type<tc>, window_params = [{transform_indices = @transform_0, window_bounds = array<i64: 256, 144>}, {transform_indices = @transform_1, window_bounds = array<i64: 144, 128>}, {transform_indices = @transform_2, window_bounds = array<i64: 1, 128>}, {transform_indices = @transform_3, window_bounds = array<i64: 256, 128>}]} {
    %c0 = arith.constant 0 : index
    %c0_0 = arith.constant 0 : index
    %0 = vector.load %arg2[%c0, %c0_0] : memref<256x144xbf16, #tpu.memory_space<vmem>>, vector<256x144xbf16>
    %c0_1 = arith.constant 0 : index
    %c0_2 = arith.constant 0 : index
    %1 = vector.load %arg3[%c0_1, %c0_2] : memref<144x128xbf16, #tpu.memory_space<vmem>>, vector<144x128xbf16>
    %cst = arith.constant dense<0.000000e+00> : vector<256x128xf32>
    %2 = tpu.matmul %0, %1, %cst {dimension_numbers = #tpu.dot_dimension_numbers<[1], [0], [0], [1], [0, 0, 1, 1], [], []>} : vector<256x144xbf16>, vector<144x128xbf16>, vector<256x128xf32> -> vector<256x128xf32>
    %c0_3 = arith.constant 0 : index
    %c0_4 = arith.constant 0 : index
    %3 = vector.load %arg4[%c0_3, %c0_4] : memref<1x128xf32, #tpu.memory_space<vmem>>, vector<1x128xf32>
    %4 = vector.broadcast %3 : vector<1x128xf32> to vector<256x128xf32>
    %5 = arith.addf %2, %4 : vector<256x128xf32>
    %6 = math.tanh %5 : vector<256x128xf32>
    %c0_5 = arith.constant 0 : index
    %c0_6 = arith.constant 0 : index
    %7 = vector.load %arg5[%c0_5, %c0_6] : memref<256x128xf32, #tpu.memory_space<vmem>>, vector<256x128xf32>
    tpu.vector_store %arg5[%c0_5, %c0_6], %6 {strides = array<i32>} : memref<256x128xf32, #tpu.memory_space<vmem>>, vector<256x128xf32>,
    return
  }
  func.func @transform_0(%arg0: i32, %arg1: i32) -> (i32, i32) {
    %c0_i32 = arith.constant 0 : i32
    %c0_i32_0 = arith.constant 0 : i32
    return %arg0, %c0_i32 : i32, i32
  }
  func.func @transform_1(%arg0: i32, %arg1: i32) -> (i32, i32) {
    %c0_i32 = arith.constant 0 : i32
    %c0_i32_0 = arith.constant 0 : i32
    return %c0_i32, %arg1 : i32, i32
  }
  func.func @transform_2(%arg0: i32, %arg1: i32) -> (i32, i32) {
    %c0_i32 = arith.constant 0 : i32
    %c0_i32_0 = arith.constant 0 : i32
    return %c0_i32, %arg1 : i32, i32
  }
  func.func @transform_3(%arg0: i32, %arg1: i32) -> (i32, i32) {
    %c0_i32 = arith.constant 0 : i32
    return %arg0, %arg1 : i32, i32
  }
}

</mosaic_0001>

<llo_original>
// kernel: unet_forward.12
$region0: #{unet_forward.12}
  #allocation0 [shape = 'u32[]', space=smem, size = 0x4, offset = 0x4, fixed_abs, tag = 'smem constant byte address 0x4 - core index']
  #allocation1 [shape = 'u32[144,128]{1,0:T(1,128)}', space=vmem, size = 0x12000, scoped, tag = 'internal scratch']
  %s0 = inlined_call_operand.vmem [shape: bf16[2048,96], index: 0, kind: input, shape index: {}]
  %s1 = inlined_call_operand.vmem [shape: bf16[96,128], index: 1, kind: input, shape index: {}]
  %s2 = inlined_call_operand.vmem [shape: f32[1,128], index: 2, kind: input, shape index: {}]
  %s3 = inlined_call_operand.vmem [shape: bf16[2048,128], index: 3, kind: output, shape index: {}]
  %s4 = sld [smem:[#allocation0]]
  $region45: #{unet_forward.12} parent=0
    _
  %s6 = ssub.s32 1, %s4
  %s7 = scalar_select 0, %s6, %s4
  loop: start=0, step=1, limit=10
  $region2: #{unet_forward.12} parent=0 // loop_pre_header
    _
  $region3: #{unet_forward.12} parent=0 // loop_header
    %s9 = sphi 0, %s13
    %p10 = scmp.ge.s32.totalorder %s9, 10
    %s16 = sphi 0, %s28
    %s17 = sphi 0, %s24
    %s18 = sphi 0, %s16
    %s19 = sphi 0, %s17
    %s20 = sphi 0, %s18
    %s21 = sphi 0, %s19
    %s31 = sphi 0, %s33
    %s34 = sphi 0, %s31
    %s35 = sphi 0, %s34
    %s51 = sphi 0, %s35
    %s57 = sphi 0, %s59
    %s60 = sphi 0, %s57
    %s61 = sphi 0, %s60
    %s77 = sphi 0, %s61
    %s83 = sphi 0, %s85
    %s86 = sphi 0, %s83
    %s87 = sphi 0, %s86
    %s103 = sphi 0, %s87
    %s111 = sphi 0, %s113
    %s114 = sphi 0, %s111
    %s115 = sphi 0, %s114
    %s131 = sphi 0, %s115
  $region4: #{unet_forward.12} parent=0 // loop_header_branch
    %12 = sbr.rel (%p10) target = $region8
  $region5: #{unet_forward.12} parent=0 // loop_body
    %s14 = ssub.s32 %s9, 1
    %s15 = ssub.s32 %s9, 2
    %s22 = sadd.s32 1, %s17
    %p23 = scmp.ge.s32.totalorder %s22, 1
    %s24 = scalar_select %p23, 0, %s22
    %s25 = sadd.s32 1, %s16
    %s26 = scalar_select %p23, %s25, %s16
    %p27 = scmp.ge.s32.totalorder %s26, 8
    %s28 = scalar_select %p27, 0, %s26
    %s29 = ssub.s32 %s16, %s28
    %p30 = scmp.eq.s32.totalorder %s29, 0
    %s32 = sadd.s32 %s31, 1
    %s33 = scalar_select %p30, %s31, %s32
    %p36 = pneg %p30
    %p37 = scmp.eq.s32.totalorder %s9, 7
    %p38 = por %p36, %p37
    %p39 = scmp.ne.s32.totalorder %s31, %s34
    %p40 = scmp.eq.s32.totalorder %s9, 0
    %p41 = por %p39, %p40
    %p42 = scmp.ne.s32.totalorder %s31, %s34
    %p43 = scmp.eq.s32.totalorder %s14, 7
    %p44 = por %p42, %p43
    %p45 = scmp.ne.s32.totalorder %s34, %s35
    %p46 = scmp.eq.s32.totalorder %s14, 0
    %p47 = por %p45, %p46
    %p48 = scmp.ne.s32.totalorder %s34, %s35
    %p49 = scmp.eq.s32.totalorder %s15, 7
    %p50 = por %p48, %p49
    %p52 = scmp.ne.s32.totalorder %s35, %s51
    %p53 = scmp.eq.s32.totalorder %s15, 0
    %p54 = por %p52, %p53
    %s55 = ssub.s32 %s17, %s24
    %p56 = scmp.eq.s32.totalorder %s55, 0
    %s58 = sadd.s32 %s57, 1
    %s59 = scalar_select %p56, %s57, %s58
    %p62 = pneg %p56
    %p63 = scmp.eq.s32.totalorder %s9, 7
    %p64 = por %p62, %p63
    %p65 = scmp.ne.s32.totalorder %s57, %s60
    %p66 = scmp.eq.s32.totalorder %s9, 0
    %p67 = por %p65, %p66
    %p68 = scmp.ne.s32.totalorder %s57, %s60
    %p69 = scmp.eq.s32.totalorder %s14, 7
    %p70 = por %p68, %p69
    %p71 = scmp.ne.s32.totalorder %s60, %s61
    %p72 = scmp.eq.s32.totalorder %s14, 0
    %p73 = por %p71, %p72
    %p74 = scmp.ne.s32.totalorder %s60, %s61
    %p75 = scmp.eq.s32.totalorder %s15, 7
    %p76 = por %p74, %p75
    %p78 = scmp.ne.s32.totalorder %s61, %s77
    %p79 = scmp.eq.s32.totalorder %s15, 0
    %p80 = por %p78, %p79
    %s81 = ssub.s32 %s17, %s24
    %p82 = scmp.eq.s32.totalorder %s81, 0
    %s84 = sadd.s32 %s83, 1
    %s85 = scalar_select %p82, %s83, %s84
    %p88 = pneg %p82
    %p89 = scmp.eq.s32.totalorder %s9, 7
    %p90 = por %p88, %p89
    %p91 = scmp.ne.s32.totalorder %s83, %s86
    %p92 = scmp.eq.s32.totalorder %s9, 0
    %p93 = por %p91, %p92
    %p94 = scmp.ne.s32.totalorder %s83, %s86
    %p95 = scmp.eq.s32.totalorder %s14, 7
    %p96 = por %p94, %p95
    %p97 = scmp.ne.s32.totalorder %s86, %s87
    %p98 = scmp.eq.s32.totalorder %s14, 0
    %p99 = por %p97, %p98
    %p100 = scmp.ne.s32.totalorder %s86, %s87
    %p101 = scmp.eq.s32.totalorder %s15, 7
    %p102 = por %p100, %p101
    %p104 = scmp.ne.s32.totalorder %s87, %s103
    %p105 = scmp.eq.s32.totalorder %s15, 0
    %p106 = por %p104, %p105
    %s107 = ssub.s32 %s16, %s28
    %s108 = ssub.s32 %s17, %s24
    %s109 = sor.u32 %s107, %s108
    %p110 = scmp.eq.s32.totalorder %s109, 0
    %s112 = sadd.s32 %s111, 1
    %s113 = scalar_select %p110, %s111, %s112
    %p116 = pneg %p110
    %p117 = scmp.eq.s32.totalorder %s9, 7
    %p118 = por %p116, %p117
    %p119 = scmp.ne.s32.totalorder %s111, %s114
    %p120 = scmp.eq.s32.totalorder %s9, 0
    %p121 = por %p119, %p120
    %p122 = scmp.ne.s32.totalorder %s111, %s114
    %p123 = scmp.eq.s32.totalorder %s14, 7
    %p124 = por %p122, %p123
    %p125 = scmp.ne.s32.totalorder %s114, %s115
    %p126 = scmp.eq.s32.totalorder %s14, 0
    %p127 = por %p125, %p126
    %p128 = scmp.ne.s32.totalorder %s114, %s115
    %p129 = scmp.eq.s32.totalorder %s15, 7
    %p130 = por %p128, %p129
    %p132 = scmp.ne.s32.totalorder %s115, %s131
    %p133 = scmp.eq.s32.totalorder %s15, 0
    %p134 = por %p132, %p133
    %p135 = scmp.le.s32.totalorder 1, %s9
    %p136 = scmp.lt.s32.totalorder %s9, 9
    %p137 = pnand %p135, %p136
    %p138 = pneg %p137
    // Predicated region
    $region9: #{unet_forward.12} parent=5 // pred_check
      _
    $region10: #{unet_forward.12} parent=5 // pred_check_branch
      %140 = sbr.rel (%p137) target = $region12
    $region11: #{unet_forward.12} parent=5 // pred_region
      %s141 = ssub.s32 %s9, 1
      // Predicated region
      $region13: #{unet_forward.12} parent=11 // pred_check
        %p142 = pneg %p73
      $region14: #{unet_forward.12} parent=11 // pred_check_branch
        %144 = sbr.rel (%p142) target = $region16
      $region15: #{unet_forward.12} parent=11 // pred_region
        %p145 = scmp.lt.s32.totalorder %s19, 0
        %s146 = scalar_select %p145, %s19, 0
        %s147 = smul.addr %s146, 4
        %s148 = scalar_lea.vmem %s1, %s147
      $region16: #{unet_forward.12} parent=11 // pred_fallthru
        _
      // Predicated region
      $region17: #{unet_forward.12} parent=11 // pred_check
        %p149 = pneg %p99
      $region18: #{unet_forward.12} parent=11 // pred_check_branch
        %151 = sbr.rel (%p149) target = $region20
      $region19: #{unet_forward.12} parent=11 // pred_region
        %p152 = scmp.lt.s32.totalorder %s19, 0
        %s153 = scalar_select %p152, %s19, 0
        %s154 = scalar_lea.vmem %s2, %s153
      $region20: #{unet_forward.12} parent=11 // pred_fallthru
        _
    $region12: #{unet_forward.12} parent=5 // pred_fallthru
      _
    %p155 = scmp.lt.s32.totalorder %s9, 8
    // Predicated region
    $region21: #{unet_forward.12} parent=5 // pred_check
      %p156 = pneg %p155
    $region22: #{unet_forward.12} parent=5 // pred_check_branch
      %158 = sbr.rel (%p156) target = $region24
    $region23: #{unet_forward.12} parent=5 // pred_region
      // Predicated region
      $region25: #{unet_forward.12} parent=23 // pred_check
        %p159 = pneg %p41
      $region26: #{unet_forward.12} parent=23 // pred_check_branch
        %161 = sbr.rel (%p159) target = $region28
      $region27: #{unet_forward.12} parent=23 // pred_region
        %s162 = smul.u32 32, %s16
        %p163 = scmp.lt.s32.totalorder %s162, 255
        %s164 = scalar_select %p163, %s162, 255
        %s165 = smul.addr %s164, 4
        %s166 = scalar_lea.vmem %s0, %s165
        %s167 = smul.u32 32, %s16
      $region28: #{unet_forward.12} parent=23 // pred_fallthru
        _
    $region24: #{unet_forward.12} parent=5 // pred_fallthru
      _
    %p168 = scmp.le.s32.totalorder 1, %s9
    %p169 = scmp.lt.s32.totalorder %s9, 9
    %p170 = pnand %p168, %p169
    %p171 = pneg %p170
    // Predicated region
    $region29: #{unet_forward.12} parent=5 // pred_check
      _
    $region30: #{unet_forward.12} parent=5 // pred_check_branch
      %173 = sbr.rel (%p170) target = $region32
    $region31: #{unet_forward.12} parent=5 // pred_region
      %s174 = ssub.s32 %s9, 1
      %s175 = smul.u32 32, %s18
      %p176 = scmp.lt.s32.totalorder %s175, 255
      %s177 = scalar_select %p176, %s175, 255
      %s178 = smul.addr %s177, 4
      %s179 = scalar_lea.vmem %s0, %s178
      %p180 = pneg %p47
      %p181 = pneg %p44
      %p182 = scmp.lt.s32.totalorder %s19, 0
      %s183 = scalar_select %p182, %s19, 0
      %s184 = smul.addr %s183, 4
      %s185 = scalar_lea.vmem %s1, %s184
      %p186 = pneg %p73
      %p187 = pneg %p70
      %p188 = scmp.lt.s32.totalorder %s19, 0
      %s189 = scalar_select %p188, %s19, 0
      %s190 = scalar_lea.vmem %s2, %s189
      %p191 = pneg %p99
      %p192 = pneg %p96
      %p193 = pneg %p127
      %p194 = pneg %p124
      %s195 = smul.u32 32, %s18
      %p196 = scmp.lt.s32.totalorder %s195, 255
      %s197 = scalar_select %p196, %s195, 255
      %p198 = scmp.lt.s32.totalorder %s19, 0
      %s199 = scalar_select %p198, %s19, 0
      %s200 = sadd.s32 %s199, %s197
      %s201 = smul.addr %s200, 4
      %s202 = scalar_lea.vmem %s3, %s201
      %s203 = smul.u32 32, %s18
      %p204 = scmp.lt.s32.totalorder %s203, 255
      %s205 = scalar_select %p204, %s203, 255
      %s206 = smul.addr %s205, 4
      %s207 = scalar_lea.vmem %s0, %s206
      %s208 = smul.u32 32, %s18
      %p209 = scmp.lt.s32.totalorder %s19, 0
      %s210 = scalar_select %p209, %s19, 0
      %s211 = smul.addr %s210, 4
      %s212 = scalar_lea.vmem %s1, %s211
      %p213 = scmp.lt.s32.totalorder %s19, 0
      %s214 = scalar_select %p213, %s19, 0
      %s215 = scalar_lea.vmem %s2, %s214
      %s216 = smul.u32 32, %s18
      %p217 = scmp.lt.s32.totalorder %s216, 255
      %s218 = scalar_select %p217, %s216, 255
      %p219 = scmp.lt.s32.totalorder %s19, 0
      %s220 = scalar_select %p219, %s19, 0
      %s221 = sadd.s32 %s220, %s218
      %s222 = smul.addr %s221, 4
      %s223 = scalar_lea.vmem %s3, %s222
      %s224 = smul.u32 32, %s18
      %v226 = vld [vmem:[%s207] sm:$0xf]
      %v227 = vld [vmem:[%s207 + $0x4] sm:$0xf]
      %v228 = vld [vmem:[%s207 + $0x8] sm:$0xf]
      %v229 = vld [vmem:[%s207 + $0xc] sm:$0xf]
      %v230 = vld [vmem:[%s207 + $0x10] sm:$0xf]
      %v231 = vld [vmem:[%s207 + $0x14] sm:$0xf]
      %v232 = vld [vmem:[%s207 + $0x18] sm:$0xf]
      %v233 = vld [vmem:[%s207 + $0x1c] sm:$0xf]
      %v234 = vld [vmem:[%s207 + $0x20] sm:$0xf]
      %v235 = vld [vmem:[%s207 + $0x24] sm:$0xf]
      %v236 = vld [vmem:[%s207 + $0x28] sm:$0xf]
      %v237 = vld [vmem:[%s207 + $0x2c] sm:$0xf]
      %v238 = vld [vmem:[%s207 + $0x30] sm:$0xf]
      %v239 = vld [vmem:[%s207 + $0x34] sm:$0xf]
      %v240 = vld [vmem:[%s207 + $0x38] sm:$0xf]
      %v241 = vld [vmem:[%s207 + $0x3c] sm:$0xf]
      %v242 = vld [vmem:[%s207 + $0x40] sm:$0xf]
      %v243 = vld [vmem:[%s207 + $0x44] sm:$0xf]
      %v244 = vld [vmem:[%s207 + $0x48] sm:$0xf]
      %v245 = vld [vmem:[%s207 + $0x4c] sm:$0xf]
      %v246 = vld [vmem:[%s207 + $0x50] sm:$0xf]
      %v247 = vld [vmem:[%s207 + $0x54] sm:$0xf]
      %v248 = vld [vmem:[%s207 + $0x58] sm:$0xf]
      %v249 = vld [vmem:[%s207 + $0x5c] sm:$0xf]
      %v250 = vld [vmem:[%s207 + $0x60] sm:$0xf]
      %v251 = vld [vmem:[%s207 + $0x64] sm:$0xf]
      %v252 = vld [vmem:[%s207 + $0x68] sm:$0xf]
      %v253 = vld [vmem:[%s207 + $0x6c] sm:$0xf]
      %v254 = vld [vmem:[%s207 + $0x70] sm:$0xf]
      %v255 = vld [vmem:[%s207 + $0x74] sm:$0xf]
      %v256 = vld [vmem:[%s207 + $0x78] sm:$0xf]
      %v257 = vld [vmem:[%s207 + $0x7c] sm:$0xf]
      %v258 = vld [vmem:[%s212] sm:$0xf]
      %v259 = vld [vmem:[%s212 + $0x4] sm:$0xf]
      %v260 = vld [vmem:[%s212 + $0x8] sm:$0xf]
      %v261 = vld [vmem:[%s212 + $0xc] sm:$0xf]
      %v262 = vld [vmem:[%s212 + $0x10] sm:$0xf]
      %v263 = vld [vmem:[%s212 + $0x14] sm:$0xf]
      %v264 = vld [vmem:[%s212 + $0x18] sm:$0xf]
      %v265 = vld [vmem:[%s212 + $0x1c] sm:$0xf]
      %v266 = vld [vmem:[%s212 + $0x20] sm:$0xf]
      %v267 = vld [vmem:[%s212 + $0x24] sm:$0xf]
      %v268 = vld [vmem:[%s212 + $0x28] sm:$0xf]
      %v269 = vld [vmem:[%s212 + $0x2c] sm:$0xf]
      %v270 = vld [vmem:[%s215] sm:$0x1]
      %v272 = vlaneseq
      %v273 = vshrl.u32 %v272, 7
      %v274 = vsub.s32 0, %v273
      %v275 = vrot.slane %v270, %v274
      %v309 = vunpack.c.l.b16 %v226
      %v310 = vunpack.c.l.b16 %v227
      %v311 = vunpack.c.l.b16 %v228
      %v312 = vunpack.c.l.b16 %v229
      %v313 = vunpack.c.l.b16 %v230
      %v314 = vunpack.c.l.b16 %v231
      %v315 = vunpack.c.l.b16 %v232
      %v316 = vunpack.c.l.b16 %v233
      %v317 = vunpack.c.l.b16 %v234
      %v318 = vunpack.c.l.b16 %v235
      %v319 = vunpack.c.l.b16 %v236
      %v320 = vunpack.c.l.b16 %v237
      %v321 = vunpack.c.l.b16 %v238
      %v322 = vunpack.c.l.b16 %v239
      %v323 = vunpack.c.l.b16 %v240
      %v324 = vunpack.c.l.b16 %v241
      %v325 = vunpack.c.l.b16 %v242
      %v326 = vunpack.c.l.b16 %v243
      %v327 = vunpack.c.l.b16 %v244
      %v328 = vunpack.c.l.b16 %v245
      %v329 = vunpack.c.l.b16 %v246
      %v330 = vunpack.c.l.b16 %v247
      %v331 = vunpack.c.l.b16 %v248
      %v332 = vunpack.c.l.b16 %v249
      %v333 = vunpack.c.l.b16 %v250
      %v334 = vunpack.c.l.b16 %v251
      %v335 = vunpack.c.l.b16 %v252
      %v336 = vunpack.c.l.b16 %v253
      %v337 = vunpack.c.l.b16 %v254
      %v338 = vunpack.c.l.b16 %v255
      %v339 = vunpack.c.l.b16 %v256
      %v340 = vunpack.c.l.b16 %v257
      %v341 = vpack.c.b16 %v310, %v309
      %v342 = vpack.c.b16 %v312, %v311
      %v343 = vpack.c.b16 %v314, %v313
      %v344 = vpack.c.b16 %v316, %v315
      %v345 = vpack.c.b16 %v318, %v317
      %v346 = vpack.c.b16 %v320, %v319
      %v347 = vpack.c.b16 %v322, %v321
      %v348 = vpack.c.b16 %v324, %v323
      %v349 = vpack.c.b16 %v326, %v325
      %v350 = vpack.c.b16 %v328, %v327
      %v351 = vpack.c.b16 %v330, %v329
      %v352 = vpack.c.b16 %v332, %v331
      %v353 = vpack.c.b16 %v334, %v333
      %v354 = vpack.c.b16 %v336, %v335
      %v355 = vpack.c.b16 %v338, %v337
      %v356 = vpack.c.b16 %v340, %v339
      %v369 = vunpack.c.l.b16 %v258
      %v370 = vunpack.c.l.b16 %v259
      %v371 = vunpack.c.l.b16 %v260
      %v372 = vunpack.c.l.b16 %v261
      %v373 = vunpack.c.l.b16 %v262
      %v374 = vunpack.c.l.b16 %v263
      %v375 = vunpack.c.l.b16 %v264
      %v376 = vunpack.c.l.b16 %v265
      %v377 = vunpack.c.l.b16 %v266
      %v378 = vunpack.c.l.b16 %v267
      %v379 = vunpack.c.l.b16 %v268
      %v380 = vunpack.c.l.b16 %v269
      %v381 = vpack.c.b16 %v370, %v369
      %v382 = vpack.c.b16 %v372, %v371
      %v383 = vpack.c.b16 %v374, %v373
      %v384 = vpack.c.b16 %v376, %v375
      %v385 = vpack.c.b16 %v378, %v377
      %v386 = vpack.c.b16 %v380, %v379
      %vm393 = vcmask 785408
      %v395 = vsel %vm393, %v341, 0
      %v398 = vsel %vm393, %v342, 0
      %v401 = vsel %vm393, %v343, 0
      %v404 = vsel %vm393, %v344, 0
      %v407 = vsel %vm393, %v345, 0
      %v410 = vsel %vm393, %v346, 0
      %v413 = vsel %vm393, %v347, 0
      %v416 = vsel %vm393, %v348, 0
      %v419 = vsel %vm393, %v349, 0
      %v422 = vsel %vm393, %v350, 0
      %v425 = vsel %vm393, %v351, 0
      %v428 = vsel %vm393, %v352, 0
      %v431 = vsel %vm393, %v353, 0
      %v434 = vsel %vm393, %v354, 0
      %v437 = vsel %vm393, %v355, 0
      %v440 = vsel %vm393, %v356, 0
      %442 = vmatprep.subr.bf16.mxu0 0
      %443 = vmatpush1.bf16.msra.mxu0 %v381
      %444 = vmatprep.subr.bf16.mxu0 0
      %445 = vmatpush1.bf16.msra.mxu0 %v382
      %446 = vmatprep.subr.bf16.mxu0 0
      %447 = vmatpush1.bf16.msra.mxu0 %v383
      %448 = vmatprep.subr.bf16.mxu0 0
      %449 = vmatpush1.bf16.msra.mxu0 %v384
      %450 = vmatprep.subr.bf16.mxu0 0
      %451 = vmatpush1.bf16.msra.mxu0 %v385
      %452 = vmatprep.subr.bf16.mxu0 0
      %453 = vmatpush1.bf16.msra.mxu0 %v386
      %454 = vmatprep.subr.bf16.mxu0 0
      %455 = vmatpush1.bf16.msra.mxu0 0
      %456 = vmatprep.subr.bf16.mxu0 0
      %457 = vmatpush1.bf16.msra.mxu0 0
      %458 = vmatprep.subr.bf16.mxu0 0
      %459 = vmatpush1.bf16.msra.mxu0 0
      %460 = vmatprep.subr.bf16.mxu0 0
      %461 = vmatpush1.bf16.msra.mxu0 0
      %462 = vmatprep.subr.bf16.mxu0 0
      %463 = vmatpush1.bf16.msra.mxu0 0
      %464 = vmatprep.subr.bf16.mxu0 0
      %465 = vmatpush1.bf16.msra.mxu0 0
      %466 = vmatprep.subr.bf16.mxu0 0
      %467 = vmatpush1.bf16.msra.mxu0 0
      %468 = vmatprep.subr.bf16.mxu0 0
      %469 = vmatpush1.bf16.msra.mxu0 0
      %470 = vmatprep.subr.bf16.mxu0 0
      %471 = vmatpush1.bf16.msra.mxu0 0
      %472 = vmatprep.subr.bf16.mxu0 0
      %473 = vmatpush1.bf16.msra.mxu0 0
      %474 = vmatprep.mubr.bf16.mxu0 0
      %475 = vmatmul.mubr.bf16.gmra.mrb[0].mxu0 %v395
      %v476 = vpop.f32.mrb[0].mxu0
      %v477 = vadd.f32 %v275, %v476
      %v478 = vpop.f32.mrb[0].mxu0
      %v479 = vpop.f32.mrb[0].mxu0
      %v480 = vadd.f32 %v275, %v479
      %v481 = vpop.f32.mrb[0].mxu0
      %482 = vmatprep.mubr.bf16.mxu0 0
      %483 = vmatmul.mubr.bf16.gmra.mrb[0].mxu0 %v398
      %v484 = vpop.f32.mrb[0].mxu0
      %v485 = vadd.f32 %v275, %v484
      %v486 = vpop.f32.mrb[0].mxu0
      %v487 = vpop.f32.mrb[0].mxu0
      %v488 = vadd.f32 %v275, %v487
      %v489 = vpop.f32.mrb[0].mxu0
      %490 = vmatprep.mubr.bf16.mxu0 0
      %491 = vmatmul.mubr.bf16.gmra.mrb[0].mxu0 %v401
      %v492 = vpop.f32.mrb[0].mxu0
      %v493 = vadd.f32 %v275, %v492
      %v494 = vpop.f32.mrb[0].mxu0
      %v495 = vpop.f32.mrb[0].mxu0
      %v496 = vadd.f32 %v275, %v495
      %v497 = vpop.f32.mrb[0].mxu0
      %498 = vmatprep.mubr.bf16.mxu0 0
      %499 = vmatmul.mubr.bf16.gmra.mrb[0].mxu0 %v404
      %v500 = vpop.f32.mrb[0].mxu0
      %v501 = vadd.f32 %v275, %v500
      %v502 = vpop.f32.mrb[0].mxu0
      %v503 = vpop.f32.mrb[0].mxu0
      %v504 = vadd.f32 %v275, %v503
      %v505 = vpop.f32.mrb[0].mxu0
      %506 = vmatprep.mubr.bf16.mxu0 0
      %507 = vmatmul.mubr.bf16.gmra.mrb[0].mxu0 %v407
      %v508 = vpop.f32.mrb[0].mxu0
      %v509 = vadd.f32 %v275, %v508
      %v510 = vpop.f32.mrb[0].mxu0
      %v511 = vpop.f32.mrb[0].mxu0
      %v512 = vadd.f32 %v275, %v511
      %v513 = vpop.f32.mrb[0].mxu0
      %514 = vmatprep.mubr.bf16.mxu0 0
      %515 = vmatmul.mubr.bf16.gmra.mrb[0].mxu0 %v410
      %v516 = vpop.f32.mrb[0].mxu0
      %v517 = vadd.f32 %v275, %v516
      %v518 = vpop.f32.mrb[0].mxu0
      %v519 = vpop.f32.mrb[0].mxu0
      %v520 = vadd.f32 %v275, %v519
      %v521 = vpop.f32.mrb[0].mxu0
      %522 = vmatprep.mubr.bf16.mxu0 0
      %523 = vmatmul.mubr.bf16.gmra.mrb[0].mxu0 %v413
      %v524 = vpop.f32.mrb[0].mxu0
      %v525 = vadd.f32 %v275, %v524
      %v526 = vpop.f32.mrb[0].mxu0
      %v527 = vpop.f32.mrb[0].mxu0
      %v528 = vadd.f32 %v275, %v527
      %v529 = vpop.f32.mrb[0].mxu0
      %530 = vmatprep.mubr.bf16.mxu0 0
      %531 = vmatmul.mubr.bf16.gmra.mrb[0].mxu0 %v416
      %v532 = vpop.f32.mrb[0].mxu0
      %v533 = vadd.f32 %v275, %v532
      %v534 = vpop.f32.mrb[0].mxu0
      %v535 = vpop.f32.mrb[0].mxu0
      %v536 = vadd.f32 %v275, %v535
      %v537 = vpop.f32.mrb[0].mxu0
      %538 = vmatprep.mubr.bf16.mxu0 0
      %539 = vmatmul.mubr.bf16.gmra.mrb[0].mxu0 %v419
      %v540 = vpop.f32.mrb[0].mxu0
      %v541 = vadd.f32 %v275, %v540
      %v542 = vpop.f32.mrb[0].mxu0
      %v543 = vpop.f32.mrb[0].mxu0
      %v544 = vadd.f32 %v275, %v543
      %v545 = vpop.f32.mrb[0].mxu0
      %546 = vmatprep.mubr.bf16.mxu0 0
      %547 = vmatmul.mubr.bf16.gmra.mrb[0].mxu0 %v422
      %v548 = vpop.f32.mrb[0].mxu0
      %v549 = vadd.f32 %v275, %v548
      %v550 = vpop.f32.mrb[0].mxu0
      %v551 = vpop.f32.mrb[0].mxu0
      %v552 = vadd.f32 %v275, %v551
      %v553 = vpop.f32.mrb[0].mxu0
      %554 = vmatprep.mubr.bf16.mxu0 0
      %555 = vmatmul.mubr.bf16.gmra.mrb[0].mxu0 %v425
      %v556 = vpop.f32.mrb[0].mxu0
      %v557 = vadd.f32 %v275, %v556
      %v558 = vpop.f32.mrb[0].mxu0
      %v559 = vpop.f32.mrb[0].mxu0
      %v560 = vadd.f32 %v275, %v559
      %v561 = vpop.f32.mrb[0].mxu0
      %562 = vmatprep.mubr.bf16.mxu0 0
      %563 = vmatmul.mubr.bf16.gmra.mrb[0].mxu0 %v428
      %v564 = vpop.f32.mrb[0].mxu0
      %v565 = vadd.f32 %v275, %v564
      %v566 = vpop.f32.mrb[0].mxu0
      %v567 = vpop.f32.mrb[0].mxu0
      %v568 = vadd.f32 %v275, %v567
      %v569 = vpop.f32.mrb[0].mxu0
      %570 = vmatprep.mubr.bf16.mxu0 0
      %571 = vmatmul.mubr.bf16.gmra.mrb[0].mxu0 %v431
      %v572 = vpop.f32.mrb[0].mxu0
      %v573 = vadd.f32 %v275, %v572
      %v574 = vpop.f32.mrb[0].mxu0
      %v575 = vpop.f32.mrb[0].mxu0
      %v576 = vadd.f32 %v275, %v575
      %v577 = vpop.f32.mrb[0].mxu0
      %578 = vmatprep.mubr.bf16.mxu0 0
      %579 = vmatmul.mubr.bf16.gmra.mrb[0].mxu0 %v434
      %v580 = vpop.f32.mrb[0].mxu0
      %v581 = vadd.f32 %v275, %v580
      %v582 = vpop.f32.mrb[0].mxu0
      %v583 = vpop.f32.mrb[0].mxu0
      %v584 = vadd.f32 %v275, %v583
      %v585 = vpop.f32.mrb[0].mxu0
      %586 = vmatprep.mubr.bf16.mxu0 0
      %587 = vmatmul.mubr.bf16.gmra.mrb[0].mxu0 %v437
      %v588 = vpop.f32.mrb[0].mxu0
      %v589 = vadd.f32 %v275, %v588
      %v590 = vpop.f32.mrb[0].mxu0
      %v591 = vpop.f32.mrb[0].mxu0
      %v592 = vadd.f32 %v275, %v591
      %v593 = vpop.f32.mrb[0].mxu0
      %594 = vmatprep.mubr.bf16.mxu0 0
      %595 = vmatmul.mubr.bf16.gmra.mrb[0].mxu0 %v440
      %v596 = vpop.f32.mrb[0].mxu0
      %v597 = vadd.f32 %v275, %v596
      %v598 = vpop.f32.mrb[0].mxu0
      %v599 = vpop.f32.mrb[0].mxu0
      %v600 = vadd.f32 %v275, %v599
      %v601 = vpop.f32.mrb[0].mxu0
      %602 = vdwg.mxu0
      %vm603 = vcmp.gt.f32.partialorder %v477, 0.0
      %vm604 = vcmp.gt.f32.partialorder %v480, 0.0
      %vm605 = vcmp.gt.f32.partialorder %v485, 0.0
      %vm606 = vcmp.gt.f32.partialorder %v488, 0.0
      %vm607 = vcmp.gt.f32.partialorder %v493, 0.0
      %vm608 = vcmp.gt.f32.partialorder %v496, 0.0
      %vm609 = vcmp.gt.f32.partialorder %v501, 0.0
      %vm610 = vcmp.gt.f32.partialorder %v504, 0.0
      %vm611 = vcmp.gt.f32.partialorder %v509, 0.0
      %vm612 = vcmp.gt.f32.partialorder %v512, 0.0
      %vm613 = vcmp.gt.f32.partialorder %v517, 0.0
      %vm614 = vcmp.gt.f32.partialorder %v520, 0.0
      %vm615 = vcmp.gt.f32.partialorder %v525, 0.0
      %vm616 = vcmp.gt.f32.partialorder %v528, 0.0
      %vm617 = vcmp.gt.f32.partialorder %v533, 0.0
      %vm618 = vcmp.gt.f32.partialorder %v536, 0.0
      %vm619 = vcmp.gt.f32.partialorder %v541, 0.0
      %vm620 = vcmp.gt.f32.partialorder %v544, 0.0
      %vm621 = vcmp.gt.f32.partialorder %v549, 0.0
      %vm622 = vcmp.gt.f32.partialorder %v552, 0.0
      %vm623 = vcmp.gt.f32.partialorder %v557, 0.0
      %vm624 = vcmp.gt.f32.partialorder %v560, 0.0
      %vm625 = vcmp.gt.f32.partialorder %v565, 0.0
      %vm626 = vcmp.gt.f32.partialorder %v568, 0.0
      %vm627 = vcmp.gt.f32.partialorder %v573, 0.0
      %vm628 = vcmp.gt.f32.partialorder %v576, 0.0
      %vm629 = vcmp.gt.f32.partialorder %v581, 0.0
      %vm630 = vcmp.gt.f32.partialorder %v584, 0.0
      %vm631 = vcmp.gt.f32.partialorder %v589, 0.0
      %vm632 = vcmp.gt.f32.partialorder %v592, 0.0
      %vm633 = vcmp.gt.f32.partialorder %v597, 0.0
      %vm634 = vcmp.gt.f32.partialorder %v600, 0.0
      %v635 = vmul.f32 %v477, 0.2
      %v636 = vmul.f32 %v480, 0.2
      %v637 = vmul.f32 %v485, 0.2
      %v638 = vmul.f32 %v488, 0.2
      %v639 = vmul.f32 %v493, 0.2
      %v640 = vmul.f32 %v496, 0.2
      %v641 = vmul.f32 %v501, 0.2
      %v642 = vmul.f32 %v504, 0.2
      %v643 = vmul.f32 %v509, 0.2
      %v644 = vmul.f32 %v512, 0.2
      %v645 = vmul.f32 %v517, 0.2
      %v646 = vmul.f32 %v520, 0.2
      %v647 = vmul.f32 %v525, 0.2
      %v648 = vmul.f32 %v528, 0.2
      %v649 = vmul.f32 %v533, 0.2
      %v650 = vmul.f32 %v536, 0.2
      %v651 = vmul.f32 %v541, 0.2
      %v652 = vmul.f32 %v544, 0.2
      %v653 = vmul.f32 %v549, 0.2
      %v654 = vmul.f32 %v552, 0.2
      %v655 = vmul.f32 %v557, 0.2
      %v656 = vmul.f32 %v560, 0.2
      %v657 = vmul.f32 %v565, 0.2
      %v658 = vmul.f32 %v568, 0.2
      %v659 = vmul.f32 %v573, 0.2
      %v660 = vmul.f32 %v576, 0.2
      %v661 = vmul.f32 %v581, 0.2
      %v662 = vmul.f32 %v584, 0.2
      %v663 = vmul.f32 %v589, 0.2
      %v664 = vmul.f32 %v592, 0.2
      %v665 = vmul.f32 %v597, 0.2
      %v666 = vmul.f32 %v600, 0.2
      %v667 = vsel %vm603, %v477, %v635
      %v668 = vsel %vm604, %v480, %v636
      %v669 = vsel %vm605, %v485, %v637
      %v670 = vsel %vm606, %v488, %v638
      %v671 = vsel %vm607, %v493, %v639
      %v672 = vsel %vm608, %v496, %v640
      %v673 = vsel %vm609, %v501, %v641
      %v674 = vsel %vm610, %v504, %v642
      %v675 = vsel %vm611, %v509, %v643
      %v676 = vsel %vm612, %v512, %v644
      %v677 = vsel %vm613, %v517, %v645
      %v678 = vsel %vm614, %v520, %v646
      %v679 = vsel %vm615, %v525, %v647
      %v680 = vsel %vm616, %v528, %v648
      %v681 = vsel %vm617, %v533, %v649
      %v682 = vsel %vm618, %v536, %v650
      %v683 = vsel %vm619, %v541, %v651
      %v684 = vsel %vm620, %v544, %v652
      %v685 = vsel %vm621, %v549, %v653
      %v686 = vsel %vm622, %v552, %v654
      %v687 = vsel %vm623, %v557, %v655
      %v688 = vsel %vm624, %v560, %v656
      %v689 = vsel %vm625, %v565, %v657
      %v690 = vsel %vm626, %v568, %v658
      %v691 = vsel %vm627, %v573, %v659
      %v692 = vsel %vm628, %v576, %v660
      %v693 = vsel %vm629, %v581, %v661
      %v694 = vsel %vm630, %v584, %v662
      %v695 = vsel %vm631, %v589, %v663
      %v696 = vsel %vm632, %v592, %v664
      %v697 = vsel %vm633, %v597, %v665
      %v698 = vsel %vm634, %v600, %v666
      %v699 = vpack.c.bf16 %v668, %v667
      %v700 = vpack.c.bf16 %v670, %v669
      %v701 = vpack.c.bf16 %v672, %v671
      %v702 = vpack.c.bf16 %v674, %v673
      %v703 = vpack.c.bf16 %v676, %v675
      %v704 = vpack.c.bf16 %v678, %v677
      %v705 = vpack.c.bf16 %v680, %v679
      %v706 = vpack.c.bf16 %v682, %v681
      %v707 = vpack.c.bf16 %v684, %v683
      %v708 = vpack.c.bf16 %v686, %v685
      %v709 = vpack.c.bf16 %v688, %v687
      %v710 = vpack.c.bf16 %v690, %v689
      %v711 = vpack.c.bf16 %v692, %v691
      %v712 = vpack.c.bf16 %v694, %v693
      %v713 = vpack.c.bf16 %v696, %v695
      %v714 = vpack.c.bf16 %v698, %v697
      %v731 = vunpack.c.l.b16 %v699
      %v732 = vunpack.c.h.b16 %v699
      %v733 = vunpack.c.l.b16 %v700
      %v734 = vunpack.c.h.b16 %v700
      %v735 = vunpack.c.l.b16 %v701
      %v736 = vunpack.c.h.b16 %v701
      %v737 = vunpack.c.l.b16 %v702
      %v738 = vunpack.c.h.b16 %v702
      %v739 = vunpack.c.l.b16 %v703
      %v740 = vunpack.c.h.b16 %v703
      %v741 = vunpack.c.l.b16 %v704
      %v742 = vunpack.c.h.b16 %v704
      %v743 = vunpack.c.l.b16 %v705
      %v744 = vunpack.c.h.b16 %v705
      %v745 = vunpack.c.l.b16 %v706
      %v746 = vunpack.c.h.b16 %v706
      %v747 = vunpack.c.l.b16 %v707
      %v748 = vunpack.c.h.b16 %v707
      %v749 = vunpack.c.l.b16 %v708
      %v750 = vunpack.c.h.b16 %v708
      %v751 = vunpack.c.l.b16 %v709
      %v752 = vunpack.c.h.b16 %v709
      %v753 = vunpack.c.l.b16 %v710
      %v754 = vunpack.c.h.b16 %v710
      %v755 = vunpack.c.l.b16 %v711
      %v756 = vunpack.c.h.b16 %v711
      %v757 = vunpack.c.l.b16 %v712
      %v758 = vunpack.c.h.b16 %v712
      %v759 = vunpack.c.l.b16 %v713
      %v760 = vunpack.c.h.b16 %v713
      %v761 = vunpack.c.l.b16 %v714
      %v762 = vunpack.c.h.b16 %v714
      %v763 = vpack.c.b16 %v731, %v731
      %v764 = vpack.c.b16 %v732, %v732
      %v765 = vpack.c.b16 %v733, %v733
      %v766 = vpack.c.b16 %v734, %v734
      %v767 = vpack.c.b16 %v735, %v735
      %v768 = vpack.c.b16 %v736, %v736
      %v769 = vpack.c.b16 %v737, %v737
      %v770 = vpack.c.b16 %v738, %v738
      %v771 = vpack.c.b16 %v739, %v739
      %v772 = vpack.c.b16 %v740, %v740
      %v773 = vpack.c.b16 %v741, %v741
      %v774 = vpack.c.b16 %v742, %v742
      %v775 = vpack.c.b16 %v743, %v743
      %v776 = vpack.c.b16 %v744, %v744
      %v777 = vpack.c.b16 %v745, %v745
      %v778 = vpack.c.b16 %v746, %v746
      %v779 = vpack.c.b16 %v747, %v747
      %v780 = vpack.c.b16 %v748, %v748
      %v781 = vpack.c.b16 %v749, %v749
      %v782 = vpack.c.b16 %v750, %v750
      %v783 = vpack.c.b16 %v751, %v751
      %v784 = vpack.c.b16 %v752, %v752
      %v785 = vpack.c.b16 %v753, %v753
      %v786 = vpack.c.b16 %v754, %v754
      %v787 = vpack.c.b16 %v755, %v755
      %v788 = vpack.c.b16 %v756, %v756
      %v789 = vpack.c.b16 %v757, %v757
      %v790 = vpack.c.b16 %v758, %v758
      %v791 = vpack.c.b16 %v759, %v759
      %v792 = vpack.c.b16 %v760, %v760
      %v793 = vpack.c.b16 %v761, %v761
      %v794 = vpack.c.b16 %v762, %v762
      %827 = vst [vmem:[%s223] sm:$0xf] %v763
      %828 = vst [vmem:[%s223 + $0x4] sm:$0xf] %v764
      %829 = vst [vmem:[%s223 + $0x8] sm:$0xf] %v765
      %830 = vst [vmem:[%s223 + $0xc] sm:$0xf] %v766
      %831 = vst [vmem:[%s223 + $0x10] sm:$0xf] %v767
      %832 = vst [vmem:[%s223 + $0x14] sm:$0xf] %v768
      %833 = vst [vmem:[%s223 + $0x18] sm:$0xf] %v769
      %834 = vst [vmem:[%s223 + $0x1c] sm:$0xf] %v770
      %835 = vst [vmem:[%s223 + $0x20] sm:$0xf] %v771
      %836 = vst [vmem:[%s223 + $0x24] sm:$0xf] %v772
      %837 = vst [vmem:[%s223 + $0x28] sm:$0xf] %v773
      %838 = vst [vmem:[%s223 + $0x2c] sm:$0xf] %v774
      %839 = vst [vmem:[%s223 + $0x30] sm:$0xf] %v775
      %840 = vst [vmem:[%s223 + $0x34] sm:$0xf] %v776
      %841 = vst [vmem:[%s223 + $0x38] sm:$0xf] %v777
      %842 = vst [vmem:[%s223 + $0x3c] sm:$0xf] %v778
      %843 = vst [vmem:[%s223 + $0x40] sm:$0xf] %v779
      %844 = vst [vmem:[%s223 + $0x44] sm:$0xf] %v780
      %845 = vst [vmem:[%s223 + $0x48] sm:$0xf] %v781
      %846 = vst [vmem:[%s223 + $0x4c] sm:$0xf] %v782
      %847 = vst [vmem:[%s223 + $0x50] sm:$0xf] %v783
      %848 = vst [vmem:[%s223 + $0x54] sm:$0xf] %v784
      %849 = vst [vmem:[%s223 + $0x58] sm:$0xf] %v785
      %850 = vst [vmem:[%s223 + $0x5c] sm:$0xf] %v786
      %851 = vst [vmem:[%s223 + $0x60] sm:$0xf] %v787
      %852 = vst [vmem:[%s223 + $0x64] sm:$0xf] %v788
      %853 = vst [vmem:[%s223 + $0x68] sm:$0xf] %v789
      %854 = vst [vmem:[%s223 + $0x6c] sm:$0xf] %v790
      %855 = vst [vmem:[%s223 + $0x70] sm:$0xf] %v791
      %856 = vst [vmem:[%s223 + $0x74] sm:$0xf] %v792
      %857 = vst [vmem:[%s223 + $0x78] sm:$0xf] %v793
      %858 = vst [vmem:[%s223 + $0x7c] sm:$0xf] %v794
      %s859 = smul.u32 32, %s18
      %p860 = scmp.lt.s32.totalorder %s859, 255
      %s861 = scalar_select %p860, %s859, 255
      %p862 = scmp.lt.s32.totalorder %s19, 0
      %s863 = scalar_select %p862, %s19, 0
      %s864 = sadd.s32 %s863, %s861
      %s865 = smul.addr %s864, 4
      %s866 = scalar_lea.vmem %s3, %s865
      // Predicated region
      $region33: #{unet_forward.12} parent=31 // pred_check
        %p867 = pneg %p124
      $region34: #{unet_forward.12} parent=31 // pred_check_branch
        %869 = sbr.rel (%p867) target = $region36
      $region35: #{unet_forward.12} parent=31 // pred_region
        %s870 = smul.u32 32, %s18
      $region36: #{unet_forward.12} parent=31 // pred_fallthru
        _
    $region32: #{unet_forward.12} parent=5 // pred_fallthru
      _
    %p871 = scmp.le.s32.totalorder 2, %s9
    // Predicated region
    $region37: #{unet_forward.12} parent=5 // pred_check
      %p872 = pneg %p871
    $region38: #{unet_forward.12} parent=5 // pred_check_branch
      %874 = sbr.rel (%p872) target = $region40
    $region39: #{unet_forward.12} parent=5 // pred_region
      %s875 = ssub.s32 %s9, 2
      // Predicated region
      $region41: #{unet_forward.12} parent=39 // pred_check
        %p876 = pneg %p130
      $region42: #{unet_forward.12} parent=39 // pred_check_branch
        %878 = sbr.rel (%p876) target = $region44
      $region43: #{unet_forward.12} parent=39 // pred_region
        %s879 = smul.u32 32, %s20
        %p880 = scmp.lt.s32.totalorder %s879, 255
        %s881 = scalar_select %p880, %s879, 255
        %p882 = scmp.lt.s32.totalorder %s21, 0
        %s883 = scalar_select %p882, %s21, 0
        %s884 = sadd.s32 %s883, %s881
        %s885 = smul.addr %s884, 4
        %s886 = scalar_lea.vmem %s3, %s885
      $region44: #{unet_forward.12} parent=39 // pred_fallthru
        _
    $region40: #{unet_forward.12} parent=5 // pred_fallthru
      _
  $region6: #{unet_forward.12} parent=0 // loop_footer
    %s13 = sadd.s32 1, %s9
  $region7: #{unet_forward.12} parent=0 // loop_footer_branch
    %8 = sbr.rel target = $region3
  $region8: #{unet_forward.12} parent=0 // loop_exit
    _

// kernel: unet_forward.13
$region0: #{unet_forward.13}
  #allocation0 [shape = 'u32[]', space=smem, size = 0x4, offset = 0x4, fixed_abs, tag = 'smem constant byte address 0x4 - core index']
  #allocation1 [shape = 'u32[144,128]{1,0:T(1,128)}', space=vmem, size = 0x12000, scoped, tag = 'internal scratch']
  %s0 = inlined_call_operand.vmem [shape: bf16[512,128], index: 0, kind: input, shape index: {}]
  %s1 = inlined_call_operand.vmem [shape: bf16[128,128], index: 1, kind: input, shape index: {}]
  %s2 = inlined_call_operand.vmem [shape: f32[1,128], index: 2, kind: input, shape index: {}]
  %s3 = inlined_call_operand.vmem [shape: bf16[512,128], index: 3, kind: output, shape index: {}]
  %s4 = sld [smem:[#allocation0]]
  $region45: #{unet_forward.13} parent=0
    _
  %s6 = ssub.s32 1, %s4
  %s7 = scalar_select 0, %s6, %s4
  loop: start=0, step=1, limit=4
  $region2: #{unet_forward.13} parent=0 // loop_pre_header
    _
  $region3: #{unet_forward.13} parent=0 // loop_header
    %s9 = sphi 0, %s13
    %p10 = scmp.ge.s32.totalorder %s9, 4
    %s16 = sphi 0, %s28
    %s17 = sphi 0, %s24
    %s18 = sphi 0, %s16
    %s19 = sphi 0, %s17
    %s20 = sphi 0, %s18
    %s21 = sphi 0, %s19
    %s31 = sphi 0, %s33
    %s34 = sphi 0, %s31
    %s35 = sphi 0, %s34
    %s51 = sphi 0, %s35
    %s57 = sphi 0, %s59
    %s60 = sphi 0, %s57
    %s61 = sphi 0, %s60
    %s77 = sphi 0, %s61
    %s83 = sphi 0, %s85
    %s86 = sphi 0, %s83
    %s87 = sphi 0, %s86
    %s103 = sphi 0, %s87
    %s111 = sphi 0, %s113
    %s114 = sphi 0, %s111
    %s115 = sphi 0, %s114
    %s131 = sphi 0, %s115
  $region4: #{unet_forward.13} parent=0 // loop_header_branch
    %12 = sbr.rel (%p10) target = $region8
  $region5: #{unet_forward.13} parent=0 // loop_body
    %s14 = ssub.s32 %s9, 1
    %s15 = ssub.s32 %s9, 2
    %s22 = sadd.s32 1, %s17
    %p23 = scmp.ge.s32.totalorder %s22, 1
    %s24 = scalar_select %p23, 0, %s22
    %s25 = sadd.s32 1, %s16
    %s26 = scalar_select %p23, %s25, %s16
    %p27 = scmp.ge.s32.totalorder %s26, 2
    %s28 = scalar_select %p27, 0, %s26
    %s29 = ssub.s32 %s16, %s28
    %p30 = scmp.eq.s32.totalorder %s29, 0
    %s32 = sadd.s32 %s31, 1
    %s33 = scalar_select %p30, %s31, %s32
    %p36 = pneg %p30
    %p37 = scmp.eq.s32.totalorder %s9, 1
    %p38 = por %p36, %p37
    %p39 = scmp.ne.s32.totalorder %s31, %s34
    %p40 = scmp.eq.s32.totalorder %s9, 0
    %p41 = por %p39, %p40
    %p42 = scmp.ne.s32.totalorder %s31, %s34
    %p43 = scmp.eq.s32.totalorder %s14, 1
    %p44 = por %p42, %p43
    %p45 = scmp.ne.s32.totalorder %s34, %s35
    %p46 = scmp.eq.s32.totalorder %s14, 0
    %p47 = por %p45, %p46
    %p48 = scmp.ne.s32.totalorder %s34, %s35
    %p49 = scmp.eq.s32.totalorder %s15, 1
    %p50 = por %p48, %p49
    %p52 = scmp.ne.s32.totalorder %s35, %s51
    %p53 = scmp.eq.s32.totalorder %s15, 0
    %p54 = por %p52, %p53
    %s55 = ssub.s32 %s17, %s24
    %p56 = scmp.eq.s32.totalorder %s55, 0
    %s58 = sadd.s32 %s57, 1
    %s59 = scalar_select %p56, %s57, %s58
    %p62 = pneg %p56
    %p63 = scmp.eq.s32.totalorder %s9, 1
    %p64 = por %p62, %p63
    %p65 = scmp.ne.s32.totalorder %s57, %s60
    %p66 = scmp.eq.s32.totalorder %s9, 0
    %p67 = por %p65, %p66
    %p68 = scmp.ne.s32.totalorder %s57, %s60
    %p69 = scmp.eq.s32.totalorder %s14, 1
    %p70 = por %p68, %p69
    %p71 = scmp.ne.s32.totalorder %s60, %s61
    %p72 = scmp.eq.s32.totalorder %s14, 0
    %p73 = por %p71, %p72
    %p74 = scmp.ne.s32.totalorder %s60, %s61
    %p75 = scmp.eq.s32.totalorder %s15, 1
    %p76 = por %p74, %p75
    %p78 = scmp.ne.s32.totalorder %s61, %s77
    %p79 = scmp.eq.s32.totalorder %s15, 0
    %p80 = por %p78, %p79
    %s81 = ssub.s32 %s17, %s24
    %p82 = scmp.eq.s32.totalorder %s81, 0
    %s84 = sadd.s32 %s83, 1
    %s85 = scalar_select %p82, %s83, %s84
    %p88 = pneg %p82
    %p89 = scmp.eq.s32.totalorder %s9, 1
    %p90 = por %p88, %p89
    %p91 = scmp.ne.s32.totalorder %s83, %s86
    %p92 = scmp.eq.s32.totalorder %s9, 0
    %p93 = por %p91, %p92
    %p94 = scmp.ne.s32.totalorder %s83, %s86
    %p95 = scmp.eq.s32.totalorder %s14, 1
    %p96 = por %p94, %p95
    %p97 = scmp.ne.s32.totalorder %s86, %s87
    %p98 = scmp.eq.s32.totalorder %s14, 0
    %p99 = por %p97, %p98
    %p100 = scmp.ne.s32.totalorder %s86, %s87
    %p101 = scmp.eq.s32.totalorder %s15, 1
    %p102 = por %p100, %p101
    %p104 = scmp.ne.s32.totalorder %s87, %s103
    %p105 = scmp.eq.s32.totalorder %s15, 0
    %p106 = por %p104, %p105
    %s107 = ssub.s32 %s16, %s28
    %s108 = ssub.s32 %s17, %s24
    %s109 = sor.u32 %s107, %s108
    %p110 = scmp.eq.s32.totalorder %s109, 0
    %s112 = sadd.s32 %s111, 1
    %s113 = scalar_select %p110, %s111, %s112
    %p116 = pneg %p110
    %p117 = scmp.eq.s32.totalorder %s9, 1
    %p118 = por %p116, %p117
    %p119 = scmp.ne.s32.totalorder %s111, %s114
    %p120 = scmp.eq.s32.totalorder %s9, 0
    %p121 = por %p119, %p120
    %p122 = scmp.ne.s32.totalorder %s111, %s114
    %p123 = scmp.eq.s32.totalorder %s14, 1
    %p124 = por %p122, %p123
    %p125 = scmp.ne.s32.totalorder %s114, %s115
    %p126 = scmp.eq.s32.totalorder %s14, 0
    %p127 = por %p125, %p126
    %p128 = scmp.ne.s32.totalorder %s114, %s115
    %p129 = scmp.eq.s32.totalorder %s15, 1
    %p130 = por %p128, %p129
    %p132 = scmp.ne.s32.totalorder %s115, %s131
    %p133 = scmp.eq.s32.totalorder %s15, 0
    %p134 = por %p132, %p133
    %p135 = scmp.le.s32.totalorder 1, %s9
    %p136 = scmp.lt.s32.totalorder %s9, 3
    %p137 = pnand %p135, %p136
    %p138 = pneg %p137
    // Predicated region
    $region9: #{unet_forward.13} parent=5 // pred_check
      _
    $region10: #{unet_forward.13} parent=5 // pred_check_branch
      %140 = sbr.rel (%p137) target = $region12
    $region11: #{unet_forward.13} parent=5 // pred_region
      %s141 = ssub.s32 %s9, 1
      // Predicated region
      $region13: #{unet_forward.13} parent=11 // pred_check
        %p142 = pneg %p73
      $region14: #{unet_forward.13} parent=11 // pred_check_branch
        %144 = sbr.rel (%p142) target = $region16
      $region15: #{unet_forward.13} parent=11 // pred_region
        %p145 = scmp.lt.s32.totalorder %s19, 0
        %s146 = scalar_select %p145, %s19, 0
        %s147 = smul.addr %s146, 4
        %s148 = scalar_lea.vmem %s1, %s147
      $region16: #{unet_forward.13} parent=11 // pred_fallthru
        _
      // Predicated region
      $region17: #{unet_forward.13} parent=11 // pred_check
        %p149 = pneg %p99
      $region18: #{unet_forward.13} parent=11 // pred_check_branch
        %151 = sbr.rel (%p149) target = $region20
      $region19: #{unet_forward.13} parent=11 // pred_region
        %p152 = scmp.lt.s32.totalorder %s19, 0
        %s153 = scalar_select %p152, %s19, 0
        %s154 = scalar_lea.vmem %s2, %s153
      $region20: #{unet_forward.13} parent=11 // pred_fallthru
        _
    $region12: #{unet_forward.13} parent=5 // pred_fallthru
      _
    %p155 = scmp.lt.s32.totalorder %s9, 2
    // Predicated region
    $region21: #{unet_forward.13} parent=5 // pred_check
      %p156 = pneg %p155
    $region22: #{unet_forward.13} parent=5 // pred_check_branch
      %158 = sbr.rel (%p156) target = $region24
    $region23: #{unet_forward.13} parent=5 // pred_region
      // Predicated region
      $region25: #{unet_forward.13} parent=23 // pred_check
        %p159 = pneg %p41
      $region26: #{unet_forward.13} parent=23 // pred_check_branch
        %161 = sbr.rel (%p159) target = $region28
      $region27: #{unet_forward.13} parent=23 // pred_region
        %s162 = smul.u32 32, %s16
        %p163 = scmp.lt.s32.totalorder %s162, 63
        %s164 = scalar_select %p163, %s162, 63
        %s165 = smul.addr %s164, 4
        %s166 = scalar_lea.vmem %s0, %s165
        %s167 = smul.u32 32, %s16
      $region28: #{unet_forward.13} parent=23 // pred_fallthru
        _
    $region24: #{unet_forward.13} parent=5 // pred_fallthru
      _
    %p168 = scmp.le.s32.totalorder 1, %s9
    %p169 = scmp.lt.s32.totalorder %s9, 3
    %p170 = pnand %p168, %p169
    %p171 = pneg %p170
    // Predicated region
    $region29: #{unet_forward.13} parent=5 // pred_check
      _
    $region30: #{unet_forward.13} parent=5 // pred_check_branch
      %173 = sbr.rel (%p170) target = $region32
    $region31: #{unet_forward.13} parent=5 // pred_region
      %s174 = ssub.s32 %s9, 1
      %s175 = smul.u32 32, %s18
      %p176 = scmp.lt.s32.totalorder %s175, 63
      %s177 = scalar_select %p176, %s175, 63
      %s178 = smul.addr %s177, 4
      %s179 = scalar_lea.vmem %s0, %s178
      %p180 = pneg %p47
      %p181 = pneg %p44
      %p182 = scmp.lt.s32.totalorder %s19, 0
      %s183 = scalar_select %p182, %s19, 0
      %s184 = smul.addr %s183, 4
      %s185 = scalar_lea.vmem %s1, %s184
      %p186 = pneg %p73
      %p187 = pneg %p70
      %p188 = scmp.lt.s32.totalorder %s19, 0
      %s189 = scalar_select %p188, %s19, 0
      %s190 = scalar_lea.vmem %s2, %s189
      %p191 = pneg %p99
      %p192 = pneg %p96
      %p193 = pneg %p127
      %p194 = pneg %p124
      %s195 = smul.u32 32, %s18
      %p196 = scmp.lt.s32.totalorder %s195, 63
      %s197 = scalar_select %p196, %s195, 63
      %p198 = scmp.lt.s32.totalorder %s19, 0
      %s199 = scalar_select %p198, %s19, 0
      %s200 = sadd.s32 %s199, %s197
      %s201 = smul.addr %s200, 4
      %s202 = scalar_lea.vmem %s3, %s201
      %s203 = smul.u32 32, %s18
      %p204 = scmp.lt.s32.totalorder %s203, 63
      %s205 = scalar_select %p204, %s203, 63
      %s206 = smul.addr %s205, 4
      %s207 = scalar_lea.vmem %s0, %s206
      %s208 = smul.u32 32, %s18
      %p209 = scmp.lt.s32.totalorder %s19, 0
      %s210 = scalar_select %p209, %s19, 0
      %s211 = smul.addr %s210, 4
      %s212 = scalar_lea.vmem %s1, %s211
      %p213 = scmp.lt.s32.totalorder %s19, 0
      %s214 = scalar_select %p213, %s19, 0
      %s215 = scalar_lea.vmem %s2, %s214
      %s216 = smul.u32 32, %s18
      %p217 = scmp.lt.s32.totalorder %s216, 63
      %s218 = scalar_select %p217, %s216, 63
      %p219 = scmp.lt.s32.totalorder %s19, 0
      %s220 = scalar_select %p219, %s19, 0
      %s221 = sadd.s32 %s220, %s218
      %s222 = smul.addr %s221, 4
      %s223 = scalar_lea.vmem %s3, %s222
      %s224 = smul.u32 32, %s18
      %v226 = vld [vmem:[%s207] sm:$0xf]
      %v227 = vld [vmem:[%s207 + $0x4] sm:$0xf]
      %v228 = vld [vmem:[%s207 + $0x8] sm:$0xf]
      %v229 = vld [vmem:[%s207 + $0xc] sm:$0xf]
      %v230 = vld [vmem:[%s207 + $0x10] sm:$0xf]
      %v231 = vld [vmem:[%s207 + $0x14] sm:$0xf]
      %v232 = vld [vmem:[%s207 + $0x18] sm:$0xf]
      %v233 = vld [vmem:[%s207 + $0x1c] sm:$0xf]
      %v234 = vld [vmem:[%s207 + $0x20] sm:$0xf]
      %v235 = vld [vmem:[%s207 + $0x24] sm:$0xf]
      %v236 = vld [vmem:[%s207 + $0x28] sm:$0xf]
      %v237 = vld [vmem:[%s207 + $0x2c] sm:$0xf]
      %v238 = vld [vmem:[%s207 + $0x30] sm:$0xf]
      %v239 = vld [vmem:[%s207 + $0x34] sm:$0xf]
      %v240 = vld [vmem:[%s207 + $0x38] sm:$0xf]
      %v241 = vld [vmem:[%s207 + $0x3c] sm:$0xf]
      %v242 = vld [vmem:[%s207 + $0x40] sm:$0xf]
      %v243 = vld [vmem:[%s207 + $0x44] sm:$0xf]
      %v244 = vld [vmem:[%s207 + $0x48] sm:$0xf]
      %v245 = vld [vmem:[%s207 + $0x4c] sm:$0xf]
      %v246 = vld [vmem:[%s207 + $0x50] sm:$0xf]
      %v247 = vld [vmem:[%s207 + $0x54] sm:$0xf]
      %v248 = vld [vmem:[%s207 + $0x58] sm:$0xf]
      %v249 = vld [vmem:[%s207 + $0x5c] sm:$0xf]
      %v250 = vld [vmem:[%s207 + $0x60] sm:$0xf]
      %v251 = vld [vmem:[%s207 + $0x64] sm:$0xf]
      %v252 = vld [vmem:[%s207 + $0x68] sm:$0xf]
      %v253 = vld [vmem:[%s207 + $0x6c] sm:$0xf]
      %v254 = vld [vmem:[%s207 + $0x70] sm:$0xf]
      %v255 = vld [vmem:[%s207 + $0x74] sm:$0xf]
      %v256 = vld [vmem:[%s207 + $0x78] sm:$0xf]
      %v257 = vld [vmem:[%s207 + $0x7c] sm:$0xf]
      %v258 = vld [vmem:[%s212] sm:$0xf]
      %v259 = vld [vmem:[%s212 + $0x4] sm:$0xf]
      %v260 = vld [vmem:[%s212 + $0x8] sm:$0xf]
      %v261 = vld [vmem:[%s212 + $0xc] sm:$0xf]
      %v262 = vld [vmem:[%s212 + $0x10] sm:$0xf]
      %v263 = vld [vmem:[%s212 + $0x14] sm:$0xf]
      %v264 = vld [vmem:[%s212 + $0x18] sm:$0xf]
      %v265 = vld [vmem:[%s212 + $0x1c] sm:$0xf]
      %v266 = vld [vmem:[%s212 + $0x20] sm:$0xf]
      %v267 = vld [vmem:[%s212 + $0x24] sm:$0xf]
      %v268 = vld [vmem:[%s212 + $0x28] sm:$0xf]
      %v269 = vld [vmem:[%s212 + $0x2c] sm:$0xf]
      %v270 = vld [vmem:[%s212 + $0x30] sm:$0xf]
      %v271 = vld [vmem:[%s212 + $0x34] sm:$0xf]
      %v272 = vld [vmem:[%s212 + $0x38] sm:$0xf]
      %v273 = vld [vmem:[%s212 + $0x3c] sm:$0xf]
      %v274 = vld [vmem:[%s215] sm:$0x1]
      %v276 = vlaneseq
      %v277 = vshrl.u32 %v276, 7
      %v278 = vsub.s32 0, %v277
      %v279 = vrot.slane %v274, %v278
      %v313 = vunpack.c.l.b16 %v226
      %v314 = vunpack.c.l.b16 %v227
      %v315 = vunpack.c.l.b16 %v228
      %v316 = vunpack.c.l.b16 %v229
      %v317 = vunpack.c.l.b16 %v230
      %v318 = vunpack.c.l.b16 %v231
      %v319 = vunpack.c.l.b16 %v232
      %v320 = vunpack.c.l.b16 %v233
      %v321 = vunpack.c.l.b16 %v234
      %v322 = vunpack.c.l.b16 %v235
      %v323 = vunpack.c.l.b16 %v236
      %v324 = vunpack.c.l.b16 %v237
      %v325 = vunpack.c.l.b16 %v238
      %v326 = vunpack.c.l.b16 %v239
      %v327 = vunpack.c.l.b16 %v240
      %v328 = vunpack.c.l.b16 %v241
      %v329 = vunpack.c.l.b16 %v242
      %v330 = vunpack.c.l.b16 %v243
      %v331 = vunpack.c.l.b16 %v244
      %v332 = vunpack.c.l.b16 %v245
      %v333 = vunpack.c.l.b16 %v246
      %v334 = vunpack.c.l.b16 %v247
      %v335 = vunpack.c.l.b16 %v248
      %v336 = vunpack.c.l.b16 %v249
      %v337 = vunpack.c.l.b16 %v250
      %v338 = vunpack.c.l.b16 %v251
      %v339 = vunpack.c.l.b16 %v252
      %v340 = vunpack.c.l.b16 %v253
      %v341 = vunpack.c.l.b16 %v254
      %v342 = vunpack.c.l.b16 %v255
      %v343 = vunpack.c.l.b16 %v256
      %v344 = vunpack.c.l.b16 %v257
      %v345 = vpack.c.b16 %v314, %v313
      %v346 = vpack.c.b16 %v316, %v315
      %v347 = vpack.c.b16 %v318, %v317
      %v348 = vpack.c.b16 %v320, %v319
      %v349 = vpack.c.b16 %v322, %v321
      %v350 = vpack.c.b16 %v324, %v323
      %v351 = vpack.c.b16 %v326, %v325
      %v352 = vpack.c.b16 %v328, %v327
      %v353 = vpack.c.b16 %v330, %v329
      %v354 = vpack.c.b16 %v332, %v331
      %v355 = vpack.c.b16 %v334, %v333
      %v356 = vpack.c.b16 %v336, %v335
      %v357 = vpack.c.b16 %v338, %v337
      %v358 = vpack.c.b16 %v340, %v339
      %v359 = vpack.c.b16 %v342, %v341
      %v360 = vpack.c.b16 %v344, %v343
      %v393 = vunpack.c.l.b16 %v258
      %v394 = vunpack.c.l.b16 %v259
      %v395 = vunpack.c.l.b16 %v260
      %v396 = vunpack.c.l.b16 %v261
      %v397 = vunpack.c.l.b16 %v262
      %v398 = vunpack.c.l.b16 %v263
      %v399 = vunpack.c.l.b16 %v264
      %v400 = vunpack.c.l.b16 %v265
      %v401 = vunpack.c.l.b16 %v266
      %v402 = vunpack.c.l.b16 %v267
      %v403 = vunpack.c.l.b16 %v268
      %v404 = vunpack.c.l.b16 %v269
      %v405 = vunpack.c.l.b16 %v270
      %v406 = vunpack.c.l.b16 %v271
      %v407 = vunpack.c.l.b16 %v272
      %v408 = vunpack.c.l.b16 %v273
      %v409 = vpack.c.b16 %v394, %v393
      %v410 = vpack.c.b16 %v396, %v395
      %v411 = vpack.c.b16 %v398, %v397
      %v412 = vpack.c.b16 %v400, %v399
      %v413 = vpack.c.b16 %v402, %v401
      %v414 = vpack.c.b16 %v404, %v403
      %v415 = vpack.c.b16 %v406, %v405
      %v416 = vpack.c.b16 %v408, %v407
      %425 = vmatprep.subr.bf16.mxu0 0
      %426 = vmatpush1.bf16.msra.mxu0 %v409
      %427 = vmatprep.subr.bf16.mxu0 0
      %428 = vmatpush1.bf16.msra.mxu0 %v410
      %429 = vmatprep.subr.bf16.mxu0 0
      %430 = vmatpush1.bf16.msra.mxu0 %v411
      %431 = vmatprep.subr.bf16.mxu0 0
      %432 = vmatpush1.bf16.msra.mxu0 %v412
      %433 = vmatprep.subr.bf16.mxu0 0
      %434 = vmatpush1.bf16.msra.mxu0 %v413
      %435 = vmatprep.subr.bf16.mxu0 0
      %436 = vmatpush1.bf16.msra.mxu0 %v414
      %437 = vmatprep.subr.bf16.mxu0 0
      %438 = vmatpush1.bf16.msra.mxu0 %v415
      %439 = vmatprep.subr.bf16.mxu0 0
      %440 = vmatpush1.bf16.msra.mxu0 %v416
      %441 = vmatprep.subr.bf16.mxu0 0
      %442 = vmatpush1.bf16.msra.mxu0 0
      %443 = vmatprep.subr.bf16.mxu0 0
      %444 = vmatpush1.bf16.msra.mxu0 0
      %445 = vmatprep.subr.bf16.mxu0 0
      %446 = vmatpush1.bf16.msra.mxu0 0
      %447 = vmatprep.subr.bf16.mxu0 0
      %448 = vmatpush1.bf16.msra.mxu0 0
      %449 = vmatprep.subr.bf16.mxu0 0
      %450 = vmatpush1.bf16.msra.mxu0 0
      %451 = vmatprep.subr.bf16.mxu0 0
      %452 = vmatpush1.bf16.msra.mxu0 0
      %453 = vmatprep.subr.bf16.mxu0 0
      %454 = vmatpush1.bf16.msra.mxu0 0
      %455 = vmatprep.subr.bf16.mxu0 0
      %456 = vmatpush1.bf16.msra.mxu0 0
      %457 = vmatprep.mubr.bf16.mxu0 0
      %458 = vmatmul.mubr.bf16.gmra.mrb[0].mxu0 %v345
      %v459 = vpop.f32.mrb[0].mxu0
      %v460 = vadd.f32 %v279, %v459
      %v461 = vpop.f32.mrb[0].mxu0
      %v462 = vpop.f32.mrb[0].mxu0
      %v463 = vadd.f32 %v279, %v462
      %v464 = vpop.f32.mrb[0].mxu0
      %465 = vmatprep.mubr.bf16.mxu0 0
      %466 = vmatmul.mubr.bf16.gmra.mrb[0].mxu0 %v346
      %v467 = vpop.f32.mrb[0].mxu0
      %v468 = vadd.f32 %v279, %v467
      %v469 = vpop.f32.mrb[0].mxu0
      %v470 = vpop.f32.mrb[0].mxu0
      %v471 = vadd.f32 %v279, %v470
      %v472 = vpop.f32.mrb[0].mxu0
      %473 = vmatprep.mubr.bf16.mxu0 0
      %474 = vmatmul.mubr.bf16.gmra.mrb[0].mxu0 %v347
      %v475 = vpop.f32.mrb[0].mxu0
      %v476 = vadd.f32 %v279, %v475
      %v477 = vpop.f32.mrb[0].mxu0
      %v478 = vpop.f32.mrb[0].mxu0
      %v479 = vadd.f32 %v279, %v478
      %v480 = vpop.f32.mrb[0].mxu0
      %481 = vmatprep.mubr.bf16.mxu0 0
      %482 = vmatmul.mubr.bf16.gmra.mrb[0].mxu0 %v348
      %v483 = vpop.f32.mrb[0].mxu0
      %v484 = vadd.f32 %v279, %v483
      %v485 = vpop.f32.mrb[0].mxu0
      %v486 = vpop.f32.mrb[0].mxu0
      %v487 = vadd.f32 %v279, %v486
      %v488 = vpop.f32.mrb[0].mxu0
      %489 = vmatprep.mubr.bf16.mxu0 0
      %490 = vmatmul.mubr.bf16.gmra.mrb[0].mxu0 %v349
      %v491 = vpop.f32.mrb[0].mxu0
      %v492 = vadd.f32 %v279, %v491
      %v493 = vpop.f32.mrb[0].mxu0
      %v494 = vpop.f32.mrb[0].mxu0
      %v495 = vadd.f32 %v279, %v494
      %v496 = vpop.f32.mrb[0].mxu0
      %497 = vmatprep.mubr.bf16.mxu0 0
      %498 = vmatmul.mubr.bf16.gmra.mrb[0].mxu0 %v350
      %v499 = vpop.f32.mrb[0].mxu0
      %v500 = vadd.f32 %v279, %v499
      %v501 = vpop.f32.mrb[0].mxu0
      %v502 = vpop.f32.mrb[0].mxu0
      %v503 = vadd.f32 %v279, %v502
      %v504 = vpop.f32.mrb[0].mxu0
      %505 = vmatprep.mubr.bf16.mxu0 0
      %506 = vmatmul.mubr.bf16.gmra.mrb[0].mxu0 %v351
      %v507 = vpop.f32.mrb[0].mxu0
      %v508 = vadd.f32 %v279, %v507
      %v509 = vpop.f32.mrb[0].mxu0
      %v510 = vpop.f32.mrb[0].mxu0
      %v511 = vadd.f32 %v279, %v510
      %v512 = vpop.f32.mrb[0].mxu0
      %513 = vmatprep.mubr.bf16.mxu0 0
      %514 = vmatmul.mubr.bf16.gmra.mrb[0].mxu0 %v352
      %v515 = vpop.f32.mrb[0].mxu0
      %v516 = vadd.f32 %v279, %v515
      %v517 = vpop.f32.mrb[0].mxu0
      %v518 = vpop.f32.mrb[0].mxu0
      %v519 = vadd.f32 %v279, %v518
      %v520 = vpop.f32.mrb[0].mxu0
      %521 = vmatprep.mubr.bf16.mxu0 0
      %522 = vmatmul.mubr.bf16.gmra.mrb[0].mxu0 %v353
      %v523 = vpop.f32.mrb[0].mxu0
      %v524 = vadd.f32 %v279, %v523
      %v525 = vpop.f32.mrb[0].mxu0
      %v526 = vpop.f32.mrb[0].mxu0
      %v527 = vadd.f32 %v279, %v526
      %v528 = vpop.f32.mrb[0].mxu0
      %529 = vmatprep.mubr.bf16.mxu0 0
      %530 = vmatmul.mubr.bf16.gmra.mrb[0].mxu0 %v354
      %v531 = vpop.f32.mrb[0].mxu0
      %v532 = vadd.f32 %v279, %v531
      %v533 = vpop.f32.mrb[0].mxu0
      %v534 = vpop.f32.mrb[0].mxu0
      %v535 = vadd.f32 %v279, %v534
      %v536 = vpop.f32.mrb[0].mxu0
      %537 = vmatprep.mubr.bf16.mxu0 0
      %538 = vmatmul.mubr.bf16.gmra.mrb[0].mxu0 %v355
      %v539 = vpop.f32.mrb[0].mxu0
      %v540 = vadd.f32 %v279, %v539
      %v541 = vpop.f32.mrb[0].mxu0
      %v542 = vpop.f32.mrb[0].mxu0
      %v543 = vadd.f32 %v279, %v542
      %v544 = vpop.f32.mrb[0].mxu0
      %545 = vmatprep.mubr.bf16.mxu0 0
      %546 = vmatmul.mubr.bf16.gmra.mrb[0].mxu0 %v356
      %v547 = vpop.f32.mrb[0].mxu0
      %v548 = vadd.f32 %v279, %v547
      %v549 = vpop.f32.mrb[0].mxu0
      %v550 = vpop.f32.mrb[0].mxu0
      %v551 = vadd.f32 %v279, %v550
      %v552 = vpop.f32.mrb[0].mxu0
      %553 = vmatprep.mubr.bf16.mxu0 0
      %554 = vmatmul.mubr.bf16.gmra.mrb[0].mxu0 %v357
      %v555 = vpop.f32.mrb[0].mxu0
      %v556 = vadd.f32 %v279, %v555
      %v557 = vpop.f32.mrb[0].mxu0
      %v558 = vpop.f32.mrb[0].mxu0
      %v559 = vadd.f32 %v279, %v558
      %v560 = vpop.f32.mrb[0].mxu0
      %561 = vmatprep.mubr.bf16.mxu0 0
      %562 = vmatmul.mubr.bf16.gmra.mrb[0].mxu0 %v358
      %v563 = vpop.f32.mrb[0].mxu0
      %v564 = vadd.f32 %v279, %v563
      %v565 = vpop.f32.mrb[0].mxu0
      %v566 = vpop.f32.mrb[0].mxu0
      %v567 = vadd.f32 %v279, %v566
      %v568 = vpop.f32.mrb[0].mxu0
      %569 = vmatprep.mubr.bf16.mxu0 0
      %570 = vmatmul.mubr.bf16.gmra.mrb[0].mxu0 %v359
      %v571 = vpop.f32.mrb[0].mxu0
      %v572 = vadd.f32 %v279, %v571
      %v573 = vpop.f32.mrb[0].mxu0
      %v574 = vpop.f32.mrb[0].mxu0
      %v575 = vadd.f32 %v279, %v574
      %v576 = vpop.f32.mrb[0].mxu0
      %577 = vmatprep.mubr.bf16.mxu0 0
      %578 = vmatmul.mubr.bf16.gmra.mrb[0].mxu0 %v360
      %v579 = vpop.f32.mrb[0].mxu0
      %v580 = vadd.f32 %v279, %v579
      %v581 = vpop.f32.mrb[0].mxu0
      %v582 = vpop.f32.mrb[0].mxu0
      %v583 = vadd.f32 %v279, %v582
      %v584 = vpop.f32.mrb[0].mxu0
      %585 = vdwg.mxu0
      %vm586 = vcmp.gt.f32.partialorder %v460, 0.0
      %vm587 = vcmp.gt.f32.partialorder %v463, 0.0
      %vm588 = vcmp.gt.f32.partialorder %v468, 0.0
      %vm589 = vcmp.gt.f32.partialorder %v471, 0.0
      %vm590 = vcmp.gt.f32.partialorder %v476, 0.0
      %vm591 = vcmp.gt.f32.partialorder %v479, 0.0
      %vm592 = vcmp.gt.f32.partialorder %v484, 0.0
      %vm593 = vcmp.gt.f32.partialorder %v487, 0.0
      %vm594 = vcmp.gt.f32.partialorder %v492, 0.0
      %vm595 = vcmp.gt.f32.partialorder %v495, 0.0
      %vm596 = vcmp.gt.f32.partialorder %v500, 0.0
      %vm597 = vcmp.gt.f32.partialorder %v503, 0.0
      %vm598 = vcmp.gt.f32.partialorder %v508, 0.0
      %vm599 = vcmp.gt.f32.partialorder %v511, 0.0
      %vm600 = vcmp.gt.f32.partialorder %v516, 0.0
      %vm601 = vcmp.gt.f32.partialorder %v519, 0.0
      %vm602 = vcmp.gt.f32.partialorder %v524, 0.0
      %vm603 = vcmp.gt.f32.partialorder %v527, 0.0
      %vm604 = vcmp.gt.f32.partialorder %v532, 0.0
      %vm605 = vcmp.gt.f32.partialorder %v535, 0.0
      %vm606 = vcmp.gt.f32.partialorder %v540, 0.0
      %vm607 = vcmp.gt.f32.partialorder %v543, 0.0
      %vm608 = vcmp.gt.f32.partialorder %v548, 0.0
      %vm609 = vcmp.gt.f32.partialorder %v551, 0.0
      %vm610 = vcmp.gt.f32.partialorder %v556, 0.0
      %vm611 = vcmp.gt.f32.partialorder %v559, 0.0
      %vm612 = vcmp.gt.f32.partialorder %v564, 0.0
      %vm613 = vcmp.gt.f32.partialorder %v567, 0.0
      %vm614 = vcmp.gt.f32.partialorder %v572, 0.0
      %vm615 = vcmp.gt.f32.partialorder %v575, 0.0
      %vm616 = vcmp.gt.f32.partialorder %v580, 0.0
      %vm617 = vcmp.gt.f32.partialorder %v583, 0.0
      %v618 = vmul.f32 %v460, 0.2
      %v619 = vmul.f32 %v463, 0.2
      %v620 = vmul.f32 %v468, 0.2
      %v621 = vmul.f32 %v471, 0.2
      %v622 = vmul.f32 %v476, 0.2
      %v623 = vmul.f32 %v479, 0.2
      %v624 = vmul.f32 %v484, 0.2
      %v625 = vmul.f32 %v487, 0.2
      %v626 = vmul.f32 %v492, 0.2
      %v627 = vmul.f32 %v495, 0.2
      %v628 = vmul.f32 %v500, 0.2
      %v629 = vmul.f32 %v503, 0.2
      %v630 = vmul.f32 %v508, 0.2
      %v631 = vmul.f32 %v511, 0.2
      %v632 = vmul.f32 %v516, 0.2
      %v633 = vmul.f32 %v519, 0.2
      %v634 = vmul.f32 %v524, 0.2
      %v635 = vmul.f32 %v527, 0.2
      %v636 = vmul.f32 %v532, 0.2
      %v637 = vmul.f32 %v535, 0.2
      %v638 = vmul.f32 %v540, 0.2
      %v639 = vmul.f32 %v543, 0.2
      %v640 = vmul.f32 %v548, 0.2
      %v641 = vmul.f32 %v551, 0.2
      %v642 = vmul.f32 %v556, 0.2
      %v643 = vmul.f32 %v559, 0.2
      %v644 = vmul.f32 %v564, 0.2
      %v645 = vmul.f32 %v567, 0.2
      %v646 = vmul.f32 %v572, 0.2
      %v647 = vmul.f32 %v575, 0.2
      %v648 = vmul.f32 %v580, 0.2
      %v649 = vmul.f32 %v583, 0.2
      %v650 = vsel %vm586, %v460, %v618
      %v651 = vsel %vm587, %v463, %v619
      %v652 = vsel %vm588, %v468, %v620
      %v653 = vsel %vm589, %v471, %v621
      %v654 = vsel %vm590, %v476, %v622
      %v655 = vsel %vm591, %v479, %v623
      %v656 = vsel %vm592, %v484, %v624
      %v657 = vsel %vm593, %v487, %v625
      %v658 = vsel %vm594, %v492, %v626
      %v659 = vsel %vm595, %v495, %v627
      %v660 = vsel %vm596, %v500, %v628
      %v661 = vsel %vm597, %v503, %v629
      %v662 = vsel %vm598, %v508, %v630
      %v663 = vsel %vm599, %v511, %v631
      %v664 = vsel %vm600, %v516, %v632
      %v665 = vsel %vm601, %v519, %v633
      %v666 = vsel %vm602, %v524, %v634
      %v667 = vsel %vm603, %v527, %v635
      %v668 = vsel %vm604, %v532, %v636
      %v669 = vsel %vm605, %v535, %v637
      %v670 = vsel %vm606, %v540, %v638
      %v671 = vsel %vm607, %v543, %v639
      %v672 = vsel %vm608, %v548, %v640
      %v673 = vsel %vm609, %v551, %v641
      %v674 = vsel %vm610, %v556, %v642
      %v675 = vsel %vm611, %v559, %v643
      %v676 = vsel %vm612, %v564, %v644
      %v677 = vsel %vm613, %v567, %v645
      %v678 = vsel %vm614, %v572, %v646
      %v679 = vsel %vm615, %v575, %v647
      %v680 = vsel %vm616, %v580, %v648
      %v681 = vsel %vm617, %v583, %v649
      %v682 = vpack.c.bf16 %v651, %v650
      %v683 = vpack.c.bf16 %v653, %v652
      %v684 = vpack.c.bf16 %v655, %v654
      %v685 = vpack.c.bf16 %v657, %v656
      %v686 = vpack.c.bf16 %v659, %v658
      %v687 = vpack.c.bf16 %v661, %v660
      %v688 = vpack.c.bf16 %v663, %v662
      %v689 = vpack.c.bf16 %v665, %v664
      %v690 = vpack.c.bf16 %v667, %v666
      %v691 = vpack.c.bf16 %v669, %v668
      %v692 = vpack.c.bf16 %v671, %v670
      %v693 = vpack.c.bf16 %v673, %v672
      %v694 = vpack.c.bf16 %v675, %v674
      %v695 = vpack.c.bf16 %v677, %v676
      %v696 = vpack.c.bf16 %v679, %v678
      %v697 = vpack.c.bf16 %v681, %v680
      %v714 = vunpack.c.l.b16 %v682
      %v715 = vunpack.c.h.b16 %v682
      %v716 = vunpack.c.l.b16 %v683
      %v717 = vunpack.c.h.b16 %v683
      %v718 = vunpack.c.l.b16 %v684
      %v719 = vunpack.c.h.b16 %v684
      %v720 = vunpack.c.l.b16 %v685
      %v721 = vunpack.c.h.b16 %v685
      %v722 = vunpack.c.l.b16 %v686
      %v723 = vunpack.c.h.b16 %v686
      %v724 = vunpack.c.l.b16 %v687
      %v725 = vunpack.c.h.b16 %v687
      %v726 = vunpack.c.l.b16 %v688
      %v727 = vunpack.c.h.b16 %v688
      %v728 = vunpack.c.l.b16 %v689
      %v729 = vunpack.c.h.b16 %v689
      %v730 = vunpack.c.l.b16 %v690
      %v731 = vunpack.c.h.b16 %v690
      %v732 = vunpack.c.l.b16 %v691
      %v733 = vunpack.c.h.b16 %v691
      %v734 = vunpack.c.l.b16 %v692
      %v735 = vunpack.c.h.b16 %v692
      %v736 = vunpack.c.l.b16 %v693
      %v737 = vunpack.c.h.b16 %v693
      %v738 = vunpack.c.l.b16 %v694
      %v739 = vunpack.c.h.b16 %v694
      %v740 = vunpack.c.l.b16 %v695
      %v741 = vunpack.c.h.b16 %v695
      %v742 = vunpack.c.l.b16 %v696
      %v743 = vunpack.c.h.b16 %v696
      %v744 = vunpack.c.l.b16 %v697
      %v745 = vunpack.c.h.b16 %v697
      %v746 = vpack.c.b16 %v714, %v714
      %v747 = vpack.c.b16 %v715, %v715
      %v748 = vpack.c.b16 %v716, %v716
      %v749 = vpack.c.b16 %v717, %v717
      %v750 = vpack.c.b16 %v718, %v718
      %v751 = vpack.c.b16 %v719, %v719
      %v752 = vpack.c.b16 %v720, %v720
      %v753 = vpack.c.b16 %v721, %v721
      %v754 = vpack.c.b16 %v722, %v722
      %v755 = vpack.c.b16 %v723, %v723
      %v756 = vpack.c.b16 %v724, %v724
      %v757 = vpack.c.b16 %v725, %v725
      %v758 = vpack.c.b16 %v726, %v726
      %v759 = vpack.c.b16 %v727, %v727
      %v760 = vpack.c.b16 %v728, %v728
      %v761 = vpack.c.b16 %v729, %v729
      %v762 = vpack.c.b16 %v730, %v730
      %v763 = vpack.c.b16 %v731, %v731
      %v764 = vpack.c.b16 %v732, %v732
      %v765 = vpack.c.b16 %v733, %v733
      %v766 = vpack.c.b16 %v734, %v734
      %v767 = vpack.c.b16 %v735, %v735
      %v768 = vpack.c.b16 %v736, %v736
      %v769 = vpack.c.b16 %v737, %v737
      %v770 = vpack.c.b16 %v738, %v738
      %v771 = vpack.c.b16 %v739, %v739
      %v772 = vpack.c.b16 %v740, %v740
      %v773 = vpack.c.b16 %v741, %v741
      %v774 = vpack.c.b16 %v742, %v742
      %v775 = vpack.c.b16 %v743, %v743
      %v776 = vpack.c.b16 %v744, %v744
      %v777 = vpack.c.b16 %v745, %v745
      %810 = vst [vmem:[%s223] sm:$0xf] %v746
      %811 = vst [vmem:[%s223 + $0x4] sm:$0xf] %v747
      %812 = vst [vmem:[%s223 + $0x8] sm:$0xf] %v748
      %813 = vst [vmem:[%s223 + $0xc] sm:$0xf] %v749
      %814 = vst [vmem:[%s223 + $0x10] sm:$0xf] %v750
      %815 = vst [vmem:[%s223 + $0x14] sm:$0xf] %v751
      %816 = vst [vmem:[%s223 + $0x18] sm:$0xf] %v752
      %817 = vst [vmem:[%s223 + $0x1c] sm:$0xf] %v753
      %818 = vst [vmem:[%s223 + $0x20] sm:$0xf] %v754
      %819 = vst [vmem:[%s223 + $0x24] sm:$0xf] %v755
      %820 = vst [vmem:[%s223 + $0x28] sm:$0xf] %v756
      %821 = vst [vmem:[%s223 + $0x2c] sm:$0xf] %v757
      %822 = vst [vmem:[%s223 + $0x30] sm:$0xf] %v758
      %823 = vst [vmem:[%s223 + $0x34] sm:$0xf] %v759
      %824 = vst [vmem:[%s223 + $0x38] sm:$0xf] %v760
      %825 = vst [vmem:[%s223 + $0x3c] sm:$0xf] %v761
      %826 = vst [vmem:[%s223 + $0x40] sm:$0xf] %v762
      %827 = vst [vmem:[%s223 + $0x44] sm:$0xf] %v763
      %828 = vst [vmem:[%s223 + $0x48] sm:$0xf] %v764
      %829 = vst [vmem:[%s223 + $0x4c] sm:$0xf] %v765
      %830 = vst [vmem:[%s223 + $0x50] sm:$0xf] %v766
      %831 = vst [vmem:[%s223 + $0x54] sm:$0xf] %v767
      %832 = vst [vmem:[%s223 + $0x58] sm:$0xf] %v768
      %833 = vst [vmem:[%s223 + $0x5c] sm:$0xf] %v769
      %834 = vst [vmem:[%s223 + $0x60] sm:$0xf] %v770
      %835 = vst [vmem:[%s223 + $0x64] sm:$0xf] %v771
      %836 = vst [vmem:[%s223 + $0x68] sm:$0xf] %v772
      %837 = vst [vmem:[%s223 + $0x6c] sm:$0xf] %v773
      %838 = vst [vmem:[%s223 + $0x70] sm:$0xf] %v774
      %839 = vst [vmem:[%s223 + $0x74] sm:$0xf] %v775
      %840 = vst [vmem:[%s223 + $0x78] sm:$0xf] %v776
      %841 = vst [vmem:[%s223 + $0x7c] sm:$0xf] %v777
      %s842 = smul.u32 32, %s18
      %p843 = scmp.lt.s32.totalorder %s842, 63
      %s844 = scalar_select %p843, %s842, 63
      %p845 = scmp.lt.s32.totalorder %s19, 0
      %s846 = scalar_select %p845, %s19, 0
      %s847 = sadd.s32 %s846, %s844
      %s848 = smul.addr %s847, 4
      %s849 = scalar_lea.vmem %s3, %s848
      // Predicated region
      $region33: #{unet_forward.13} parent=31 // pred_check
        %p850 = pneg %p124
      $region34: #{unet_forward.13} parent=31 // pred_check_branch
        %852 = sbr.rel (%p850) target = $region36
      $region35: #{unet_forward.13} parent=31 // pred_region
        %s853 = smul.u32 32, %s18
      $region36: #{unet_forward.13} parent=31 // pred_fallthru
        _
    $region32: #{unet_forward.13} parent=5 // pred_fallthru
      _
    %p854 = scmp.le.s32.totalorder 2, %s9
    // Predicated region
    $region37: #{unet_forward.13} parent=5 // pred_check
      %p855 = pneg %p854
    $region38: #{unet_forward.13} parent=5 // pred_check_branch
      %857 = sbr.rel (%p855) target = $region40
    $region39: #{unet_forward.13} parent=5 // pred_region
      %s858 = ssub.s32 %s9, 2
      // Predicated region
      $region41: #{unet_forward.13} parent=39 // pred_check
        %p859 = pneg %p130
      $region42: #{unet_forward.13} parent=39 // pred_check_branch
        %861 = sbr.rel (%p859) target = $region44
      $region43: #{unet_forward.13} parent=39 // pred_region
        %s862 = smul.u32 32, %s20
        %p863 = scmp.lt.s32.totalorder %s862, 63
        %s864 = scalar_select %p863, %s862, 63
        %p865 = scmp.lt.s32.totalorder %s21, 0
        %s866 = scalar_select %p865, %s21, 0
        %s867 = sadd.s32 %s866, %s864
        %s868 = smul.addr %s867, 4
        %s869 = scalar_lea.vmem %s3, %s868
      $region44: #{unet_forward.13} parent=39 // pred_fallthru
        _
    $region40: #{unet_forward.13} parent=5 // pred_fallthru
      _
  $region6: #{unet_forward.13} parent=0 // loop_footer
    %s13 = sadd.s32 1, %s9
  $region7: #{unet_forward.13} parent=0 // loop_footer_branch
    %8 = sbr.rel target = $region3
  $region8: #{unet_forward.13} parent=0 // loop_exit
    _

// kernel: unet_forward.14
$region0: #{unet_forward.14}
  #allocation0 [shape = 'u32[]', space=smem, size = 0x4, offset = 0x4, fixed_abs, tag = 'smem constant byte address 0x4 - core index']
  #allocation1 [shape = 'u32[144,128]{1,0:T(1,128)}', space=vmem, size = 0x12000, scoped, tag = 'internal scratch']
  %s0 = inlined_call_operand.vmem [shape: bf16[128,256], index: 0, kind: input, shape index: {}]
  %s1 = inlined_call_operand.vmem [shape: bf16[256,128], index: 1, kind: input, shape index: {}]
  %s2 = inlined_call_operand.vmem [shape: f32[1,128], index: 2, kind: input, shape index: {}]
  %s3 = inlined_call_operand.vmem [shape: bf16[128,128], index: 3, kind: output, shape index: {}]
  %s4 = sld [smem:[#allocation0]]
  $region22: #{unet_forward.14} parent=0
    _
  %s6 = ssub.s32 1, %s4
  %s7 = scalar_select 0, %s6, %s4
  // Predicated region
  $region2: #{unet_forward.14} parent=0 // pred_check
    _
  $region3: #{unet_forward.14} parent=0 // pred_check_branch
    %9 = sbr.rel (0) target = $region5
  $region4: #{unet_forward.14} parent=0 // pred_region
    _
  $region5: #{unet_forward.14} parent=0 // pred_fallthru
    _
  // Predicated region
  $region6: #{unet_forward.14} parent=0 // pred_check
    _
  $region7: #{unet_forward.14} parent=0 // pred_check_branch
    %11 = sbr.rel (0) target = $region9
  $region8: #{unet_forward.14} parent=0 // pred_region
    _
  $region9: #{unet_forward.14} parent=0 // pred_fallthru
    _
  // Predicated region
  $region10: #{unet_forward.14} parent=0 // pred_check
    _
  $region11: #{unet_forward.14} parent=0 // pred_check_branch
    %13 = sbr.rel (0) target = $region13
  $region12: #{unet_forward.14} parent=0 // pred_region
    _
  $region13: #{unet_forward.14} parent=0 // pred_fallthru
    _
  %v15 = vld [vmem:[%s0] sm:$0xff]
  %v16 = vld [vmem:[%s0 + $0x8] sm:$0xff]
  %v17 = vld [vmem:[%s0 + $0x10] sm:$0xff]
  %v18 = vld [vmem:[%s0 + $0x18] sm:$0xff]
  %v19 = vld [vmem:[%s0 + $0x20] sm:$0xff]
  %v20 = vld [vmem:[%s0 + $0x28] sm:$0xff]
  %v21 = vld [vmem:[%s0 + $0x30] sm:$0xff]
  %v22 = vld [vmem:[%s0 + $0x38] sm:$0xff]
  %v23 = vld [vmem:[%s0 + $0x40] sm:$0xff]
  %v24 = vld [vmem:[%s0 + $0x48] sm:$0xff]
  %v25 = vld [vmem:[%s0 + $0x50] sm:$0xff]
  %v26 = vld [vmem:[%s0 + $0x58] sm:$0xff]
  %v27 = vld [vmem:[%s0 + $0x60] sm:$0xff]
  %v28 = vld [vmem:[%s0 + $0x68] sm:$0xff]
  %v29 = vld [vmem:[%s0 + $0x70] sm:$0xff]
  %v30 = vld [vmem:[%s0 + $0x78] sm:$0xff]
  %v31 = vld [vmem:[%s1] sm:$0xf]
  %v32 = vld [vmem:[%s1 + $0x4] sm:$0xf]
  %v33 = vld [vmem:[%s1 + $0x8] sm:$0xf]
  %v34 = vld [vmem:[%s1 + $0xc] sm:$0xf]
  %v35 = vld [vmem:[%s1 + $0x10] sm:$0xf]
  %v36 = vld [vmem:[%s1 + $0x14] sm:$0xf]
  %v37 = vld [vmem:[%s1 + $0x18] sm:$0xf]
  %v38 = vld [vmem:[%s1 + $0x1c] sm:$0xf]
  %v39 = vld [vmem:[%s1 + $0x20] sm:$0xf]
  %v40 = vld [vmem:[%s1 + $0x24] sm:$0xf]
  %v41 = vld [vmem:[%s1 + $0x28] sm:$0xf]
  %v42 = vld [vmem:[%s1 + $0x2c] sm:$0xf]
  %v43 = vld [vmem:[%s1 + $0x30] sm:$0xf]
  %v44 = vld [vmem:[%s1 + $0x34] sm:$0xf]
  %v45 = vld [vmem:[%s1 + $0x38] sm:$0xf]
  %v46 = vld [vmem:[%s1 + $0x3c] sm:$0xf]
  %v47 = vld [vmem:[%s1 + $0x40] sm:$0xf]
  %v48 = vld [vmem:[%s1 + $0x44] sm:$0xf]
  %v49 = vld [vmem:[%s1 + $0x48] sm:$0xf]
  %v50 = vld [vmem:[%s1 + $0x4c] sm:$0xf]
  %v51 = vld [vmem:[%s1 + $0x50] sm:$0xf]
  %v52 = vld [vmem:[%s1 + $0x54] sm:$0xf]
  %v53 = vld [vmem:[%s1 + $0x58] sm:$0xf]
  %v54 = vld [vmem:[%s1 + $0x5c] sm:$0xf]
  %v55 = vld [vmem:[%s1 + $0x60] sm:$0xf]
  %v56 = vld [vmem:[%s1 + $0x64] sm:$0xf]
  %v57 = vld [vmem:[%s1 + $0x68] sm:$0xf]
  %v58 = vld [vmem:[%s1 + $0x6c] sm:$0xf]
  %v59 = vld [vmem:[%s1 + $0x70] sm:$0xf]
  %v60 = vld [vmem:[%s1 + $0x74] sm:$0xf]
  %v61 = vld [vmem:[%s1 + $0x78] sm:$0xf]
  %v62 = vld [vmem:[%s1 + $0x7c] sm:$0xf]
  %v63 = vld [vmem:[%s2] sm:$0x1]
  %v65 = vlaneseq
  %v66 = vshrl.u32 %v65, 7
  %v67 = vsub.s32 0, %v66
  %v68 = vrot.slane %v63, %v67
  %v86 = vunpack.c.l.b16 %v15
  %v87 = vunpack.c.h.b16 %v15
  %v88 = vunpack.c.l.b16 %v16
  %v89 = vunpack.c.h.b16 %v16
  %v90 = vunpack.c.l.b16 %v17
  %v91 = vunpack.c.h.b16 %v17
  %v92 = vunpack.c.l.b16 %v18
  %v93 = vunpack.c.h.b16 %v18
  %v94 = vunpack.c.l.b16 %v19
  %v95 = vunpack.c.h.b16 %v19
  %v96 = vunpack.c.l.b16 %v20
  %v97 = vunpack.c.h.b16 %v20
  %v98 = vunpack.c.l.b16 %v21
  %v99 = vunpack.c.h.b16 %v21
  %v100 = vunpack.c.l.b16 %v22
  %v101 = vunpack.c.h.b16 %v22
  %v102 = vunpack.c.l.b16 %v23
  %v103 = vunpack.c.h.b16 %v23
  %v104 = vunpack.c.l.b16 %v24
  %v105 = vunpack.c.h.b16 %v24
  %v106 = vunpack.c.l.b16 %v25
  %v107 = vunpack.c.h.b16 %v25
  %v108 = vunpack.c.l.b16 %v26
  %v109 = vunpack.c.h.b16 %v26
  %v110 = vunpack.c.l.b16 %v27
  %v111 = vunpack.c.h.b16 %v27
  %v112 = vunpack.c.l.b16 %v28
  %v113 = vunpack.c.h.b16 %v28
  %v114 = vunpack.c.l.b16 %v29
  %v115 = vunpack.c.h.b16 %v29
  %v116 = vunpack.c.l.b16 %v30
  %v117 = vunpack.c.h.b16 %v30
  %v118 = vpack.c.b16 %v88, %v86
  %v119 = vpack.c.b16 %v89, %v87
  %v120 = vpack.c.b16 %v92, %v90
  %v121 = vpack.c.b16 %v93, %v91
  %v122 = vpack.c.b16 %v96, %v94
  %v123 = vpack.c.b16 %v97, %v95
  %v124 = vpack.c.b16 %v100, %v98
  %v125 = vpack.c.b16 %v101, %v99
  %v126 = vpack.c.b16 %v104, %v102
  %v127 = vpack.c.b16 %v105, %v103
  %v128 = vpack.c.b16 %v108, %v106
  %v129 = vpack.c.b16 %v109, %v107
  %v130 = vpack.c.b16 %v112, %v110
  %v131 = vpack.c.b16 %v113, %v111
  %v132 = vpack.c.b16 %v116, %v114
  %v133 = vpack.c.b16 %v117, %v115
  %v182 = vunpack.c.l.b16 %v31
  %v183 = vunpack.c.l.b16 %v32
  %v184 = vunpack.c.l.b16 %v33
  %v185 = vunpack.c.l.b16 %v34
  %v186 = vunpack.c.l.b16 %v35
  %v187 = vunpack.c.l.b16 %v36
  %v188 = vunpack.c.l.b16 %v37
  %v189 = vunpack.c.l.b16 %v38
  %v190 = vunpack.c.l.b16 %v39
  %v191 = vunpack.c.l.b16 %v40
  %v192 = vunpack.c.l.b16 %v41
  %v193 = vunpack.c.l.b16 %v42
  %v194 = vunpack.c.l.b16 %v43
  %v195 = vunpack.c.l.b16 %v44
  %v196 = vunpack.c.l.b16 %v45
  %v197 = vunpack.c.l.b16 %v46
  %v198 = vunpack.c.l.b16 %v47
  %v199 = vunpack.c.l.b16 %v48
  %v200 = vunpack.c.l.b16 %v49
  %v201 = vunpack.c.l.b16 %v50
  %v202 = vunpack.c.l.b16 %v51
  %v203 = vunpack.c.l.b16 %v52
  %v204 = vunpack.c.l.b16 %v53
  %v205 = vunpack.c.l.b16 %v54
  %v206 = vunpack.c.l.b16 %v55
  %v207 = vunpack.c.l.b16 %v56
  %v208 = vunpack.c.l.b16 %v57
  %v209 = vunpack.c.l.b16 %v58
  %v210 = vunpack.c.l.b16 %v59
  %v211 = vunpack.c.l.b16 %v60
  %v212 = vunpack.c.l.b16 %v61
  %v213 = vunpack.c.l.b16 %v62
  %v214 = vpack.c.b16 %v183, %v182
  %v215 = vpack.c.b16 %v185, %v184
  %v216 = vpack.c.b16 %v187, %v186
  %v217 = vpack.c.b16 %v189, %v188
  %v218 = vpack.c.b16 %v191, %v190
  %v219 = vpack.c.b16 %v193, %v192
  %v220 = vpack.c.b16 %v195, %v194
  %v221 = vpack.c.b16 %v197, %v196
  %v222 = vpack.c.b16 %v199, %v198
  %v223 = vpack.c.b16 %v201, %v200
  %v224 = vpack.c.b16 %v203, %v202
  %v225 = vpack.c.b16 %v205, %v204
  %v226 = vpack.c.b16 %v207, %v206
  %v227 = vpack.c.b16 %v209, %v208
  %v228 = vpack.c.b16 %v211, %v210
  %v229 = vpack.c.b16 %v213, %v212
  %246 = vmatprep.subr.bf16.mxu0 0
  %247 = vmatpush1.bf16.msra.mxu0 %v214
  %248 = vmatprep.subr.bf16.mxu0 0
  %249 = vmatpush1.bf16.msra.mxu0 %v215
  %250 = vmatprep.subr.bf16.mxu0 0
  %251 = vmatpush1.bf16.msra.mxu0 %v216
  %252 = vmatprep.subr.bf16.mxu0 0
  %253 = vmatpush1.bf16.msra.mxu0 %v217
  %254 = vmatprep.subr.bf16.mxu0 0
  %255 = vmatpush1.bf16.msra.mxu0 %v218
  %256 = vmatprep.subr.bf16.mxu0 0
  %257 = vmatpush1.bf16.msra.mxu0 %v219
  %258 = vmatprep.subr.bf16.mxu0 0
  %259 = vmatpush1.bf16.msra.mxu0 %v220
  %260 = vmatprep.subr.bf16.mxu0 0
  %261 = vmatpush1.bf16.msra.mxu0 %v221
  %262 = vmatprep.subr.bf16.mxu0 0
  %263 = vmatpush1.bf16.msra.mxu0 %v222
  %264 = vmatprep.subr.bf16.mxu0 0
  %265 = vmatpush1.bf16.msra.mxu0 %v223
  %266 = vmatprep.subr.bf16.mxu0 0
  %267 = vmatpush1.bf16.msra.mxu0 %v224
  %268 = vmatprep.subr.bf16.mxu0 0
  %269 = vmatpush1.bf16.msra.mxu0 %v225
  %270 = vmatprep.subr.bf16.mxu0 0
  %271 = vmatpush1.bf16.msra.mxu0 %v226
  %272 = vmatprep.subr.bf16.mxu0 0
  %273 = vmatpush1.bf16.msra.mxu0 %v227
  %274 = vmatprep.subr.bf16.mxu0 0
  %275 = vmatpush1.bf16.msra.mxu0 %v228
  %276 = vmatprep.subr.bf16.mxu0 0
  %277 = vmatpush1.bf16.msra.mxu0 %v229
  %278 = vmatprep.mubr.bf16.mxu0 %v119
  %279 = vmatmul.mubr.bf16.gmra.mrb[0].mxu0 %v118
  %v280 = vpop.f32.mrb[0].mxu0
  %v281 = vadd.f32 %v68, %v280
  %v282 = vpop.f32.mrb[0].mxu0
  %v283 = vpop.f32.mrb[0].mxu0
  %v284 = vadd.f32 %v68, %v283
  %v285 = vpop.f32.mrb[0].mxu0
  %286 = vmatprep.mubr.bf16.mxu0 %v121
  %287 = vmatmul.mubr.bf16.gmra.mrb[0].mxu0 %v120
  %v288 = vpop.f32.mrb[0].mxu0
  %v289 = vadd.f32 %v68, %v288
  %v290 = vpop.f32.mrb[0].mxu0
  %v291 = vpop.f32.mrb[0].mxu0
  %v292 = vadd.f32 %v68, %v291
  %v293 = vpop.f32.mrb[0].mxu0
  %294 = vmatprep.mubr.bf16.mxu0 %v123
  %295 = vmatmul.mubr.bf16.gmra.mrb[0].mxu0 %v122
  %v296 = vpop.f32.mrb[0].mxu0
  %v297 = vadd.f32 %v68, %v296
  %v298 = vpop.f32.mrb[0].mxu0
  %v299 = vpop.f32.mrb[0].mxu0
  %v300 = vadd.f32 %v68, %v299
  %v301 = vpop.f32.mrb[0].mxu0
  %302 = vmatprep.mubr.bf16.mxu0 %v125
  %303 = vmatmul.mubr.bf16.gmra.mrb[0].mxu0 %v124
  %v304 = vpop.f32.mrb[0].mxu0
  %v305 = vadd.f32 %v68, %v304
  %v306 = vpop.f32.mrb[0].mxu0
  %v307 = vpop.f32.mrb[0].mxu0
  %v308 = vadd.f32 %v68, %v307
  %v309 = vpop.f32.mrb[0].mxu0
  %310 = vmatprep.mubr.bf16.mxu0 %v127
  %311 = vmatmul.mubr.bf16.gmra.mrb[0].mxu0 %v126
  %v312 = vpop.f32.mrb[0].mxu0
  %v313 = vadd.f32 %v68, %v312
  %v314 = vpop.f32.mrb[0].mxu0
  %v315 = vpop.f32.mrb[0].mxu0
  %v316 = vadd.f32 %v68, %v315
  %v317 = vpop.f32.mrb[0].mxu0
  %318 = vmatprep.mubr.bf16.mxu0 %v129
  %319 = vmatmul.mubr.bf16.gmra.mrb[0].mxu0 %v128
  %v320 = vpop.f32.mrb[0].mxu0
  %v321 = vadd.f32 %v68, %v320
  %v322 = vpop.f32.mrb[0].mxu0
  %v323 = vpop.f32.mrb[0].mxu0
  %v324 = vadd.f32 %v68, %v323
  %v325 = vpop.f32.mrb[0].mxu0
  %326 = vmatprep.mubr.bf16.mxu0 %v131
  %327 = vmatmul.mubr.bf16.gmra.mrb[0].mxu0 %v130
  %v328 = vpop.f32.mrb[0].mxu0
  %v329 = vadd.f32 %v68, %v328
  %v330 = vpop.f32.mrb[0].mxu0
  %v331 = vpop.f32.mrb[0].mxu0
  %v332 = vadd.f32 %v68, %v331
  %v333 = vpop.f32.mrb[0].mxu0
  %334 = vmatprep.mubr.bf16.mxu0 %v133
  %335 = vmatmul.mubr.bf16.gmra.mrb[0].mxu0 %v132
  %v336 = vpop.f32.mrb[0].mxu0
  %v337 = vadd.f32 %v68, %v336
  %v338 = vpop.f32.mrb[0].mxu0
  %v339 = vpop.f32.mrb[0].mxu0
  %v340 = vadd.f32 %v68, %v339
  %v341 = vpop.f32.mrb[0].mxu0
  %342 = vdwg.mxu0
  %vm343 = vcmp.gt.f32.partialorder %v281, 0.0
  %vm344 = vcmp.gt.f32.partialorder %v284, 0.0
  %vm345 = vcmp.gt.f32.partialorder %v289, 0.0
  %vm346 = vcmp.gt.f32.partialorder %v292, 0.0
  %vm347 = vcmp.gt.f32.partialorder %v297, 0.0
  %vm348 = vcmp.gt.f32.partialorder %v300, 0.0
  %vm349 = vcmp.gt.f32.partialorder %v305, 0.0
  %vm350 = vcmp.gt.f32.partialorder %v308, 0.0
  %vm351 = vcmp.gt.f32.partialorder %v313, 0.0
  %vm352 = vcmp.gt.f32.partialorder %v316, 0.0
  %vm353 = vcmp.gt.f32.partialorder %v321, 0.0
  %vm354 = vcmp.gt.f32.partialorder %v324, 0.0
  %vm355 = vcmp.gt.f32.partialorder %v329, 0.0
  %vm356 = vcmp.gt.f32.partialorder %v332, 0.0
  %vm357 = vcmp.gt.f32.partialorder %v337, 0.0
  %vm358 = vcmp.gt.f32.partialorder %v340, 0.0
  %v359 = vmul.f32 %v281, 0.2
  %v360 = vmul.f32 %v284, 0.2
  %v361 = vmul.f32 %v289, 0.2
  %v362 = vmul.f32 %v292, 0.2
  %v363 = vmul.f32 %v297, 0.2
  %v364 = vmul.f32 %v300, 0.2
  %v365 = vmul.f32 %v305, 0.2
  %v366 = vmul.f32 %v308, 0.2
  %v367 = vmul.f32 %v313, 0.2
  %v368 = vmul.f32 %v316, 0.2
  %v369 = vmul.f32 %v321, 0.2
  %v370 = vmul.f32 %v324, 0.2
  %v371 = vmul.f32 %v329, 0.2
  %v372 = vmul.f32 %v332, 0.2
  %v373 = vmul.f32 %v337, 0.2
  %v374 = vmul.f32 %v340, 0.2
  %v375 = vsel %vm343, %v281, %v359
  %v376 = vsel %vm344, %v284, %v360
  %v377 = vsel %vm345, %v289, %v361
  %v378 = vsel %vm346, %v292, %v362
  %v379 = vsel %vm347, %v297, %v363
  %v380 = vsel %vm348, %v300, %v364
  %v381 = vsel %vm349, %v305, %v365
  %v382 = vsel %vm350, %v308, %v366
  %v383 = vsel %vm351, %v313, %v367
  %v384 = vsel %vm352, %v316, %v368
  %v385 = vsel %vm353, %v321, %v369
  %v386 = vsel %vm354, %v324, %v370
  %v387 = vsel %vm355, %v329, %v371
  %v388 = vsel %vm356, %v332, %v372
  %v389 = vsel %vm357, %v337, %v373
  %v390 = vsel %vm358, %v340, %v374
  %v391 = vpack.c.bf16 %v376, %v375
  %v392 = vpack.c.bf16 %v378, %v377
  %v393 = vpack.c.bf16 %v380, %v379
  %v394 = vpack.c.bf16 %v382, %v381
  %v395 = vpack.c.bf16 %v384, %v383
  %v396 = vpack.c.bf16 %v386, %v385
  %v397 = vpack.c.bf16 %v388, %v387
  %v398 = vpack.c.bf16 %v390, %v389
  %v407 = vunpack.c.l.b16 %v391
  %v408 = vunpack.c.h.b16 %v391
  %v409 = vunpack.c.l.b16 %v392
  %v410 = vunpack.c.h.b16 %v392
  %v411 = vunpack.c.l.b16 %v393
  %v412 = vunpack.c.h.b16 %v393
  %v413 = vunpack.c.l.b16 %v394
  %v414 = vunpack.c.h.b16 %v394
  %v415 = vunpack.c.l.b16 %v395
  %v416 = vunpack.c.h.b16 %v395
  %v417 = vunpack.c.l.b16 %v396
  %v418 = vunpack.c.h.b16 %v396
  %v419 = vunpack.c.l.b16 %v397
  %v420 = vunpack.c.h.b16 %v397
  %v421 = vunpack.c.l.b16 %v398
  %v422 = vunpack.c.h.b16 %v398
  %v423 = vpack.c.b16 %v407, %v407
  %v424 = vpack.c.b16 %v408, %v408
  %v425 = vpack.c.b16 %v409, %v409
  %v426 = vpack.c.b16 %v410, %v410
  %v427 = vpack.c.b16 %v411, %v411
  %v428 = vpack.c.b16 %v412, %v412
  %v429 = vpack.c.b16 %v413, %v413
  %v430 = vpack.c.b16 %v414, %v414
  %v431 = vpack.c.b16 %v415, %v415
  %v432 = vpack.c.b16 %v416, %v416
  %v433 = vpack.c.b16 %v417, %v417
  %v434 = vpack.c.b16 %v418, %v418
  %v435 = vpack.c.b16 %v419, %v419
  %v436 = vpack.c.b16 %v420, %v420
  %v437 = vpack.c.b16 %v421, %v421
  %v438 = vpack.c.b16 %v422, %v422
  %455 = vst [vmem:[%s3] sm:$0xf] %v423
  %456 = vst [vmem:[%s3 + $0x4] sm:$0xf] %v424
  %457 = vst [vmem:[%s3 + $0x8] sm:$0xf] %v425
  %458 = vst [vmem:[%s3 + $0xc] sm:$0xf] %v426
  %459 = vst [vmem:[%s3 + $0x10] sm:$0xf] %v427
  %460 = vst [vmem:[%s3 + $0x14] sm:$0xf] %v428
  %461 = vst [vmem:[%s3 + $0x18] sm:$0xf] %v429
  %462 = vst [vmem:[%s3 + $0x1c] sm:$0xf] %v430
  %463 = vst [vmem:[%s3 + $0x20] sm:$0xf] %v431
  %464 = vst [vmem:[%s3 + $0x24] sm:$0xf] %v432
  %465 = vst [vmem:[%s3 + $0x28] sm:$0xf] %v433
  %466 = vst [vmem:[%s3 + $0x2c] sm:$0xf] %v434
  %467 = vst [vmem:[%s3 + $0x30] sm:$0xf] %v435
  %468 = vst [vmem:[%s3 + $0x34] sm:$0xf] %v436
  %469 = vst [vmem:[%s3 + $0x38] sm:$0xf] %v437
  %470 = vst [vmem:[%s3 + $0x3c] sm:$0xf] %v438
  // Predicated region
  $region14: #{unet_forward.14} parent=0 // pred_check
    _
  $region15: #{unet_forward.14} parent=0 // pred_check_branch
    %472 = sbr.rel (0) target = $region17
  $region16: #{unet_forward.14} parent=0 // pred_region
    _
  $region17: #{unet_forward.14} parent=0 // pred_fallthru
    _
  // Predicated region
  $region18: #{unet_forward.14} parent=0 // pred_check
    _
  $region19: #{unet_forward.14} parent=0 // pred_check_branch
    %474 = sbr.rel (0) target = $region21
  $region20: #{unet_forward.14} parent=0 // pred_region
    _
  $region21: #{unet_forward.14} parent=0 // pred_fallthru
    _

// kernel: unet_forward.15
$region0: #{unet_forward.15}
  #allocation0 [shape = 'u32[]', space=smem, size = 0x4, offset = 0x4, fixed_abs, tag = 'smem constant byte address 0x4 - core index']
  #allocation1 [shape = 'u32[144,128]{1,0:T(1,128)}', space=vmem, size = 0x12000, scoped, tag = 'internal scratch']
  %s0 = inlined_call_operand.vmem [shape: bf16[32,512], index: 0, kind: input, shape index: {}]
  %s1 = inlined_call_operand.vmem [shape: bf16[512,128], index: 1, kind: input, shape index: {}]
  %s2 = inlined_call_operand.vmem [shape: f32[1,128], index: 2, kind: input, shape index: {}]
  %s3 = inlined_call_operand.vmem [shape: bf16[32,128], index: 3, kind: output, shape index: {}]
  %s4 = sld [smem:[#allocation0]]
  $region22: #{unet_forward.15} parent=0
    _
  %s6 = ssub.s32 1, %s4
  %s7 = scalar_select 0, %s6, %s4
  // Predicated region
  $region2: #{unet_forward.15} parent=0 // pred_check
    _
  $region3: #{unet_forward.15} parent=0 // pred_check_branch
    %9 = sbr.rel (0) target = $region5
  $region4: #{unet_forward.15} parent=0 // pred_region
    _
  $region5: #{unet_forward.15} parent=0 // pred_fallthru
    _
  // Predicated region
  $region6: #{unet_forward.15} parent=0 // pred_check
    _
  $region7: #{unet_forward.15} parent=0 // pred_check_branch
    %11 = sbr.rel (0) target = $region9
  $region8: #{unet_forward.15} parent=0 // pred_region
    _
  $region9: #{unet_forward.15} parent=0 // pred_fallthru
    _
  // Predicated region
  $region10: #{unet_forward.15} parent=0 // pred_check
    _
  $region11: #{unet_forward.15} parent=0 // pred_check_branch
    %13 = sbr.rel (0) target = $region13
  $region12: #{unet_forward.15} parent=0 // pred_region
    _
  $region13: #{unet_forward.15} parent=0 // pred_fallthru
    _
  %v15 = vld [vmem:[%s0] sm:$0xff]
  %v16 = vld [vmem:[%s0 + $0x8] sm:$0xff]
  %v17 = vld [vmem:[%s0 + $0x10] sm:$0xff]
  %v18 = vld [vmem:[%s0 + $0x18] sm:$0xff]
  %v19 = vld [vmem:[%s0 + $0x20] sm:$0xff]
  %v20 = vld [vmem:[%s0 + $0x28] sm:$0xff]
  %v21 = vld [vmem:[%s0 + $0x30] sm:$0xff]
  %v22 = vld [vmem:[%s0 + $0x38] sm:$0xff]
  %v23 = vld [vmem:[%s1] sm:$0xf]
  %v24 = vld [vmem:[%s1 + $0x4] sm:$0xf]
  %v25 = vld [vmem:[%s1 + $0x8] sm:$0xf]
  %v26 = vld [vmem:[%s1 + $0xc] sm:$0xf]
  %v27 = vld [vmem:[%s1 + $0x10] sm:$0xf]
  %v28 = vld [vmem:[%s1 + $0x14] sm:$0xf]
  %v29 = vld [vmem:[%s1 + $0x18] sm:$0xf]
  %v30 = vld [vmem:[%s1 + $0x1c] sm:$0xf]
  %v31 = vld [vmem:[%s1 + $0x20] sm:$0xf]
  %v32 = vld [vmem:[%s1 + $0x24] sm:$0xf]
  %v33 = vld [vmem:[%s1 + $0x28] sm:$0xf]
  %v34 = vld [vmem:[%s1 + $0x2c] sm:$0xf]
  %v35 = vld [vmem:[%s1 + $0x30] sm:$0xf]
  %v36 = vld [vmem:[%s1 + $0x34] sm:$0xf]
  %v37 = vld [vmem:[%s1 + $0x38] sm:$0xf]
  %v38 = vld [vmem:[%s1 + $0x3c] sm:$0xf]
  %v39 = vld [vmem:[%s1 + $0x40] sm:$0xf]
  %v40 = vld [vmem:[%s1 + $0x44] sm:$0xf]
  %v41 = vld [vmem:[%s1 + $0x48] sm:$0xf]
  %v42 = vld [vmem:[%s1 + $0x4c] sm:$0xf]
  %v43 = vld [vmem:[%s1 + $0x50] sm:$0xf]
  %v44 = vld [vmem:[%s1 + $0x54] sm:$0xf]
  %v45 = vld [vmem:[%s1 + $0x58] sm:$0xf]
  %v46 = vld [vmem:[%s1 + $0x5c] sm:$0xf]
  %v47 = vld [vmem:[%s1 + $0x60] sm:$0xf]
  %v48 = vld [vmem:[%s1 + $0x64] sm:$0xf]
  %v49 = vld [vmem:[%s1 + $0x68] sm:$0xf]
  %v50 = vld [vmem:[%s1 + $0x6c] sm:$0xf]
  %v51 = vld [vmem:[%s1 + $0x70] sm:$0xf]
  %v52 = vld [vmem:[%s1 + $0x74] sm:$0xf]
  %v53 = vld [vmem:[%s1 + $0x78] sm:$0xf]
  %v54 = vld [vmem:[%s1 + $0x7c] sm:$0xf]
  %v55 = vld [vmem:[%s1 + $0x80] sm:$0xf]
  %v56 = vld [vmem:[%s1 + $0x84] sm:$0xf]
  %v57 = vld [vmem:[%s1 + $0x88] sm:$0xf]
  %v58 = vld [vmem:[%s1 + $0x8c] sm:$0xf]
  %v59 = vld [vmem:[%s1 + $0x90] sm:$0xf]
  %v60 = vld [vmem:[%s1 + $0x94] sm:$0xf]
  %v61 = vld [vmem:[%s1 + $0x98] sm:$0xf]
  %v62 = vld [vmem:[%s1 + $0x9c] sm:$0xf]
  %v63 = vld [vmem:[%s1 + $0xa0] sm:$0xf]
  %v64 = vld [vmem:[%s1 + $0xa4] sm:$0xf]
  %v65 = vld [vmem:[%s1 + $0xa8] sm:$0xf]
  %v66 = vld [vmem:[%s1 + $0xac] sm:$0xf]
  %v67 = vld [vmem:[%s1 + $0xb0] sm:$0xf]
  %v68 = vld [vmem:[%s1 + $0xb4] sm:$0xf]
  %v69 = vld [vmem:[%s1 + $0xb8] sm:$0xf]
  %v70 = vld [vmem:[%s1 + $0xbc] sm:$0xf]
  %v71 = vld [vmem:[%s1 + $0xc0] sm:$0xf]
  %v72 = vld [vmem:[%s1 + $0xc4] sm:$0xf]
  %v73 = vld [vmem:[%s1 + $0xc8] sm:$0xf]
  %v74 = vld [vmem:[%s1 + $0xcc] sm:$0xf]
  %v75 = vld [vmem:[%s1 + $0xd0] sm:$0xf]
  %v76 = vld [vmem:[%s1 + $0xd4] sm:$0xf]
  %v77 = vld [vmem:[%s1 + $0xd8] sm:$0xf]
  %v78 = vld [vmem:[%s1 + $0xdc] sm:$0xf]
  %v79 = vld [vmem:[%s1 + $0xe0] sm:$0xf]
  %v80 = vld [vmem:[%s1 + $0xe4] sm:$0xf]
  %v81 = vld [vmem:[%s1 + $0xe8] sm:$0xf]
  %v82 = vld [vmem:[%s1 + $0xec] sm:$0xf]
  %v83 = vld [vmem:[%s1 + $0xf0] sm:$0xf]
  %v84 = vld [vmem:[%s1 + $0xf4] sm:$0xf]
  %v85 = vld [vmem:[%s1 + $0xf8] sm:$0xf]
  %v86 = vld [vmem:[%s1 + $0xfc] sm:$0xf]
  %v87 = vld [vmem:[%s2] sm:$0x1]
  %v89 = vlaneseq
  %v90 = vshrl.u32 %v89, 7
  %v91 = vsub.s32 0, %v90
  %v92 = vrot.slane %v87, %v91
  %v102 = vunpack.c.l.b16 %v15
  %v103 = vunpack.c.h.b16 %v15
  %v104 = vunpack.c.l.b16 %v16
  %v105 = vunpack.c.h.b16 %v16
  %v106 = vunpack.c.l.b16 %v17
  %v107 = vunpack.c.h.b16 %v17
  %v108 = vunpack.c.l.b16 %v18
  %v109 = vunpack.c.h.b16 %v18
  %v110 = vunpack.c.l.b16 %v19
  %v111 = vunpack.c.h.b16 %v19
  %v112 = vunpack.c.l.b16 %v20
  %v113 = vunpack.c.h.b16 %v20
  %v114 = vunpack.c.l.b16 %v21
  %v115 = vunpack.c.h.b16 %v21
  %v116 = vunpack.c.l.b16 %v22
  %v117 = vunpack.c.h.b16 %v22
  %v118 = vpack.c.b16 %v106, %v102
  %v119 = vpack.c.b16 %v107, %v103
  %v120 = vpack.c.b16 %v108, %v104
  %v121 = vpack.c.b16 %v109, %v105
  %v122 = vpack.c.b16 %v114, %v110
  %v123 = vpack.c.b16 %v115, %v111
  %v124 = vpack.c.b16 %v116, %v112
  %v125 = vpack.c.b16 %v117, %v113
  %v198 = vunpack.c.l.b16 %v23
  %v199 = vunpack.c.l.b16 %v24
  %v200 = vunpack.c.l.b16 %v25
  %v201 = vunpack.c.l.b16 %v26
  %v202 = vunpack.c.l.b16 %v27
  %v203 = vunpack.c.l.b16 %v28
  %v204 = vunpack.c.l.b16 %v29
  %v205 = vunpack.c.l.b16 %v30
  %v206 = vunpack.c.l.b16 %v31
  %v207 = vunpack.c.l.b16 %v32
  %v208 = vunpack.c.l.b16 %v33
  %v209 = vunpack.c.l.b16 %v34
  %v210 = vunpack.c.l.b16 %v35
  %v211 = vunpack.c.l.b16 %v36
  %v212 = vunpack.c.l.b16 %v37
  %v213 = vunpack.c.l.b16 %v38
  %v214 = vunpack.c.l.b16 %v39
  %v215 = vunpack.c.l.b16 %v40
  %v216 = vunpack.c.l.b16 %v41
  %v217 = vunpack.c.l.b16 %v42
  %v218 = vunpack.c.l.b16 %v43
  %v219 = vunpack.c.l.b16 %v44
  %v220 = vunpack.c.l.b16 %v45
  %v221 = vunpack.c.l.b16 %v46
  %v222 = vunpack.c.l.b16 %v47
  %v223 = vunpack.c.l.b16 %v48
  %v224 = vunpack.c.l.b16 %v49
  %v225 = vunpack.c.l.b16 %v50
  %v226 = vunpack.c.l.b16 %v51
  %v227 = vunpack.c.l.b16 %v52
  %v228 = vunpack.c.l.b16 %v53
  %v229 = vunpack.c.l.b16 %v54
  %v230 = vunpack.c.l.b16 %v55
  %v231 = vunpack.c.l.b16 %v56
  %v232 = vunpack.c.l.b16 %v57
  %v233 = vunpack.c.l.b16 %v58
  %v234 = vunpack.c.l.b16 %v59
  %v235 = vunpack.c.l.b16 %v60
  %v236 = vunpack.c.l.b16 %v61
  %v237 = vunpack.c.l.b16 %v62
  %v238 = vunpack.c.l.b16 %v63
  %v239 = vunpack.c.l.b16 %v64
  %v240 = vunpack.c.l.b16 %v65
  %v241 = vunpack.c.l.b16 %v66
  %v242 = vunpack.c.l.b16 %v67
  %v243 = vunpack.c.l.b16 %v68
  %v244 = vunpack.c.l.b16 %v69
  %v245 = vunpack.c.l.b16 %v70
  %v246 = vunpack.c.l.b16 %v71
  %v247 = vunpack.c.l.b16 %v72
  %v248 = vunpack.c.l.b16 %v73
  %v249 = vunpack.c.l.b16 %v74
  %v250 = vunpack.c.l.b16 %v75
  %v251 = vunpack.c.l.b16 %v76
  %v252 = vunpack.c.l.b16 %v77
  %v253 = vunpack.c.l.b16 %v78
  %v254 = vunpack.c.l.b16 %v79
  %v255 = vunpack.c.l.b16 %v80
  %v256 = vunpack.c.l.b16 %v81
  %v257 = vunpack.c.l.b16 %v82
  %v258 = vunpack.c.l.b16 %v83
  %v259 = vunpack.c.l.b16 %v84
  %v260 = vunpack.c.l.b16 %v85
  %v261 = vunpack.c.l.b16 %v86
  %v262 = vpack.c.b16 %v199, %v198
  %v263 = vpack.c.b16 %v201, %v200
  %v264 = vpack.c.b16 %v203, %v202
  %v265 = vpack.c.b16 %v205, %v204
  %v266 = vpack.c.b16 %v207, %v206
  %v267 = vpack.c.b16 %v209, %v208
  %v268 = vpack.c.b16 %v211, %v210
  %v269 = vpack.c.b16 %v213, %v212
  %v270 = vpack.c.b16 %v215, %v214
  %v271 = vpack.c.b16 %v217, %v216
  %v272 = vpack.c.b16 %v219, %v218
  %v273 = vpack.c.b16 %v221, %v220
  %v274 = vpack.c.b16 %v223, %v222
  %v275 = vpack.c.b16 %v225, %v224
  %v276 = vpack.c.b16 %v227, %v226
  %v277 = vpack.c.b16 %v229, %v228
  %v278 = vpack.c.b16 %v231, %v230
  %v279 = vpack.c.b16 %v233, %v232
  %v280 = vpack.c.b16 %v235, %v234
  %v281 = vpack.c.b16 %v237, %v236
  %v282 = vpack.c.b16 %v239, %v238
  %v283 = vpack.c.b16 %v241, %v240
  %v284 = vpack.c.b16 %v243, %v242
  %v285 = vpack.c.b16 %v245, %v244
  %v286 = vpack.c.b16 %v247, %v246
  %v287 = vpack.c.b16 %v249, %v248
  %v288 = vpack.c.b16 %v251, %v250
  %v289 = vpack.c.b16 %v253, %v252
  %v290 = vpack.c.b16 %v255, %v254
  %v291 = vpack.c.b16 %v257, %v256
  %v292 = vpack.c.b16 %v259, %v258
  %v293 = vpack.c.b16 %v261, %v260
  %326 = vmatprep.subr.bf16.mxu0 0
  %327 = vmatpush1.bf16.msra.mxu0 %v262
  %328 = vmatprep.subr.bf16.mxu0 0
  %329 = vmatpush1.bf16.msra.mxu0 %v263
  %330 = vmatprep.subr.bf16.mxu0 0
  %331 = vmatpush1.bf16.msra.mxu0 %v264
  %332 = vmatprep.subr.bf16.mxu0 0
  %333 = vmatpush1.bf16.msra.mxu0 %v265
  %334 = vmatprep.subr.bf16.mxu0 0
  %335 = vmatpush1.bf16.msra.mxu0 %v266
  %336 = vmatprep.subr.bf16.mxu0 0
  %337 = vmatpush1.bf16.msra.mxu0 %v267
  %338 = vmatprep.subr.bf16.mxu0 0
  %339 = vmatpush1.bf16.msra.mxu0 %v268
  %340 = vmatprep.subr.bf16.mxu0 0
  %341 = vmatpush1.bf16.msra.mxu0 %v269
  %342 = vmatprep.subr.bf16.mxu0 0
  %343 = vmatpush1.bf16.msra.mxu0 %v270
  %344 = vmatprep.subr.bf16.mxu0 0
  %345 = vmatpush1.bf16.msra.mxu0 %v271
  %346 = vmatprep.subr.bf16.mxu0 0
  %347 = vmatpush1.bf16.msra.mxu0 %v272
  %348 = vmatprep.subr.bf16.mxu0 0
  %349 = vmatpush1.bf16.msra.mxu0 %v273
  %350 = vmatprep.subr.bf16.mxu0 0
  %351 = vmatpush1.bf16.msra.mxu0 %v274
  %352 = vmatprep.subr.bf16.mxu0 0
  %353 = vmatpush1.bf16.msra.mxu0 %v275
  %354 = vmatprep.subr.bf16.mxu0 0
  %355 = vmatpush1.bf16.msra.mxu0 %v276
  %356 = vmatprep.subr.bf16.mxu0 0
  %357 = vmatpush1.bf16.msra.mxu0 %v277
  %358 = vmatprep.mubr.bf16.mxu0 %v119
  %359 = vmatmul.mubr.bf16.gmra.mrb[0].mxu0 %v118
  %v360 = vpop.f32.mrb[0].mxu0
  %v361 = vadd.f32 %v92, %v360
  %v362 = vpop.f32.mrb[0].mxu0
  %v363 = vpop.f32.mrb[0].mxu0
  %v364 = vadd.f32 %v92, %v363
  %v365 = vpop.f32.mrb[0].mxu0
  %366 = vmatprep.mubr.bf16.mxu0 %v123
  %367 = vmatmul.mubr.bf16.gmra.mrb[0].mxu0 %v122
  %v368 = vpop.f32.mrb[0].mxu0
  %v369 = vadd.f32 %v92, %v368
  %v370 = vpop.f32.mrb[0].mxu0
  %v371 = vpop.f32.mrb[0].mxu0
  %v372 = vadd.f32 %v92, %v371
  %v373 = vpop.f32.mrb[0].mxu0
  %374 = vdwg.mxu0
  %375 = vmatprep.subr.bf16.mxu0 0
  %376 = vmatpush1.bf16.msra.mxu0 %v278
  %377 = vmatprep.subr.bf16.mxu0 0
  %378 = vmatpush1.bf16.msra.mxu0 %v279
  %379 = vmatprep.subr.bf16.mxu0 0
  %380 = vmatpush1.bf16.msra.mxu0 %v280
  %381 = vmatprep.subr.bf16.mxu0 0
  %382 = vmatpush1.bf16.msra.mxu0 %v281
  %383 = vmatprep.subr.bf16.mxu0 0
  %384 = vmatpush1.bf16.msra.mxu0 %v282
  %385 = vmatprep.subr.bf16.mxu0 0
  %386 = vmatpush1.bf16.msra.mxu0 %v283
  %387 = vmatprep.subr.bf16.mxu0 0
  %388 = vmatpush1.bf16.msra.mxu0 %v284
  %389 = vmatprep.subr.bf16.mxu0 0
  %390 = vmatpush1.bf16.msra.mxu0 %v285
  %391 = vmatprep.subr.bf16.mxu0 0
  %392 = vmatpush1.bf16.msra.mxu0 %v286
  %393 = vmatprep.subr.bf16.mxu0 0
  %394 = vmatpush1.bf16.msra.mxu0 %v287
  %395 = vmatprep.subr.bf16.mxu0 0
  %396 = vmatpush1.bf16.msra.mxu0 %v288
  %397 = vmatprep.subr.bf16.mxu0 0
  %398 = vmatpush1.bf16.msra.mxu0 %v289
  %399 = vmatprep.subr.bf16.mxu0 0
  %400 = vmatpush1.bf16.msra.mxu0 %v290
  %401 = vmatprep.subr.bf16.mxu0 0
  %402 = vmatpush1.bf16.msra.mxu0 %v291
  %403 = vmatprep.subr.bf16.mxu0 0
  %404 = vmatpush1.bf16.msra.mxu0 %v292
  %405 = vmatprep.subr.bf16.mxu0 0
  %406 = vmatpush1.bf16.msra.mxu0 %v293
  %407 = vmatprep.mubr.bf16.mxu0 %v121
  %408 = vmatmul.mubr.bf16.gmra.mrb[0].mxu0 %v120
  %v409 = vpop.f32.mrb[0].mxu0
  %v410 = vadd.f32 %v361, %v409
  %v411 = vpop.f32.mrb[0].mxu0
  %v412 = vpop.f32.mrb[0].mxu0
  %v413 = vadd.f32 %v364, %v412
  %v414 = vpop.f32.mrb[0].mxu0
  %415 = vmatprep.mubr.bf16.mxu0 %v125
  %416 = vmatmul.mubr.bf16.gmra.mrb[0].mxu0 %v124
  %v417 = vpop.f32.mrb[0].mxu0
  %v418 = vadd.f32 %v369, %v417
  %v419 = vpop.f32.mrb[0].mxu0
  %v420 = vpop.f32.mrb[0].mxu0
  %v421 = vadd.f32 %v372, %v420
  %v422 = vpop.f32.mrb[0].mxu0
  %423 = vdwg.mxu0
  %vm424 = vcmp.gt.f32.partialorder %v410, 0.0
  %vm425 = vcmp.gt.f32.partialorder %v413, 0.0
  %vm426 = vcmp.gt.f32.partialorder %v418, 0.0
  %vm427 = vcmp.gt.f32.partialorder %v421, 0.0
  %v428 = vmul.f32 %v410, 0.2
  %v429 = vmul.f32 %v413, 0.2
  %v430 = vmul.f32 %v418, 0.2
  %v431 = vmul.f32 %v421, 0.2
  %v432 = vsel %vm424, %v410, %v428
  %v433 = vsel %vm425, %v413, %v429
  %v434 = vsel %vm426, %v418, %v430
  %v435 = vsel %vm427, %v421, %v431
  %v436 = vpack.c.bf16 %v433, %v432
  %v437 = vpack.c.bf16 %v435, %v434
  %v440 = vunpack.c.l.b16 %v436
  %v441 = vunpack.c.h.b16 %v436
  %v442 = vunpack.c.l.b16 %v437
  %v443 = vunpack.c.h.b16 %v437
  %v444 = vpack.c.b16 %v440, %v440
  %v445 = vpack.c.b16 %v441, %v441
  %v446 = vpack.c.b16 %v442, %v442
  %v447 = vpack.c.b16 %v443, %v443
  %452 = vst [vmem:[%s3] sm:$0xf] %v444
  %453 = vst [vmem:[%s3 + $0x4] sm:$0xf] %v445
  %454 = vst [vmem:[%s3 + $0x8] sm:$0xf] %v446
  %455 = vst [vmem:[%s3 + $0xc] sm:$0xf] %v447
  // Predicated region
  $region14: #{unet_forward.15} parent=0 // pred_check
    _
  $region15: #{unet_forward.15} parent=0 // pred_check_branch
    %457 = sbr.rel (0) target = $region17
  $region16: #{unet_forward.15} parent=0 // pred_region
    _
  $region17: #{unet_forward.15} parent=0 // pred_fallthru
    _
  // Predicated region
  $region18: #{unet_forward.15} parent=0 // pred_check
    _
  $region19: #{unet_forward.15} parent=0 // pred_check_branch
    %459 = sbr.rel (0) target = $region21
  $region20: #{unet_forward.15} parent=0 // pred_region
    _
  $region21: #{unet_forward.15} parent=0 // pred_fallthru
    _

// kernel: unet_forward.16
$region0: #{unet_forward.16}
  #allocation0 [shape = 'u32[]', space=smem, size = 0x4, offset = 0x4, fixed_abs, tag = 'smem constant byte address 0x4 - core index']
  #allocation1 [shape = 'u32[144,128]{1,0:T(1,128)}', space=vmem, size = 0x12000, scoped, tag = 'internal scratch']
  %s0 = inlined_call_operand.vmem [shape: bf16[16,1024], index: 0, kind: input, shape index: {}]
  %s1 = inlined_call_operand.vmem [shape: bf16[1024,128], index: 1, kind: input, shape index: {}]
  %s2 = inlined_call_operand.vmem [shape: f32[1,128], index: 2, kind: input, shape index: {}]
  %s3 = inlined_call_operand.vmem [shape: bf16[16,128], index: 3, kind: output, shape index: {}]
  %s4 = sld [smem:[#allocation0]]
  $region22: #{unet_forward.16} parent=0
    _
  %s6 = ssub.s32 1, %s4
  %s7 = scalar_select 0, %s6, %s4
  // Predicated region
  $region2: #{unet_forward.16} parent=0 // pred_check
    _
  $region3: #{unet_forward.16} parent=0 // pred_check_branch
    %9 = sbr.rel (0) target = $region5
  $region4: #{unet_forward.16} parent=0 // pred_region
    _
  $region5: #{unet_forward.16} parent=0 // pred_fallthru
    _
  // Predicated region
  $region6: #{unet_forward.16} parent=0 // pred_check
    _
  $region7: #{unet_forward.16} parent=0 // pred_check_branch
    %11 = sbr.rel (0) target = $region9
  $region8: #{unet_forward.16} parent=0 // pred_region
    _
  $region9: #{unet_forward.16} parent=0 // pred_fallthru
    _
  // Predicated region
  $region10: #{unet_forward.16} parent=0 // pred_check
    _
  $region11: #{unet_forward.16} parent=0 // pred_check_branch
    %13 = sbr.rel (0) target = $region13
  $region12: #{unet_forward.16} parent=0 // pred_region
    _
  $region13: #{unet_forward.16} parent=0 // pred_fallthru
    _
  %v15 = vld [vmem:[%s0] sm:$0xff]
  %v16 = vld [vmem:[%s0 + $0x8] sm:$0xff]
  %v17 = vld [vmem:[%s0 + $0x10] sm:$0xff]
  %v18 = vld [vmem:[%s0 + $0x18] sm:$0xff]
  %v19 = vld [vmem:[%s0 + $0x20] sm:$0xff]
  %v20 = vld [vmem:[%s0 + $0x28] sm:$0xff]
  %v21 = vld [vmem:[%s0 + $0x30] sm:$0xff]
  %v22 = vld [vmem:[%s0 + $0x38] sm:$0xff]
  %v23 = vld [vmem:[%s1] sm:$0xf]
  %v24 = vld [vmem:[%s1 + $0x4] sm:$0xf]
  %v25 = vld [vmem:[%s1 + $0x8] sm:$0xf]
  %v26 = vld [vmem:[%s1 + $0xc] sm:$0xf]
  %v27 = vld [vmem:[%s1 + $0x10] sm:$0xf]
  %v28 = vld [vmem:[%s1 + $0x14] sm:$0xf]
  %v29 = vld [vmem:[%s1 + $0x18] sm:$0xf]
  %v30 = vld [vmem:[%s1 + $0x1c] sm:$0xf]
  %v31 = vld [vmem:[%s1 + $0x20] sm:$0xf]
  %v32 = vld [vmem:[%s1 + $0x24] sm:$0xf]
  %v33 = vld [vmem:[%s1 + $0x28] sm:$0xf]
  %v34 = vld [vmem:[%s1 + $0x2c] sm:$0xf]
  %v35 = vld [vmem:[%s1 + $0x30] sm:$0xf]
  %v36 = vld [vmem:[%s1 + $0x34] sm:$0xf]
  %v37 = vld [vmem:[%s1 + $0x38] sm:$0xf]
  %v38 = vld [vmem:[%s1 + $0x3c] sm:$0xf]
  %v39 = vld [vmem:[%s1 + $0x40] sm:$0xf]
  %v40 = vld [vmem:[%s1 + $0x44] sm:$0xf]
  %v41 = vld [vmem:[%s1 + $0x48] sm:$0xf]
  %v42 = vld [vmem:[%s1 + $0x4c] sm:$0xf]
  %v43 = vld [vmem:[%s1 + $0x50] sm:$0xf]
  %v44 = vld [vmem:[%s1 + $0x54] sm:$0xf]
  %v45 = vld [vmem:[%s1 + $0x58] sm:$0xf]
  %v46 = vld [vmem:[%s1 + $0x5c] sm:$0xf]
  %v47 = vld [vmem:[%s1 + $0x60] sm:$0xf]
  %v48 = vld [vmem:[%s1 + $0x64] sm:$0xf]
  %v49 = vld [vmem:[%s1 + $0x68] sm:$0xf]
  %v50 = vld [vmem:[%s1 + $0x6c] sm:$0xf]
  %v51 = vld [vmem:[%s1 + $0x70] sm:$0xf]
  %v52 = vld [vmem:[%s1 + $0x74] sm:$0xf]
  %v53 = vld [vmem:[%s1 + $0x78] sm:$0xf]
  %v54 = vld [vmem:[%s1 + $0x7c] sm:$0xf]
  %v55 = vld [vmem:[%s1 + $0x80] sm:$0xf]
  %v56 = vld [vmem:[%s1 + $0x84] sm:$0xf]
  %v57 = vld [vmem:[%s1 + $0x88] sm:$0xf]
  %v58 = vld [vmem:[%s1 + $0x8c] sm:$0xf]
  %v59 = vld [vmem:[%s1 + $0x90] sm:$0xf]
  %v60 = vld [vmem:[%s1 + $0x94] sm:$0xf]
  %v61 = vld [vmem:[%s1 + $0x98] sm:$0xf]
  %v62 = vld [vmem:[%s1 + $0x9c] sm:$0xf]
  %v63 = vld [vmem:[%s1 + $0xa0] sm:$0xf]
  %v64 = vld [vmem:[%s1 + $0xa4] sm:$0xf]
  %v65 = vld [vmem:[%s1 + $0xa8] sm:$0xf]
  %v66 = vld [vmem:[%s1 + $0xac] sm:$0xf]
  %v67 = vld [vmem:[%s1 + $0xb0] sm:$0xf]
  %v68 = vld [vmem:[%s1 + $0xb4] sm:$0xf]
  %v69 = vld [vmem:[%s1 + $0xb8] sm:$0xf]
  %v70 = vld [vmem:[%s1 + $0xbc] sm:$0xf]
  %v71 = vld [vmem:[%s1 + $0xc0] sm:$0xf]
  %v72 = vld [vmem:[%s1 + $0xc4] sm:$0xf]
  %v73 = vld [vmem:[%s1 + $0xc8] sm:$0xf]
  %v74 = vld [vmem:[%s1 + $0xcc] sm:$0xf]
  %v75 = vld [vmem:[%s1 + $0xd0] sm:$0xf]
  %v76 = vld [vmem:[%s1 + $0xd4] sm:$0xf]
  %v77 = vld [vmem:[%s1 + $0xd8] sm:$0xf]
  %v78 = vld [vmem:[%s1 + $0xdc] sm:$0xf]
  %v79 = vld [vmem:[%s1 + $0xe0] sm:$0xf]
  %v80 = vld [vmem:[%s1 + $0xe4] sm:$0xf]
  %v81 = vld [vmem:[%s1 + $0xe8] sm:$0xf]
  %v82 = vld [vmem:[%s1 + $0xec] sm:$0xf]
  %v83 = vld [vmem:[%s1 + $0xf0] sm:$0xf]
  %v84 = vld [vmem:[%s1 + $0xf4] sm:$0xf]
  %v85 = vld [vmem:[%s1 + $0xf8] sm:$0xf]
  %v86 = vld [vmem:[%s1 + $0xfc] sm:$0xf]
  %v87 = vld [vmem:[%s1 + $0x100] sm:$0xf]
  %v88 = vld [vmem:[%s1 + $0x104] sm:$0xf]
  %v89 = vld [vmem:[%s1 + $0x108] sm:$0xf]
  %v90 = vld [vmem:[%s1 + $0x10c] sm:$0xf]
  %v91 = vld [vmem:[%s1 + $0x110] sm:$0xf]
  %v92 = vld [vmem:[%s1 + $0x114] sm:$0xf]
  %v93 = vld [vmem:[%s1 + $0x118] sm:$0xf]
  %v94 = vld [vmem:[%s1 + $0x11c] sm:$0xf]
  %v95 = vld [vmem:[%s1 + $0x120] sm:$0xf]
  %v96 = vld [vmem:[%s1 + $0x124] sm:$0xf]
  %v97 = vld [vmem:[%s1 + $0x128] sm:$0xf]
  %v98 = vld [vmem:[%s1 + $0x12c] sm:$0xf]
  %v99 = vld [vmem:[%s1 + $0x130] sm:$0xf]
  %v100 = vld [vmem:[%s1 + $0x134] sm:$0xf]
  %v101 = vld [vmem:[%s1 + $0x138] sm:$0xf]
  %v102 = vld [vmem:[%s1 + $0x13c] sm:$0xf]
  %v103 = vld [vmem:[%s1 + $0x140] sm:$0xf]
  %v104 = vld [vmem:[%s1 + $0x144] sm:$0xf]
  %v105 = vld [vmem:[%s1 + $0x148] sm:$0xf]
  %v106 = vld [vmem:[%s1 + $0x14c] sm:$0xf]
  %v107 = vld [vmem:[%s1 + $0x150] sm:$0xf]
  %v108 = vld [vmem:[%s1 + $0x154] sm:$0xf]
  %v109 = vld [vmem:[%s1 + $0x158] sm:$0xf]
  %v110 = vld [vmem:[%s1 + $0x15c] sm:$0xf]
  %v111 = vld [vmem:[%s1 + $0x160] sm:$0xf]
  %v112 = vld [vmem:[%s1 + $0x164] sm:$0xf]
  %v113 = vld [vmem:[%s1 + $0x168] sm:$0xf]
  %v114 = vld [vmem:[%s1 + $0x16c] sm:$0xf]
  %v115 = vld [vmem:[%s1 + $0x170] sm:$0xf]
  %v116 = vld [vmem:[%s1 + $0x174] sm:$0xf]
  %v117 = vld [vmem:[%s1 + $0x178] sm:$0xf]
  %v118 = vld [vmem:[%s1 + $0x17c] sm:$0xf]
  %v119 = vld [vmem:[%s1 + $0x180] sm:$0xf]
  %v120 = vld [vmem:[%s1 + $0x184] sm:$0xf]
  %v121 = vld [vmem:[%s1 + $0x188] sm:$0xf]
  %v122 = vld [vmem:[%s1 + $0x18c] sm:$0xf]
  %v123 = vld [vmem:[%s1 + $0x190] sm:$0xf]
  %v124 = vld [vmem:[%s1 + $0x194] sm:$0xf]
  %v125 = vld [vmem:[%s1 + $0x198] sm:$0xf]
  %v126 = vld [vmem:[%s1 + $0x19c] sm:$0xf]
  %v127 = vld [vmem:[%s1 + $0x1a0] sm:$0xf]
  %v128 = vld [vmem:[%s1 + $0x1a4] sm:$0xf]
  %v129 = vld [vmem:[%s1 + $0x1a8] sm:$0xf]
  %v130 = vld [vmem:[%s1 + $0x1ac] sm:$0xf]
  %v131 = vld [vmem:[%s1 + $0x1b0] sm:$0xf]
  %v132 = vld [vmem:[%s1 + $0x1b4] sm:$0xf]
  %v133 = vld [vmem:[%s1 + $0x1b8] sm:$0xf]
  %v134 = vld [vmem:[%s1 + $0x1bc] sm:$0xf]
  %v135 = vld [vmem:[%s1 + $0x1c0] sm:$0xf]
  %v136 = vld [vmem:[%s1 + $0x1c4] sm:$0xf]
  %v137 = vld [vmem:[%s1 + $0x1c8] sm:$0xf]
  %v138 = vld [vmem:[%s1 + $0x1cc] sm:$0xf]
  %v139 = vld [vmem:[%s1 + $0x1d0] sm:$0xf]
  %v140 = vld [vmem:[%s1 + $0x1d4] sm:$0xf]
  %v141 = vld [vmem:[%s1 + $0x1d8] sm:$0xf]
  %v142 = vld [vmem:[%s1 + $0x1dc] sm:$0xf]
  %v143 = vld [vmem:[%s1 + $0x1e0] sm:$0xf]
  %v144 = vld [vmem:[%s1 + $0x1e4] sm:$0xf]
  %v145 = vld [vmem:[%s1 + $0x1e8] sm:$0xf]
  %v146 = vld [vmem:[%s1 + $0x1ec] sm:$0xf]
  %v147 = vld [vmem:[%s1 + $0x1f0] sm:$0xf]
  %v148 = vld [vmem:[%s1 + $0x1f4] sm:$0xf]
  %v149 = vld [vmem:[%s1 + $0x1f8] sm:$0xf]
  %v150 = vld [vmem:[%s1 + $0x1fc] sm:$0xf]
  %v151 = vld [vmem:[%s2] sm:$0x1]
  %v153 = vlaneseq
  %v154 = vshrl.u32 %v153, 7
  %v155 = vsub.s32 0, %v154
  %v156 = vrot.slane %v151, %v155
  %v166 = vunpack.c.l.b16 %v15
  %v167 = vunpack.c.h.b16 %v15
  %v168 = vunpack.c.l.b16 %v16
  %v169 = vunpack.c.h.b16 %v16
  %v170 = vunpack.c.l.b16 %v17
  %v171 = vunpack.c.h.b16 %v17
  %v172 = vunpack.c.l.b16 %v18
  %v173 = vunpack.c.h.b16 %v18
  %v174 = vunpack.c.l.b16 %v19
  %v175 = vunpack.c.h.b16 %v19
  %v176 = vunpack.c.l.b16 %v20
  %v177 = vunpack.c.h.b16 %v20
  %v178 = vunpack.c.l.b16 %v21
  %v179 = vunpack.c.h.b16 %v21
  %v180 = vunpack.c.l.b16 %v22
  %v181 = vunpack.c.h.b16 %v22
  %v182 = vpack.c.b16 %v174, %v166
  %v183 = vpack.c.b16 %v175, %v167
  %v184 = vpack.c.b16 %v176, %v168
  %v185 = vpack.c.b16 %v177, %v169
  %v186 = vpack.c.b16 %v178, %v170
  %v187 = vpack.c.b16 %v179, %v171
  %v188 = vpack.c.b16 %v180, %v172
  %v189 = vpack.c.b16 %v181, %v173
  %v326 = vunpack.c.l.b16 %v23
  %v327 = vunpack.c.l.b16 %v24
  %v328 = vunpack.c.l.b16 %v25
  %v329 = vunpack.c.l.b16 %v26
  %v330 = vunpack.c.l.b16 %v27
  %v331 = vunpack.c.l.b16 %v28
  %v332 = vunpack.c.l.b16 %v29
  %v333 = vunpack.c.l.b16 %v30
  %v334 = vunpack.c.l.b16 %v31
  %v335 = vunpack.c.l.b16 %v32
  %v336 = vunpack.c.l.b16 %v33
  %v337 = vunpack.c.l.b16 %v34
  %v338 = vunpack.c.l.b16 %v35
  %v339 = vunpack.c.l.b16 %v36
  %v340 = vunpack.c.l.b16 %v37
  %v341 = vunpack.c.l.b16 %v38
  %v342 = vunpack.c.l.b16 %v39
  %v343 = vunpack.c.l.b16 %v40
  %v344 = vunpack.c.l.b16 %v41
  %v345 = vunpack.c.l.b16 %v42
  %v346 = vunpack.c.l.b16 %v43
  %v347 = vunpack.c.l.b16 %v44
  %v348 = vunpack.c.l.b16 %v45
  %v349 = vunpack.c.l.b16 %v46
  %v350 = vunpack.c.l.b16 %v47
  %v351 = vunpack.c.l.b16 %v48
  %v352 = vunpack.c.l.b16 %v49
  %v353 = vunpack.c.l.b16 %v50
  %v354 = vunpack.c.l.b16 %v51
  %v355 = vunpack.c.l.b16 %v52
  %v356 = vunpack.c.l.b16 %v53
  %v357 = vunpack.c.l.b16 %v54
  %v358 = vunpack.c.l.b16 %v55
  %v359 = vunpack.c.l.b16 %v56
  %v360 = vunpack.c.l.b16 %v57
  %v361 = vunpack.c.l.b16 %v58
  %v362 = vunpack.c.l.b16 %v59
  %v363 = vunpack.c.l.b16 %v60
  %v364 = vunpack.c.l.b16 %v61
  %v365 = vunpack.c.l.b16 %v62
  %v366 = vunpack.c.l.b16 %v63
  %v367 = vunpack.c.l.b16 %v64
  %v368 = vunpack.c.l.b16 %v65
  %v369 = vunpack.c.l.b16 %v66
  %v370 = vunpack.c.l.b16 %v67
  %v371 = vunpack.c.l.b16 %v68
  %v372 = vunpack.c.l.b16 %v69
  %v373 = vunpack.c.l.b16 %v70
  %v374 = vunpack.c.l.b16 %v71
  %v375 = vunpack.c.l.b16 %v72
  %v376 = vunpack.c.l.b16 %v73
  %v377 = vunpack.c.l.b16 %v74
  %v378 = vunpack.c.l.b16 %v75
  %v379 = vunpack.c.l.b16 %v76
  %v380 = vunpack.c.l.b16 %v77
  %v381 = vunpack.c.l.b16 %v78
  %v382 = vunpack.c.l.b16 %v79
  %v383 = vunpack.c.l.b16 %v80
  %v384 = vunpack.c.l.b16 %v81
  %v385 = vunpack.c.l.b16 %v82
  %v386 = vunpack.c.l.b16 %v83
  %v387 = vunpack.c.l.b16 %v84
  %v388 = vunpack.c.l.b16 %v85
  %v389 = vunpack.c.l.b16 %v86
  %v390 = vunpack.c.l.b16 %v87
  %v391 = vunpack.c.l.b16 %v88
  %v392 = vunpack.c.l.b16 %v89
  %v393 = vunpack.c.l.b16 %v90
  %v394 = vunpack.c.l.b16 %v91
  %v395 = vunpack.c.l.b16 %v92
  %v396 = vunpack.c.l.b16 %v93
  %v397 = vunpack.c.l.b16 %v94
  %v398 = vunpack.c.l.b16 %v95
  %v399 = vunpack.c.l.b16 %v96
  %v400 = vunpack.c.l.b16 %v97
  %v401 = vunpack.c.l.b16 %v98
  %v402 = vunpack.c.l.b16 %v99
  %v403 = vunpack.c.l.b16 %v100
  %v404 = vunpack.c.l.b16 %v101
  %v405 = vunpack.c.l.b16 %v102
  %v406 = vunpack.c.l.b16 %v103
  %v407 = vunpack.c.l.b16 %v104
  %v408 = vunpack.c.l.b16 %v105
  %v409 = vunpack.c.l.b16 %v106
  %v410 = vunpack.c.l.b16 %v107
  %v411 = vunpack.c.l.b16 %v108
  %v412 = vunpack.c.l.b16 %v109
  %v413 = vunpack.c.l.b16 %v110
  %v414 = vunpack.c.l.b16 %v111
  %v415 = vunpack.c.l.b16 %v112
  %v416 = vunpack.c.l.b16 %v113
  %v417 = vunpack.c.l.b16 %v114
  %v418 = vunpack.c.l.b16 %v115
  %v419 = vunpack.c.l.b16 %v116
  %v420 = vunpack.c.l.b16 %v117
  %v421 = vunpack.c.l.b16 %v118
  %v422 = vunpack.c.l.b16 %v119
  %v423 = vunpack.c.l.b16 %v120
  %v424 = vunpack.c.l.b16 %v121
  %v425 = vunpack.c.l.b16 %v122
  %v426 = vunpack.c.l.b16 %v123
  %v427 = vunpack.c.l.b16 %v124
  %v428 = vunpack.c.l.b16 %v125
  %v429 = vunpack.c.l.b16 %v126
  %v430 = vunpack.c.l.b16 %v127
  %v431 = vunpack.c.l.b16 %v128
  %v432 = vunpack.c.l.b16 %v129
  %v433 = vunpack.c.l.b16 %v130
  %v434 = vunpack.c.l.b16 %v131
  %v435 = vunpack.c.l.b16 %v132
  %v436 = vunpack.c.l.b16 %v133
  %v437 = vunpack.c.l.b16 %v134
  %v438 = vunpack.c.l.b16 %v135
  %v439 = vunpack.c.l.b16 %v136
  %v440 = vunpack.c.l.b16 %v137
  %v441 = vunpack.c.l.b16 %v138
  %v442 = vunpack.c.l.b16 %v139
  %v443 = vunpack.c.l.b16 %v140
  %v444 = vunpack.c.l.b16 %v141
  %v445 = vunpack.c.l.b16 %v142
  %v446 = vunpack.c.l.b16 %v143
  %v447 = vunpack.c.l.b16 %v144
  %v448 = vunpack.c.l.b16 %v145
  %v449 = vunpack.c.l.b16 %v146
  %v450 = vunpack.c.l.b16 %v147
  %v451 = vunpack.c.l.b16 %v148
  %v452 = vunpack.c.l.b16 %v149
  %v453 = vunpack.c.l.b16 %v150
  %v454 = vpack.c.b16 %v327, %v326
  %v455 = vpack.c.b16 %v329, %v328
  %v456 = vpack.c.b16 %v331, %v330
  %v457 = vpack.c.b16 %v333, %v332
  %v458 = vpack.c.b16 %v335, %v334
  %v459 = vpack.c.b16 %v337, %v336
  %v460 = vpack.c.b16 %v339, %v338
  %v461 = vpack.c.b16 %v341, %v340
  %v462 = vpack.c.b16 %v343, %v342
  %v463 = vpack.c.b16 %v345, %v344
  %v464 = vpack.c.b16 %v347, %v346
  %v465 = vpack.c.b16 %v349, %v348
  %v466 = vpack.c.b16 %v351, %v350
  %v467 = vpack.c.b16 %v353, %v352
  %v468 = vpack.c.b16 %v355, %v354
  %v469 = vpack.c.b16 %v357, %v356
  %v470 = vpack.c.b16 %v359, %v358
  %v471 = vpack.c.b16 %v361, %v360
  %v472 = vpack.c.b16 %v363, %v362
  %v473 = vpack.c.b16 %v365, %v364
  %v474 = vpack.c.b16 %v367, %v366
  %v475 = vpack.c.b16 %v369, %v368
  %v476 = vpack.c.b16 %v371, %v370
  %v477 = vpack.c.b16 %v373, %v372
  %v478 = vpack.c.b16 %v375, %v374
  %v479 = vpack.c.b16 %v377, %v376
  %v480 = vpack.c.b16 %v379, %v378
  %v481 = vpack.c.b16 %v381, %v380
  %v482 = vpack.c.b16 %v383, %v382
  %v483 = vpack.c.b16 %v385, %v384
  %v484 = vpack.c.b16 %v387, %v386
  %v485 = vpack.c.b16 %v389, %v388
  %v486 = vpack.c.b16 %v391, %v390
  %v487 = vpack.c.b16 %v393, %v392
  %v488 = vpack.c.b16 %v395, %v394
  %v489 = vpack.c.b16 %v397, %v396
  %v490 = vpack.c.b16 %v399, %v398
  %v491 = vpack.c.b16 %v401, %v400
  %v492 = vpack.c.b16 %v403, %v402
  %v493 = vpack.c.b16 %v405, %v404
  %v494 = vpack.c.b16 %v407, %v406
  %v495 = vpack.c.b16 %v409, %v408
  %v496 = vpack.c.b16 %v411, %v410
  %v497 = vpack.c.b16 %v413, %v412
  %v498 = vpack.c.b16 %v415, %v414
  %v499 = vpack.c.b16 %v417, %v416
  %v500 = vpack.c.b16 %v419, %v418
  %v501 = vpack.c.b16 %v421, %v420
  %v502 = vpack.c.b16 %v423, %v422
  %v503 = vpack.c.b16 %v425, %v424
  %v504 = vpack.c.b16 %v427, %v426
  %v505 = vpack.c.b16 %v429, %v428
  %v506 = vpack.c.b16 %v431, %v430
  %v507 = vpack.c.b16 %v433, %v432
  %v508 = vpack.c.b16 %v435, %v434
  %v509 = vpack.c.b16 %v437, %v436
  %v510 = vpack.c.b16 %v439, %v438
  %v511 = vpack.c.b16 %v441, %v440
  %v512 = vpack.c.b16 %v443, %v442
  %v513 = vpack.c.b16 %v445, %v444
  %v514 = vpack.c.b16 %v447, %v446
  %v515 = vpack.c.b16 %v449, %v448
  %v516 = vpack.c.b16 %v451, %v450
  %v517 = vpack.c.b16 %v453, %v452
  %582 = vmatprep.subr.bf16.mxu0 0
  %583 = vmatpush1.bf16.msra.mxu0 %v454
  %584 = vmatprep.subr.bf16.mxu0 0
  %585 = vmatpush1.bf16.msra.mxu0 %v455
  %586 = vmatprep.subr.bf16.mxu0 0
  %587 = vmatpush1.bf16.msra.mxu0 %v456
  %588 = vmatprep.subr.bf16.mxu0 0
  %589 = vmatpush1.bf16.msra.mxu0 %v457
  %590 = vmatprep.subr.bf16.mxu0 0
  %591 = vmatpush1.bf16.msra.mxu0 %v458
  %592 = vmatprep.subr.bf16.mxu0 0
  %593 = vmatpush1.bf16.msra.mxu0 %v459
  %594 = vmatprep.subr.bf16.mxu0 0
  %595 = vmatpush1.bf16.msra.mxu0 %v460
  %596 = vmatprep.subr.bf16.mxu0 0
  %597 = vmatpush1.bf16.msra.mxu0 %v461
  %598 = vmatprep.subr.bf16.mxu0 0
  %599 = vmatpush1.bf16.msra.mxu0 %v462
  %600 = vmatprep.subr.bf16.mxu0 0
  %601 = vmatpush1.bf16.msra.mxu0 %v463
  %602 = vmatprep.subr.bf16.mxu0 0
  %603 = vmatpush1.bf16.msra.mxu0 %v464
  %604 = vmatprep.subr.bf16.mxu0 0
  %605 = vmatpush1.bf16.msra.mxu0 %v465
  %606 = vmatprep.subr.bf16.mxu0 0
  %607 = vmatpush1.bf16.msra.mxu0 %v466
  %608 = vmatprep.subr.bf16.mxu0 0
  %609 = vmatpush1.bf16.msra.mxu0 %v467
  %610 = vmatprep.subr.bf16.mxu0 0
  %611 = vmatpush1.bf16.msra.mxu0 %v468
  %612 = vmatprep.subr.bf16.mxu0 0
  %613 = vmatpush1.bf16.msra.mxu0 %v469
  %614 = vmatprep.mubr.bf16.mxu0 %v183
  %615 = vmatmul.mubr.bf16.gmra.mrb[0].mxu0 %v182
  %v616 = vpop.f32.mrb[0].mxu0
  %v617 = vadd.f32 %v156, %v616
  %v618 = vpop.f32.mrb[0].mxu0
  %v619 = vpop.f32.mrb[0].mxu0
  %v620 = vadd.f32 %v156, %v619
  %v621 = vpop.f32.mrb[0].mxu0
  %622 = vdwg.mxu0
  %623 = vmatprep.subr.bf16.mxu0 0
  %624 = vmatpush1.bf16.msra.mxu0 %v470
  %625 = vmatprep.subr.bf16.mxu0 0
  %626 = vmatpush1.bf16.msra.mxu0 %v471
  %627 = vmatprep.subr.bf16.mxu0 0
  %628 = vmatpush1.bf16.msra.mxu0 %v472
  %629 = vmatprep.subr.bf16.mxu0 0
  %630 = vmatpush1.bf16.msra.mxu0 %v473
  %631 = vmatprep.subr.bf16.mxu0 0
  %632 = vmatpush1.bf16.msra.mxu0 %v474
  %633 = vmatprep.subr.bf16.mxu0 0
  %634 = vmatpush1.bf16.msra.mxu0 %v475
  %635 = vmatprep.subr.bf16.mxu0 0
  %636 = vmatpush1.bf16.msra.mxu0 %v476
  %637 = vmatprep.subr.bf16.mxu0 0
  %638 = vmatpush1.bf16.msra.mxu0 %v477
  %639 = vmatprep.subr.bf16.mxu0 0
  %640 = vmatpush1.bf16.msra.mxu0 %v478
  %641 = vmatprep.subr.bf16.mxu0 0
  %642 = vmatpush1.bf16.msra.mxu0 %v479
  %643 = vmatprep.subr.bf16.mxu0 0
  %644 = vmatpush1.bf16.msra.mxu0 %v480
  %645 = vmatprep.subr.bf16.mxu0 0
  %646 = vmatpush1.bf16.msra.mxu0 %v481
  %647 = vmatprep.subr.bf16.mxu0 0
  %648 = vmatpush1.bf16.msra.mxu0 %v482
  %649 = vmatprep.subr.bf16.mxu0 0
  %650 = vmatpush1.bf16.msra.mxu0 %v483
  %651 = vmatprep.subr.bf16.mxu0 0
  %652 = vmatpush1.bf16.msra.mxu0 %v484
  %653 = vmatprep.subr.bf16.mxu0 0
  %654 = vmatpush1.bf16.msra.mxu0 %v485
  %655 = vmatprep.mubr.bf16.mxu0 %v185
  %656 = vmatmul.mubr.bf16.gmra.mrb[0].mxu0 %v184
  %v657 = vpop.f32.mrb[0].mxu0
  %v658 = vadd.f32 %v617, %v657
  %v659 = vpop.f32.mrb[0].mxu0
  %v660 = vpop.f32.mrb[0].mxu0
  %v661 = vadd.f32 %v620, %v660
  %v662 = vpop.f32.mrb[0].mxu0
  %663 = vdwg.mxu0
  %664 = vmatprep.subr.bf16.mxu0 0
  %665 = vmatpush1.bf16.msra.mxu0 %v486
  %666 = vmatprep.subr.bf16.mxu0 0
  %667 = vmatpush1.bf16.msra.mxu0 %v487
  %668 = vmatprep.subr.bf16.mxu0 0
  %669 = vmatpush1.bf16.msra.mxu0 %v488
  %670 = vmatprep.subr.bf16.mxu0 0
  %671 = vmatpush1.bf16.msra.mxu0 %v489
  %672 = vmatprep.subr.bf16.mxu0 0
  %673 = vmatpush1.bf16.msra.mxu0 %v490
  %674 = vmatprep.subr.bf16.mxu0 0
  %675 = vmatpush1.bf16.msra.mxu0 %v491
  %676 = vmatprep.subr.bf16.mxu0 0
  %677 = vmatpush1.bf16.msra.mxu0 %v492
  %678 = vmatprep.subr.bf16.mxu0 0
  %679 = vmatpush1.bf16.msra.mxu0 %v493
  %680 = vmatprep.subr.bf16.mxu0 0
  %681 = vmatpush1.bf16.msra.mxu0 %v494
  %682 = vmatprep.subr.bf16.mxu0 0
  %683 = vmatpush1.bf16.msra.mxu0 %v495
  %684 = vmatprep.subr.bf16.mxu0 0
  %685 = vmatpush1.bf16.msra.mxu0 %v496
  %686 = vmatprep.subr.bf16.mxu0 0
  %687 = vmatpush1.bf16.msra.mxu0 %v497
  %688 = vmatprep.subr.bf16.mxu0 0
  %689 = vmatpush1.bf16.msra.mxu0 %v498
  %690 = vmatprep.subr.bf16.mxu0 0
  %691 = vmatpush1.bf16.msra.mxu0 %v499
  %692 = vmatprep.subr.bf16.mxu0 0
  %693 = vmatpush1.bf16.msra.mxu0 %v500
  %694 = vmatprep.subr.bf16.mxu0 0
  %695 = vmatpush1.bf16.msra.mxu0 %v501
  %696 = vmatprep.mubr.bf16.mxu0 %v187
  %697 = vmatmul.mubr.bf16.gmra.mrb[0].mxu0 %v186
  %v698 = vpop.f32.mrb[0].mxu0
  %v699 = vadd.f32 %v658, %v698
  %v700 = vpop.f32.mrb[0].mxu0
  %v701 = vpop.f32.mrb[0].mxu0
  %v702 = vadd.f32 %v661, %v701
  %v703 = vpop.f32.mrb[0].mxu0
  %704 = vdwg.mxu0
  %705 = vmatprep.subr.bf16.mxu0 0
  %706 = vmatpush1.bf16.msra.mxu0 %v502
  %707 = vmatprep.subr.bf16.mxu0 0
  %708 = vmatpush1.bf16.msra.mxu0 %v503
  %709 = vmatprep.subr.bf16.mxu0 0
  %710 = vmatpush1.bf16.msra.mxu0 %v504
  %711 = vmatprep.subr.bf16.mxu0 0
  %712 = vmatpush1.bf16.msra.mxu0 %v505
  %713 = vmatprep.subr.bf16.mxu0 0
  %714 = vmatpush1.bf16.msra.mxu0 %v506
  %715 = vmatprep.subr.bf16.mxu0 0
  %716 = vmatpush1.bf16.msra.mxu0 %v507
  %717 = vmatprep.subr.bf16.mxu0 0
  %718 = vmatpush1.bf16.msra.mxu0 %v508
  %719 = vmatprep.subr.bf16.mxu0 0
  %720 = vmatpush1.bf16.msra.mxu0 %v509
  %721 = vmatprep.subr.bf16.mxu0 0
  %722 = vmatpush1.bf16.msra.mxu0 %v510
  %723 = vmatprep.subr.bf16.mxu0 0
  %724 = vmatpush1.bf16.msra.mxu0 %v511
  %725 = vmatprep.subr.bf16.mxu0 0
  %726 = vmatpush1.bf16.msra.mxu0 %v512
  %727 = vmatprep.subr.bf16.mxu0 0
  %728 = vmatpush1.bf16.msra.mxu0 %v513
  %729 = vmatprep.subr.bf16.mxu0 0
  %730 = vmatpush1.bf16.msra.mxu0 %v514
  %731 = vmatprep.subr.bf16.mxu0 0
  %732 = vmatpush1.bf16.msra.mxu0 %v515
  %733 = vmatprep.subr.bf16.mxu0 0
  %734 = vmatpush1.bf16.msra.mxu0 %v516
  %735 = vmatprep.subr.bf16.mxu0 0
  %736 = vmatpush1.bf16.msra.mxu0 %v517
  %737 = vmatprep.mubr.bf16.mxu0 %v189
  %738 = vmatmul.mubr.bf16.gmra.mrb[0].mxu0 %v188
  %v739 = vpop.f32.mrb[0].mxu0
  %v740 = vadd.f32 %v699, %v739
  %v741 = vpop.f32.mrb[0].mxu0
  %v742 = vpop.f32.mrb[0].mxu0
  %v743 = vadd.f32 %v702, %v742
  %v744 = vpop.f32.mrb[0].mxu0
  %745 = vdwg.mxu0
  %vm746 = vcmp.gt.f32.partialorder %v740, 0.0
  %vm747 = vcmp.gt.f32.partialorder %v743, 0.0
  %v748 = vmul.f32 %v740, 0.2
  %v749 = vmul.f32 %v743, 0.2
  %v750 = vsel %vm746, %v740, %v748
  %v751 = vsel %vm747, %v743, %v749
  %v752 = vpack.c.bf16 %v751, %v750
  %v754 = vunpack.c.l.b16 %v752
  %v755 = vunpack.c.h.b16 %v752
  %v756 = vpack.c.b16 %v754, %v754
  %v757 = vpack.c.b16 %v755, %v755
  %760 = vst [vmem:[%s3] sm:$0xf] %v756
  %761 = vst [vmem:[%s3 + $0x4] sm:$0xf] %v757
  // Predicated region
  $region14: #{unet_forward.16} parent=0 // pred_check
    _
  $region15: #{unet_forward.16} parent=0 // pred_check_branch
    %763 = sbr.rel (0) target = $region17
  $region16: #{unet_forward.16} parent=0 // pred_region
    _
  $region17: #{unet_forward.16} parent=0 // pred_fallthru
    _
  // Predicated region
  $region18: #{unet_forward.16} parent=0 // pred_check
    _
  $region19: #{unet_forward.16} parent=0 // pred_check_branch
    %765 = sbr.rel (0) target = $region21
  $region20: #{unet_forward.16} parent=0 // pred_region
    _
  $region21: #{unet_forward.16} parent=0 // pred_fallthru
    _

// kernel: unet_forward.18
$region0: #{unet_forward.18}
  #allocation0 [shape = 'u32[]', space=smem, size = 0x4, offset = 0x4, fixed_abs, tag = 'smem constant byte address 0x4 - core index']
  #allocation1 [shape = 'u32[144,128]{1,0:T(1,128)}', space=vmem, size = 0x12000, scoped, tag = 'internal scratch']
  %s0 = inlined_call_operand.vmem [shape: bf16[16,576], index: 0, kind: input, shape index: {}]
  %s1 = inlined_call_operand.vmem [shape: bf16[576,256], index: 1, kind: input, shape index: {}]
  %s2 = inlined_call_operand.vmem [shape: f32[1,256], index: 2, kind: input, shape index: {}]
  %s3 = inlined_call_operand.vmem [shape: bf16[16,256], index: 3, kind: output, shape index: {}]
  %s4 = sld [smem:[#allocation0]]
  $region22: #{unet_forward.18} parent=0
    _
  %s6 = ssub.s32 1, %s4
  %s7 = scalar_select 0, %s6, %s4
  // Predicated region
  $region2: #{unet_forward.18} parent=0 // pred_check
    _
  $region3: #{unet_forward.18} parent=0 // pred_check_branch
    %9 = sbr.rel (0) target = $region5
  $region4: #{unet_forward.18} parent=0 // pred_region
    _
  $region5: #{unet_forward.18} parent=0 // pred_fallthru
    _
  // Predicated region
  $region6: #{unet_forward.18} parent=0 // pred_check
    _
  $region7: #{unet_forward.18} parent=0 // pred_check_branch
    %11 = sbr.rel (0) target = $region9
  $region8: #{unet_forward.18} parent=0 // pred_region
    _
  $region9: #{unet_forward.18} parent=0 // pred_fallthru
    _
  // Predicated region
  $region10: #{unet_forward.18} parent=0 // pred_check
    _
  $region11: #{unet_forward.18} parent=0 // pred_check_branch
    %13 = sbr.rel (0) target = $region13
  $region12: #{unet_forward.18} parent=0 // pred_region
    _
  $region13: #{unet_forward.18} parent=0 // pred_fallthru
    _
  %v15 = vld [vmem:[%s0] sm:$0xff]
  %v16 = vld [vmem:[%s0 + $0x8] sm:$0xff]
  %v17 = vld [vmem:[%s0 + $0x10] sm:$0xf]
  %v18 = vld [vmem:[%s0 + $0x14] sm:$0xff]
  %v19 = vld [vmem:[%s0 + $0x1c] sm:$0xff]
  %v20 = vld [vmem:[%s0 + $0x24] sm:$0xf]
  %v21 = vld [vmem:[%s1] sm:$0xff]
  %v22 = vld [vmem:[%s1 + $0x8] sm:$0xff]
  %v23 = vld [vmem:[%s1 + $0x10] sm:$0xff]
  %v24 = vld [vmem:[%s1 + $0x18] sm:$0xff]
  %v25 = vld [vmem:[%s1 + $0x20] sm:$0xff]
  %v26 = vld [vmem:[%s1 + $0x28] sm:$0xff]
  %v27 = vld [vmem:[%s1 + $0x30] sm:$0xff]
  %v28 = vld [vmem:[%s1 + $0x38] sm:$0xff]
  %v29 = vld [vmem:[%s1 + $0x40] sm:$0xff]
  %v30 = vld [vmem:[%s1 + $0x48] sm:$0xff]
  %v31 = vld [vmem:[%s1 + $0x50] sm:$0xff]
  %v32 = vld [vmem:[%s1 + $0x58] sm:$0xff]
  %v33 = vld [vmem:[%s1 + $0x60] sm:$0xff]
  %v34 = vld [vmem:[%s1 + $0x68] sm:$0xff]
  %v35 = vld [vmem:[%s1 + $0x70] sm:$0xff]
  %v36 = vld [vmem:[%s1 + $0x78] sm:$0xff]
  %v37 = vld [vmem:[%s1 + $0x80] sm:$0xff]
  %v38 = vld [vmem:[%s1 + $0x88] sm:$0xff]
  %v39 = vld [vmem:[%s1 + $0x90] sm:$0xff]
  %v40 = vld [vmem:[%s1 + $0x98] sm:$0xff]
  %v41 = vld [vmem:[%s1 + $0xa0] sm:$0xff]
  %v42 = vld [vmem:[%s1 + $0xa8] sm:$0xff]
  %v43 = vld [vmem:[%s1 + $0xb0] sm:$0xff]
  %v44 = vld [vmem:[%s1 + $0xb8] sm:$0xff]
  %v45 = vld [vmem:[%s1 + $0xc0] sm:$0xff]
  %v46 = vld [vmem:[%s1 + $0xc8] sm:$0xff]
  %v47 = vld [vmem:[%s1 + $0xd0] sm:$0xff]
  %v48 = vld [vmem:[%s1 + $0xd8] sm:$0xff]
  %v49 = vld [vmem:[%s1 + $0xe0] sm:$0xff]
  %v50 = vld [vmem:[%s1 + $0xe8] sm:$0xff]
  %v51 = vld [vmem:[%s1 + $0xf0] sm:$0xff]
  %v52 = vld [vmem:[%s1 + $0xf8] sm:$0xff]
  %v53 = vld [vmem:[%s1 + $0x100] sm:$0xff]
  %v54 = vld [vmem:[%s1 + $0x108] sm:$0xff]
  %v55 = vld [vmem:[%s1 + $0x110] sm:$0xff]
  %v56 = vld [vmem:[%s1 + $0x118] sm:$0xff]
  %v57 = vld [vmem:[%s1 + $0x120] sm:$0xff]
  %v58 = vld [vmem:[%s1 + $0x128] sm:$0xff]
  %v59 = vld [vmem:[%s1 + $0x130] sm:$0xff]
  %v60 = vld [vmem:[%s1 + $0x138] sm:$0xff]
  %v61 = vld [vmem:[%s1 + $0x140] sm:$0xff]
  %v62 = vld [vmem:[%s1 + $0x148] sm:$0xff]
  %v63 = vld [vmem:[%s1 + $0x150] sm:$0xff]
  %v64 = vld [vmem:[%s1 + $0x158] sm:$0xff]
  %v65 = vld [vmem:[%s1 + $0x160] sm:$0xff]
  %v66 = vld [vmem:[%s1 + $0x168] sm:$0xff]
  %v67 = vld [vmem:[%s1 + $0x170] sm:$0xff]
  %v68 = vld [vmem:[%s1 + $0x178] sm:$0xff]
  %v69 = vld [vmem:[%s1 + $0x180] sm:$0xff]
  %v70 = vld [vmem:[%s1 + $0x188] sm:$0xff]
  %v71 = vld [vmem:[%s1 + $0x190] sm:$0xff]
  %v72 = vld [vmem:[%s1 + $0x198] sm:$0xff]
  %v73 = vld [vmem:[%s1 + $0x1a0] sm:$0xff]
  %v74 = vld [vmem:[%s1 + $0x1a8] sm:$0xff]
  %v75 = vld [vmem:[%s1 + $0x1b0] sm:$0xff]
  %v76 = vld [vmem:[%s1 + $0x1b8] sm:$0xff]
  %v77 = vld [vmem:[%s1 + $0x1c0] sm:$0xff]
  %v78 = vld [vmem:[%s1 + $0x1c8] sm:$0xff]
  %v79 = vld [vmem:[%s1 + $0x1d0] sm:$0xff]
  %v80 = vld [vmem:[%s1 + $0x1d8] sm:$0xff]
  %v81 = vld [vmem:[%s1 + $0x1e0] sm:$0xff]
  %v82 = vld [vmem:[%s1 + $0x1e8] sm:$0xff]
  %v83 = vld [vmem:[%s1 + $0x1f0] sm:$0xff]
  %v84 = vld [vmem:[%s1 + $0x1f8] sm:$0xff]
  %v85 = vld [vmem:[%s1 + $0x200] sm:$0xff]
  %v86 = vld [vmem:[%s1 + $0x208] sm:$0xff]
  %v87 = vld [vmem:[%s1 + $0x210] sm:$0xff]
  %v88 = vld [vmem:[%s1 + $0x218] sm:$0xff]
  %v89 = vld [vmem:[%s1 + $0x220] sm:$0xff]
  %v90 = vld [vmem:[%s1 + $0x228] sm:$0xff]
  %v91 = vld [vmem:[%s1 + $0x230] sm:$0xff]
  %v92 = vld [vmem:[%s1 + $0x238] sm:$0xff]
  %v93 = vld [vmem:[%s2] sm:$0x3]
  %v95 = vlaneseq
  %v96 = vshrl.u32 %v95, 7
  %v97 = vsub.s32 0, %v96
  %v98 = vrot.slane %v93, %v97
  %v99 = vlaneseq
  %v100 = vshrl.u32 %v99, 7
  %v101 = vsub.s32 1, %v100
  %v102 = vrot.slane %v93, %v101
  %v111 = vunpack.c.l.b16 %v15
  %v112 = vunpack.c.h.b16 %v15
  %v113 = vunpack.c.l.b16 %v16
  %v114 = vunpack.c.h.b16 %v16
  %v115 = vunpack.c.l.b16 %v17
  %v116 = vunpack.c.l.b16 %v18
  %v117 = vunpack.c.h.b16 %v18
  %v118 = vunpack.c.l.b16 %v19
  %v119 = vunpack.c.h.b16 %v19
  %v120 = vunpack.c.l.b16 %v20
  %v121 = vpack.c.b16 %v116, %v111
  %v122 = vpack.c.b16 %v117, %v112
  %v123 = vpack.c.b16 %v118, %v113
  %v124 = vpack.c.b16 %v119, %v114
  %v125 = vpack.c.b16 %v120, %v115
  %v202 = vunpack.c.l.b16 %v21
  %v203 = vunpack.c.h.b16 %v21
  %v204 = vunpack.c.l.b16 %v22
  %v205 = vunpack.c.h.b16 %v22
  %v206 = vunpack.c.l.b16 %v23
  %v207 = vunpack.c.h.b16 %v23
  %v208 = vunpack.c.l.b16 %v24
  %v209 = vunpack.c.h.b16 %v24
  %v210 = vunpack.c.l.b16 %v25
  %v211 = vunpack.c.h.b16 %v25
  %v212 = vunpack.c.l.b16 %v26
  %v213 = vunpack.c.h.b16 %v26
  %v214 = vunpack.c.l.b16 %v27
  %v215 = vunpack.c.h.b16 %v27
  %v216 = vunpack.c.l.b16 %v28
  %v217 = vunpack.c.h.b16 %v28
  %v218 = vunpack.c.l.b16 %v29
  %v219 = vunpack.c.h.b16 %v29
  %v220 = vunpack.c.l.b16 %v30
  %v221 = vunpack.c.h.b16 %v30
  %v222 = vunpack.c.l.b16 %v31
  %v223 = vunpack.c.h.b16 %v31
  %v224 = vunpack.c.l.b16 %v32
  %v225 = vunpack.c.h.b16 %v32
  %v226 = vunpack.c.l.b16 %v33
  %v227 = vunpack.c.h.b16 %v33
  %v228 = vunpack.c.l.b16 %v34
  %v229 = vunpack.c.h.b16 %v34
  %v230 = vunpack.c.l.b16 %v35
  %v231 = vunpack.c.h.b16 %v35
  %v232 = vunpack.c.l.b16 %v36
  %v233 = vunpack.c.h.b16 %v36
  %v234 = vunpack.c.l.b16 %v37
  %v235 = vunpack.c.h.b16 %v37
  %v236 = vunpack.c.l.b16 %v38
  %v237 = vunpack.c.h.b16 %v38
  %v238 = vunpack.c.l.b16 %v39
  %v239 = vunpack.c.h.b16 %v39
  %v240 = vunpack.c.l.b16 %v40
  %v241 = vunpack.c.h.b16 %v40
  %v242 = vunpack.c.l.b16 %v41
  %v243 = vunpack.c.h.b16 %v41
  %v244 = vunpack.c.l.b16 %v42
  %v245 = vunpack.c.h.b16 %v42
  %v246 = vunpack.c.l.b16 %v43
  %v247 = vunpack.c.h.b16 %v43
  %v248 = vunpack.c.l.b16 %v44
  %v249 = vunpack.c.h.b16 %v44
  %v250 = vunpack.c.l.b16 %v45
  %v251 = vunpack.c.h.b16 %v45
  %v252 = vunpack.c.l.b16 %v46
  %v253 = vunpack.c.h.b16 %v46
  %v254 = vunpack.c.l.b16 %v47
  %v255 = vunpack.c.h.b16 %v47
  %v256 = vunpack.c.l.b16 %v48
  %v257 = vunpack.c.h.b16 %v48
  %v258 = vunpack.c.l.b16 %v49
  %v259 = vunpack.c.h.b16 %v49
  %v260 = vunpack.c.l.b16 %v50
  %v261 = vunpack.c.h.b16 %v50
  %v262 = vunpack.c.l.b16 %v51
  %v263 = vunpack.c.h.b16 %v51
  %v264 = vunpack.c.l.b16 %v52
  %v265 = vunpack.c.h.b16 %v52
  %v266 = vunpack.c.l.b16 %v53
  %v267 = vunpack.c.h.b16 %v53
  %v268 = vunpack.c.l.b16 %v54
  %v269 = vunpack.c.h.b16 %v54
  %v270 = vunpack.c.l.b16 %v55
  %v271 = vunpack.c.h.b16 %v55
  %v272 = vunpack.c.l.b16 %v56
  %v273 = vunpack.c.h.b16 %v56
  %v274 = vunpack.c.l.b16 %v57
  %v275 = vunpack.c.h.b16 %v57
  %v276 = vunpack.c.l.b16 %v58
  %v277 = vunpack.c.h.b16 %v58
  %v278 = vunpack.c.l.b16 %v59
  %v279 = vunpack.c.h.b16 %v59
  %v280 = vunpack.c.l.b16 %v60
  %v281 = vunpack.c.h.b16 %v60
  %v282 = vunpack.c.l.b16 %v61
  %v283 = vunpack.c.h.b16 %v61
  %v284 = vunpack.c.l.b16 %v62
  %v285 = vunpack.c.h.b16 %v62
  %v286 = vunpack.c.l.b16 %v63
  %v287 = vunpack.c.h.b16 %v63
  %v288 = vunpack.c.l.b16 %v64
  %v289 = vunpack.c.h.b16 %v64
  %v290 = vunpack.c.l.b16 %v65
  %v291 = vunpack.c.h.b16 %v65
  %v292 = vunpack.c.l.b16 %v66
  %v293 = vunpack.c.h.b16 %v66
  %v294 = vunpack.c.l.b16 %v67
  %v295 = vunpack.c.h.b16 %v67
  %v296 = vunpack.c.l.b16 %v68
  %v297 = vunpack.c.h.b16 %v68
  %v298 = vunpack.c.l.b16 %v69
  %v299 = vunpack.c.h.b16 %v69
  %v300 = vunpack.c.l.b16 %v70
  %v301 = vunpack.c.h.b16 %v70
  %v302 = vunpack.c.l.b16 %v71
  %v303 = vunpack.c.h.b16 %v71
  %v304 = vunpack.c.l.b16 %v72
  %v305 = vunpack.c.h.b16 %v72
  %v306 = vunpack.c.l.b16 %v73
  %v307 = vunpack.c.h.b16 %v73
  %v308 = vunpack.c.l.b16 %v74
  %v309 = vunpack.c.h.b16 %v74
  %v310 = vunpack.c.l.b16 %v75
  %v311 = vunpack.c.h.b16 %v75
  %v312 = vunpack.c.l.b16 %v76
  %v313 = vunpack.c.h.b16 %v76
  %v314 = vunpack.c.l.b16 %v77
  %v315 = vunpack.c.h.b16 %v77
  %v316 = vunpack.c.l.b16 %v78
  %v317 = vunpack.c.h.b16 %v78
  %v318 = vunpack.c.l.b16 %v79
  %v319 = vunpack.c.h.b16 %v79
  %v320 = vunpack.c.l.b16 %v80
  %v321 = vunpack.c.h.b16 %v80
  %v322 = vunpack.c.l.b16 %v81
  %v323 = vunpack.c.h.b16 %v81
  %v324 = vunpack.c.l.b16 %v82
  %v325 = vunpack.c.h.b16 %v82
  %v326 = vunpack.c.l.b16 %v83
  %v327 = vunpack.c.h.b16 %v83
  %v328 = vunpack.c.l.b16 %v84
  %v329 = vunpack.c.h.b16 %v84
  %v330 = vunpack.c.l.b16 %v85
  %v331 = vunpack.c.h.b16 %v85
  %v332 = vunpack.c.l.b16 %v86
  %v333 = vunpack.c.h.b16 %v86
  %v334 = vunpack.c.l.b16 %v87
  %v335 = vunpack.c.h.b16 %v87
  %v336 = vunpack.c.l.b16 %v88
  %v337 = vunpack.c.h.b16 %v88
  %v338 = vunpack.c.l.b16 %v89
  %v339 = vunpack.c.h.b16 %v89
  %v340 = vunpack.c.l.b16 %v90
  %v341 = vunpack.c.h.b16 %v90
  %v342 = vunpack.c.l.b16 %v91
  %v343 = vunpack.c.h.b16 %v91
  %v344 = vunpack.c.l.b16 %v92
  %v345 = vunpack.c.h.b16 %v92
  %v346 = vpack.c.b16 %v204, %v202
  %v347 = vpack.c.b16 %v205, %v203
  %v348 = vpack.c.b16 %v208, %v206
  %v349 = vpack.c.b16 %v209, %v207
  %v350 = vpack.c.b16 %v212, %v210
  %v351 = vpack.c.b16 %v213, %v211
  %v352 = vpack.c.b16 %v216, %v214
  %v353 = vpack.c.b16 %v217, %v215
  %v354 = vpack.c.b16 %v220, %v218
  %v355 = vpack.c.b16 %v221, %v219
  %v356 = vpack.c.b16 %v224, %v222
  %v357 = vpack.c.b16 %v225, %v223
  %v358 = vpack.c.b16 %v228, %v226
  %v359 = vpack.c.b16 %v229, %v227
  %v360 = vpack.c.b16 %v232, %v230
  %v361 = vpack.c.b16 %v233, %v231
  %v362 = vpack.c.b16 %v236, %v234
  %v363 = vpack.c.b16 %v237, %v235
  %v364 = vpack.c.b16 %v240, %v238
  %v365 = vpack.c.b16 %v241, %v239
  %v366 = vpack.c.b16 %v244, %v242
  %v367 = vpack.c.b16 %v245, %v243
  %v368 = vpack.c.b16 %v248, %v246
  %v369 = vpack.c.b16 %v249, %v247
  %v370 = vpack.c.b16 %v252, %v250
  %v371 = vpack.c.b16 %v253, %v251
  %v372 = vpack.c.b16 %v256, %v254
  %v373 = vpack.c.b16 %v257, %v255
  %v374 = vpack.c.b16 %v260, %v258
  %v375 = vpack.c.b16 %v261, %v259
  %v376 = vpack.c.b16 %v264, %v262
  %v377 = vpack.c.b16 %v265, %v263
  %v378 = vpack.c.b16 %v268, %v266
  %v379 = vpack.c.b16 %v269, %v267
  %v380 = vpack.c.b16 %v272, %v270
  %v381 = vpack.c.b16 %v273, %v271
  %v382 = vpack.c.b16 %v276, %v274
  %v383 = vpack.c.b16 %v277, %v275
  %v384 = vpack.c.b16 %v280, %v278
  %v385 = vpack.c.b16 %v281, %v279
  %v386 = vpack.c.b16 %v284, %v282
  %v387 = vpack.c.b16 %v285, %v283
  %v388 = vpack.c.b16 %v288, %v286
  %v389 = vpack.c.b16 %v289, %v287
  %v390 = vpack.c.b16 %v292, %v290
  %v391 = vpack.c.b16 %v293, %v291
  %v392 = vpack.c.b16 %v296, %v294
  %v393 = vpack.c.b16 %v297, %v295
  %v394 = vpack.c.b16 %v300, %v298
  %v395 = vpack.c.b16 %v301, %v299
  %v396 = vpack.c.b16 %v304, %v302
  %v397 = vpack.c.b16 %v305, %v303
  %v398 = vpack.c.b16 %v308, %v306
  %v399 = vpack.c.b16 %v309, %v307
  %v400 = vpack.c.b16 %v312, %v310
  %v401 = vpack.c.b16 %v313, %v311
  %v402 = vpack.c.b16 %v316, %v314
  %v403 = vpack.c.b16 %v317, %v315
  %v404 = vpack.c.b16 %v320, %v318
  %v405 = vpack.c.b16 %v321, %v319
  %v406 = vpack.c.b16 %v324, %v322
  %v407 = vpack.c.b16 %v325, %v323
  %v408 = vpack.c.b16 %v328, %v326
  %v409 = vpack.c.b16 %v329, %v327
  %v410 = vpack.c.b16 %v332, %v330
  %v411 = vpack.c.b16 %v333, %v331
  %v412 = vpack.c.b16 %v336, %v334
  %v413 = vpack.c.b16 %v337, %v335
  %v414 = vpack.c.b16 %v340, %v338
  %v415 = vpack.c.b16 %v341, %v339
  %v416 = vpack.c.b16 %v344, %v342
  %v417 = vpack.c.b16 %v345, %v343
  %vm490 = vcmask 523264
  %v492 = vsel %vm490, %v125, 0
  %494 = vmatprep.subr.bf16.mxu0 %v347
  %495 = vmatpush1.bf16.msra.mxu0 %v346
  %496 = vmatprep.subr.bf16.mxu0 %v349
  %497 = vmatpush1.bf16.msra.mxu0 %v348
  %498 = vmatprep.subr.bf16.mxu0 %v351
  %499 = vmatpush1.bf16.msra.mxu0 %v350
  %500 = vmatprep.subr.bf16.mxu0 %v353
  %501 = vmatpush1.bf16.msra.mxu0 %v352
  %502 = vmatprep.subr.bf16.mxu0 %v355
  %503 = vmatpush1.bf16.msra.mxu0 %v354
  %504 = vmatprep.subr.bf16.mxu0 %v357
  %505 = vmatpush1.bf16.msra.mxu0 %v356
  %506 = vmatprep.subr.bf16.mxu0 %v359
  %507 = vmatpush1.bf16.msra.mxu0 %v358
  %508 = vmatprep.subr.bf16.mxu0 %v361
  %509 = vmatpush1.bf16.msra.mxu0 %v360
  %510 = vmatprep.subr.bf16.mxu0 %v363
  %511 = vmatpush1.bf16.msra.mxu0 %v362
  %512 = vmatprep.subr.bf16.mxu0 %v365
  %513 = vmatpush1.bf16.msra.mxu0 %v364
  %514 = vmatprep.subr.bf16.mxu0 %v367
  %515 = vmatpush1.bf16.msra.mxu0 %v366
  %516 = vmatprep.subr.bf16.mxu0 %v369
  %517 = vmatpush1.bf16.msra.mxu0 %v368
  %518 = vmatprep.subr.bf16.mxu0 %v371
  %519 = vmatpush1.bf16.msra.mxu0 %v370
  %520 = vmatprep.subr.bf16.mxu0 %v373
  %521 = vmatpush1.bf16.msra.mxu0 %v372
  %522 = vmatprep.subr.bf16.mxu0 %v375
  %523 = vmatpush1.bf16.msra.mxu0 %v374
  %524 = vmatprep.subr.bf16.mxu0 %v377
  %525 = vmatpush1.bf16.msra.mxu0 %v376
  %526 = vmatprep.mubr.bf16.mxu0 %v122
  %527 = vmatmul.mubr.bf16.gmra.mrb[0].mxu0 %v121
  %v528 = vpop.f32.mrb[0].mxu0
  %v529 = vadd.f32 %v98, %v528
  %v530 = vpop.f32.mrb[0].mxu0
  %v531 = vadd.f32 %v102, %v530
  %v532 = vpop.f32.mrb[0].mxu0
  %v533 = vadd.f32 %v98, %v532
  %v534 = vpop.f32.mrb[0].mxu0
  %v535 = vadd.f32 %v102, %v534
  %536 = vdwg.mxu0
  %537 = vmatprep.subr.bf16.mxu0 %v379
  %538 = vmatpush1.bf16.msra.mxu0 %v378
  %539 = vmatprep.subr.bf16.mxu0 %v381
  %540 = vmatpush1.bf16.msra.mxu0 %v380
  %541 = vmatprep.subr.bf16.mxu0 %v383
  %542 = vmatpush1.bf16.msra.mxu0 %v382
  %543 = vmatprep.subr.bf16.mxu0 %v385
  %544 = vmatpush1.bf16.msra.mxu0 %v384
  %545 = vmatprep.subr.bf16.mxu0 %v387
  %546 = vmatpush1.bf16.msra.mxu0 %v386
  %547 = vmatprep.subr.bf16.mxu0 %v389
  %548 = vmatpush1.bf16.msra.mxu0 %v388
  %549 = vmatprep.subr.bf16.mxu0 %v391
  %550 = vmatpush1.bf16.msra.mxu0 %v390
  %551 = vmatprep.subr.bf16.mxu0 %v393
  %552 = vmatpush1.bf16.msra.mxu0 %v392
  %553 = vmatprep.subr.bf16.mxu0 %v395
  %554 = vmatpush1.bf16.msra.mxu0 %v394
  %555 = vmatprep.subr.bf16.mxu0 %v397
  %556 = vmatpush1.bf16.msra.mxu0 %v396
  %557 = vmatprep.subr.bf16.mxu0 %v399
  %558 = vmatpush1.bf16.msra.mxu0 %v398
  %559 = vmatprep.subr.bf16.mxu0 %v401
  %560 = vmatpush1.bf16.msra.mxu0 %v400
  %561 = vmatprep.subr.bf16.mxu0 %v403
  %562 = vmatpush1.bf16.msra.mxu0 %v402
  %563 = vmatprep.subr.bf16.mxu0 %v405
  %564 = vmatpush1.bf16.msra.mxu0 %v404
  %565 = vmatprep.subr.bf16.mxu0 %v407
  %566 = vmatpush1.bf16.msra.mxu0 %v406
  %567 = vmatprep.subr.bf16.mxu0 %v409
  %568 = vmatpush1.bf16.msra.mxu0 %v408
  %569 = vmatprep.mubr.bf16.mxu0 %v124
  %570 = vmatmul.mubr.bf16.gmra.mrb[0].mxu0 %v123
  %v571 = vpop.f32.mrb[0].mxu0
  %v572 = vadd.f32 %v529, %v571
  %v573 = vpop.f32.mrb[0].mxu0
  %v574 = vadd.f32 %v531, %v573
  %v575 = vpop.f32.mrb[0].mxu0
  %v576 = vadd.f32 %v533, %v575
  %v577 = vpop.f32.mrb[0].mxu0
  %v578 = vadd.f32 %v535, %v577
  %579 = vdwg.mxu0
  %580 = vmatprep.subr.bf16.mxu0 %v411
  %581 = vmatpush1.bf16.msra.mxu0 %v410
  %582 = vmatprep.subr.bf16.mxu0 %v413
  %583 = vmatpush1.bf16.msra.mxu0 %v412
  %584 = vmatprep.subr.bf16.mxu0 %v415
  %585 = vmatpush1.bf16.msra.mxu0 %v414
  %586 = vmatprep.subr.bf16.mxu0 %v417
  %587 = vmatpush1.bf16.msra.mxu0 %v416
  %588 = vmatprep.subr.bf16.mxu0 0
  %589 = vmatpush1.bf16.msra.mxu0 0
  %590 = vmatprep.subr.bf16.mxu0 0
  %591 = vmatpush1.bf16.msra.mxu0 0
  %592 = vmatprep.subr.bf16.mxu0 0
  %593 = vmatpush1.bf16.msra.mxu0 0
  %594 = vmatprep.subr.bf16.mxu0 0
  %595 = vmatpush1.bf16.msra.mxu0 0
  %596 = vmatprep.subr.bf16.mxu0 0
  %597 = vmatpush1.bf16.msra.mxu0 0
  %598 = vmatprep.subr.bf16.mxu0 0
  %599 = vmatpush1.bf16.msra.mxu0 0
  %600 = vmatprep.subr.bf16.mxu0 0
  %601 = vmatpush1.bf16.msra.mxu0 0
  %602 = vmatprep.subr.bf16.mxu0 0
  %603 = vmatpush1.bf16.msra.mxu0 0
  %604 = vmatprep.subr.bf16.mxu0 0
  %605 = vmatpush1.bf16.msra.mxu0 0
  %606 = vmatprep.subr.bf16.mxu0 0
  %607 = vmatpush1.bf16.msra.mxu0 0
  %608 = vmatprep.subr.bf16.mxu0 0
  %609 = vmatpush1.bf16.msra.mxu0 0
  %610 = vmatprep.subr.bf16.mxu0 0
  %611 = vmatpush1.bf16.msra.mxu0 0
  %612 = vmatprep.mubr.bf16.mxu0 0
  %613 = vmatmul.mubr.bf16.gmra.mrb[0].mxu0 %v492
  %v614 = vpop.f32.mrb[0].mxu0
  %v615 = vadd.f32 %v572, %v614
  %v616 = vpop.f32.mrb[0].mxu0
  %v617 = vadd.f32 %v574, %v616
  %v618 = vpop.f32.mrb[0].mxu0
  %v619 = vadd.f32 %v576, %v618
  %v620 = vpop.f32.mrb[0].mxu0
  %v621 = vadd.f32 %v578, %v620
  %622 = vdwg.mxu0
  %v623 = vmax.f32 %v615, 0.0
  %v624 = vmax.f32 %v617, 0.0
  %v625 = vmax.f32 %v619, 0.0
  %v626 = vmax.f32 %v621, 0.0
  %v627 = vpack.c.bf16 %v625, %v623
  %v628 = vpack.c.bf16 %v626, %v624
  %v631 = vunpack.c.l.b16 %v627
  %v632 = vunpack.c.l.b16 %v628
  %v633 = vunpack.c.h.b16 %v627
  %v634 = vunpack.c.h.b16 %v628
  %v635 = vpack.c.b16 %v632, %v631
  %v636 = vpack.c.b16 %v634, %v633
  %639 = vst [vmem:[%s3] sm:$0xff] %v635
  %640 = vst [vmem:[%s3 + $0x8] sm:$0xff] %v636
  // Predicated region
  $region14: #{unet_forward.18} parent=0 // pred_check
    _
  $region15: #{unet_forward.18} parent=0 // pred_check_branch
    %642 = sbr.rel (0) target = $region17
  $region16: #{unet_forward.18} parent=0 // pred_region
    _
  $region17: #{unet_forward.18} parent=0 // pred_fallthru
    _
  // Predicated region
  $region18: #{unet_forward.18} parent=0 // pred_check
    _
  $region19: #{unet_forward.18} parent=0 // pred_check_branch
    %644 = sbr.rel (0) target = $region21
  $region20: #{unet_forward.18} parent=0 // pred_region
    _
  $region21: #{unet_forward.18} parent=0 // pred_fallthru
    _

// kernel: unet_forward.19
$region0: #{unet_forward.19}
  #allocation0 [shape = 'u32[]', space=smem, size = 0x4, offset = 0x4, fixed_abs, tag = 'smem constant byte address 0x4 - core index']
  #allocation1 [shape = 'u32[144,128]{1,0:T(1,128)}', space=vmem, size = 0x12000, scoped, tag = 'internal scratch']
  %s0 = inlined_call_operand.vmem [shape: bf16[16,1152], index: 0, kind: input, shape index: {}]
  %s1 = inlined_call_operand.vmem [shape: bf16[1152,256], index: 1, kind: input, shape index: {}]
  %s2 = inlined_call_operand.vmem [shape: f32[1,256], index: 2, kind: input, shape index: {}]
  %s3 = inlined_call_operand.vmem [shape: bf16[16,256], index: 3, kind: output, shape index: {}]
  %s4 = sld [smem:[#allocation0]]
  $region22: #{unet_forward.19} parent=0
    _
  %s6 = ssub.s32 1, %s4
  %s7 = scalar_select 0, %s6, %s4
  // Predicated region
  $region2: #{unet_forward.19} parent=0 // pred_check
    _
  $region3: #{unet_forward.19} parent=0 // pred_check_branch
    %9 = sbr.rel (0) target = $region5
  $region4: #{unet_forward.19} parent=0 // pred_region
    _
  $region5: #{unet_forward.19} parent=0 // pred_fallthru
    _
  // Predicated region
  $region6: #{unet_forward.19} parent=0 // pred_check
    _
  $region7: #{unet_forward.19} parent=0 // pred_check_branch
    %11 = sbr.rel (0) target = $region9
  $region8: #{unet_forward.19} parent=0 // pred_region
    _
  $region9: #{unet_forward.19} parent=0 // pred_fallthru
    _
  // Predicated region
  $region10: #{unet_forward.19} parent=0 // pred_check
    _
  $region11: #{unet_forward.19} parent=0 // pred_check_branch
    %13 = sbr.rel (0) target = $region13
  $region12: #{unet_forward.19} parent=0 // pred_region
    _
  $region13: #{unet_forward.19} parent=0 // pred_fallthru
    _
  %v15 = vld [vmem:[%s0] sm:$0xff]
  %v16 = vld [vmem:[%s0 + $0x8] sm:$0xff]
  %v17 = vld [vmem:[%s0 + $0x10] sm:$0xff]
  %v18 = vld [vmem:[%s0 + $0x18] sm:$0xff]
  %v19 = vld [vmem:[%s0 + $0x20] sm:$0xf]
  %v20 = vld [vmem:[%s0 + $0x24] sm:$0xff]
  %v21 = vld [vmem:[%s0 + $0x2c] sm:$0xff]
  %v22 = vld [vmem:[%s0 + $0x34] sm:$0xff]
  %v23 = vld [vmem:[%s0 + $0x3c] sm:$0xff]
  %v24 = vld [vmem:[%s0 + $0x44] sm:$0xf]
  %v25 = vld [vmem:[%s1] sm:$0xff]
  %v26 = vld [vmem:[%s1 + $0x8] sm:$0xff]
  %v27 = vld [vmem:[%s1 + $0x10] sm:$0xff]
  %v28 = vld [vmem:[%s1 + $0x18] sm:$0xff]
  %v29 = vld [vmem:[%s1 + $0x20] sm:$0xff]
  %v30 = vld [vmem:[%s1 + $0x28] sm:$0xff]
  %v31 = vld [vmem:[%s1 + $0x30] sm:$0xff]
  %v32 = vld [vmem:[%s1 + $0x38] sm:$0xff]
  %v33 = vld [vmem:[%s1 + $0x40] sm:$0xff]
  %v34 = vld [vmem:[%s1 + $0x48] sm:$0xff]
  %v35 = vld [vmem:[%s1 + $0x50] sm:$0xff]
  %v36 = vld [vmem:[%s1 + $0x58] sm:$0xff]
  %v37 = vld [vmem:[%s1 + $0x60] sm:$0xff]
  %v38 = vld [vmem:[%s1 + $0x68] sm:$0xff]
  %v39 = vld [vmem:[%s1 + $0x70] sm:$0xff]
  %v40 = vld [vmem:[%s1 + $0x78] sm:$0xff]
  %v41 = vld [vmem:[%s1 + $0x80] sm:$0xff]
  %v42 = vld [vmem:[%s1 + $0x88] sm:$0xff]
  %v43 = vld [vmem:[%s1 + $0x90] sm:$0xff]
  %v44 = vld [vmem:[%s1 + $0x98] sm:$0xff]
  %v45 = vld [vmem:[%s1 + $0xa0] sm:$0xff]
  %v46 = vld [vmem:[%s1 + $0xa8] sm:$0xff]
  %v47 = vld [vmem:[%s1 + $0xb0] sm:$0xff]
  %v48 = vld [vmem:[%s1 + $0xb8] sm:$0xff]
  %v49 = vld [vmem:[%s1 + $0xc0] sm:$0xff]
  %v50 = vld [vmem:[%s1 + $0xc8] sm:$0xff]
  %v51 = vld [vmem:[%s1 + $0xd0] sm:$0xff]
  %v52 = vld [vmem:[%s1 + $0xd8] sm:$0xff]
  %v53 = vld [vmem:[%s1 + $0xe0] sm:$0xff]
  %v54 = vld [vmem:[%s1 + $0xe8] sm:$0xff]
  %v55 = vld [vmem:[%s1 + $0xf0] sm:$0xff]
  %v56 = vld [vmem:[%s1 + $0xf8] sm:$0xff]
  %v57 = vld [vmem:[%s1 + $0x100] sm:$0xff]
  %v58 = vld [vmem:[%s1 + $0x108] sm:$0xff]
  %v59 = vld [vmem:[%s1 + $0x110] sm:$0xff]
  %v60 = vld [vmem:[%s1 + $0x118] sm:$0xff]
  %v61 = vld [vmem:[%s1 + $0x120] sm:$0xff]
  %v62 = vld [vmem:[%s1 + $0x128] sm:$0xff]
  %v63 = vld [vmem:[%s1 + $0x130] sm:$0xff]
  %v64 = vld [vmem:[%s1 + $0x138] sm:$0xff]
  %v65 = vld [vmem:[%s1 + $0x140] sm:$0xff]
  %v66 = vld [vmem:[%s1 + $0x148] sm:$0xff]
  %v67 = vld [vmem:[%s1 + $0x150] sm:$0xff]
  %v68 = vld [vmem:[%s1 + $0x158] sm:$0xff]
  %v69 = vld [vmem:[%s1 + $0x160] sm:$0xff]
  %v70 = vld [vmem:[%s1 + $0x168] sm:$0xff]
  %v71 = vld [vmem:[%s1 + $0x170] sm:$0xff]
  %v72 = vld [vmem:[%s1 + $0x178] sm:$0xff]
  %v73 = vld [vmem:[%s1 + $0x180] sm:$0xff]
  %v74 = vld [vmem:[%s1 + $0x188] sm:$0xff]
  %v75 = vld [vmem:[%s1 + $0x190] sm:$0xff]
  %v76 = vld [vmem:[%s1 + $0x198] sm:$0xff]
  %v77 = vld [vmem:[%s1 + $0x1a0] sm:$0xff]
  %v78 = vld [vmem:[%s1 + $0x1a8] sm:$0xff]
  %v79 = vld [vmem:[%s1 + $0x1b0] sm:$0xff]
  %v80 = vld [vmem:[%s1 + $0x1b8] sm:$0xff]
  %v81 = vld [vmem:[%s1 + $0x1c0] sm:$0xff]
  %v82 = vld [vmem:[%s1 + $0x1c8] sm:$0xff]
  %v83 = vld [vmem:[%s1 + $0x1d0] sm:$0xff]
  %v84 = vld [vmem:[%s1 + $0x1d8] sm:$0xff]
  %v85 = vld [vmem:[%s1 + $0x1e0] sm:$0xff]
  %v86 = vld [vmem:[%s1 + $0x1e8] sm:$0xff]
  %v87 = vld [vmem:[%s1 + $0x1f0] sm:$0xff]
  %v88 = vld [vmem:[%s1 + $0x1f8] sm:$0xff]
  %v89 = vld [vmem:[%s1 + $0x200] sm:$0xff]
  %v90 = vld [vmem:[%s1 + $0x208] sm:$0xff]
  %v91 = vld [vmem:[%s1 + $0x210] sm:$0xff]
  %v92 = vld [vmem:[%s1 + $0x218] sm:$0xff]
  %v93 = vld [vmem:[%s1 + $0x220] sm:$0xff]
  %v94 = vld [vmem:[%s1 + $0x228] sm:$0xff]
  %v95 = vld [vmem:[%s1 + $0x230] sm:$0xff]
  %v96 = vld [vmem:[%s1 + $0x238] sm:$0xff]
  %v97 = vld [vmem:[%s1 + $0x240] sm:$0xff]
  %v98 = vld [vmem:[%s1 + $0x248] sm:$0xff]
  %v99 = vld [vmem:[%s1 + $0x250] sm:$0xff]
  %v100 = vld [vmem:[%s1 + $0x258] sm:$0xff]
  %v101 = vld [vmem:[%s1 + $0x260] sm:$0xff]
  %v102 = vld [vmem:[%s1 + $0x268] sm:$0xff]
  %v103 = vld [vmem:[%s1 + $0x270] sm:$0xff]
  %v104 = vld [vmem:[%s1 + $0x278] sm:$0xff]
  %v105 = vld [vmem:[%s1 + $0x280] sm:$0xff]
  %v106 = vld [vmem:[%s1 + $0x288] sm:$0xff]
  %v107 = vld [vmem:[%s1 + $0x290] sm:$0xff]
  %v108 = vld [vmem:[%s1 + $0x298] sm:$0xff]
  %v109 = vld [vmem:[%s1 + $0x2a0] sm:$0xff]
  %v110 = vld [vmem:[%s1 + $0x2a8] sm:$0xff]
  %v111 = vld [vmem:[%s1 + $0x2b0] sm:$0xff]
  %v112 = vld [vmem:[%s1 + $0x2b8] sm:$0xff]
  %v113 = vld [vmem:[%s1 + $0x2c0] sm:$0xff]
  %v114 = vld [vmem:[%s1 + $0x2c8] sm:$0xff]
  %v115 = vld [vmem:[%s1 + $0x2d0] sm:$0xff]
  %v116 = vld [vmem:[%s1 + $0x2d8] sm:$0xff]
  %v117 = vld [vmem:[%s1 + $0x2e0] sm:$0xff]
  %v118 = vld [vmem:[%s1 + $0x2e8] sm:$0xff]
  %v119 = vld [vmem:[%s1 + $0x2f0] sm:$0xff]
  %v120 = vld [vmem:[%s1 + $0x2f8] sm:$0xff]
  %v121 = vld [vmem:[%s1 + $0x300] sm:$0xff]
  %v122 = vld [vmem:[%s1 + $0x308] sm:$0xff]
  %v123 = vld [vmem:[%s1 + $0x310] sm:$0xff]
  %v124 = vld [vmem:[%s1 + $0x318] sm:$0xff]
  %v125 = vld [vmem:[%s1 + $0x320] sm:$0xff]
  %v126 = vld [vmem:[%s1 + $0x328] sm:$0xff]
  %v127 = vld [vmem:[%s1 + $0x330] sm:$0xff]
  %v128 = vld [vmem:[%s1 + $0x338] sm:$0xff]
  %v129 = vld [vmem:[%s1 + $0x340] sm:$0xff]
  %v130 = vld [vmem:[%s1 + $0x348] sm:$0xff]
  %v131 = vld [vmem:[%s1 + $0x350] sm:$0xff]
  %v132 = vld [vmem:[%s1 + $0x358] sm:$0xff]
  %v133 = vld [vmem:[%s1 + $0x360] sm:$0xff]
  %v134 = vld [vmem:[%s1 + $0x368] sm:$0xff]
  %v135 = vld [vmem:[%s1 + $0x370] sm:$0xff]
  %v136 = vld [vmem:[%s1 + $0x378] sm:$0xff]
  %v137 = vld [vmem:[%s1 + $0x380] sm:$0xff]
  %v138 = vld [vmem:[%s1 + $0x388] sm:$0xff]
  %v139 = vld [vmem:[%s1 + $0x390] sm:$0xff]
  %v140 = vld [vmem:[%s1 + $0x398] sm:$0xff]
  %v141 = vld [vmem:[%s1 + $0x3a0] sm:$0xff]
  %v142 = vld [vmem:[%s1 + $0x3a8] sm:$0xff]
  %v143 = vld [vmem:[%s1 + $0x3b0] sm:$0xff]
  %v144 = vld [vmem:[%s1 + $0x3b8] sm:$0xff]
  %v145 = vld [vmem:[%s1 + $0x3c0] sm:$0xff]
  %v146 = vld [vmem:[%s1 + $0x3c8] sm:$0xff]
  %v147 = vld [vmem:[%s1 + $0x3d0] sm:$0xff]
  %v148 = vld [vmem:[%s1 + $0x3d8] sm:$0xff]
  %v149 = vld [vmem:[%s1 + $0x3e0] sm:$0xff]
  %v150 = vld [vmem:[%s1 + $0x3e8] sm:$0xff]
  %v151 = vld [vmem:[%s1 + $0x3f0] sm:$0xff]
  %v152 = vld [vmem:[%s1 + $0x3f8] sm:$0xff]
  %v153 = vld [vmem:[%s1 + $0x400] sm:$0xff]
  %v154 = vld [vmem:[%s1 + $0x408] sm:$0xff]
  %v155 = vld [vmem:[%s1 + $0x410] sm:$0xff]
  %v156 = vld [vmem:[%s1 + $0x418] sm:$0xff]
  %v157 = vld [vmem:[%s1 + $0x420] sm:$0xff]
  %v158 = vld [vmem:[%s1 + $0x428] sm:$0xff]
  %v159 = vld [vmem:[%s1 + $0x430] sm:$0xff]
  %v160 = vld [vmem:[%s1 + $0x438] sm:$0xff]
  %v161 = vld [vmem:[%s1 + $0x440] sm:$0xff]
  %v162 = vld [vmem:[%s1 + $0x448] sm:$0xff]
  %v163 = vld [vmem:[%s1 + $0x450] sm:$0xff]
  %v164 = vld [vmem:[%s1 + $0x458] sm:$0xff]
  %v165 = vld [vmem:[%s1 + $0x460] sm:$0xff]
  %v166 = vld [vmem:[%s1 + $0x468] sm:$0xff]
  %v167 = vld [vmem:[%s1 + $0x470] sm:$0xff]
  %v168 = vld [vmem:[%s1 + $0x478] sm:$0xff]
  %v169 = vld [vmem:[%s2] sm:$0x3]
  %v171 = vlaneseq
  %v172 = vshrl.u32 %v171, 7
  %v173 = vsub.s32 0, %v172
  %v174 = vrot.slane %v169, %v173
  %v175 = vlaneseq
  %v176 = vshrl.u32 %v175, 7
  %v177 = vsub.s32 1, %v176
  %v178 = vrot.slane %v169, %v177
  %v191 = vunpack.c.l.b16 %v15
  %v192 = vunpack.c.h.b16 %v15
  %v193 = vunpack.c.l.b16 %v16
  %v194 = vunpack.c.h.b16 %v16
  %v195 = vunpack.c.l.b16 %v17
  %v196 = vunpack.c.h.b16 %v17
  %v197 = vunpack.c.l.b16 %v18
  %v198 = vunpack.c.h.b16 %v18
  %v199 = vunpack.c.l.b16 %v19
  %v200 = vunpack.c.l.b16 %v20
  %v201 = vunpack.c.h.b16 %v20
  %v202 = vunpack.c.l.b16 %v21
  %v203 = vunpack.c.h.b16 %v21
  %v204 = vunpack.c.l.b16 %v22
  %v205 = vunpack.c.h.b16 %v22
  %v206 = vunpack.c.l.b16 %v23
  %v207 = vunpack.c.h.b16 %v23
  %v208 = vunpack.c.l.b16 %v24
  %v209 = vpack.c.b16 %v200, %v191
  %v210 = vpack.c.b16 %v201, %v192
  %v211 = vpack.c.b16 %v202, %v193
  %v212 = vpack.c.b16 %v203, %v194
  %v213 = vpack.c.b16 %v204, %v195
  %v214 = vpack.c.b16 %v205, %v196
  %v215 = vpack.c.b16 %v206, %v197
  %v216 = vpack.c.b16 %v207, %v198
  %v217 = vpack.c.b16 %v208, %v199
  %v371 = vunpack.c.l.b16 %v25
  %v372 = vunpack.c.h.b16 %v25
  %v373 = vunpack.c.l.b16 %v26
  %v374 = vunpack.c.h.b16 %v26
  %v375 = vunpack.c.l.b16 %v27
  %v376 = vunpack.c.h.b16 %v27
  %v377 = vunpack.c.l.b16 %v28
  %v378 = vunpack.c.h.b16 %v28
  %v379 = vunpack.c.l.b16 %v29
  %v380 = vunpack.c.h.b16 %v29
  %v381 = vunpack.c.l.b16 %v30
  %v382 = vunpack.c.h.b16 %v30
  %v383 = vunpack.c.l.b16 %v31
  %v384 = vunpack.c.h.b16 %v31
  %v385 = vunpack.c.l.b16 %v32
  %v386 = vunpack.c.h.b16 %v32
  %v387 = vunpack.c.l.b16 %v33
  %v388 = vunpack.c.h.b16 %v33
  %v389 = vunpack.c.l.b16 %v34
  %v390 = vunpack.c.h.b16 %v34
  %v391 = vunpack.c.l.b16 %v35
  %v392 = vunpack.c.h.b16 %v35
  %v393 = vunpack.c.l.b16 %v36
  %v394 = vunpack.c.h.b16 %v36
  %v395 = vunpack.c.l.b16 %v37
  %v396 = vunpack.c.h.b16 %v37
  %v397 = vunpack.c.l.b16 %v38
  %v398 = vunpack.c.h.b16 %v38
  %v399 = vunpack.c.l.b16 %v39
  %v400 = vunpack.c.h.b16 %v39
  %v401 = vunpack.c.l.b16 %v40
  %v402 = vunpack.c.h.b16 %v40
  %v403 = vunpack.c.l.b16 %v41
  %v404 = vunpack.c.h.b16 %v41
  %v405 = vunpack.c.l.b16 %v42
  %v406 = vunpack.c.h.b16 %v42
  %v407 = vunpack.c.l.b16 %v43
  %v408 = vunpack.c.h.b16 %v43
  %v409 = vunpack.c.l.b16 %v44
  %v410 = vunpack.c.h.b16 %v44
  %v411 = vunpack.c.l.b16 %v45
  %v412 = vunpack.c.h.b16 %v45
  %v413 = vunpack.c.l.b16 %v46
  %v414 = vunpack.c.h.b16 %v46
  %v415 = vunpack.c.l.b16 %v47
  %v416 = vunpack.c.h.b16 %v47
  %v417 = vunpack.c.l.b16 %v48
  %v418 = vunpack.c.h.b16 %v48
  %v419 = vunpack.c.l.b16 %v49
  %v420 = vunpack.c.h.b16 %v49
  %v421 = vunpack.c.l.b16 %v50
  %v422 = vunpack.c.h.b16 %v50
  %v423 = vunpack.c.l.b16 %v51
  %v424 = vunpack.c.h.b16 %v51
  %v425 = vunpack.c.l.b16 %v52
  %v426 = vunpack.c.h.b16 %v52
  %v427 = vunpack.c.l.b16 %v53
  %v428 = vunpack.c.h.b16 %v53
  %v429 = vunpack.c.l.b16 %v54
  %v430 = vunpack.c.h.b16 %v54
  %v431 = vunpack.c.l.b16 %v55
  %v432 = vunpack.c.h.b16 %v55
  %v433 = vunpack.c.l.b16 %v56
  %v434 = vunpack.c.h.b16 %v56
  %v435 = vunpack.c.l.b16 %v57
  %v436 = vunpack.c.h.b16 %v57
  %v437 = vunpack.c.l.b16 %v58
  %v438 = vunpack.c.h.b16 %v58
  %v439 = vunpack.c.l.b16 %v59
  %v440 = vunpack.c.h.b16 %v59
  %v441 = vunpack.c.l.b16 %v60
  %v442 = vunpack.c.h.b16 %v60
  %v443 = vunpack.c.l.b16 %v61
  %v444 = vunpack.c.h.b16 %v61
  %v445 = vunpack.c.l.b16 %v62
  %v446 = vunpack.c.h.b16 %v62
  %v447 = vunpack.c.l.b16 %v63
  %v448 = vunpack.c.h.b16 %v63
  %v449 = vunpack.c.l.b16 %v64
  %v450 = vunpack.c.h.b16 %v64
  %v451 = vunpack.c.l.b16 %v65
  %v452 = vunpack.c.h.b16 %v65
  %v453 = vunpack.c.l.b16 %v66
  %v454 = vunpack.c.h.b16 %v66
  %v455 = vunpack.c.l.b16 %v67
  %v456 = vunpack.c.h.b16 %v67
  %v457 = vunpack.c.l.b16 %v68
  %v458 = vunpack.c.h.b16 %v68
  %v459 = vunpack.c.l.b16 %v69
  %v460 = vunpack.c.h.b16 %v69
  %v461 = vunpack.c.l.b16 %v70
  %v462 = vunpack.c.h.b16 %v70
  %v463 = vunpack.c.l.b16 %v71
  %v464 = vunpack.c.h.b16 %v71
  %v465 = vunpack.c.l.b16 %v72
  %v466 = vunpack.c.h.b16 %v72
  %v467 = vunpack.c.l.b16 %v73
  %v468 = vunpack.c.h.b16 %v73
  %v469 = vunpack.c.l.b16 %v74
  %v470 = vunpack.c.h.b16 %v74
  %v471 = vunpack.c.l.b16 %v75
  %v472 = vunpack.c.h.b16 %v75
  %v473 = vunpack.c.l.b16 %v76
  %v474 = vunpack.c.h.b16 %v76
  %v475 = vunpack.c.l.b16 %v77
  %v476 = vunpack.c.h.b16 %v77
  %v477 = vunpack.c.l.b16 %v78
  %v478 = vunpack.c.h.b16 %v78
  %v479 = vunpack.c.l.b16 %v79
  %v480 = vunpack.c.h.b16 %v79
  %v481 = vunpack.c.l.b16 %v80
  %v482 = vunpack.c.h.b16 %v80
  %v483 = vunpack.c.l.b16 %v81
  %v484 = vunpack.c.h.b16 %v81
  %v485 = vunpack.c.l.b16 %v82
  %v486 = vunpack.c.h.b16 %v82
  %v487 = vunpack.c.l.b16 %v83
  %v488 = vunpack.c.h.b16 %v83
  %v489 = vunpack.c.l.b16 %v84
  %v490 = vunpack.c.h.b16 %v84
  %v491 = vunpack.c.l.b16 %v85
  %v492 = vunpack.c.h.b16 %v85
  %v493 = vunpack.c.l.b16 %v86
  %v494 = vunpack.c.h.b16 %v86
  %v495 = vunpack.c.l.b16 %v87
  %v496 = vunpack.c.h.b16 %v87
  %v497 = vunpack.c.l.b16 %v88
  %v498 = vunpack.c.h.b16 %v88
  %v499 = vunpack.c.l.b16 %v89
  %v500 = vunpack.c.h.b16 %v89
  %v501 = vunpack.c.l.b16 %v90
  %v502 = vunpack.c.h.b16 %v90
  %v503 = vunpack.c.l.b16 %v91
  %v504 = vunpack.c.h.b16 %v91
  %v505 = vunpack.c.l.b16 %v92
  %v506 = vunpack.c.h.b16 %v92
  %v507 = vunpack.c.l.b16 %v93
  %v508 = vunpack.c.h.b16 %v93
  %v509 = vunpack.c.l.b16 %v94
  %v510 = vunpack.c.h.b16 %v94
  %v511 = vunpack.c.l.b16 %v95
  %v512 = vunpack.c.h.b16 %v95
  %v513 = vunpack.c.l.b16 %v96
  %v514 = vunpack.c.h.b16 %v96
  %v515 = vunpack.c.l.b16 %v97
  %v516 = vunpack.c.h.b16 %v97
  %v517 = vunpack.c.l.b16 %v98
  %v518 = vunpack.c.h.b16 %v98
  %v519 = vunpack.c.l.b16 %v99
  %v520 = vunpack.c.h.b16 %v99
  %v521 = vunpack.c.l.b16 %v100
  %v522 = vunpack.c.h.b16 %v100
  %v523 = vunpack.c.l.b16 %v101
  %v524 = vunpack.c.h.b16 %v101
  %v525 = vunpack.c.l.b16 %v102
  %v526 = vunpack.c.h.b16 %v102
  %v527 = vunpack.c.l.b16 %v103
  %v528 = vunpack.c.h.b16 %v103
  %v529 = vunpack.c.l.b16 %v104
  %v530 = vunpack.c.h.b16 %v104
  %v531 = vunpack.c.l.b16 %v105
  %v532 = vunpack.c.h.b16 %v105
  %v533 = vunpack.c.l.b16 %v106
  %v534 = vunpack.c.h.b16 %v106
  %v535 = vunpack.c.l.b16 %v107
  %v536 = vunpack.c.h.b16 %v107
  %v537 = vunpack.c.l.b16 %v108
  %v538 = vunpack.c.h.b16 %v108
  %v539 = vunpack.c.l.b16 %v109
  %v540 = vunpack.c.h.b16 %v109
  %v541 = vunpack.c.l.b16 %v110
  %v542 = vunpack.c.h.b16 %v110
  %v543 = vunpack.c.l.b16 %v111
  %v544 = vunpack.c.h.b16 %v111
  %v545 = vunpack.c.l.b16 %v112
  %v546 = vunpack.c.h.b16 %v112
  %v547 = vunpack.c.l.b16 %v113
  %v548 = vunpack.c.h.b16 %v113
  %v549 = vunpack.c.l.b16 %v114
  %v550 = vunpack.c.h.b16 %v114
  %v551 = vunpack.c.l.b16 %v115
  %v552 = vunpack.c.h.b16 %v115
  %v553 = vunpack.c.l.b16 %v116
  %v554 = vunpack.c.h.b16 %v116
  %v555 = vunpack.c.l.b16 %v117
  %v556 = vunpack.c.h.b16 %v117
  %v557 = vunpack.c.l.b16 %v118
  %v558 = vunpack.c.h.b16 %v118
  %v559 = vunpack.c.l.b16 %v119
  %v560 = vunpack.c.h.b16 %v119
  %v561 = vunpack.c.l.b16 %v120
  %v562 = vunpack.c.h.b16 %v120
  %v563 = vunpack.c.l.b16 %v121
  %v564 = vunpack.c.h.b16 %v121
  %v565 = vunpack.c.l.b16 %v122
  %v566 = vunpack.c.h.b16 %v122
  %v567 = vunpack.c.l.b16 %v123
  %v568 = vunpack.c.h.b16 %v123
  %v569 = vunpack.c.l.b16 %v124
  %v570 = vunpack.c.h.b16 %v124
  %v571 = vunpack.c.l.b16 %v125
  %v572 = vunpack.c.h.b16 %v125
  %v573 = vunpack.c.l.b16 %v126
  %v574 = vunpack.c.h.b16 %v126
  %v575 = vunpack.c.l.b16 %v127
  %v576 = vunpack.c.h.b16 %v127
  %v577 = vunpack.c.l.b16 %v128
  %v578 = vunpack.c.h.b16 %v128
  %v579 = vunpack.c.l.b16 %v129
  %v580 = vunpack.c.h.b16 %v129
  %v581 = vunpack.c.l.b16 %v130
  %v582 = vunpack.c.h.b16 %v130
  %v583 = vunpack.c.l.b16 %v131
  %v584 = vunpack.c.h.b16 %v131
  %v585 = vunpack.c.l.b16 %v132
  %v586 = vunpack.c.h.b16 %v132
  %v587 = vunpack.c.l.b16 %v133
  %v588 = vunpack.c.h.b16 %v133
  %v589 = vunpack.c.l.b16 %v134
  %v590 = vunpack.c.h.b16 %v134
  %v591 = vunpack.c.l.b16 %v135
  %v592 = vunpack.c.h.b16 %v135
  %v593 = vunpack.c.l.b16 %v136
  %v594 = vunpack.c.h.b16 %v136
  %v595 = vunpack.c.l.b16 %v137
  %v596 = vunpack.c.h.b16 %v137
  %v597 = vunpack.c.l.b16 %v138
  %v598 = vunpack.c.h.b16 %v138
  %v599 = vunpack.c.l.b16 %v139
  %v600 = vunpack.c.h.b16 %v139
  %v601 = vunpack.c.l.b16 %v140
  %v602 = vunpack.c.h.b16 %v140
  %v603 = vunpack.c.l.b16 %v141
  %v604 = vunpack.c.h.b16 %v141
  %v605 = vunpack.c.l.b16 %v142
  %v606 = vunpack.c.h.b16 %v142
  %v607 = vunpack.c.l.b16 %v143
  %v608 = vunpack.c.h.b16 %v143
  %v609 = vunpack.c.l.b16 %v144
  %v610 = vunpack.c.h.b16 %v144
  %v611 = vunpack.c.l.b16 %v145
  %v612 = vunpack.c.h.b16 %v145
  %v613 = vunpack.c.l.b16 %v146
  %v614 = vunpack.c.h.b16 %v146
  %v615 = vunpack.c.l.b16 %v147
  %v616 = vunpack.c.h.b16 %v147
  %v617 = vunpack.c.l.b16 %v148
  %v618 = vunpack.c.h.b16 %v148
  %v619 = vunpack.c.l.b16 %v149
  %v620 = vunpack.c.h.b16 %v149
  %v621 = vunpack.c.l.b16 %v150
  %v622 = vunpack.c.h.b16 %v150
  %v623 = vunpack.c.l.b16 %v151
  %v624 = vunpack.c.h.b16 %v151
  %v625 = vunpack.c.l.b16 %v152
  %v626 = vunpack.c.h.b16 %v152
  %v627 = vunpack.c.l.b16 %v153
  %v628 = vunpack.c.h.b16 %v153
  %v629 = vunpack.c.l.b16 %v154
  %v630 = vunpack.c.h.b16 %v154
  %v631 = vunpack.c.l.b16 %v155
  %v632 = vunpack.c.h.b16 %v155
  %v633 = vunpack.c.l.b16 %v156
  %v634 = vunpack.c.h.b16 %v156
  %v635 = vunpack.c.l.b16 %v157
  %v636 = vunpack.c.h.b16 %v157
  %v637 = vunpack.c.l.b16 %v158
  %v638 = vunpack.c.h.b16 %v158
  %v639 = vunpack.c.l.b16 %v159
  %v640 = vunpack.c.h.b16 %v159
  %v641 = vunpack.c.l.b16 %v160
  %v642 = vunpack.c.h.b16 %v160
  %v643 = vunpack.c.l.b16 %v161
  %v644 = vunpack.c.h.b16 %v161
  %v645 = vunpack.c.l.b16 %v162
  %v646 = vunpack.c.h.b16 %v162
  %v647 = vunpack.c.l.b16 %v163
  %v648 = vunpack.c.h.b16 %v163
  %v649 = vunpack.c.l.b16 %v164
  %v650 = vunpack.c.h.b16 %v164
  %v651 = vunpack.c.l.b16 %v165
  %v652 = vunpack.c.h.b16 %v165
  %v653 = vunpack.c.l.b16 %v166
  %v654 = vunpack.c.h.b16 %v166
  %v655 = vunpack.c.l.b16 %v167
  %v656 = vunpack.c.h.b16 %v167
  %v657 = vunpack.c.l.b16 %v168
  %v658 = vunpack.c.h.b16 %v168
  %v659 = vpack.c.b16 %v373, %v371
  %v660 = vpack.c.b16 %v374, %v372
  %v661 = vpack.c.b16 %v377, %v375
  %v662 = vpack.c.b16 %v378, %v376
  %v663 = vpack.c.b16 %v381, %v379
  %v664 = vpack.c.b16 %v382, %v380
  %v665 = vpack.c.b16 %v385, %v383
  %v666 = vpack.c.b16 %v386, %v384
  %v667 = vpack.c.b16 %v389, %v387
  %v668 = vpack.c.b16 %v390, %v388
  %v669 = vpack.c.b16 %v393, %v391
  %v670 = vpack.c.b16 %v394, %v392
  %v671 = vpack.c.b16 %v397, %v395
  %v672 = vpack.c.b16 %v398, %v396
  %v673 = vpack.c.b16 %v401, %v399
  %v674 = vpack.c.b16 %v402, %v400
  %v675 = vpack.c.b16 %v405, %v403
  %v676 = vpack.c.b16 %v406, %v404
  %v677 = vpack.c.b16 %v409, %v407
  %v678 = vpack.c.b16 %v410, %v408
  %v679 = vpack.c.b16 %v413, %v411
  %v680 = vpack.c.b16 %v414, %v412
  %v681 = vpack.c.b16 %v417, %v415
  %v682 = vpack.c.b16 %v418, %v416
  %v683 = vpack.c.b16 %v421, %v419
  %v684 = vpack.c.b16 %v422, %v420
  %v685 = vpack.c.b16 %v425, %v423
  %v686 = vpack.c.b16 %v426, %v424
  %v687 = vpack.c.b16 %v429, %v427
  %v688 = vpack.c.b16 %v430, %v428
  %v689 = vpack.c.b16 %v433, %v431
  %v690 = vpack.c.b16 %v434, %v432
  %v691 = vpack.c.b16 %v437, %v435
  %v692 = vpack.c.b16 %v438, %v436
  %v693 = vpack.c.b16 %v441, %v439
  %v694 = vpack.c.b16 %v442, %v440
  %v695 = vpack.c.b16 %v445, %v443
  %v696 = vpack.c.b16 %v446, %v444
  %v697 = vpack.c.b16 %v449, %v447
  %v698 = vpack.c.b16 %v450, %v448
  %v699 = vpack.c.b16 %v453, %v451
  %v700 = vpack.c.b16 %v454, %v452
  %v701 = vpack.c.b16 %v457, %v455
  %v702 = vpack.c.b16 %v458, %v456
  %v703 = vpack.c.b16 %v461, %v459
  %v704 = vpack.c.b16 %v462, %v460
  %v705 = vpack.c.b16 %v465, %v463
  %v706 = vpack.c.b16 %v466, %v464
  %v707 = vpack.c.b16 %v469, %v467
  %v708 = vpack.c.b16 %v470, %v468
  %v709 = vpack.c.b16 %v473, %v471
  %v710 = vpack.c.b16 %v474, %v472
  %v711 = vpack.c.b16 %v477, %v475
  %v712 = vpack.c.b16 %v478, %v476
  %v713 = vpack.c.b16 %v481, %v479
  %v714 = vpack.c.b16 %v482, %v480
  %v715 = vpack.c.b16 %v485, %v483
  %v716 = vpack.c.b16 %v486, %v484
  %v717 = vpack.c.b16 %v489, %v487
  %v718 = vpack.c.b16 %v490, %v488
  %v719 = vpack.c.b16 %v493, %v491
  %v720 = vpack.c.b16 %v494, %v492
  %v721 = vpack.c.b16 %v497, %v495
  %v722 = vpack.c.b16 %v498, %v496
  %v723 = vpack.c.b16 %v501, %v499
  %v724 = vpack.c.b16 %v502, %v500
  %v725 = vpack.c.b16 %v505, %v503
  %v726 = vpack.c.b16 %v506, %v504
  %v727 = vpack.c.b16 %v509, %v507
  %v728 = vpack.c.b16 %v510, %v508
  %v729 = vpack.c.b16 %v513, %v511
  %v730 = vpack.c.b16 %v514, %v512
  %v731 = vpack.c.b16 %v517, %v515
  %v732 = vpack.c.b16 %v518, %v516
  %v733 = vpack.c.b16 %v521, %v519
  %v734 = vpack.c.b16 %v522, %v520
  %v735 = vpack.c.b16 %v525, %v523
  %v736 = vpack.c.b16 %v526, %v524
  %v737 = vpack.c.b16 %v529, %v527
  %v738 = vpack.c.b16 %v530, %v528
  %v739 = vpack.c.b16 %v533, %v531
  %v740 = vpack.c.b16 %v534, %v532
  %v741 = vpack.c.b16 %v537, %v535
  %v742 = vpack.c.b16 %v538, %v536
  %v743 = vpack.c.b16 %v541, %v539
  %v744 = vpack.c.b16 %v542, %v540
  %v745 = vpack.c.b16 %v545, %v543
  %v746 = vpack.c.b16 %v546, %v544
  %v747 = vpack.c.b16 %v549, %v547
  %v748 = vpack.c.b16 %v550, %v548
  %v749 = vpack.c.b16 %v553, %v551
  %v750 = vpack.c.b16 %v554, %v552
  %v751 = vpack.c.b16 %v557, %v555
  %v752 = vpack.c.b16 %v558, %v556
  %v753 = vpack.c.b16 %v561, %v559
  %v754 = vpack.c.b16 %v562, %v560
  %v755 = vpack.c.b16 %v565, %v563
  %v756 = vpack.c.b16 %v566, %v564
  %v757 = vpack.c.b16 %v569, %v567
  %v758 = vpack.c.b16 %v570, %v568
  %v759 = vpack.c.b16 %v573, %v571
  %v760 = vpack.c.b16 %v574, %v572
  %v761 = vpack.c.b16 %v577, %v575
  %v762 = vpack.c.b16 %v578, %v576
  %v763 = vpack.c.b16 %v581, %v579
  %v764 = vpack.c.b16 %v582, %v580
  %v765 = vpack.c.b16 %v585, %v583
  %v766 = vpack.c.b16 %v586, %v584
  %v767 = vpack.c.b16 %v589, %v587
  %v768 = vpack.c.b16 %v590, %v588
  %v769 = vpack.c.b16 %v593, %v591
  %v770 = vpack.c.b16 %v594, %v592
  %v771 = vpack.c.b16 %v597, %v595
  %v772 = vpack.c.b16 %v598, %v596
  %v773 = vpack.c.b16 %v601, %v599
  %v774 = vpack.c.b16 %v602, %v600
  %v775 = vpack.c.b16 %v605, %v603
  %v776 = vpack.c.b16 %v606, %v604
  %v777 = vpack.c.b16 %v609, %v607
  %v778 = vpack.c.b16 %v610, %v608
  %v779 = vpack.c.b16 %v613, %v611
  %v780 = vpack.c.b16 %v614, %v612
  %v781 = vpack.c.b16 %v617, %v615
  %v782 = vpack.c.b16 %v618, %v616
  %v783 = vpack.c.b16 %v621, %v619
  %v784 = vpack.c.b16 %v622, %v620
  %v785 = vpack.c.b16 %v625, %v623
  %v786 = vpack.c.b16 %v626, %v624
  %v787 = vpack.c.b16 %v629, %v627
  %v788 = vpack.c.b16 %v630, %v628
  %v789 = vpack.c.b16 %v633, %v631
  %v790 = vpack.c.b16 %v634, %v632
  %v791 = vpack.c.b16 %v637, %v635
  %v792 = vpack.c.b16 %v638, %v636
  %v793 = vpack.c.b16 %v641, %v639
  %v794 = vpack.c.b16 %v642, %v640
  %v795 = vpack.c.b16 %v645, %v643
  %v796 = vpack.c.b16 %v646, %v644
  %v797 = vpack.c.b16 %v649, %v647
  %v798 = vpack.c.b16 %v650, %v648
  %v799 = vpack.c.b16 %v653, %v651
  %v800 = vpack.c.b16 %v654, %v652
  %v801 = vpack.c.b16 %v657, %v655
  %v802 = vpack.c.b16 %v658, %v656
  %947 = vmatprep.subr.bf16.mxu0 %v660
  %948 = vmatpush1.bf16.msra.mxu0 %v659
  %949 = vmatprep.subr.bf16.mxu0 %v662
  %950 = vmatpush1.bf16.msra.mxu0 %v661
  %951 = vmatprep.subr.bf16.mxu0 %v664
  %952 = vmatpush1.bf16.msra.mxu0 %v663
  %953 = vmatprep.subr.bf16.mxu0 %v666
  %954 = vmatpush1.bf16.msra.mxu0 %v665
  %955 = vmatprep.subr.bf16.mxu0 %v668
  %956 = vmatpush1.bf16.msra.mxu0 %v667
  %957 = vmatprep.subr.bf16.mxu0 %v670
  %958 = vmatpush1.bf16.msra.mxu0 %v669
  %959 = vmatprep.subr.bf16.mxu0 %v672
  %960 = vmatpush1.bf16.msra.mxu0 %v671
  %961 = vmatprep.subr.bf16.mxu0 %v674
  %962 = vmatpush1.bf16.msra.mxu0 %v673
  %963 = vmatprep.subr.bf16.mxu0 %v676
  %964 = vmatpush1.bf16.msra.mxu0 %v675
  %965 = vmatprep.subr.bf16.mxu0 %v678
  %966 = vmatpush1.bf16.msra.mxu0 %v677
  %967 = vmatprep.subr.bf16.mxu0 %v680
  %968 = vmatpush1.bf16.msra.mxu0 %v679
  %969 = vmatprep.subr.bf16.mxu0 %v682
  %970 = vmatpush1.bf16.msra.mxu0 %v681
  %971 = vmatprep.subr.bf16.mxu0 %v684
  %972 = vmatpush1.bf16.msra.mxu0 %v683
  %973 = vmatprep.subr.bf16.mxu0 %v686
  %974 = vmatpush1.bf16.msra.mxu0 %v685
  %975 = vmatprep.subr.bf16.mxu0 %v688
  %976 = vmatpush1.bf16.msra.mxu0 %v687
  %977 = vmatprep.subr.bf16.mxu0 %v690
  %978 = vmatpush1.bf16.msra.mxu0 %v689
  %979 = vmatprep.mubr.bf16.mxu0 %v210
  %980 = vmatmul.mubr.bf16.gmra.mrb[0].mxu0 %v209
  %v981 = vpop.f32.mrb[0].mxu0
  %v982 = vadd.f32 %v174, %v981
  %v983 = vpop.f32.mrb[0].mxu0
  %v984 = vadd.f32 %v178, %v983
  %v985 = vpop.f32.mrb[0].mxu0
  %v986 = vadd.f32 %v174, %v985
  %v987 = vpop.f32.mrb[0].mxu0
  %v988 = vadd.f32 %v178, %v987
  %989 = vdwg.mxu0
  %990 = vmatprep.subr.bf16.mxu0 %v692
  %991 = vmatpush1.bf16.msra.mxu0 %v691
  %992 = vmatprep.subr.bf16.mxu0 %v694
  %993 = vmatpush1.bf16.msra.mxu0 %v693
  %994 = vmatprep.subr.bf16.mxu0 %v696
  %995 = vmatpush1.bf16.msra.mxu0 %v695
  %996 = vmatprep.subr.bf16.mxu0 %v698
  %997 = vmatpush1.bf16.msra.mxu0 %v697
  %998 = vmatprep.subr.bf16.mxu0 %v700
  %999 = vmatpush1.bf16.msra.mxu0 %v699
  %1000 = vmatprep.subr.bf16.mxu0 %v702
  %1001 = vmatpush1.bf16.msra.mxu0 %v701
  %1002 = vmatprep.subr.bf16.mxu0 %v704
  %1003 = vmatpush1.bf16.msra.mxu0 %v703
  %1004 = vmatprep.subr.bf16.mxu0 %v706
  %1005 = vmatpush1.bf16.msra.mxu0 %v705
  %1006 = vmatprep.subr.bf16.mxu0 %v708
  %1007 = vmatpush1.bf16.msra.mxu0 %v707
  %1008 = vmatprep.subr.bf16.mxu0 %v710
  %1009 = vmatpush1.bf16.msra.mxu0 %v709
  %1010 = vmatprep.subr.bf16.mxu0 %v712
  %1011 = vmatpush1.bf16.msra.mxu0 %v711
  %1012 = vmatprep.subr.bf16.mxu0 %v714
  %1013 = vmatpush1.bf16.msra.mxu0 %v713
  %1014 = vmatprep.subr.bf16.mxu0 %v716
  %1015 = vmatpush1.bf16.msra.mxu0 %v715
  %1016 = vmatprep.subr.bf16.mxu0 %v718
  %1017 = vmatpush1.bf16.msra.mxu0 %v717
  %1018 = vmatprep.subr.bf16.mxu0 %v720
  %1019 = vmatpush1.bf16.msra.mxu0 %v719
  %1020 = vmatprep.subr.bf16.mxu0 %v722
  %1021 = vmatpush1.bf16.msra.mxu0 %v721
  %1022 = vmatprep.mubr.bf16.mxu0 %v212
  %1023 = vmatmul.mubr.bf16.gmra.mrb[0].mxu0 %v211
  %v1024 = vpop.f32.mrb[0].mxu0
  %v1025 = vadd.f32 %v982, %v1024
  %v1026 = vpop.f32.mrb[0].mxu0
  %v1027 = vadd.f32 %v984, %v1026
  %v1028 = vpop.f32.mrb[0].mxu0
  %v1029 = vadd.f32 %v986, %v1028
  %v1030 = vpop.f32.mrb[0].mxu0
  %v1031 = vadd.f32 %v988, %v1030
  %1032 = vdwg.mxu0
  %1033 = vmatprep.subr.bf16.mxu0 %v724
  %1034 = vmatpush1.bf16.msra.mxu0 %v723
  %1035 = vmatprep.subr.bf16.mxu0 %v726
  %1036 = vmatpush1.bf16.msra.mxu0 %v725
  %1037 = vmatprep.subr.bf16.mxu0 %v728
  %1038 = vmatpush1.bf16.msra.mxu0 %v727
  %1039 = vmatprep.subr.bf16.mxu0 %v730
  %1040 = vmatpush1.bf16.msra.mxu0 %v729
  %1041 = vmatprep.subr.bf16.mxu0 %v732
  %1042 = vmatpush1.bf16.msra.mxu0 %v731
  %1043 = vmatprep.subr.bf16.mxu0 %v734
  %1044 = vmatpush1.bf16.msra.mxu0 %v733
  %1045 = vmatprep.subr.bf16.mxu0 %v736
  %1046 = vmatpush1.bf16.msra.mxu0 %v735
  %1047 = vmatprep.subr.bf16.mxu0 %v738
  %1048 = vmatpush1.bf16.msra.mxu0 %v737
  %1049 = vmatprep.subr.bf16.mxu0 %v740
  %1050 = vmatpush1.bf16.msra.mxu0 %v739
  %1051 = vmatprep.subr.bf16.mxu0 %v742
  %1052 = vmatpush1.bf16.msra.mxu0 %v741
  %1053 = vmatprep.subr.bf16.mxu0 %v744
  %1054 = vmatpush1.bf16.msra.mxu0 %v743
  %1055 = vmatprep.subr.bf16.mxu0 %v746
  %1056 = vmatpush1.bf16.msra.mxu0 %v745
  %1057 = vmatprep.subr.bf16.mxu0 %v748
  %1058 = vmatpush1.bf16.msra.mxu0 %v747
  %1059 = vmatprep.subr.bf16.mxu0 %v750
  %1060 = vmatpush1.bf16.msra.mxu0 %v749
  %1061 = vmatprep.subr.bf16.mxu0 %v752
  %1062 = vmatpush1.bf16.msra.mxu0 %v751
  %1063 = vmatprep.subr.bf16.mxu0 %v754
  %1064 = vmatpush1.bf16.msra.mxu0 %v753
  %1065 = vmatprep.mubr.bf16.mxu0 %v214
  %1066 = vmatmul.mubr.bf16.gmra.mrb[0].mxu0 %v213
  %v1067 = vpop.f32.mrb[0].mxu0
  %v1068 = vadd.f32 %v1025, %v1067
  %v1069 = vpop.f32.mrb[0].mxu0
  %v1070 = vadd.f32 %v1027, %v1069
  %v1071 = vpop.f32.mrb[0].mxu0
  %v1072 = vadd.f32 %v1029, %v1071
  %v1073 = vpop.f32.mrb[0].mxu0
  %v1074 = vadd.f32 %v1031, %v1073
  %1075 = vdwg.mxu0
  %1076 = vmatprep.subr.bf16.mxu0 %v756
  %1077 = vmatpush1.bf16.msra.mxu0 %v755
  %1078 = vmatprep.subr.bf16.mxu0 %v758
  %1079 = vmatpush1.bf16.msra.mxu0 %v757
  %1080 = vmatprep.subr.bf16.mxu0 %v760
  %1081 = vmatpush1.bf16.msra.mxu0 %v759
  %1082 = vmatprep.subr.bf16.mxu0 %v762
  %1083 = vmatpush1.bf16.msra.mxu0 %v761
  %1084 = vmatprep.subr.bf16.mxu0 %v764
  %1085 = vmatpush1.bf16.msra.mxu0 %v763
  %1086 = vmatprep.subr.bf16.mxu0 %v766
  %1087 = vmatpush1.bf16.msra.mxu0 %v765
  %1088 = vmatprep.subr.bf16.mxu0 %v768
  %1089 = vmatpush1.bf16.msra.mxu0 %v767
  %1090 = vmatprep.subr.bf16.mxu0 %v770
  %1091 = vmatpush1.bf16.msra.mxu0 %v769
  %1092 = vmatprep.subr.bf16.mxu0 %v772
  %1093 = vmatpush1.bf16.msra.mxu0 %v771
  %1094 = vmatprep.subr.bf16.mxu0 %v774
  %1095 = vmatpush1.bf16.msra.mxu0 %v773
  %1096 = vmatprep.subr.bf16.mxu0 %v776
  %1097 = vmatpush1.bf16.msra.mxu0 %v775
  %1098 = vmatprep.subr.bf16.mxu0 %v778
  %1099 = vmatpush1.bf16.msra.mxu0 %v777
  %1100 = vmatprep.subr.bf16.mxu0 %v780
  %1101 = vmatpush1.bf16.msra.mxu0 %v779
  %1102 = vmatprep.subr.bf16.mxu0 %v782
  %1103 = vmatpush1.bf16.msra.mxu0 %v781
  %1104 = vmatprep.subr.bf16.mxu0 %v784
  %1105 = vmatpush1.bf16.msra.mxu0 %v783
  %1106 = vmatprep.subr.bf16.mxu0 %v786
  %1107 = vmatpush1.bf16.msra.mxu0 %v785
  %1108 = vmatprep.mubr.bf16.mxu0 %v216
  %1109 = vmatmul.mubr.bf16.gmra.mrb[0].mxu0 %v215
  %v1110 = vpop.f32.mrb[0].mxu0
  %v1111 = vadd.f32 %v1068, %v1110
  %v1112 = vpop.f32.mrb[0].mxu0
  %v1113 = vadd.f32 %v1070, %v1112
  %v1114 = vpop.f32.mrb[0].mxu0
  %v1115 = vadd.f32 %v1072, %v1114
  %v1116 = vpop.f32.mrb[0].mxu0
  %v1117 = vadd.f32 %v1074, %v1116
  %1118 = vdwg.mxu0
  %1119 = vmatprep.subr.bf16.mxu0 %v788
  %1120 = vmatpush1.bf16.msra.mxu0 %v787
  %1121 = vmatprep.subr.bf16.mxu0 %v790
  %1122 = vmatpush1.bf16.msra.mxu0 %v789
  %1123 = vmatprep.subr.bf16.mxu0 %v792
  %1124 = vmatpush1.bf16.msra.mxu0 %v791
  %1125 = vmatprep.subr.bf16.mxu0 %v794
  %1126 = vmatpush1.bf16.msra.mxu0 %v793
  %1127 = vmatprep.subr.bf16.mxu0 %v796
  %1128 = vmatpush1.bf16.msra.mxu0 %v795
  %1129 = vmatprep.subr.bf16.mxu0 %v798
  %1130 = vmatpush1.bf16.msra.mxu0 %v797
  %1131 = vmatprep.subr.bf16.mxu0 %v800
  %1132 = vmatpush1.bf16.msra.mxu0 %v799
  %1133 = vmatprep.subr.bf16.mxu0 %v802
  %1134 = vmatpush1.bf16.msra.mxu0 %v801
  %1135 = vmatprep.subr.bf16.mxu0 0
  %1136 = vmatpush1.bf16.msra.mxu0 0
  %1137 = vmatprep.subr.bf16.mxu0 0
  %1138 = vmatpush1.bf16.msra.mxu0 0
  %1139 = vmatprep.subr.bf16.mxu0 0
  %1140 = vmatpush1.bf16.msra.mxu0 0
  %1141 = vmatprep.subr.bf16.mxu0 0
  %1142 = vmatpush1.bf16.msra.mxu0 0
  %1143 = vmatprep.subr.bf16.mxu0 0
  %1144 = vmatpush1.bf16.msra.mxu0 0
  %1145 = vmatprep.subr.bf16.mxu0 0
  %1146 = vmatpush1.bf16.msra.mxu0 0
  %1147 = vmatprep.subr.bf16.mxu0 0
  %1148 = vmatpush1.bf16.msra.mxu0 0
  %1149 = vmatprep.subr.bf16.mxu0 0
  %1150 = vmatpush1.bf16.msra.mxu0 0
  %1151 = vmatprep.mubr.bf16.mxu0 0
  %1152 = vmatmul.mubr.bf16.gmra.mrb[0].mxu0 %v217
  %v1153 = vpop.f32.mrb[0].mxu0
  %v1154 = vadd.f32 %v1111, %v1153
  %v1155 = vpop.f32.mrb[0].mxu0
  %v1156 = vadd.f32 %v1113, %v1155
  %v1157 = vpop.f32.mrb[0].mxu0
  %v1158 = vadd.f32 %v1115, %v1157
  %v1159 = vpop.f32.mrb[0].mxu0
  %v1160 = vadd.f32 %v1117, %v1159
  %1161 = vdwg.mxu0
  %v1162 = vmax.f32 %v1154, 0.0
  %v1163 = vmax.f32 %v1156, 0.0
  %v1164 = vmax.f32 %v1158, 0.0
  %v1165 = vmax.f32 %v1160, 0.0
  %v1166 = vpack.c.bf16 %v1164, %v1162
  %v1167 = vpack.c.bf16 %v1165, %v1163
  %v1170 = vunpack.c.l.b16 %v1166
  %v1171 = vunpack.c.l.b16 %v1167
  %v1172 = vunpack.c.h.b16 %v1166
  %v1173 = vunpack.c.h.b16 %v1167
  %v1174 = vpack.c.b16 %v1171, %v1170
  %v1175 = vpack.c.b16 %v1173, %v1172
  %1178 = vst [vmem:[%s3] sm:$0xff] %v1174
  %1179 = vst [vmem:[%s3 + $0x8] sm:$0xff] %v1175
  // Predicated region
  $region14: #{unet_forward.19} parent=0 // pred_check
    _
  $region15: #{unet_forward.19} parent=0 // pred_check_branch
    %1181 = sbr.rel (0) target = $region17
  $region16: #{unet_forward.19} parent=0 // pred_region
    _
  $region17: #{unet_forward.19} parent=0 // pred_fallthru
    _
  // Predicated region
  $region18: #{unet_forward.19} parent=0 // pred_check
    _
  $region19: #{unet_forward.19} parent=0 // pred_check_branch
    %1183 = sbr.rel (0) target = $region21
  $region20: #{unet_forward.19} parent=0 // pred_region
    _
  $region21: #{unet_forward.19} parent=0 // pred_fallthru
    _

// kernel: unet_forward.20
$region0: #{unet_forward.20}
  #allocation0 [shape = 'u32[]', space=smem, size = 0x4, offset = 0x4, fixed_abs, tag = 'smem constant byte address 0x4 - core index']
  #allocation1 [shape = 'u32[144,128]{1,0:T(1,128)}', space=vmem, size = 0x12000, scoped, tag = 'internal scratch']
  %s0 = inlined_call_operand.vmem [shape: bf16[32,1152], index: 0, kind: input, shape index: {}]
  %s1 = inlined_call_operand.vmem [shape: bf16[1152,128], index: 1, kind: input, shape index: {}]
  %s2 = inlined_call_operand.vmem [shape: f32[1,128], index: 2, kind: input, shape index: {}]
  %s3 = inlined_call_operand.vmem [shape: bf16[32,128], index: 3, kind: output, shape index: {}]
  %s4 = sld [smem:[#allocation0]]
  $region22: #{unet_forward.20} parent=0
    _
  %s6 = ssub.s32 1, %s4
  %s7 = scalar_select 0, %s6, %s4
  // Predicated region
  $region2: #{unet_forward.20} parent=0 // pred_check
    _
  $region3: #{unet_forward.20} parent=0 // pred_check_branch
    %9 = sbr.rel (0) target = $region5
  $region4: #{unet_forward.20} parent=0 // pred_region
    _
  $region5: #{unet_forward.20} parent=0 // pred_fallthru
    _
  // Predicated region
  $region6: #{unet_forward.20} parent=0 // pred_check
    _
  $region7: #{unet_forward.20} parent=0 // pred_check_branch
    %11 = sbr.rel (0) target = $region9
  $region8: #{unet_forward.20} parent=0 // pred_region
    _
  $region9: #{unet_forward.20} parent=0 // pred_fallthru
    _
  // Predicated region
  $region10: #{unet_forward.20} parent=0 // pred_check
    _
  $region11: #{unet_forward.20} parent=0 // pred_check_branch
    %13 = sbr.rel (0) target = $region13
  $region12: #{unet_forward.20} parent=0 // pred_region
    _
  $region13: #{unet_forward.20} parent=0 // pred_fallthru
    _
  %v15 = vld [vmem:[%s0] sm:$0xff]
  %v16 = vld [vmem:[%s0 + $0x8] sm:$0xff]
  %v17 = vld [vmem:[%s0 + $0x10] sm:$0xff]
  %v18 = vld [vmem:[%s0 + $0x18] sm:$0xff]
  %v19 = vld [vmem:[%s0 + $0x20] sm:$0xf]
  %v20 = vld [vmem:[%s0 + $0x24] sm:$0xff]
  %v21 = vld [vmem:[%s0 + $0x2c] sm:$0xff]
  %v22 = vld [vmem:[%s0 + $0x34] sm:$0xff]
  %v23 = vld [vmem:[%s0 + $0x3c] sm:$0xff]
  %v24 = vld [vmem:[%s0 + $0x44] sm:$0xf]
  %v25 = vld [vmem:[%s0 + $0x48] sm:$0xff]
  %v26 = vld [vmem:[%s0 + $0x50] sm:$0xff]
  %v27 = vld [vmem:[%s0 + $0x58] sm:$0xff]
  %v28 = vld [vmem:[%s0 + $0x60] sm:$0xff]
  %v29 = vld [vmem:[%s0 + $0x68] sm:$0xf]
  %v30 = vld [vmem:[%s0 + $0x6c] sm:$0xff]
  %v31 = vld [vmem:[%s0 + $0x74] sm:$0xff]
  %v32 = vld [vmem:[%s0 + $0x7c] sm:$0xff]
  %v33 = vld [vmem:[%s0 + $0x84] sm:$0xff]
  %v34 = vld [vmem:[%s0 + $0x8c] sm:$0xf]
  %v35 = vld [vmem:[%s1] sm:$0xf]
  %v36 = vld [vmem:[%s1 + $0x4] sm:$0xf]
  %v37 = vld [vmem:[%s1 + $0x8] sm:$0xf]
  %v38 = vld [vmem:[%s1 + $0xc] sm:$0xf]
  %v39 = vld [vmem:[%s1 + $0x10] sm:$0xf]
  %v40 = vld [vmem:[%s1 + $0x14] sm:$0xf]
  %v41 = vld [vmem:[%s1 + $0x18] sm:$0xf]
  %v42 = vld [vmem:[%s1 + $0x1c] sm:$0xf]
  %v43 = vld [vmem:[%s1 + $0x20] sm:$0xf]
  %v44 = vld [vmem:[%s1 + $0x24] sm:$0xf]
  %v45 = vld [vmem:[%s1 + $0x28] sm:$0xf]
  %v46 = vld [vmem:[%s1 + $0x2c] sm:$0xf]
  %v47 = vld [vmem:[%s1 + $0x30] sm:$0xf]
  %v48 = vld [vmem:[%s1 + $0x34] sm:$0xf]
  %v49 = vld [vmem:[%s1 + $0x38] sm:$0xf]
  %v50 = vld [vmem:[%s1 + $0x3c] sm:$0xf]
  %v51 = vld [vmem:[%s1 + $0x40] sm:$0xf]
  %v52 = vld [vmem:[%s1 + $0x44] sm:$0xf]
  %v53 = vld [vmem:[%s1 + $0x48] sm:$0xf]
  %v54 = vld [vmem:[%s1 + $0x4c] sm:$0xf]
  %v55 = vld [vmem:[%s1 + $0x50] sm:$0xf]
  %v56 = vld [vmem:[%s1 + $0x54] sm:$0xf]
  %v57 = vld [vmem:[%s1 + $0x58] sm:$0xf]
  %v58 = vld [vmem:[%s1 + $0x5c] sm:$0xf]
  %v59 = vld [vmem:[%s1 + $0x60] sm:$0xf]
  %v60 = vld [vmem:[%s1 + $0x64] sm:$0xf]
  %v61 = vld [vmem:[%s1 + $0x68] sm:$0xf]
  %v62 = vld [vmem:[%s1 + $0x6c] sm:$0xf]
  %v63 = vld [vmem:[%s1 + $0x70] sm:$0xf]
  %v64 = vld [vmem:[%s1 + $0x74] sm:$0xf]
  %v65 = vld [vmem:[%s1 + $0x78] sm:$0xf]
  %v66 = vld [vmem:[%s1 + $0x7c] sm:$0xf]
  %v67 = vld [vmem:[%s1 + $0x80] sm:$0xf]
  %v68 = vld [vmem:[%s1 + $0x84] sm:$0xf]
  %v69 = vld [vmem:[%s1 + $0x88] sm:$0xf]
  %v70 = vld [vmem:[%s1 + $0x8c] sm:$0xf]
  %v71 = vld [vmem:[%s1 + $0x90] sm:$0xf]
  %v72 = vld [vmem:[%s1 + $0x94] sm:$0xf]
  %v73 = vld [vmem:[%s1 + $0x98] sm:$0xf]
  %v74 = vld [vmem:[%s1 + $0x9c] sm:$0xf]
  %v75 = vld [vmem:[%s1 + $0xa0] sm:$0xf]
  %v76 = vld [vmem:[%s1 + $0xa4] sm:$0xf]
  %v77 = vld [vmem:[%s1 + $0xa8] sm:$0xf]
  %v78 = vld [vmem:[%s1 + $0xac] sm:$0xf]
  %v79 = vld [vmem:[%s1 + $0xb0] sm:$0xf]
  %v80 = vld [vmem:[%s1 + $0xb4] sm:$0xf]
  %v81 = vld [vmem:[%s1 + $0xb8] sm:$0xf]
  %v82 = vld [vmem:[%s1 + $0xbc] sm:$0xf]
  %v83 = vld [vmem:[%s1 + $0xc0] sm:$0xf]
  %v84 = vld [vmem:[%s1 + $0xc4] sm:$0xf]
  %v85 = vld [vmem:[%s1 + $0xc8] sm:$0xf]
  %v86 = vld [vmem:[%s1 + $0xcc] sm:$0xf]
  %v87 = vld [vmem:[%s1 + $0xd0] sm:$0xf]
  %v88 = vld [vmem:[%s1 + $0xd4] sm:$0xf]
  %v89 = vld [vmem:[%s1 + $0xd8] sm:$0xf]
  %v90 = vld [vmem:[%s1 + $0xdc] sm:$0xf]
  %v91 = vld [vmem:[%s1 + $0xe0] sm:$0xf]
  %v92 = vld [vmem:[%s1 + $0xe4] sm:$0xf]
  %v93 = vld [vmem:[%s1 + $0xe8] sm:$0xf]
  %v94 = vld [vmem:[%s1 + $0xec] sm:$0xf]
  %v95 = vld [vmem:[%s1 + $0xf0] sm:$0xf]
  %v96 = vld [vmem:[%s1 + $0xf4] sm:$0xf]
  %v97 = vld [vmem:[%s1 + $0xf8] sm:$0xf]
  %v98 = vld [vmem:[%s1 + $0xfc] sm:$0xf]
  %v99 = vld [vmem:[%s1 + $0x100] sm:$0xf]
  %v100 = vld [vmem:[%s1 + $0x104] sm:$0xf]
  %v101 = vld [vmem:[%s1 + $0x108] sm:$0xf]
  %v102 = vld [vmem:[%s1 + $0x10c] sm:$0xf]
  %v103 = vld [vmem:[%s1 + $0x110] sm:$0xf]
  %v104 = vld [vmem:[%s1 + $0x114] sm:$0xf]
  %v105 = vld [vmem:[%s1 + $0x118] sm:$0xf]
  %v106 = vld [vmem:[%s1 + $0x11c] sm:$0xf]
  %v107 = vld [vmem:[%s1 + $0x120] sm:$0xf]
  %v108 = vld [vmem:[%s1 + $0x124] sm:$0xf]
  %v109 = vld [vmem:[%s1 + $0x128] sm:$0xf]
  %v110 = vld [vmem:[%s1 + $0x12c] sm:$0xf]
  %v111 = vld [vmem:[%s1 + $0x130] sm:$0xf]
  %v112 = vld [vmem:[%s1 + $0x134] sm:$0xf]
  %v113 = vld [vmem:[%s1 + $0x138] sm:$0xf]
  %v114 = vld [vmem:[%s1 + $0x13c] sm:$0xf]
  %v115 = vld [vmem:[%s1 + $0x140] sm:$0xf]
  %v116 = vld [vmem:[%s1 + $0x144] sm:$0xf]
  %v117 = vld [vmem:[%s1 + $0x148] sm:$0xf]
  %v118 = vld [vmem:[%s1 + $0x14c] sm:$0xf]
  %v119 = vld [vmem:[%s1 + $0x150] sm:$0xf]
  %v120 = vld [vmem:[%s1 + $0x154] sm:$0xf]
  %v121 = vld [vmem:[%s1 + $0x158] sm:$0xf]
  %v122 = vld [vmem:[%s1 + $0x15c] sm:$0xf]
  %v123 = vld [vmem:[%s1 + $0x160] sm:$0xf]
  %v124 = vld [vmem:[%s1 + $0x164] sm:$0xf]
  %v125 = vld [vmem:[%s1 + $0x168] sm:$0xf]
  %v126 = vld [vmem:[%s1 + $0x16c] sm:$0xf]
  %v127 = vld [vmem:[%s1 + $0x170] sm:$0xf]
  %v128 = vld [vmem:[%s1 + $0x174] sm:$0xf]
  %v129 = vld [vmem:[%s1 + $0x178] sm:$0xf]
  %v130 = vld [vmem:[%s1 + $0x17c] sm:$0xf]
  %v131 = vld [vmem:[%s1 + $0x180] sm:$0xf]
  %v132 = vld [vmem:[%s1 + $0x184] sm:$0xf]
  %v133 = vld [vmem:[%s1 + $0x188] sm:$0xf]
  %v134 = vld [vmem:[%s1 + $0x18c] sm:$0xf]
  %v135 = vld [vmem:[%s1 + $0x190] sm:$0xf]
  %v136 = vld [vmem:[%s1 + $0x194] sm:$0xf]
  %v137 = vld [vmem:[%s1 + $0x198] sm:$0xf]
  %v138 = vld [vmem:[%s1 + $0x19c] sm:$0xf]
  %v139 = vld [vmem:[%s1 + $0x1a0] sm:$0xf]
  %v140 = vld [vmem:[%s1 + $0x1a4] sm:$0xf]
  %v141 = vld [vmem:[%s1 + $0x1a8] sm:$0xf]
  %v142 = vld [vmem:[%s1 + $0x1ac] sm:$0xf]
  %v143 = vld [vmem:[%s1 + $0x1b0] sm:$0xf]
  %v144 = vld [vmem:[%s1 + $0x1b4] sm:$0xf]
  %v145 = vld [vmem:[%s1 + $0x1b8] sm:$0xf]
  %v146 = vld [vmem:[%s1 + $0x1bc] sm:$0xf]
  %v147 = vld [vmem:[%s1 + $0x1c0] sm:$0xf]
  %v148 = vld [vmem:[%s1 + $0x1c4] sm:$0xf]
  %v149 = vld [vmem:[%s1 + $0x1c8] sm:$0xf]
  %v150 = vld [vmem:[%s1 + $0x1cc] sm:$0xf]
  %v151 = vld [vmem:[%s1 + $0x1d0] sm:$0xf]
  %v152 = vld [vmem:[%s1 + $0x1d4] sm:$0xf]
  %v153 = vld [vmem:[%s1 + $0x1d8] sm:$0xf]
  %v154 = vld [vmem:[%s1 + $0x1dc] sm:$0xf]
  %v155 = vld [vmem:[%s1 + $0x1e0] sm:$0xf]
  %v156 = vld [vmem:[%s1 + $0x1e4] sm:$0xf]
  %v157 = vld [vmem:[%s1 + $0x1e8] sm:$0xf]
  %v158 = vld [vmem:[%s1 + $0x1ec] sm:$0xf]
  %v159 = vld [vmem:[%s1 + $0x1f0] sm:$0xf]
  %v160 = vld [vmem:[%s1 + $0x1f4] sm:$0xf]
  %v161 = vld [vmem:[%s1 + $0x1f8] sm:$0xf]
  %v162 = vld [vmem:[%s1 + $0x1fc] sm:$0xf]
  %v163 = vld [vmem:[%s1 + $0x200] sm:$0xf]
  %v164 = vld [vmem:[%s1 + $0x204] sm:$0xf]
  %v165 = vld [vmem:[%s1 + $0x208] sm:$0xf]
  %v166 = vld [vmem:[%s1 + $0x20c] sm:$0xf]
  %v167 = vld [vmem:[%s1 + $0x210] sm:$0xf]
  %v168 = vld [vmem:[%s1 + $0x214] sm:$0xf]
  %v169 = vld [vmem:[%s1 + $0x218] sm:$0xf]
  %v170 = vld [vmem:[%s1 + $0x21c] sm:$0xf]
  %v171 = vld [vmem:[%s1 + $0x220] sm:$0xf]
  %v172 = vld [vmem:[%s1 + $0x224] sm:$0xf]
  %v173 = vld [vmem:[%s1 + $0x228] sm:$0xf]
  %v174 = vld [vmem:[%s1 + $0x22c] sm:$0xf]
  %v175 = vld [vmem:[%s1 + $0x230] sm:$0xf]
  %v176 = vld [vmem:[%s1 + $0x234] sm:$0xf]
  %v177 = vld [vmem:[%s1 + $0x238] sm:$0xf]
  %v178 = vld [vmem:[%s1 + $0x23c] sm:$0xf]
  %v179 = vld [vmem:[%s2] sm:$0x1]
  %v181 = vlaneseq
  %v182 = vshrl.u32 %v181, 7
  %v183 = vsub.s32 0, %v182
  %v184 = vrot.slane %v179, %v183
  %v206 = vunpack.c.l.b16 %v15
  %v207 = vunpack.c.h.b16 %v15
  %v208 = vunpack.c.l.b16 %v16
  %v209 = vunpack.c.h.b16 %v16
  %v210 = vunpack.c.l.b16 %v17
  %v211 = vunpack.c.h.b16 %v17
  %v212 = vunpack.c.l.b16 %v18
  %v213 = vunpack.c.h.b16 %v18
  %v214 = vunpack.c.l.b16 %v19
  %v215 = vunpack.c.l.b16 %v20
  %v216 = vunpack.c.h.b16 %v20
  %v217 = vunpack.c.l.b16 %v21
  %v218 = vunpack.c.h.b16 %v21
  %v219 = vunpack.c.l.b16 %v22
  %v220 = vunpack.c.h.b16 %v22
  %v221 = vunpack.c.l.b16 %v23
  %v222 = vunpack.c.h.b16 %v23
  %v223 = vunpack.c.l.b16 %v24
  %v224 = vunpack.c.l.b16 %v25
  %v225 = vunpack.c.h.b16 %v25
  %v226 = vunpack.c.l.b16 %v26
  %v227 = vunpack.c.h.b16 %v26
  %v228 = vunpack.c.l.b16 %v27
  %v229 = vunpack.c.h.b16 %v27
  %v230 = vunpack.c.l.b16 %v28
  %v231 = vunpack.c.h.b16 %v28
  %v232 = vunpack.c.l.b16 %v29
  %v233 = vunpack.c.l.b16 %v30
  %v234 = vunpack.c.h.b16 %v30
  %v235 = vunpack.c.l.b16 %v31
  %v236 = vunpack.c.h.b16 %v31
  %v237 = vunpack.c.l.b16 %v32
  %v238 = vunpack.c.h.b16 %v32
  %v239 = vunpack.c.l.b16 %v33
  %v240 = vunpack.c.h.b16 %v33
  %v241 = vunpack.c.l.b16 %v34
  %v242 = vpack.c.b16 %v215, %v206
  %v243 = vpack.c.b16 %v216, %v207
  %v244 = vpack.c.b16 %v217, %v208
  %v245 = vpack.c.b16 %v218, %v209
  %v246 = vpack.c.b16 %v219, %v210
  %v247 = vpack.c.b16 %v220, %v211
  %v248 = vpack.c.b16 %v221, %v212
  %v249 = vpack.c.b16 %v222, %v213
  %v250 = vpack.c.b16 %v223, %v214
  %v251 = vpack.c.b16 %v233, %v224
  %v252 = vpack.c.b16 %v234, %v225
  %v253 = vpack.c.b16 %v235, %v226
  %v254 = vpack.c.b16 %v236, %v227
  %v255 = vpack.c.b16 %v237, %v228
  %v256 = vpack.c.b16 %v238, %v229
  %v257 = vpack.c.b16 %v239, %v230
  %v258 = vpack.c.b16 %v240, %v231
  %v259 = vpack.c.b16 %v241, %v232
  %v422 = vunpack.c.l.b16 %v35
  %v423 = vunpack.c.l.b16 %v36
  %v424 = vunpack.c.l.b16 %v37
  %v425 = vunpack.c.l.b16 %v38
  %v426 = vunpack.c.l.b16 %v39
  %v427 = vunpack.c.l.b16 %v40
  %v428 = vunpack.c.l.b16 %v41
  %v429 = vunpack.c.l.b16 %v42
  %v430 = vunpack.c.l.b16 %v43
  %v431 = vunpack.c.l.b16 %v44
  %v432 = vunpack.c.l.b16 %v45
  %v433 = vunpack.c.l.b16 %v46
  %v434 = vunpack.c.l.b16 %v47
  %v435 = vunpack.c.l.b16 %v48
  %v436 = vunpack.c.l.b16 %v49
  %v437 = vunpack.c.l.b16 %v50
  %v438 = vunpack.c.l.b16 %v51
  %v439 = vunpack.c.l.b16 %v52
  %v440 = vunpack.c.l.b16 %v53
  %v441 = vunpack.c.l.b16 %v54
  %v442 = vunpack.c.l.b16 %v55
  %v443 = vunpack.c.l.b16 %v56
  %v444 = vunpack.c.l.b16 %v57
  %v445 = vunpack.c.l.b16 %v58
  %v446 = vunpack.c.l.b16 %v59
  %v447 = vunpack.c.l.b16 %v60
  %v448 = vunpack.c.l.b16 %v61
  %v449 = vunpack.c.l.b16 %v62
  %v450 = vunpack.c.l.b16 %v63
  %v451 = vunpack.c.l.b16 %v64
  %v452 = vunpack.c.l.b16 %v65
  %v453 = vunpack.c.l.b16 %v66
  %v454 = vunpack.c.l.b16 %v67
  %v455 = vunpack.c.l.b16 %v68
  %v456 = vunpack.c.l.b16 %v69
  %v457 = vunpack.c.l.b16 %v70
  %v458 = vunpack.c.l.b16 %v71
  %v459 = vunpack.c.l.b16 %v72
  %v460 = vunpack.c.l.b16 %v73
  %v461 = vunpack.c.l.b16 %v74
  %v462 = vunpack.c.l.b16 %v75
  %v463 = vunpack.c.l.b16 %v76
  %v464 = vunpack.c.l.b16 %v77
  %v465 = vunpack.c.l.b16 %v78
  %v466 = vunpack.c.l.b16 %v79
  %v467 = vunpack.c.l.b16 %v80
  %v468 = vunpack.c.l.b16 %v81
  %v469 = vunpack.c.l.b16 %v82
  %v470 = vunpack.c.l.b16 %v83
  %v471 = vunpack.c.l.b16 %v84
  %v472 = vunpack.c.l.b16 %v85
  %v473 = vunpack.c.l.b16 %v86
  %v474 = vunpack.c.l.b16 %v87
  %v475 = vunpack.c.l.b16 %v88
  %v476 = vunpack.c.l.b16 %v89
  %v477 = vunpack.c.l.b16 %v90
  %v478 = vunpack.c.l.b16 %v91
  %v479 = vunpack.c.l.b16 %v92
  %v480 = vunpack.c.l.b16 %v93
  %v481 = vunpack.c.l.b16 %v94
  %v482 = vunpack.c.l.b16 %v95
  %v483 = vunpack.c.l.b16 %v96
  %v484 = vunpack.c.l.b16 %v97
  %v485 = vunpack.c.l.b16 %v98
  %v486 = vunpack.c.l.b16 %v99
  %v487 = vunpack.c.l.b16 %v100
  %v488 = vunpack.c.l.b16 %v101
  %v489 = vunpack.c.l.b16 %v102
  %v490 = vunpack.c.l.b16 %v103
  %v491 = vunpack.c.l.b16 %v104
  %v492 = vunpack.c.l.b16 %v105
  %v493 = vunpack.c.l.b16 %v106
  %v494 = vunpack.c.l.b16 %v107
  %v495 = vunpack.c.l.b16 %v108
  %v496 = vunpack.c.l.b16 %v109
  %v497 = vunpack.c.l.b16 %v110
  %v498 = vunpack.c.l.b16 %v111
  %v499 = vunpack.c.l.b16 %v112
  %v500 = vunpack.c.l.b16 %v113
  %v501 = vunpack.c.l.b16 %v114
  %v502 = vunpack.c.l.b16 %v115
  %v503 = vunpack.c.l.b16 %v116
  %v504 = vunpack.c.l.b16 %v117
  %v505 = vunpack.c.l.b16 %v118
  %v506 = vunpack.c.l.b16 %v119
  %v507 = vunpack.c.l.b16 %v120
  %v508 = vunpack.c.l.b16 %v121
  %v509 = vunpack.c.l.b16 %v122
  %v510 = vunpack.c.l.b16 %v123
  %v511 = vunpack.c.l.b16 %v124
  %v512 = vunpack.c.l.b16 %v125
  %v513 = vunpack.c.l.b16 %v126
  %v514 = vunpack.c.l.b16 %v127
  %v515 = vunpack.c.l.b16 %v128
  %v516 = vunpack.c.l.b16 %v129
  %v517 = vunpack.c.l.b16 %v130
  %v518 = vunpack.c.l.b16 %v131
  %v519 = vunpack.c.l.b16 %v132
  %v520 = vunpack.c.l.b16 %v133
  %v521 = vunpack.c.l.b16 %v134
  %v522 = vunpack.c.l.b16 %v135
  %v523 = vunpack.c.l.b16 %v136
  %v524 = vunpack.c.l.b16 %v137
  %v525 = vunpack.c.l.b16 %v138
  %v526 = vunpack.c.l.b16 %v139
  %v527 = vunpack.c.l.b16 %v140
  %v528 = vunpack.c.l.b16 %v141
  %v529 = vunpack.c.l.b16 %v142
  %v530 = vunpack.c.l.b16 %v143
  %v531 = vunpack.c.l.b16 %v144
  %v532 = vunpack.c.l.b16 %v145
  %v533 = vunpack.c.l.b16 %v146
  %v534 = vunpack.c.l.b16 %v147
  %v535 = vunpack.c.l.b16 %v148
  %v536 = vunpack.c.l.b16 %v149
  %v537 = vunpack.c.l.b16 %v150
  %v538 = vunpack.c.l.b16 %v151
  %v539 = vunpack.c.l.b16 %v152
  %v540 = vunpack.c.l.b16 %v153
  %v541 = vunpack.c.l.b16 %v154
  %v542 = vunpack.c.l.b16 %v155
  %v543 = vunpack.c.l.b16 %v156
  %v544 = vunpack.c.l.b16 %v157
  %v545 = vunpack.c.l.b16 %v158
  %v546 = vunpack.c.l.b16 %v159
  %v547 = vunpack.c.l.b16 %v160
  %v548 = vunpack.c.l.b16 %v161
  %v549 = vunpack.c.l.b16 %v162
  %v550 = vunpack.c.l.b16 %v163
  %v551 = vunpack.c.l.b16 %v164
  %v552 = vunpack.c.l.b16 %v165
  %v553 = vunpack.c.l.b16 %v166
  %v554 = vunpack.c.l.b16 %v167
  %v555 = vunpack.c.l.b16 %v168
  %v556 = vunpack.c.l.b16 %v169
  %v557 = vunpack.c.l.b16 %v170
  %v558 = vunpack.c.l.b16 %v171
  %v559 = vunpack.c.l.b16 %v172
  %v560 = vunpack.c.l.b16 %v173
  %v561 = vunpack.c.l.b16 %v174
  %v562 = vunpack.c.l.b16 %v175
  %v563 = vunpack.c.l.b16 %v176
  %v564 = vunpack.c.l.b16 %v177
  %v565 = vunpack.c.l.b16 %v178
  %v566 = vpack.c.b16 %v423, %v422
  %v567 = vpack.c.b16 %v425, %v424
  %v568 = vpack.c.b16 %v427, %v426
  %v569 = vpack.c.b16 %v429, %v428
  %v570 = vpack.c.b16 %v431, %v430
  %v571 = vpack.c.b16 %v433, %v432
  %v572 = vpack.c.b16 %v435, %v434
  %v573 = vpack.c.b16 %v437, %v436
  %v574 = vpack.c.b16 %v439, %v438
  %v575 = vpack.c.b16 %v441, %v440
  %v576 = vpack.c.b16 %v443, %v442
  %v577 = vpack.c.b16 %v445, %v444
  %v578 = vpack.c.b16 %v447, %v446
  %v579 = vpack.c.b16 %v449, %v448
  %v580 = vpack.c.b16 %v451, %v450
  %v581 = vpack.c.b16 %v453, %v452
  %v582 = vpack.c.b16 %v455, %v454
  %v583 = vpack.c.b16 %v457, %v456
  %v584 = vpack.c.b16 %v459, %v458
  %v585 = vpack.c.b16 %v461, %v460
  %v586 = vpack.c.b16 %v463, %v462
  %v587 = vpack.c.b16 %v465, %v464
  %v588 = vpack.c.b16 %v467, %v466
  %v589 = vpack.c.b16 %v469, %v468
  %v590 = vpack.c.b16 %v471, %v470
  %v591 = vpack.c.b16 %v473, %v472
  %v592 = vpack.c.b16 %v475, %v474
  %v593 = vpack.c.b16 %v477, %v476
  %v594 = vpack.c.b16 %v479, %v478
  %v595 = vpack.c.b16 %v481, %v480
  %v596 = vpack.c.b16 %v483, %v482
  %v597 = vpack.c.b16 %v485, %v484
  %v598 = vpack.c.b16 %v487, %v486
  %v599 = vpack.c.b16 %v489, %v488
  %v600 = vpack.c.b16 %v491, %v490
  %v601 = vpack.c.b16 %v493, %v492
  %v602 = vpack.c.b16 %v495, %v494
  %v603 = vpack.c.b16 %v497, %v496
  %v604 = vpack.c.b16 %v499, %v498
  %v605 = vpack.c.b16 %v501, %v500
  %v606 = vpack.c.b16 %v503, %v502
  %v607 = vpack.c.b16 %v505, %v504
  %v608 = vpack.c.b16 %v507, %v506
  %v609 = vpack.c.b16 %v509, %v508
  %v610 = vpack.c.b16 %v511, %v510
  %v611 = vpack.c.b16 %v513, %v512
  %v612 = vpack.c.b16 %v515, %v514
  %v613 = vpack.c.b16 %v517, %v516
  %v614 = vpack.c.b16 %v519, %v518
  %v615 = vpack.c.b16 %v521, %v520
  %v616 = vpack.c.b16 %v523, %v522
  %v617 = vpack.c.b16 %v525, %v524
  %v618 = vpack.c.b16 %v527, %v526
  %v619 = vpack.c.b16 %v529, %v528
  %v620 = vpack.c.b16 %v531, %v530
  %v621 = vpack.c.b16 %v533, %v532
  %v622 = vpack.c.b16 %v535, %v534
  %v623 = vpack.c.b16 %v537, %v536
  %v624 = vpack.c.b16 %v539, %v538
  %v625 = vpack.c.b16 %v541, %v540
  %v626 = vpack.c.b16 %v543, %v542
  %v627 = vpack.c.b16 %v545, %v544
  %v628 = vpack.c.b16 %v547, %v546
  %v629 = vpack.c.b16 %v549, %v548
  %v630 = vpack.c.b16 %v551, %v550
  %v631 = vpack.c.b16 %v553, %v552
  %v632 = vpack.c.b16 %v555, %v554
  %v633 = vpack.c.b16 %v557, %v556
  %v634 = vpack.c.b16 %v559, %v558
  %v635 = vpack.c.b16 %v561, %v560
  %v636 = vpack.c.b16 %v563, %v562
  %v637 = vpack.c.b16 %v565, %v564
  %710 = vmatprep.subr.bf16.mxu0 0
  %711 = vmatpush1.bf16.msra.mxu0 %v566
  %712 = vmatprep.subr.bf16.mxu0 0
  %713 = vmatpush1.bf16.msra.mxu0 %v567
  %714 = vmatprep.subr.bf16.mxu0 0
  %715 = vmatpush1.bf16.msra.mxu0 %v568
  %716 = vmatprep.subr.bf16.mxu0 0
  %717 = vmatpush1.bf16.msra.mxu0 %v569
  %718 = vmatprep.subr.bf16.mxu0 0
  %719 = vmatpush1.bf16.msra.mxu0 %v570
  %720 = vmatprep.subr.bf16.mxu0 0
  %721 = vmatpush1.bf16.msra.mxu0 %v571
  %722 = vmatprep.subr.bf16.mxu0 0
  %723 = vmatpush1.bf16.msra.mxu0 %v572
  %724 = vmatprep.subr.bf16.mxu0 0
  %725 = vmatpush1.bf16.msra.mxu0 %v573
  %726 = vmatprep.subr.bf16.mxu0 0
  %727 = vmatpush1.bf16.msra.mxu0 %v574
  %728 = vmatprep.subr.bf16.mxu0 0
  %729 = vmatpush1.bf16.msra.mxu0 %v575
  %730 = vmatprep.subr.bf16.mxu0 0
  %731 = vmatpush1.bf16.msra.mxu0 %v576
  %732 = vmatprep.subr.bf16.mxu0 0
  %733 = vmatpush1.bf16.msra.mxu0 %v577
  %734 = vmatprep.subr.bf16.mxu0 0
  %735 = vmatpush1.bf16.msra.mxu0 %v578
  %736 = vmatprep.subr.bf16.mxu0 0
  %737 = vmatpush1.bf16.msra.mxu0 %v579
  %738 = vmatprep.subr.bf16.mxu0 0
  %739 = vmatpush1.bf16.msra.mxu0 %v580
  %740 = vmatprep.subr.bf16.mxu0 0
  %741 = vmatpush1.bf16.msra.mxu0 %v581
  %742 = vmatprep.mubr.bf16.mxu0 %v243
  %743 = vmatmul.mubr.bf16.gmra.mrb[0].mxu0 %v242
  %v744 = vpop.f32.mrb[0].mxu0
  %v745 = vadd.f32 %v184, %v744
  %v746 = vpop.f32.mrb[0].mxu0
  %v747 = vpop.f32.mrb[0].mxu0
  %v748 = vadd.f32 %v184, %v747
  %v749 = vpop.f32.mrb[0].mxu0
  %750 = vmatprep.mubr.bf16.mxu0 %v252
  %751 = vmatmul.mubr.bf16.gmra.mrb[0].mxu0 %v251
  %v752 = vpop.f32.mrb[0].mxu0
  %v753 = vadd.f32 %v184, %v752
  %v754 = vpop.f32.mrb[0].mxu0
  %v755 = vpop.f32.mrb[0].mxu0
  %v756 = vadd.f32 %v184, %v755
  %v757 = vpop.f32.mrb[0].mxu0
  %758 = vdwg.mxu0
  %759 = vmatprep.subr.bf16.mxu0 0
  %760 = vmatpush1.bf16.msra.mxu0 %v582
  %761 = vmatprep.subr.bf16.mxu0 0
  %762 = vmatpush1.bf16.msra.mxu0 %v583
  %763 = vmatprep.subr.bf16.mxu0 0
  %764 = vmatpush1.bf16.msra.mxu0 %v584
  %765 = vmatprep.subr.bf16.mxu0 0
  %766 = vmatpush1.bf16.msra.mxu0 %v585
  %767 = vmatprep.subr.bf16.mxu0 0
  %768 = vmatpush1.bf16.msra.mxu0 %v586
  %769 = vmatprep.subr.bf16.mxu0 0
  %770 = vmatpush1.bf16.msra.mxu0 %v587
  %771 = vmatprep.subr.bf16.mxu0 0
  %772 = vmatpush1.bf16.msra.mxu0 %v588
  %773 = vmatprep.subr.bf16.mxu0 0
  %774 = vmatpush1.bf16.msra.mxu0 %v589
  %775 = vmatprep.subr.bf16.mxu0 0
  %776 = vmatpush1.bf16.msra.mxu0 %v590
  %777 = vmatprep.subr.bf16.mxu0 0
  %778 = vmatpush1.bf16.msra.mxu0 %v591
  %779 = vmatprep.subr.bf16.mxu0 0
  %780 = vmatpush1.bf16.msra.mxu0 %v592
  %781 = vmatprep.subr.bf16.mxu0 0
  %782 = vmatpush1.bf16.msra.mxu0 %v593
  %783 = vmatprep.subr.bf16.mxu0 0
  %784 = vmatpush1.bf16.msra.mxu0 %v594
  %785 = vmatprep.subr.bf16.mxu0 0
  %786 = vmatpush1.bf16.msra.mxu0 %v595
  %787 = vmatprep.subr.bf16.mxu0 0
  %788 = vmatpush1.bf16.msra.mxu0 %v596
  %789 = vmatprep.subr.bf16.mxu0 0
  %790 = vmatpush1.bf16.msra.mxu0 %v597
  %791 = vmatprep.mubr.bf16.mxu0 %v245
  %792 = vmatmul.mubr.bf16.gmra.mrb[0].mxu0 %v244
  %v793 = vpop.f32.mrb[0].mxu0
  %v794 = vadd.f32 %v745, %v793
  %v795 = vpop.f32.mrb[0].mxu0
  %v796 = vpop.f32.mrb[0].mxu0
  %v797 = vadd.f32 %v748, %v796
  %v798 = vpop.f32.mrb[0].mxu0
  %799 = vmatprep.mubr.bf16.mxu0 %v254
  %800 = vmatmul.mubr.bf16.gmra.mrb[0].mxu0 %v253
  %v801 = vpop.f32.mrb[0].mxu0
  %v802 = vadd.f32 %v753, %v801
  %v803 = vpop.f32.mrb[0].mxu0
  %v804 = vpop.f32.mrb[0].mxu0
  %v805 = vadd.f32 %v756, %v804
  %v806 = vpop.f32.mrb[0].mxu0
  %807 = vdwg.mxu0
  %808 = vmatprep.subr.bf16.mxu0 0
  %809 = vmatpush1.bf16.msra.mxu0 %v598
  %810 = vmatprep.subr.bf16.mxu0 0
  %811 = vmatpush1.bf16.msra.mxu0 %v599
  %812 = vmatprep.subr.bf16.mxu0 0
  %813 = vmatpush1.bf16.msra.mxu0 %v600
  %814 = vmatprep.subr.bf16.mxu0 0
  %815 = vmatpush1.bf16.msra.mxu0 %v601
  %816 = vmatprep.subr.bf16.mxu0 0
  %817 = vmatpush1.bf16.msra.mxu0 %v602
  %818 = vmatprep.subr.bf16.mxu0 0
  %819 = vmatpush1.bf16.msra.mxu0 %v603
  %820 = vmatprep.subr.bf16.mxu0 0
  %821 = vmatpush1.bf16.msra.mxu0 %v604
  %822 = vmatprep.subr.bf16.mxu0 0
  %823 = vmatpush1.bf16.msra.mxu0 %v605
  %824 = vmatprep.subr.bf16.mxu0 0
  %825 = vmatpush1.bf16.msra.mxu0 %v606
  %826 = vmatprep.subr.bf16.mxu0 0
  %827 = vmatpush1.bf16.msra.mxu0 %v607
  %828 = vmatprep.subr.bf16.mxu0 0
  %829 = vmatpush1.bf16.msra.mxu0 %v608
  %830 = vmatprep.subr.bf16.mxu0 0
  %831 = vmatpush1.bf16.msra.mxu0 %v609
  %832 = vmatprep.subr.bf16.mxu0 0
  %833 = vmatpush1.bf16.msra.mxu0 %v610
  %834 = vmatprep.subr.bf16.mxu0 0
  %835 = vmatpush1.bf16.msra.mxu0 %v611
  %836 = vmatprep.subr.bf16.mxu0 0
  %837 = vmatpush1.bf16.msra.mxu0 %v612
  %838 = vmatprep.subr.bf16.mxu0 0
  %839 = vmatpush1.bf16.msra.mxu0 %v613
  %840 = vmatprep.mubr.bf16.mxu0 %v247
  %841 = vmatmul.mubr.bf16.gmra.mrb[0].mxu0 %v246
  %v842 = vpop.f32.mrb[0].mxu0
  %v843 = vadd.f32 %v794, %v842
  %v844 = vpop.f32.mrb[0].mxu0
  %v845 = vpop.f32.mrb[0].mxu0
  %v846 = vadd.f32 %v797, %v845
  %v847 = vpop.f32.mrb[0].mxu0
  %848 = vmatprep.mubr.bf16.mxu0 %v256
  %849 = vmatmul.mubr.bf16.gmra.mrb[0].mxu0 %v255
  %v850 = vpop.f32.mrb[0].mxu0
  %v851 = vadd.f32 %v802, %v850
  %v852 = vpop.f32.mrb[0].mxu0
  %v853 = vpop.f32.mrb[0].mxu0
  %v854 = vadd.f32 %v805, %v853
  %v855 = vpop.f32.mrb[0].mxu0
  %856 = vdwg.mxu0
  %857 = vmatprep.subr.bf16.mxu0 0
  %858 = vmatpush1.bf16.msra.mxu0 %v614
  %859 = vmatprep.subr.bf16.mxu0 0
  %860 = vmatpush1.bf16.msra.mxu0 %v615
  %861 = vmatprep.subr.bf16.mxu0 0
  %862 = vmatpush1.bf16.msra.mxu0 %v616
  %863 = vmatprep.subr.bf16.mxu0 0
  %864 = vmatpush1.bf16.msra.mxu0 %v617
  %865 = vmatprep.subr.bf16.mxu0 0
  %866 = vmatpush1.bf16.msra.mxu0 %v618
  %867 = vmatprep.subr.bf16.mxu0 0
  %868 = vmatpush1.bf16.msra.mxu0 %v619
  %869 = vmatprep.subr.bf16.mxu0 0
  %870 = vmatpush1.bf16.msra.mxu0 %v620
  %871 = vmatprep.subr.bf16.mxu0 0
  %872 = vmatpush1.bf16.msra.mxu0 %v621
  %873 = vmatprep.subr.bf16.mxu0 0
  %874 = vmatpush1.bf16.msra.mxu0 %v622
  %875 = vmatprep.subr.bf16.mxu0 0
  %876 = vmatpush1.bf16.msra.mxu0 %v623
  %877 = vmatprep.subr.bf16.mxu0 0
  %878 = vmatpush1.bf16.msra.mxu0 %v624
  %879 = vmatprep.subr.bf16.mxu0 0
  %880 = vmatpush1.bf16.msra.mxu0 %v625
  %881 = vmatprep.subr.bf16.mxu0 0
  %882 = vmatpush1.bf16.msra.mxu0 %v626
  %883 = vmatprep.subr.bf16.mxu0 0
  %884 = vmatpush1.bf16.msra.mxu0 %v627
  %885 = vmatprep.subr.bf16.mxu0 0
  %886 = vmatpush1.bf16.msra.mxu0 %v628
  %887 = vmatprep.subr.bf16.mxu0 0
  %888 = vmatpush1.bf16.msra.mxu0 %v629
  %889 = vmatprep.mubr.bf16.mxu0 %v249
  %890 = vmatmul.mubr.bf16.gmra.mrb[0].mxu0 %v248
  %v891 = vpop.f32.mrb[0].mxu0
  %v892 = vadd.f32 %v843, %v891
  %v893 = vpop.f32.mrb[0].mxu0
  %v894 = vpop.f32.mrb[0].mxu0
  %v895 = vadd.f32 %v846, %v894
  %v896 = vpop.f32.mrb[0].mxu0
  %897 = vmatprep.mubr.bf16.mxu0 %v258
  %898 = vmatmul.mubr.bf16.gmra.mrb[0].mxu0 %v257
  %v899 = vpop.f32.mrb[0].mxu0
  %v900 = vadd.f32 %v851, %v899
  %v901 = vpop.f32.mrb[0].mxu0
  %v902 = vpop.f32.mrb[0].mxu0
  %v903 = vadd.f32 %v854, %v902
  %v904 = vpop.f32.mrb[0].mxu0
  %905 = vdwg.mxu0
  %906 = vmatprep.subr.bf16.mxu0 0
  %907 = vmatpush1.bf16.msra.mxu0 %v630
  %908 = vmatprep.subr.bf16.mxu0 0
  %909 = vmatpush1.bf16.msra.mxu0 %v631
  %910 = vmatprep.subr.bf16.mxu0 0
  %911 = vmatpush1.bf16.msra.mxu0 %v632
  %912 = vmatprep.subr.bf16.mxu0 0
  %913 = vmatpush1.bf16.msra.mxu0 %v633
  %914 = vmatprep.subr.bf16.mxu0 0
  %915 = vmatpush1.bf16.msra.mxu0 %v634
  %916 = vmatprep.subr.bf16.mxu0 0
  %917 = vmatpush1.bf16.msra.mxu0 %v635
  %918 = vmatprep.subr.bf16.mxu0 0
  %919 = vmatpush1.bf16.msra.mxu0 %v636
  %920 = vmatprep.subr.bf16.mxu0 0
  %921 = vmatpush1.bf16.msra.mxu0 %v637
  %922 = vmatprep.subr.bf16.mxu0 0
  %923 = vmatpush1.bf16.msra.mxu0 0
  %924 = vmatprep.subr.bf16.mxu0 0
  %925 = vmatpush1.bf16.msra.mxu0 0
  %926 = vmatprep.subr.bf16.mxu0 0
  %927 = vmatpush1.bf16.msra.mxu0 0
  %928 = vmatprep.subr.bf16.mxu0 0
  %929 = vmatpush1.bf16.msra.mxu0 0
  %930 = vmatprep.subr.bf16.mxu0 0
  %931 = vmatpush1.bf16.msra.mxu0 0
  %932 = vmatprep.subr.bf16.mxu0 0
  %933 = vmatpush1.bf16.msra.mxu0 0
  %934 = vmatprep.subr.bf16.mxu0 0
  %935 = vmatpush1.bf16.msra.mxu0 0
  %936 = vmatprep.subr.bf16.mxu0 0
  %937 = vmatpush1.bf16.msra.mxu0 0
  %938 = vmatprep.mubr.bf16.mxu0 0
  %939 = vmatmul.mubr.bf16.gmra.mrb[0].mxu0 %v250
  %v940 = vpop.f32.mrb[0].mxu0
  %v941 = vadd.f32 %v892, %v940
  %v942 = vpop.f32.mrb[0].mxu0
  %v943 = vpop.f32.mrb[0].mxu0
  %v944 = vadd.f32 %v895, %v943
  %v945 = vpop.f32.mrb[0].mxu0
  %946 = vmatprep.mubr.bf16.mxu0 0
  %947 = vmatmul.mubr.bf16.gmra.mrb[0].mxu0 %v259
  %v948 = vpop.f32.mrb[0].mxu0
  %v949 = vadd.f32 %v900, %v948
  %v950 = vpop.f32.mrb[0].mxu0
  %v951 = vpop.f32.mrb[0].mxu0
  %v952 = vadd.f32 %v903, %v951
  %v953 = vpop.f32.mrb[0].mxu0
  %954 = vdwg.mxu0
  %v955 = vmax.f32 %v941, 0.0
  %v956 = vmax.f32 %v944, 0.0
  %v957 = vmax.f32 %v949, 0.0
  %v958 = vmax.f32 %v952, 0.0
  %v959 = vpack.c.bf16 %v956, %v955
  %v960 = vpack.c.bf16 %v958, %v957
  %v963 = vunpack.c.l.b16 %v959
  %v964 = vunpack.c.h.b16 %v959
  %v965 = vunpack.c.l.b16 %v960
  %v966 = vunpack.c.h.b16 %v960
  %v967 = vpack.c.b16 %v963, %v963
  %v968 = vpack.c.b16 %v964, %v964
  %v969 = vpack.c.b16 %v965, %v965
  %v970 = vpack.c.b16 %v966, %v966
  %975 = vst [vmem:[%s3] sm:$0xf] %v967
  %976 = vst [vmem:[%s3 + $0x4] sm:$0xf] %v968
  %977 = vst [vmem:[%s3 + $0x8] sm:$0xf] %v969
  %978 = vst [vmem:[%s3 + $0xc] sm:$0xf] %v970
  // Predicated region
  $region14: #{unet_forward.20} parent=0 // pred_check
    _
  $region15: #{unet_forward.20} parent=0 // pred_check_branch
    %980 = sbr.rel (0) target = $region17
  $region16: #{unet_forward.20} parent=0 // pred_region
    _
  $region17: #{unet_forward.20} parent=0 // pred_fallthru
    _
  // Predicated region
  $region18: #{unet_forward.20} parent=0 // pred_check
    _
  $region19: #{unet_forward.20} parent=0 // pred_check_branch
    %982 = sbr.rel (0) target = $region21
  $region20: #{unet_forward.20} parent=0 // pred_region
    _
  $region21: #{unet_forward.20} parent=0 // pred_fallthru
    _

// kernel: unet_forward.21
$region0: #{unet_forward.21}
  #allocation0 [shape = 'u32[]', space=smem, size = 0x4, offset = 0x4, fixed_abs, tag = 'smem constant byte address 0x4 - core index']
  #allocation1 [shape = 'u32[144,128]{1,0:T(1,128)}', space=vmem, size = 0x12000, scoped, tag = 'internal scratch']
  %s0 = inlined_call_operand.vmem [shape: bf16[128,576], index: 0, kind: input, shape index: {}]
  %s1 = inlined_call_operand.vmem [shape: bf16[576,128], index: 1, kind: input, shape index: {}]
  %s2 = inlined_call_operand.vmem [shape: f32[1,128], index: 2, kind: input, shape index: {}]
  %s3 = inlined_call_operand.vmem [shape: bf16[128,128], index: 3, kind: output, shape index: {}]
  %s4 = sld [smem:[#allocation0]]
  $region22: #{unet_forward.21} parent=0
    _
  %s6 = ssub.s32 1, %s4
  %s7 = scalar_select 0, %s6, %s4
  // Predicated region
  $region2: #{unet_forward.21} parent=0 // pred_check
    _
  $region3: #{unet_forward.21} parent=0 // pred_check_branch
    %9 = sbr.rel (0) target = $region5
  $region4: #{unet_forward.21} parent=0 // pred_region
    _
  $region5: #{unet_forward.21} parent=0 // pred_fallthru
    _
  // Predicated region
  $region6: #{unet_forward.21} parent=0 // pred_check
    _
  $region7: #{unet_forward.21} parent=0 // pred_check_branch
    %11 = sbr.rel (0) target = $region9
  $region8: #{unet_forward.21} parent=0 // pred_region
    _
  $region9: #{unet_forward.21} parent=0 // pred_fallthru
    _
  // Predicated region
  $region10: #{unet_forward.21} parent=0 // pred_check
    _
  $region11: #{unet_forward.21} parent=0 // pred_check_branch
    %13 = sbr.rel (0) target = $region13
  $region12: #{unet_forward.21} parent=0 // pred_region
    _
  $region13: #{unet_forward.21} parent=0 // pred_fallthru
    _
  %v15 = vld [vmem:[%s0] sm:$0xff]
  %v16 = vld [vmem:[%s0 + $0x8] sm:$0xff]
  %v17 = vld [vmem:[%s0 + $0x10] sm:$0xf]
  %v18 = vld [vmem:[%s0 + $0x14] sm:$0xff]
  %v19 = vld [vmem:[%s0 + $0x1c] sm:$0xff]
  %v20 = vld [vmem:[%s0 + $0x24] sm:$0xf]
  %v21 = vld [vmem:[%s0 + $0x28] sm:$0xff]
  %v22 = vld [vmem:[%s0 + $0x30] sm:$0xff]
  %v23 = vld [vmem:[%s0 + $0x38] sm:$0xf]
  %v24 = vld [vmem:[%s0 + $0x3c] sm:$0xff]
  %v25 = vld [vmem:[%s0 + $0x44] sm:$0xff]
  %v26 = vld [vmem:[%s0 + $0x4c] sm:$0xf]
  %v27 = vld [vmem:[%s0 + $0x50] sm:$0xff]
  %v28 = vld [vmem:[%s0 + $0x58] sm:$0xff]
  %v29 = vld [vmem:[%s0 + $0x60] sm:$0xf]
  %v30 = vld [vmem:[%s0 + $0x64] sm:$0xff]
  %v31 = vld [vmem:[%s0 + $0x6c] sm:$0xff]
  %v32 = vld [vmem:[%s0 + $0x74] sm:$0xf]
  %v33 = vld [vmem:[%s0 + $0x78] sm:$0xff]
  %v34 = vld [vmem:[%s0 + $0x80] sm:$0xff]
  %v35 = vld [vmem:[%s0 + $0x88] sm:$0xf]
  %v36 = vld [vmem:[%s0 + $0x8c] sm:$0xff]
  %v37 = vld [vmem:[%s0 + $0x94] sm:$0xff]
  %v38 = vld [vmem:[%s0 + $0x9c] sm:$0xf]
  %v39 = vld [vmem:[%s0 + $0xa0] sm:$0xff]
  %v40 = vld [vmem:[%s0 + $0xa8] sm:$0xff]
  %v41 = vld [vmem:[%s0 + $0xb0] sm:$0xf]
  %v42 = vld [vmem:[%s0 + $0xb4] sm:$0xff]
  %v43 = vld [vmem:[%s0 + $0xbc] sm:$0xff]
  %v44 = vld [vmem:[%s0 + $0xc4] sm:$0xf]
  %v45 = vld [vmem:[%s0 + $0xc8] sm:$0xff]
  %v46 = vld [vmem:[%s0 + $0xd0] sm:$0xff]
  %v47 = vld [vmem:[%s0 + $0xd8] sm:$0xf]
  %v48 = vld [vmem:[%s0 + $0xdc] sm:$0xff]
  %v49 = vld [vmem:[%s0 + $0xe4] sm:$0xff]
  %v50 = vld [vmem:[%s0 + $0xec] sm:$0xf]
  %v51 = vld [vmem:[%s0 + $0xf0] sm:$0xff]
  %v52 = vld [vmem:[%s0 + $0xf8] sm:$0xff]
  %v53 = vld [vmem:[%s0 + $0x100] sm:$0xf]
  %v54 = vld [vmem:[%s0 + $0x104] sm:$0xff]
  %v55 = vld [vmem:[%s0 + $0x10c] sm:$0xff]
  %v56 = vld [vmem:[%s0 + $0x114] sm:$0xf]
  %v57 = vld [vmem:[%s0 + $0x118] sm:$0xff]
  %v58 = vld [vmem:[%s0 + $0x120] sm:$0xff]
  %v59 = vld [vmem:[%s0 + $0x128] sm:$0xf]
  %v60 = vld [vmem:[%s0 + $0x12c] sm:$0xff]
  %v61 = vld [vmem:[%s0 + $0x134] sm:$0xff]
  %v62 = vld [vmem:[%s0 + $0x13c] sm:$0xf]
  %v63 = vld [vmem:[%s1] sm:$0xf]
  %v64 = vld [vmem:[%s1 + $0x4] sm:$0xf]
  %v65 = vld [vmem:[%s1 + $0x8] sm:$0xf]
  %v66 = vld [vmem:[%s1 + $0xc] sm:$0xf]
  %v67 = vld [vmem:[%s1 + $0x10] sm:$0xf]
  %v68 = vld [vmem:[%s1 + $0x14] sm:$0xf]
  %v69 = vld [vmem:[%s1 + $0x18] sm:$0xf]
  %v70 = vld [vmem:[%s1 + $0x1c] sm:$0xf]
  %v71 = vld [vmem:[%s1 + $0x20] sm:$0xf]
  %v72 = vld [vmem:[%s1 + $0x24] sm:$0xf]
  %v73 = vld [vmem:[%s1 + $0x28] sm:$0xf]
  %v74 = vld [vmem:[%s1 + $0x2c] sm:$0xf]
  %v75 = vld [vmem:[%s1 + $0x30] sm:$0xf]
  %v76 = vld [vmem:[%s1 + $0x34] sm:$0xf]
  %v77 = vld [vmem:[%s1 + $0x38] sm:$0xf]
  %v78 = vld [vmem:[%s1 + $0x3c] sm:$0xf]
  %v79 = vld [vmem:[%s1 + $0x40] sm:$0xf]
  %v80 = vld [vmem:[%s1 + $0x44] sm:$0xf]
  %v81 = vld [vmem:[%s1 + $0x48] sm:$0xf]
  %v82 = vld [vmem:[%s1 + $0x4c] sm:$0xf]
  %v83 = vld [vmem:[%s1 + $0x50] sm:$0xf]
  %v84 = vld [vmem:[%s1 + $0x54] sm:$0xf]
  %v85 = vld [vmem:[%s1 + $0x58] sm:$0xf]
  %v86 = vld [vmem:[%s1 + $0x5c] sm:$0xf]
  %v87 = vld [vmem:[%s1 + $0x60] sm:$0xf]
  %v88 = vld [vmem:[%s1 + $0x64] sm:$0xf]
  %v89 = vld [vmem:[%s1 + $0x68] sm:$0xf]
  %v90 = vld [vmem:[%s1 + $0x6c] sm:$0xf]
  %v91 = vld [vmem:[%s1 + $0x70] sm:$0xf]
  %v92 = vld [vmem:[%s1 + $0x74] sm:$0xf]
  %v93 = vld [vmem:[%s1 + $0x78] sm:$0xf]
  %v94 = vld [vmem:[%s1 + $0x7c] sm:$0xf]
  %v95 = vld [vmem:[%s1 + $0x80] sm:$0xf]
  %v96 = vld [vmem:[%s1 + $0x84] sm:$0xf]
  %v97 = vld [vmem:[%s1 + $0x88] sm:$0xf]
  %v98 = vld [vmem:[%s1 + $0x8c] sm:$0xf]
  %v99 = vld [vmem:[%s1 + $0x90] sm:$0xf]
  %v100 = vld [vmem:[%s1 + $0x94] sm:$0xf]
  %v101 = vld [vmem:[%s1 + $0x98] sm:$0xf]
  %v102 = vld [vmem:[%s1 + $0x9c] sm:$0xf]
  %v103 = vld [vmem:[%s1 + $0xa0] sm:$0xf]
  %v104 = vld [vmem:[%s1 + $0xa4] sm:$0xf]
  %v105 = vld [vmem:[%s1 + $0xa8] sm:$0xf]
  %v106 = vld [vmem:[%s1 + $0xac] sm:$0xf]
  %v107 = vld [vmem:[%s1 + $0xb0] sm:$0xf]
  %v108 = vld [vmem:[%s1 + $0xb4] sm:$0xf]
  %v109 = vld [vmem:[%s1 + $0xb8] sm:$0xf]
  %v110 = vld [vmem:[%s1 + $0xbc] sm:$0xf]
  %v111 = vld [vmem:[%s1 + $0xc0] sm:$0xf]
  %v112 = vld [vmem:[%s1 + $0xc4] sm:$0xf]
  %v113 = vld [vmem:[%s1 + $0xc8] sm:$0xf]
  %v114 = vld [vmem:[%s1 + $0xcc] sm:$0xf]
  %v115 = vld [vmem:[%s1 + $0xd0] sm:$0xf]
  %v116 = vld [vmem:[%s1 + $0xd4] sm:$0xf]
  %v117 = vld [vmem:[%s1 + $0xd8] sm:$0xf]
  %v118 = vld [vmem:[%s1 + $0xdc] sm:$0xf]
  %v119 = vld [vmem:[%s1 + $0xe0] sm:$0xf]
  %v120 = vld [vmem:[%s1 + $0xe4] sm:$0xf]
  %v121 = vld [vmem:[%s1 + $0xe8] sm:$0xf]
  %v122 = vld [vmem:[%s1 + $0xec] sm:$0xf]
  %v123 = vld [vmem:[%s1 + $0xf0] sm:$0xf]
  %v124 = vld [vmem:[%s1 + $0xf4] sm:$0xf]
  %v125 = vld [vmem:[%s1 + $0xf8] sm:$0xf]
  %v126 = vld [vmem:[%s1 + $0xfc] sm:$0xf]
  %v127 = vld [vmem:[%s1 + $0x100] sm:$0xf]
  %v128 = vld [vmem:[%s1 + $0x104] sm:$0xf]
  %v129 = vld [vmem:[%s1 + $0x108] sm:$0xf]
  %v130 = vld [vmem:[%s1 + $0x10c] sm:$0xf]
  %v131 = vld [vmem:[%s1 + $0x110] sm:$0xf]
  %v132 = vld [vmem:[%s1 + $0x114] sm:$0xf]
  %v133 = vld [vmem:[%s1 + $0x118] sm:$0xf]
  %v134 = vld [vmem:[%s1 + $0x11c] sm:$0xf]
  %v135 = vld [vmem:[%s2] sm:$0x1]
  %v137 = vlaneseq
  %v138 = vshrl.u32 %v137, 7
  %v139 = vsub.s32 0, %v138
  %v140 = vrot.slane %v135, %v139
  %v190 = vunpack.c.l.b16 %v15
  %v191 = vunpack.c.h.b16 %v15
  %v192 = vunpack.c.l.b16 %v16
  %v193 = vunpack.c.h.b16 %v16
  %v194 = vunpack.c.l.b16 %v17
  %v195 = vunpack.c.l.b16 %v18
  %v196 = vunpack.c.h.b16 %v18
  %v197 = vunpack.c.l.b16 %v19
  %v198 = vunpack.c.h.b16 %v19
  %v199 = vunpack.c.l.b16 %v20
  %v200 = vunpack.c.l.b16 %v21
  %v201 = vunpack.c.h.b16 %v21
  %v202 = vunpack.c.l.b16 %v22
  %v203 = vunpack.c.h.b16 %v22
  %v204 = vunpack.c.l.b16 %v23
  %v205 = vunpack.c.l.b16 %v24
  %v206 = vunpack.c.h.b16 %v24
  %v207 = vunpack.c.l.b16 %v25
  %v208 = vunpack.c.h.b16 %v25
  %v209 = vunpack.c.l.b16 %v26
  %v210 = vunpack.c.l.b16 %v27
  %v211 = vunpack.c.h.b16 %v27
  %v212 = vunpack.c.l.b16 %v28
  %v213 = vunpack.c.h.b16 %v28
  %v214 = vunpack.c.l.b16 %v29
  %v215 = vunpack.c.l.b16 %v30
  %v216 = vunpack.c.h.b16 %v30
  %v217 = vunpack.c.l.b16 %v31
  %v218 = vunpack.c.h.b16 %v31
  %v219 = vunpack.c.l.b16 %v32
  %v220 = vunpack.c.l.b16 %v33
  %v221 = vunpack.c.h.b16 %v33
  %v222 = vunpack.c.l.b16 %v34
  %v223 = vunpack.c.h.b16 %v34
  %v224 = vunpack.c.l.b16 %v35
  %v225 = vunpack.c.l.b16 %v36
  %v226 = vunpack.c.h.b16 %v36
  %v227 = vunpack.c.l.b16 %v37
  %v228 = vunpack.c.h.b16 %v37
  %v229 = vunpack.c.l.b16 %v38
  %v230 = vunpack.c.l.b16 %v39
  %v231 = vunpack.c.h.b16 %v39
  %v232 = vunpack.c.l.b16 %v40
  %v233 = vunpack.c.h.b16 %v40
  %v234 = vunpack.c.l.b16 %v41
  %v235 = vunpack.c.l.b16 %v42
  %v236 = vunpack.c.h.b16 %v42
  %v237 = vunpack.c.l.b16 %v43
  %v238 = vunpack.c.h.b16 %v43
  %v239 = vunpack.c.l.b16 %v44
  %v240 = vunpack.c.l.b16 %v45
  %v241 = vunpack.c.h.b16 %v45
  %v242 = vunpack.c.l.b16 %v46
  %v243 = vunpack.c.h.b16 %v46
  %v244 = vunpack.c.l.b16 %v47
  %v245 = vunpack.c.l.b16 %v48
  %v246 = vunpack.c.h.b16 %v48
  %v247 = vunpack.c.l.b16 %v49
  %v248 = vunpack.c.h.b16 %v49
  %v249 = vunpack.c.l.b16 %v50
  %v250 = vunpack.c.l.b16 %v51
  %v251 = vunpack.c.h.b16 %v51
  %v252 = vunpack.c.l.b16 %v52
  %v253 = vunpack.c.h.b16 %v52
  %v254 = vunpack.c.l.b16 %v53
  %v255 = vunpack.c.l.b16 %v54
  %v256 = vunpack.c.h.b16 %v54
  %v257 = vunpack.c.l.b16 %v55
  %v258 = vunpack.c.h.b16 %v55
  %v259 = vunpack.c.l.b16 %v56
  %v260 = vunpack.c.l.b16 %v57
  %v261 = vunpack.c.h.b16 %v57
  %v262 = vunpack.c.l.b16 %v58
  %v263 = vunpack.c.h.b16 %v58
  %v264 = vunpack.c.l.b16 %v59
  %v265 = vunpack.c.l.b16 %v60
  %v266 = vunpack.c.h.b16 %v60
  %v267 = vunpack.c.l.b16 %v61
  %v268 = vunpack.c.h.b16 %v61
  %v269 = vunpack.c.l.b16 %v62
  %v270 = vpack.c.b16 %v195, %v190
  %v271 = vpack.c.b16 %v196, %v191
  %v272 = vpack.c.b16 %v197, %v192
  %v273 = vpack.c.b16 %v198, %v193
  %v274 = vpack.c.b16 %v199, %v194
  %v275 = vpack.c.b16 %v205, %v200
  %v276 = vpack.c.b16 %v206, %v201
  %v277 = vpack.c.b16 %v207, %v202
  %v278 = vpack.c.b16 %v208, %v203
  %v279 = vpack.c.b16 %v209, %v204
  %v280 = vpack.c.b16 %v215, %v210
  %v281 = vpack.c.b16 %v216, %v211
  %v282 = vpack.c.b16 %v217, %v212
  %v283 = vpack.c.b16 %v218, %v213
  %v284 = vpack.c.b16 %v219, %v214
  %v285 = vpack.c.b16 %v225, %v220
  %v286 = vpack.c.b16 %v226, %v221
  %v287 = vpack.c.b16 %v227, %v222
  %v288 = vpack.c.b16 %v228, %v223
  %v289 = vpack.c.b16 %v229, %v224
  %v290 = vpack.c.b16 %v235, %v230
  %v291 = vpack.c.b16 %v236, %v231
  %v292 = vpack.c.b16 %v237, %v232
  %v293 = vpack.c.b16 %v238, %v233
  %v294 = vpack.c.b16 %v239, %v234
  %v295 = vpack.c.b16 %v245, %v240
  %v296 = vpack.c.b16 %v246, %v241
  %v297 = vpack.c.b16 %v247, %v242
  %v298 = vpack.c.b16 %v248, %v243
  %v299 = vpack.c.b16 %v249, %v244
  %v300 = vpack.c.b16 %v255, %v250
  %v301 = vpack.c.b16 %v256, %v251
  %v302 = vpack.c.b16 %v257, %v252
  %v303 = vpack.c.b16 %v258, %v253
  %v304 = vpack.c.b16 %v259, %v254
  %v305 = vpack.c.b16 %v265, %v260
  %v306 = vpack.c.b16 %v266, %v261
  %v307 = vpack.c.b16 %v267, %v262
  %v308 = vpack.c.b16 %v268, %v263
  %v309 = vpack.c.b16 %v269, %v264
  %v414 = vunpack.c.l.b16 %v63
  %v415 = vunpack.c.l.b16 %v64
  %v416 = vunpack.c.l.b16 %v65
  %v417 = vunpack.c.l.b16 %v66
  %v418 = vunpack.c.l.b16 %v67
  %v419 = vunpack.c.l.b16 %v68
  %v420 = vunpack.c.l.b16 %v69
  %v421 = vunpack.c.l.b16 %v70
  %v422 = vunpack.c.l.b16 %v71
  %v423 = vunpack.c.l.b16 %v72
  %v424 = vunpack.c.l.b16 %v73
  %v425 = vunpack.c.l.b16 %v74
  %v426 = vunpack.c.l.b16 %v75
  %v427 = vunpack.c.l.b16 %v76
  %v428 = vunpack.c.l.b16 %v77
  %v429 = vunpack.c.l.b16 %v78
  %v430 = vunpack.c.l.b16 %v79
  %v431 = vunpack.c.l.b16 %v80
  %v432 = vunpack.c.l.b16 %v81
  %v433 = vunpack.c.l.b16 %v82
  %v434 = vunpack.c.l.b16 %v83
  %v435 = vunpack.c.l.b16 %v84
  %v436 = vunpack.c.l.b16 %v85
  %v437 = vunpack.c.l.b16 %v86
  %v438 = vunpack.c.l.b16 %v87
  %v439 = vunpack.c.l.b16 %v88
  %v440 = vunpack.c.l.b16 %v89
  %v441 = vunpack.c.l.b16 %v90
  %v442 = vunpack.c.l.b16 %v91
  %v443 = vunpack.c.l.b16 %v92
  %v444 = vunpack.c.l.b16 %v93
  %v445 = vunpack.c.l.b16 %v94
  %v446 = vunpack.c.l.b16 %v95
  %v447 = vunpack.c.l.b16 %v96
  %v448 = vunpack.c.l.b16 %v97
  %v449 = vunpack.c.l.b16 %v98
  %v450 = vunpack.c.l.b16 %v99
  %v451 = vunpack.c.l.b16 %v100
  %v452 = vunpack.c.l.b16 %v101
  %v453 = vunpack.c.l.b16 %v102
  %v454 = vunpack.c.l.b16 %v103
  %v455 = vunpack.c.l.b16 %v104
  %v456 = vunpack.c.l.b16 %v105
  %v457 = vunpack.c.l.b16 %v106
  %v458 = vunpack.c.l.b16 %v107
  %v459 = vunpack.c.l.b16 %v108
  %v460 = vunpack.c.l.b16 %v109
  %v461 = vunpack.c.l.b16 %v110
  %v462 = vunpack.c.l.b16 %v111
  %v463 = vunpack.c.l.b16 %v112
  %v464 = vunpack.c.l.b16 %v113
  %v465 = vunpack.c.l.b16 %v114
  %v466 = vunpack.c.l.b16 %v115
  %v467 = vunpack.c.l.b16 %v116
  %v468 = vunpack.c.l.b16 %v117
  %v469 = vunpack.c.l.b16 %v118
  %v470 = vunpack.c.l.b16 %v119
  %v471 = vunpack.c.l.b16 %v120
  %v472 = vunpack.c.l.b16 %v121
  %v473 = vunpack.c.l.b16 %v122
  %v474 = vunpack.c.l.b16 %v123
  %v475 = vunpack.c.l.b16 %v124
  %v476 = vunpack.c.l.b16 %v125
  %v477 = vunpack.c.l.b16 %v126
  %v478 = vunpack.c.l.b16 %v127
  %v479 = vunpack.c.l.b16 %v128
  %v480 = vunpack.c.l.b16 %v129
  %v481 = vunpack.c.l.b16 %v130
  %v482 = vunpack.c.l.b16 %v131
  %v483 = vunpack.c.l.b16 %v132
  %v484 = vunpack.c.l.b16 %v133
  %v485 = vunpack.c.l.b16 %v134
  %v486 = vpack.c.b16 %v415, %v414
  %v487 = vpack.c.b16 %v417, %v416
  %v488 = vpack.c.b16 %v419, %v418
  %v489 = vpack.c.b16 %v421, %v420
  %v490 = vpack.c.b16 %v423, %v422
  %v491 = vpack.c.b16 %v425, %v424
  %v492 = vpack.c.b16 %v427, %v426
  %v493 = vpack.c.b16 %v429, %v428
  %v494 = vpack.c.b16 %v431, %v430
  %v495 = vpack.c.b16 %v433, %v432
  %v496 = vpack.c.b16 %v435, %v434
  %v497 = vpack.c.b16 %v437, %v436
  %v498 = vpack.c.b16 %v439, %v438
  %v499 = vpack.c.b16 %v441, %v440
  %v500 = vpack.c.b16 %v443, %v442
  %v501 = vpack.c.b16 %v445, %v444
  %v502 = vpack.c.b16 %v447, %v446
  %v503 = vpack.c.b16 %v449, %v448
  %v504 = vpack.c.b16 %v451, %v450
  %v505 = vpack.c.b16 %v453, %v452
  %v506 = vpack.c.b16 %v455, %v454
  %v507 = vpack.c.b16 %v457, %v456
  %v508 = vpack.c.b16 %v459, %v458
  %v509 = vpack.c.b16 %v461, %v460
  %v510 = vpack.c.b16 %v463, %v462
  %v511 = vpack.c.b16 %v465, %v464
  %v512 = vpack.c.b16 %v467, %v466
  %v513 = vpack.c.b16 %v469, %v468
  %v514 = vpack.c.b16 %v471, %v470
  %v515 = vpack.c.b16 %v473, %v472
  %v516 = vpack.c.b16 %v475, %v474
  %v517 = vpack.c.b16 %v477, %v476
  %v518 = vpack.c.b16 %v479, %v478
  %v519 = vpack.c.b16 %v481, %v480
  %v520 = vpack.c.b16 %v483, %v482
  %v521 = vpack.c.b16 %v485, %v484
  %vm558 = vcmask 523264
  %v560 = vsel %vm558, %v274, 0
  %v563 = vsel %vm558, %v279, 0
  %v566 = vsel %vm558, %v284, 0
  %v569 = vsel %vm558, %v289, 0
  %v572 = vsel %vm558, %v294, 0
  %v575 = vsel %vm558, %v299, 0
  %v578 = vsel %vm558, %v304, 0
  %v581 = vsel %vm558, %v309, 0
  %583 = vmatprep.subr.bf16.mxu0 0
  %584 = vmatpush1.bf16.msra.mxu0 %v486
  %585 = vmatprep.subr.bf16.mxu0 0
  %586 = vmatpush1.bf16.msra.mxu0 %v487
  %587 = vmatprep.subr.bf16.mxu0 0
  %588 = vmatpush1.bf16.msra.mxu0 %v488
  %589 = vmatprep.subr.bf16.mxu0 0
  %590 = vmatpush1.bf16.msra.mxu0 %v489
  %591 = vmatprep.subr.bf16.mxu0 0
  %592 = vmatpush1.bf16.msra.mxu0 %v490
  %593 = vmatprep.subr.bf16.mxu0 0
  %594 = vmatpush1.bf16.msra.mxu0 %v491
  %595 = vmatprep.subr.bf16.mxu0 0
  %596 = vmatpush1.bf16.msra.mxu0 %v492
  %597 = vmatprep.subr.bf16.mxu0 0
  %598 = vmatpush1.bf16.msra.mxu0 %v493
  %599 = vmatprep.subr.bf16.mxu0 0
  %600 = vmatpush1.bf16.msra.mxu0 %v494
  %601 = vmatprep.subr.bf16.mxu0 0
  %602 = vmatpush1.bf16.msra.mxu0 %v495
  %603 = vmatprep.subr.bf16.mxu0 0
  %604 = vmatpush1.bf16.msra.mxu0 %v496
  %605 = vmatprep.subr.bf16.mxu0 0
  %606 = vmatpush1.bf16.msra.mxu0 %v497
  %607 = vmatprep.subr.bf16.mxu0 0
  %608 = vmatpush1.bf16.msra.mxu0 %v498
  %609 = vmatprep.subr.bf16.mxu0 0
  %610 = vmatpush1.bf16.msra.mxu0 %v499
  %611 = vmatprep.subr.bf16.mxu0 0
  %612 = vmatpush1.bf16.msra.mxu0 %v500
  %613 = vmatprep.subr.bf16.mxu0 0
  %614 = vmatpush1.bf16.msra.mxu0 %v501
  %615 = vmatprep.mubr.bf16.mxu0 %v271
  %616 = vmatmul.mubr.bf16.gmra.mrb[0].mxu0 %v270
  %v617 = vpop.f32.mrb[0].mxu0
  %v618 = vadd.f32 %v140, %v617
  %v619 = vpop.f32.mrb[0].mxu0
  %v620 = vpop.f32.mrb[0].mxu0
  %v621 = vadd.f32 %v140, %v620
  %v622 = vpop.f32.mrb[0].mxu0
  %623 = vmatprep.mubr.bf16.mxu0 %v276
  %624 = vmatmul.mubr.bf16.gmra.mrb[0].mxu0 %v275
  %v625 = vpop.f32.mrb[0].mxu0
  %v626 = vadd.f32 %v140, %v625
  %v627 = vpop.f32.mrb[0].mxu0
  %v628 = vpop.f32.mrb[0].mxu0
  %v629 = vadd.f32 %v140, %v628
  %v630 = vpop.f32.mrb[0].mxu0
  %631 = vmatprep.mubr.bf16.mxu0 %v281
  %632 = vmatmul.mubr.bf16.gmra.mrb[0].mxu0 %v280
  %v633 = vpop.f32.mrb[0].mxu0
  %v634 = vadd.f32 %v140, %v633
  %v635 = vpop.f32.mrb[0].mxu0
  %v636 = vpop.f32.mrb[0].mxu0
  %v637 = vadd.f32 %v140, %v636
  %v638 = vpop.f32.mrb[0].mxu0
  %639 = vmatprep.mubr.bf16.mxu0 %v286
  %640 = vmatmul.mubr.bf16.gmra.mrb[0].mxu0 %v285
  %v641 = vpop.f32.mrb[0].mxu0
  %v642 = vadd.f32 %v140, %v641
  %v643 = vpop.f32.mrb[0].mxu0
  %v644 = vpop.f32.mrb[0].mxu0
  %v645 = vadd.f32 %v140, %v644
  %v646 = vpop.f32.mrb[0].mxu0
  %647 = vmatprep.mubr.bf16.mxu0 %v291
  %648 = vmatmul.mubr.bf16.gmra.mrb[0].mxu0 %v290
  %v649 = vpop.f32.mrb[0].mxu0
  %v650 = vadd.f32 %v140, %v649
  %v651 = vpop.f32.mrb[0].mxu0
  %v652 = vpop.f32.mrb[0].mxu0
  %v653 = vadd.f32 %v140, %v652
  %v654 = vpop.f32.mrb[0].mxu0
  %655 = vmatprep.mubr.bf16.mxu0 %v296
  %656 = vmatmul.mubr.bf16.gmra.mrb[0].mxu0 %v295
  %v657 = vpop.f32.mrb[0].mxu0
  %v658 = vadd.f32 %v140, %v657
  %v659 = vpop.f32.mrb[0].mxu0
  %v660 = vpop.f32.mrb[0].mxu0
  %v661 = vadd.f32 %v140, %v660
  %v662 = vpop.f32.mrb[0].mxu0
  %663 = vmatprep.mubr.bf16.mxu0 %v301
  %664 = vmatmul.mubr.bf16.gmra.mrb[0].mxu0 %v300
  %v665 = vpop.f32.mrb[0].mxu0
  %v666 = vadd.f32 %v140, %v665
  %v667 = vpop.f32.mrb[0].mxu0
  %v668 = vpop.f32.mrb[0].mxu0
  %v669 = vadd.f32 %v140, %v668
  %v670 = vpop.f32.mrb[0].mxu0
  %671 = vmatprep.mubr.bf16.mxu0 %v306
  %672 = vmatmul.mubr.bf16.gmra.mrb[0].mxu0 %v305
  %v673 = vpop.f32.mrb[0].mxu0
  %v674 = vadd.f32 %v140, %v673
  %v675 = vpop.f32.mrb[0].mxu0
  %v676 = vpop.f32.mrb[0].mxu0
  %v677 = vadd.f32 %v140, %v676
  %v678 = vpop.f32.mrb[0].mxu0
  %679 = vdwg.mxu0
  %680 = vmatprep.subr.bf16.mxu0 0
  %681 = vmatpush1.bf16.msra.mxu0 %v502
  %682 = vmatprep.subr.bf16.mxu0 0
  %683 = vmatpush1.bf16.msra.mxu0 %v503
  %684 = vmatprep.subr.bf16.mxu0 0
  %685 = vmatpush1.bf16.msra.mxu0 %v504
  %686 = vmatprep.subr.bf16.mxu0 0
  %687 = vmatpush1.bf16.msra.mxu0 %v505
  %688 = vmatprep.subr.bf16.mxu0 0
  %689 = vmatpush1.bf16.msra.mxu0 %v506
  %690 = vmatprep.subr.bf16.mxu0 0
  %691 = vmatpush1.bf16.msra.mxu0 %v507
  %692 = vmatprep.subr.bf16.mxu0 0
  %693 = vmatpush1.bf16.msra.mxu0 %v508
  %694 = vmatprep.subr.bf16.mxu0 0
  %695 = vmatpush1.bf16.msra.mxu0 %v509
  %696 = vmatprep.subr.bf16.mxu0 0
  %697 = vmatpush1.bf16.msra.mxu0 %v510
  %698 = vmatprep.subr.bf16.mxu0 0
  %699 = vmatpush1.bf16.msra.mxu0 %v511
  %700 = vmatprep.subr.bf16.mxu0 0
  %701 = vmatpush1.bf16.msra.mxu0 %v512
  %702 = vmatprep.subr.bf16.mxu0 0
  %703 = vmatpush1.bf16.msra.mxu0 %v513
  %704 = vmatprep.subr.bf16.mxu0 0
  %705 = vmatpush1.bf16.msra.mxu0 %v514
  %706 = vmatprep.subr.bf16.mxu0 0
  %707 = vmatpush1.bf16.msra.mxu0 %v515
  %708 = vmatprep.subr.bf16.mxu0 0
  %709 = vmatpush1.bf16.msra.mxu0 %v516
  %710 = vmatprep.subr.bf16.mxu0 0
  %711 = vmatpush1.bf16.msra.mxu0 %v517
  %712 = vmatprep.mubr.bf16.mxu0 %v273
  %713 = vmatmul.mubr.bf16.gmra.mrb[0].mxu0 %v272
  %v714 = vpop.f32.mrb[0].mxu0
  %v715 = vadd.f32 %v618, %v714
  %v716 = vpop.f32.mrb[0].mxu0
  %v717 = vpop.f32.mrb[0].mxu0
  %v718 = vadd.f32 %v621, %v717
  %v719 = vpop.f32.mrb[0].mxu0
  %720 = vmatprep.mubr.bf16.mxu0 %v278
  %721 = vmatmul.mubr.bf16.gmra.mrb[0].mxu0 %v277
  %v722 = vpop.f32.mrb[0].mxu0
  %v723 = vadd.f32 %v626, %v722
  %v724 = vpop.f32.mrb[0].mxu0
  %v725 = vpop.f32.mrb[0].mxu0
  %v726 = vadd.f32 %v629, %v725
  %v727 = vpop.f32.mrb[0].mxu0
  %728 = vmatprep.mubr.bf16.mxu0 %v283
  %729 = vmatmul.mubr.bf16.gmra.mrb[0].mxu0 %v282
  %v730 = vpop.f32.mrb[0].mxu0
  %v731 = vadd.f32 %v634, %v730
  %v732 = vpop.f32.mrb[0].mxu0
  %v733 = vpop.f32.mrb[0].mxu0
  %v734 = vadd.f32 %v637, %v733
  %v735 = vpop.f32.mrb[0].mxu0
  %736 = vmatprep.mubr.bf16.mxu0 %v288
  %737 = vmatmul.mubr.bf16.gmra.mrb[0].mxu0 %v287
  %v738 = vpop.f32.mrb[0].mxu0
  %v739 = vadd.f32 %v642, %v738
  %v740 = vpop.f32.mrb[0].mxu0
  %v741 = vpop.f32.mrb[0].mxu0
  %v742 = vadd.f32 %v645, %v741
  %v743 = vpop.f32.mrb[0].mxu0
  %744 = vmatprep.mubr.bf16.mxu0 %v293
  %745 = vmatmul.mubr.bf16.gmra.mrb[0].mxu0 %v292
  %v746 = vpop.f32.mrb[0].mxu0
  %v747 = vadd.f32 %v650, %v746
  %v748 = vpop.f32.mrb[0].mxu0
  %v749 = vpop.f32.mrb[0].mxu0
  %v750 = vadd.f32 %v653, %v749
  %v751 = vpop.f32.mrb[0].mxu0
  %752 = vmatprep.mubr.bf16.mxu0 %v298
  %753 = vmatmul.mubr.bf16.gmra.mrb[0].mxu0 %v297
  %v754 = vpop.f32.mrb[0].mxu0
  %v755 = vadd.f32 %v658, %v754
  %v756 = vpop.f32.mrb[0].mxu0
  %v757 = vpop.f32.mrb[0].mxu0
  %v758 = vadd.f32 %v661, %v757
  %v759 = vpop.f32.mrb[0].mxu0
  %760 = vmatprep.mubr.bf16.mxu0 %v303
  %761 = vmatmul.mubr.bf16.gmra.mrb[0].mxu0 %v302
  %v762 = vpop.f32.mrb[0].mxu0
  %v763 = vadd.f32 %v666, %v762
  %v764 = vpop.f32.mrb[0].mxu0
  %v765 = vpop.f32.mrb[0].mxu0
  %v766 = vadd.f32 %v669, %v765
  %v767 = vpop.f32.mrb[0].mxu0
  %768 = vmatprep.mubr.bf16.mxu0 %v308
  %769 = vmatmul.mubr.bf16.gmra.mrb[0].mxu0 %v307
  %v770 = vpop.f32.mrb[0].mxu0
  %v771 = vadd.f32 %v674, %v770
  %v772 = vpop.f32.mrb[0].mxu0
  %v773 = vpop.f32.mrb[0].mxu0
  %v774 = vadd.f32 %v677, %v773
  %v775 = vpop.f32.mrb[0].mxu0
  %776 = vdwg.mxu0
  %777 = vmatprep.subr.bf16.mxu0 0
  %778 = vmatpush1.bf16.msra.mxu0 %v518
  %779 = vmatprep.subr.bf16.mxu0 0
  %780 = vmatpush1.bf16.msra.mxu0 %v519
  %781 = vmatprep.subr.bf16.mxu0 0
  %782 = vmatpush1.bf16.msra.mxu0 %v520
  %783 = vmatprep.subr.bf16.mxu0 0
  %784 = vmatpush1.bf16.msra.mxu0 %v521
  %785 = vmatprep.subr.bf16.mxu0 0
  %786 = vmatpush1.bf16.msra.mxu0 0
  %787 = vmatprep.subr.bf16.mxu0 0
  %788 = vmatpush1.bf16.msra.mxu0 0
  %789 = vmatprep.subr.bf16.mxu0 0
  %790 = vmatpush1.bf16.msra.mxu0 0
  %791 = vmatprep.subr.bf16.mxu0 0
  %792 = vmatpush1.bf16.msra.mxu0 0
  %793 = vmatprep.subr.bf16.mxu0 0
  %794 = vmatpush1.bf16.msra.mxu0 0
  %795 = vmatprep.subr.bf16.mxu0 0
  %796 = vmatpush1.bf16.msra.mxu0 0
  %797 = vmatprep.subr.bf16.mxu0 0
  %798 = vmatpush1.bf16.msra.mxu0 0
  %799 = vmatprep.subr.bf16.mxu0 0
  %800 = vmatpush1.bf16.msra.mxu0 0
  %801 = vmatprep.subr.bf16.mxu0 0
  %802 = vmatpush1.bf16.msra.mxu0 0
  %803 = vmatprep.subr.bf16.mxu0 0
  %804 = vmatpush1.bf16.msra.mxu0 0
  %805 = vmatprep.subr.bf16.mxu0 0
  %806 = vmatpush1.bf16.msra.mxu0 0
  %807 = vmatprep.subr.bf16.mxu0 0
  %808 = vmatpush1.bf16.msra.mxu0 0
  %809 = vmatprep.mubr.bf16.mxu0 0
  %810 = vmatmul.mubr.bf16.gmra.mrb[0].mxu0 %v560
  %v811 = vpop.f32.mrb[0].mxu0
  %v812 = vadd.f32 %v715, %v811
  %v813 = vpop.f32.mrb[0].mxu0
  %v814 = vpop.f32.mrb[0].mxu0
  %v815 = vadd.f32 %v718, %v814
  %v816 = vpop.f32.mrb[0].mxu0
  %817 = vmatprep.mubr.bf16.mxu0 0
  %818 = vmatmul.mubr.bf16.gmra.mrb[0].mxu0 %v563
  %v819 = vpop.f32.mrb[0].mxu0
  %v820 = vadd.f32 %v723, %v819
  %v821 = vpop.f32.mrb[0].mxu0
  %v822 = vpop.f32.mrb[0].mxu0
  %v823 = vadd.f32 %v726, %v822
  %v824 = vpop.f32.mrb[0].mxu0
  %825 = vmatprep.mubr.bf16.mxu0 0
  %826 = vmatmul.mubr.bf16.gmra.mrb[0].mxu0 %v566
  %v827 = vpop.f32.mrb[0].mxu0
  %v828 = vadd.f32 %v731, %v827
  %v829 = vpop.f32.mrb[0].mxu0
  %v830 = vpop.f32.mrb[0].mxu0
  %v831 = vadd.f32 %v734, %v830
  %v832 = vpop.f32.mrb[0].mxu0
  %833 = vmatprep.mubr.bf16.mxu0 0
  %834 = vmatmul.mubr.bf16.gmra.mrb[0].mxu0 %v569
  %v835 = vpop.f32.mrb[0].mxu0
  %v836 = vadd.f32 %v739, %v835
  %v837 = vpop.f32.mrb[0].mxu0
  %v838 = vpop.f32.mrb[0].mxu0
  %v839 = vadd.f32 %v742, %v838
  %v840 = vpop.f32.mrb[0].mxu0
  %841 = vmatprep.mubr.bf16.mxu0 0
  %842 = vmatmul.mubr.bf16.gmra.mrb[0].mxu0 %v572
  %v843 = vpop.f32.mrb[0].mxu0
  %v844 = vadd.f32 %v747, %v843
  %v845 = vpop.f32.mrb[0].mxu0
  %v846 = vpop.f32.mrb[0].mxu0
  %v847 = vadd.f32 %v750, %v846
  %v848 = vpop.f32.mrb[0].mxu0
  %849 = vmatprep.mubr.bf16.mxu0 0
  %850 = vmatmul.mubr.bf16.gmra.mrb[0].mxu0 %v575
  %v851 = vpop.f32.mrb[0].mxu0
  %v852 = vadd.f32 %v755, %v851
  %v853 = vpop.f32.mrb[0].mxu0
  %v854 = vpop.f32.mrb[0].mxu0
  %v855 = vadd.f32 %v758, %v854
  %v856 = vpop.f32.mrb[0].mxu0
  %857 = vmatprep.mubr.bf16.mxu0 0
  %858 = vmatmul.mubr.bf16.gmra.mrb[0].mxu0 %v578
  %v859 = vpop.f32.mrb[0].mxu0
  %v860 = vadd.f32 %v763, %v859
  %v861 = vpop.f32.mrb[0].mxu0
  %v862 = vpop.f32.mrb[0].mxu0
  %v863 = vadd.f32 %v766, %v862
  %v864 = vpop.f32.mrb[0].mxu0
  %865 = vmatprep.mubr.bf16.mxu0 0
  %866 = vmatmul.mubr.bf16.gmra.mrb[0].mxu0 %v581
  %v867 = vpop.f32.mrb[0].mxu0
  %v868 = vadd.f32 %v771, %v867
  %v869 = vpop.f32.mrb[0].mxu0
  %v870 = vpop.f32.mrb[0].mxu0
  %v871 = vadd.f32 %v774, %v870
  %v872 = vpop.f32.mrb[0].mxu0
  %873 = vdwg.mxu0
  %v874 = vmax.f32 %v812, 0.0
  %v875 = vmax.f32 %v815, 0.0
  %v876 = vmax.f32 %v820, 0.0
  %v877 = vmax.f32 %v823, 0.0
  %v878 = vmax.f32 %v828, 0.0
  %v879 = vmax.f32 %v831, 0.0
  %v880 = vmax.f32 %v836, 0.0
  %v881 = vmax.f32 %v839, 0.0
  %v882 = vmax.f32 %v844, 0.0
  %v883 = vmax.f32 %v847, 0.0
  %v884 = vmax.f32 %v852, 0.0
  %v885 = vmax.f32 %v855, 0.0
  %v886 = vmax.f32 %v860, 0.0
  %v887 = vmax.f32 %v863, 0.0
  %v888 = vmax.f32 %v868, 0.0
  %v889 = vmax.f32 %v871, 0.0
  %v890 = vpack.c.bf16 %v875, %v874
  %v891 = vpack.c.bf16 %v877, %v876
  %v892 = vpack.c.bf16 %v879, %v878
  %v893 = vpack.c.bf16 %v881, %v880
  %v894 = vpack.c.bf16 %v883, %v882
  %v895 = vpack.c.bf16 %v885, %v884
  %v896 = vpack.c.bf16 %v887, %v886
  %v897 = vpack.c.bf16 %v889, %v888
  %v906 = vunpack.c.l.b16 %v890
  %v907 = vunpack.c.h.b16 %v890
  %v908 = vunpack.c.l.b16 %v891
  %v909 = vunpack.c.h.b16 %v891
  %v910 = vunpack.c.l.b16 %v892
  %v911 = vunpack.c.h.b16 %v892
  %v912 = vunpack.c.l.b16 %v893
  %v913 = vunpack.c.h.b16 %v893
  %v914 = vunpack.c.l.b16 %v894
  %v915 = vunpack.c.h.b16 %v894
  %v916 = vunpack.c.l.b16 %v895
  %v917 = vunpack.c.h.b16 %v895
  %v918 = vunpack.c.l.b16 %v896
  %v919 = vunpack.c.h.b16 %v896
  %v920 = vunpack.c.l.b16 %v897
  %v921 = vunpack.c.h.b16 %v897
  %v922 = vpack.c.b16 %v906, %v906
  %v923 = vpack.c.b16 %v907, %v907
  %v924 = vpack.c.b16 %v908, %v908
  %v925 = vpack.c.b16 %v909, %v909
  %v926 = vpack.c.b16 %v910, %v910
  %v927 = vpack.c.b16 %v911, %v911
  %v928 = vpack.c.b16 %v912, %v912
  %v929 = vpack.c.b16 %v913, %v913
  %v930 = vpack.c.b16 %v914, %v914
  %v931 = vpack.c.b16 %v915, %v915
  %v932 = vpack.c.b16 %v916, %v916
  %v933 = vpack.c.b16 %v917, %v917
  %v934 = vpack.c.b16 %v918, %v918
  %v935 = vpack.c.b16 %v919, %v919
  %v936 = vpack.c.b16 %v920, %v920
  %v937 = vpack.c.b16 %v921, %v921
  %954 = vst [vmem:[%s3] sm:$0xf] %v922
  %955 = vst [vmem:[%s3 + $0x4] sm:$0xf] %v923
  %956 = vst [vmem:[%s3 + $0x8] sm:$0xf] %v924
  %957 = vst [vmem:[%s3 + $0xc] sm:$0xf] %v925
  %958 = vst [vmem:[%s3 + $0x10] sm:$0xf] %v926
  %959 = vst [vmem:[%s3 + $0x14] sm:$0xf] %v927
  %960 = vst [vmem:[%s3 + $0x18] sm:$0xf] %v928
  %961 = vst [vmem:[%s3 + $0x1c] sm:$0xf] %v929
  %962 = vst [vmem:[%s3 + $0x20] sm:$0xf] %v930
  %963 = vst [vmem:[%s3 + $0x24] sm:$0xf] %v931
  %964 = vst [vmem:[%s3 + $0x28] sm:$0xf] %v932
  %965 = vst [vmem:[%s3 + $0x2c] sm:$0xf] %v933
  %966 = vst [vmem:[%s3 + $0x30] sm:$0xf] %v934
  %967 = vst [vmem:[%s3 + $0x34] sm:$0xf] %v935
  %968 = vst [vmem:[%s3 + $0x38] sm:$0xf] %v936
  %969 = vst [vmem:[%s3 + $0x3c] sm:$0xf] %v937
  // Predicated region
  $region14: #{unet_forward.21} parent=0 // pred_check
    _
  $region15: #{unet_forward.21} parent=0 // pred_check_branch
    %971 = sbr.rel (0) target = $region17
  $region16: #{unet_forward.21} parent=0 // pred_region
    _
  $region17: #{unet_forward.21} parent=0 // pred_fallthru
    _
  // Predicated region
  $region18: #{unet_forward.21} parent=0 // pred_check
    _
  $region19: #{unet_forward.21} parent=0 // pred_check_branch
    %973 = sbr.rel (0) target = $region21
  $region20: #{unet_forward.21} parent=0 // pred_region
    _
  $region21: #{unet_forward.21} parent=0 // pred_fallthru
    _

// kernel: unet_forward.22
$region0: #{unet_forward.22}
  #allocation0 [shape = 'u32[]', space=smem, size = 0x4, offset = 0x4, fixed_abs, tag = 'smem constant byte address 0x4 - core index']
  #allocation1 [shape = 'u32[144,128]{1,0:T(1,128)}', space=vmem, size = 0x12000, scoped, tag = 'internal scratch']
  %s0 = inlined_call_operand.vmem [shape: bf16[512,288], index: 0, kind: input, shape index: {}]
  %s1 = inlined_call_operand.vmem [shape: bf16[288,128], index: 1, kind: input, shape index: {}]
  %s2 = inlined_call_operand.vmem [shape: f32[1,128], index: 2, kind: input, shape index: {}]
  %s3 = inlined_call_operand.vmem [shape: bf16[512,128], index: 3, kind: output, shape index: {}]
  %s4 = sld [smem:[#allocation0]]
  $region45: #{unet_forward.22} parent=0
    _
  %s6 = ssub.s32 1, %s4
  %s7 = scalar_select 0, %s6, %s4
  loop: start=0, step=1, limit=4
  $region2: #{unet_forward.22} parent=0 // loop_pre_header
    _
  $region3: #{unet_forward.22} parent=0 // loop_header
    %s9 = sphi 0, %s13
    %p10 = scmp.ge.s32.totalorder %s9, 4
    %s16 = sphi 0, %s28
    %s17 = sphi 0, %s24
    %s18 = sphi 0, %s16
    %s19 = sphi 0, %s17
    %s20 = sphi 0, %s18
    %s21 = sphi 0, %s19
    %s31 = sphi 0, %s33
    %s34 = sphi 0, %s31
    %s35 = sphi 0, %s34
    %s51 = sphi 0, %s35
    %s57 = sphi 0, %s59
    %s60 = sphi 0, %s57
    %s61 = sphi 0, %s60
    %s77 = sphi 0, %s61
    %s83 = sphi 0, %s85
    %s86 = sphi 0, %s83
    %s87 = sphi 0, %s86
    %s103 = sphi 0, %s87
    %s111 = sphi 0, %s113
    %s114 = sphi 0, %s111
    %s115 = sphi 0, %s114
    %s131 = sphi 0, %s115
  $region4: #{unet_forward.22} parent=0 // loop_header_branch
    %12 = sbr.rel (%p10) target = $region8
  $region5: #{unet_forward.22} parent=0 // loop_body
    %s14 = ssub.s32 %s9, 1
    %s15 = ssub.s32 %s9, 2
    %s22 = sadd.s32 1, %s17
    %p23 = scmp.ge.s32.totalorder %s22, 1
    %s24 = scalar_select %p23, 0, %s22
    %s25 = sadd.s32 1, %s16
    %s26 = scalar_select %p23, %s25, %s16
    %p27 = scmp.ge.s32.totalorder %s26, 2
    %s28 = scalar_select %p27, 0, %s26
    %s29 = ssub.s32 %s16, %s28
    %p30 = scmp.eq.s32.totalorder %s29, 0
    %s32 = sadd.s32 %s31, 1
    %s33 = scalar_select %p30, %s31, %s32
    %p36 = pneg %p30
    %p37 = scmp.eq.s32.totalorder %s9, 1
    %p38 = por %p36, %p37
    %p39 = scmp.ne.s32.totalorder %s31, %s34
    %p40 = scmp.eq.s32.totalorder %s9, 0
    %p41 = por %p39, %p40
    %p42 = scmp.ne.s32.totalorder %s31, %s34
    %p43 = scmp.eq.s32.totalorder %s14, 1
    %p44 = por %p42, %p43
    %p45 = scmp.ne.s32.totalorder %s34, %s35
    %p46 = scmp.eq.s32.totalorder %s14, 0
    %p47 = por %p45, %p46
    %p48 = scmp.ne.s32.totalorder %s34, %s35
    %p49 = scmp.eq.s32.totalorder %s15, 1
    %p50 = por %p48, %p49
    %p52 = scmp.ne.s32.totalorder %s35, %s51
    %p53 = scmp.eq.s32.totalorder %s15, 0
    %p54 = por %p52, %p53
    %s55 = ssub.s32 %s17, %s24
    %p56 = scmp.eq.s32.totalorder %s55, 0
    %s58 = sadd.s32 %s57, 1
    %s59 = scalar_select %p56, %s57, %s58
    %p62 = pneg %p56
    %p63 = scmp.eq.s32.totalorder %s9, 1
    %p64 = por %p62, %p63
    %p65 = scmp.ne.s32.totalorder %s57, %s60
    %p66 = scmp.eq.s32.totalorder %s9, 0
    %p67 = por %p65, %p66
    %p68 = scmp.ne.s32.totalorder %s57, %s60
    %p69 = scmp.eq.s32.totalorder %s14, 1
    %p70 = por %p68, %p69
    %p71 = scmp.ne.s32.totalorder %s60, %s61
    %p72 = scmp.eq.s32.totalorder %s14, 0
    %p73 = por %p71, %p72
    %p74 = scmp.ne.s32.totalorder %s60, %s61
    %p75 = scmp.eq.s32.totalorder %s15, 1
    %p76 = por %p74, %p75
    %p78 = scmp.ne.s32.totalorder %s61, %s77
    %p79 = scmp.eq.s32.totalorder %s15, 0
    %p80 = por %p78, %p79
    %s81 = ssub.s32 %s17, %s24
    %p82 = scmp.eq.s32.totalorder %s81, 0
    %s84 = sadd.s32 %s83, 1
    %s85 = scalar_select %p82, %s83, %s84
    %p88 = pneg %p82
    %p89 = scmp.eq.s32.totalorder %s9, 1
    %p90 = por %p88, %p89
    %p91 = scmp.ne.s32.totalorder %s83, %s86
    %p92 = scmp.eq.s32.totalorder %s9, 0
    %p93 = por %p91, %p92
    %p94 = scmp.ne.s32.totalorder %s83, %s86
    %p95 = scmp.eq.s32.totalorder %s14, 1
    %p96 = por %p94, %p95
    %p97 = scmp.ne.s32.totalorder %s86, %s87
    %p98 = scmp.eq.s32.totalorder %s14, 0
    %p99 = por %p97, %p98
    %p100 = scmp.ne.s32.totalorder %s86, %s87
    %p101 = scmp.eq.s32.totalorder %s15, 1
    %p102 = por %p100, %p101
    %p104 = scmp.ne.s32.totalorder %s87, %s103
    %p105 = scmp.eq.s32.totalorder %s15, 0
    %p106 = por %p104, %p105
    %s107 = ssub.s32 %s16, %s28
    %s108 = ssub.s32 %s17, %s24
    %s109 = sor.u32 %s107, %s108
    %p110 = scmp.eq.s32.totalorder %s109, 0
    %s112 = sadd.s32 %s111, 1
    %s113 = scalar_select %p110, %s111, %s112
    %p116 = pneg %p110
    %p117 = scmp.eq.s32.totalorder %s9, 1
    %p118 = por %p116, %p117
    %p119 = scmp.ne.s32.totalorder %s111, %s114
    %p120 = scmp.eq.s32.totalorder %s9, 0
    %p121 = por %p119, %p120
    %p122 = scmp.ne.s32.totalorder %s111, %s114
    %p123 = scmp.eq.s32.totalorder %s14, 1
    %p124 = por %p122, %p123
    %p125 = scmp.ne.s32.totalorder %s114, %s115
    %p126 = scmp.eq.s32.totalorder %s14, 0
    %p127 = por %p125, %p126
    %p128 = scmp.ne.s32.totalorder %s114, %s115
    %p129 = scmp.eq.s32.totalorder %s15, 1
    %p130 = por %p128, %p129
    %p132 = scmp.ne.s32.totalorder %s115, %s131
    %p133 = scmp.eq.s32.totalorder %s15, 0
    %p134 = por %p132, %p133
    %p135 = scmp.le.s32.totalorder 1, %s9
    %p136 = scmp.lt.s32.totalorder %s9, 3
    %p137 = pnand %p135, %p136
    %p138 = pneg %p137
    // Predicated region
    $region9: #{unet_forward.22} parent=5 // pred_check
      _
    $region10: #{unet_forward.22} parent=5 // pred_check_branch
      %140 = sbr.rel (%p137) target = $region12
    $region11: #{unet_forward.22} parent=5 // pred_region
      %s141 = ssub.s32 %s9, 1
      // Predicated region
      $region13: #{unet_forward.22} parent=11 // pred_check
        %p142 = pneg %p73
      $region14: #{unet_forward.22} parent=11 // pred_check_branch
        %144 = sbr.rel (%p142) target = $region16
      $region15: #{unet_forward.22} parent=11 // pred_region
        %p145 = scmp.lt.s32.totalorder %s19, 0
        %s146 = scalar_select %p145, %s19, 0
        %s147 = smul.addr %s146, 4
        %s148 = scalar_lea.vmem %s1, %s147
      $region16: #{unet_forward.22} parent=11 // pred_fallthru
        _
      // Predicated region
      $region17: #{unet_forward.22} parent=11 // pred_check
        %p149 = pneg %p99
      $region18: #{unet_forward.22} parent=11 // pred_check_branch
        %151 = sbr.rel (%p149) target = $region20
      $region19: #{unet_forward.22} parent=11 // pred_region
        %p152 = scmp.lt.s32.totalorder %s19, 0
        %s153 = scalar_select %p152, %s19, 0
        %s154 = scalar_lea.vmem %s2, %s153
      $region20: #{unet_forward.22} parent=11 // pred_fallthru
        _
    $region12: #{unet_forward.22} parent=5 // pred_fallthru
      _
    %p155 = scmp.lt.s32.totalorder %s9, 2
    // Predicated region
    $region21: #{unet_forward.22} parent=5 // pred_check
      %p156 = pneg %p155
    $region22: #{unet_forward.22} parent=5 // pred_check_branch
      %158 = sbr.rel (%p156) target = $region24
    $region23: #{unet_forward.22} parent=5 // pred_region
      // Predicated region
      $region25: #{unet_forward.22} parent=23 // pred_check
        %p159 = pneg %p41
      $region26: #{unet_forward.22} parent=23 // pred_check_branch
        %161 = sbr.rel (%p159) target = $region28
      $region27: #{unet_forward.22} parent=23 // pred_region
        %s162 = smul.u32 32, %s16
        %p163 = scmp.lt.s32.totalorder %s162, 63
        %s164 = scalar_select %p163, %s162, 63
        %s165 = smul.addr %s164, 3
        %s166 = smul.addr %s165, 4
        %s167 = scalar_lea.vmem %s0, %s166
        %s168 = smul.u32 32, %s16
      $region28: #{unet_forward.22} parent=23 // pred_fallthru
        _
    $region24: #{unet_forward.22} parent=5 // pred_fallthru
      _
    %p169 = scmp.le.s32.totalorder 1, %s9
    %p170 = scmp.lt.s32.totalorder %s9, 3
    %p171 = pnand %p169, %p170
    %p172 = pneg %p171
    // Predicated region
    $region29: #{unet_forward.22} parent=5 // pred_check
      _
    $region30: #{unet_forward.22} parent=5 // pred_check_branch
      %174 = sbr.rel (%p171) target = $region32
    $region31: #{unet_forward.22} parent=5 // pred_region
      %s175 = ssub.s32 %s9, 1
      %s176 = smul.u32 32, %s18
      %p177 = scmp.lt.s32.totalorder %s176, 63
      %s178 = scalar_select %p177, %s176, 63
      %s179 = smul.addr %s178, 3
      %s180 = smul.addr %s179, 4
      %s181 = scalar_lea.vmem %s0, %s180
      %p182 = pneg %p47
      %p183 = pneg %p44
      %p184 = scmp.lt.s32.totalorder %s19, 0
      %s185 = scalar_select %p184, %s19, 0
      %s186 = smul.addr %s185, 4
      %s187 = scalar_lea.vmem %s1, %s186
      %p188 = pneg %p73
      %p189 = pneg %p70
      %p190 = scmp.lt.s32.totalorder %s19, 0
      %s191 = scalar_select %p190, %s19, 0
      %s192 = scalar_lea.vmem %s2, %s191
      %p193 = pneg %p99
      %p194 = pneg %p96
      %p195 = pneg %p127
      %p196 = pneg %p124
      %s197 = smul.u32 32, %s18
      %p198 = scmp.lt.s32.totalorder %s197, 63
      %s199 = scalar_select %p198, %s197, 63
      %p200 = scmp.lt.s32.totalorder %s19, 0
      %s201 = scalar_select %p200, %s19, 0
      %s202 = sadd.s32 %s201, %s199
      %s203 = smul.addr %s202, 4
      %s204 = scalar_lea.vmem %s3, %s203
      %s205 = smul.u32 32, %s18
      %p206 = scmp.lt.s32.totalorder %s205, 63
      %s207 = scalar_select %p206, %s205, 63
      %s208 = smul.addr %s207, 3
      %s209 = smul.addr %s208, 4
      %s210 = scalar_lea.vmem %s0, %s209
      %s211 = smul.u32 32, %s18
      %p212 = scmp.lt.s32.totalorder %s19, 0
      %s213 = scalar_select %p212, %s19, 0
      %s214 = smul.addr %s213, 4
      %s215 = scalar_lea.vmem %s1, %s214
      %p216 = scmp.lt.s32.totalorder %s19, 0
      %s217 = scalar_select %p216, %s19, 0
      %s218 = scalar_lea.vmem %s2, %s217
      %s219 = smul.u32 32, %s18
      %p220 = scmp.lt.s32.totalorder %s219, 63
      %s221 = scalar_select %p220, %s219, 63
      %p222 = scmp.lt.s32.totalorder %s19, 0
      %s223 = scalar_select %p222, %s19, 0
      %s224 = sadd.s32 %s223, %s221
      %s225 = smul.addr %s224, 4
      %s226 = scalar_lea.vmem %s3, %s225
      %s227 = smul.u32 32, %s18
      %v229 = vld [vmem:[%s210] sm:$0xff]
      %v230 = vld [vmem:[%s210 + $0x8] sm:$0xf]
      %v231 = vld [vmem:[%s210 + $0xc] sm:$0xff]
      %v232 = vld [vmem:[%s210 + $0x14] sm:$0xf]
      %v233 = vld [vmem:[%s210 + $0x18] sm:$0xff]
      %v234 = vld [vmem:[%s210 + $0x20] sm:$0xf]
      %v235 = vld [vmem:[%s210 + $0x24] sm:$0xff]
      %v236 = vld [vmem:[%s210 + $0x2c] sm:$0xf]
      %v237 = vld [vmem:[%s210 + $0x30] sm:$0xff]
      %v238 = vld [vmem:[%s210 + $0x38] sm:$0xf]
      %v239 = vld [vmem:[%s210 + $0x3c] sm:$0xff]
      %v240 = vld [vmem:[%s210 + $0x44] sm:$0xf]
      %v241 = vld [vmem:[%s210 + $0x48] sm:$0xff]
      %v242 = vld [vmem:[%s210 + $0x50] sm:$0xf]
      %v243 = vld [vmem:[%s210 + $0x54] sm:$0xff]
      %v244 = vld [vmem:[%s210 + $0x5c] sm:$0xf]
      %v245 = vld [vmem:[%s210 + $0x60] sm:$0xff]
      %v246 = vld [vmem:[%s210 + $0x68] sm:$0xf]
      %v247 = vld [vmem:[%s210 + $0x6c] sm:$0xff]
      %v248 = vld [vmem:[%s210 + $0x74] sm:$0xf]
      %v249 = vld [vmem:[%s210 + $0x78] sm:$0xff]
      %v250 = vld [vmem:[%s210 + $0x80] sm:$0xf]
      %v251 = vld [vmem:[%s210 + $0x84] sm:$0xff]
      %v252 = vld [vmem:[%s210 + $0x8c] sm:$0xf]
      %v253 = vld [vmem:[%s210 + $0x90] sm:$0xff]
      %v254 = vld [vmem:[%s210 + $0x98] sm:$0xf]
      %v255 = vld [vmem:[%s210 + $0x9c] sm:$0xff]
      %v256 = vld [vmem:[%s210 + $0xa4] sm:$0xf]
      %v257 = vld [vmem:[%s210 + $0xa8] sm:$0xff]
      %v258 = vld [vmem:[%s210 + $0xb0] sm:$0xf]
      %v259 = vld [vmem:[%s210 + $0xb4] sm:$0xff]
      %v260 = vld [vmem:[%s210 + $0xbc] sm:$0xf]
      %v261 = vld [vmem:[%s210 + $0xc0] sm:$0xff]
      %v262 = vld [vmem:[%s210 + $0xc8] sm:$0xf]
      %v263 = vld [vmem:[%s210 + $0xcc] sm:$0xff]
      %v264 = vld [vmem:[%s210 + $0xd4] sm:$0xf]
      %v265 = vld [vmem:[%s210 + $0xd8] sm:$0xff]
      %v266 = vld [vmem:[%s210 + $0xe0] sm:$0xf]
      %v267 = vld [vmem:[%s210 + $0xe4] sm:$0xff]
      %v268 = vld [vmem:[%s210 + $0xec] sm:$0xf]
      %v269 = vld [vmem:[%s210 + $0xf0] sm:$0xff]
      %v270 = vld [vmem:[%s210 + $0xf8] sm:$0xf]
      %v271 = vld [vmem:[%s210 + $0xfc] sm:$0xff]
      %v272 = vld [vmem:[%s210 + $0x104] sm:$0xf]
      %v273 = vld [vmem:[%s210 + $0x108] sm:$0xff]
      %v274 = vld [vmem:[%s210 + $0x110] sm:$0xf]
      %v275 = vld [vmem:[%s210 + $0x114] sm:$0xff]
      %v276 = vld [vmem:[%s210 + $0x11c] sm:$0xf]
      %v277 = vld [vmem:[%s210 + $0x120] sm:$0xff]
      %v278 = vld [vmem:[%s210 + $0x128] sm:$0xf]
      %v279 = vld [vmem:[%s210 + $0x12c] sm:$0xff]
      %v280 = vld [vmem:[%s210 + $0x134] sm:$0xf]
      %v281 = vld [vmem:[%s210 + $0x138] sm:$0xff]
      %v282 = vld [vmem:[%s210 + $0x140] sm:$0xf]
      %v283 = vld [vmem:[%s210 + $0x144] sm:$0xff]
      %v284 = vld [vmem:[%s210 + $0x14c] sm:$0xf]
      %v285 = vld [vmem:[%s210 + $0x150] sm:$0xff]
      %v286 = vld [vmem:[%s210 + $0x158] sm:$0xf]
      %v287 = vld [vmem:[%s210 + $0x15c] sm:$0xff]
      %v288 = vld [vmem:[%s210 + $0x164] sm:$0xf]
      %v289 = vld [vmem:[%s210 + $0x168] sm:$0xff]
      %v290 = vld [vmem:[%s210 + $0x170] sm:$0xf]
      %v291 = vld [vmem:[%s210 + $0x174] sm:$0xff]
      %v292 = vld [vmem:[%s210 + $0x17c] sm:$0xf]
      %v293 = vld [vmem:[%s215] sm:$0xf]
      %v294 = vld [vmem:[%s215 + $0x4] sm:$0xf]
      %v295 = vld [vmem:[%s215 + $0x8] sm:$0xf]
      %v296 = vld [vmem:[%s215 + $0xc] sm:$0xf]
      %v297 = vld [vmem:[%s215 + $0x10] sm:$0xf]
      %v298 = vld [vmem:[%s215 + $0x14] sm:$0xf]
      %v299 = vld [vmem:[%s215 + $0x18] sm:$0xf]
      %v300 = vld [vmem:[%s215 + $0x1c] sm:$0xf]
      %v301 = vld [vmem:[%s215 + $0x20] sm:$0xf]
      %v302 = vld [vmem:[%s215 + $0x24] sm:$0xf]
      %v303 = vld [vmem:[%s215 + $0x28] sm:$0xf]
      %v304 = vld [vmem:[%s215 + $0x2c] sm:$0xf]
      %v305 = vld [vmem:[%s215 + $0x30] sm:$0xf]
      %v306 = vld [vmem:[%s215 + $0x34] sm:$0xf]
      %v307 = vld [vmem:[%s215 + $0x38] sm:$0xf]
      %v308 = vld [vmem:[%s215 + $0x3c] sm:$0xf]
      %v309 = vld [vmem:[%s215 + $0x40] sm:$0xf]
      %v310 = vld [vmem:[%s215 + $0x44] sm:$0xf]
      %v311 = vld [vmem:[%s215 + $0x48] sm:$0xf]
      %v312 = vld [vmem:[%s215 + $0x4c] sm:$0xf]
      %v313 = vld [vmem:[%s215 + $0x50] sm:$0xf]
      %v314 = vld [vmem:[%s215 + $0x54] sm:$0xf]
      %v315 = vld [vmem:[%s215 + $0x58] sm:$0xf]
      %v316 = vld [vmem:[%s215 + $0x5c] sm:$0xf]
      %v317 = vld [vmem:[%s215 + $0x60] sm:$0xf]
      %v318 = vld [vmem:[%s215 + $0x64] sm:$0xf]
      %v319 = vld [vmem:[%s215 + $0x68] sm:$0xf]
      %v320 = vld [vmem:[%s215 + $0x6c] sm:$0xf]
      %v321 = vld [vmem:[%s215 + $0x70] sm:$0xf]
      %v322 = vld [vmem:[%s215 + $0x74] sm:$0xf]
      %v323 = vld [vmem:[%s215 + $0x78] sm:$0xf]
      %v324 = vld [vmem:[%s215 + $0x7c] sm:$0xf]
      %v325 = vld [vmem:[%s215 + $0x80] sm:$0xf]
      %v326 = vld [vmem:[%s215 + $0x84] sm:$0xf]
      %v327 = vld [vmem:[%s215 + $0x88] sm:$0xf]
      %v328 = vld [vmem:[%s215 + $0x8c] sm:$0xf]
      %v329 = vld [vmem:[%s218] sm:$0x1]
      %v331 = vlaneseq
      %v332 = vshrl.u32 %v331, 7
      %v333 = vsub.s32 0, %v332
      %v334 = vrot.slane %v329, %v333
      %v400 = vunpack.c.l.b16 %v229
      %v401 = vunpack.c.h.b16 %v229
      %v402 = vunpack.c.l.b16 %v230
      %v403 = vunpack.c.l.b16 %v231
      %v404 = vunpack.c.h.b16 %v231
      %v405 = vunpack.c.l.b16 %v232
      %v406 = vunpack.c.l.b16 %v233
      %v407 = vunpack.c.h.b16 %v233
      %v408 = vunpack.c.l.b16 %v234
      %v409 = vunpack.c.l.b16 %v235
      %v410 = vunpack.c.h.b16 %v235
      %v411 = vunpack.c.l.b16 %v236
      %v412 = vunpack.c.l.b16 %v237
      %v413 = vunpack.c.h.b16 %v237
      %v414 = vunpack.c.l.b16 %v238
      %v415 = vunpack.c.l.b16 %v239
      %v416 = vunpack.c.h.b16 %v239
      %v417 = vunpack.c.l.b16 %v240
      %v418 = vunpack.c.l.b16 %v241
      %v419 = vunpack.c.h.b16 %v241
      %v420 = vunpack.c.l.b16 %v242
      %v421 = vunpack.c.l.b16 %v243
      %v422 = vunpack.c.h.b16 %v243
      %v423 = vunpack.c.l.b16 %v244
      %v424 = vunpack.c.l.b16 %v245
      %v425 = vunpack.c.h.b16 %v245
      %v426 = vunpack.c.l.b16 %v246
      %v427 = vunpack.c.l.b16 %v247
      %v428 = vunpack.c.h.b16 %v247
      %v429 = vunpack.c.l.b16 %v248
      %v430 = vunpack.c.l.b16 %v249
      %v431 = vunpack.c.h.b16 %v249
      %v432 = vunpack.c.l.b16 %v250
      %v433 = vunpack.c.l.b16 %v251
      %v434 = vunpack.c.h.b16 %v251
      %v435 = vunpack.c.l.b16 %v252
      %v436 = vunpack.c.l.b16 %v253
      %v437 = vunpack.c.h.b16 %v253
      %v438 = vunpack.c.l.b16 %v254
      %v439 = vunpack.c.l.b16 %v255
      %v440 = vunpack.c.h.b16 %v255
      %v441 = vunpack.c.l.b16 %v256
      %v442 = vunpack.c.l.b16 %v257
      %v443 = vunpack.c.h.b16 %v257
      %v444 = vunpack.c.l.b16 %v258
      %v445 = vunpack.c.l.b16 %v259
      %v446 = vunpack.c.h.b16 %v259
      %v447 = vunpack.c.l.b16 %v260
      %v448 = vunpack.c.l.b16 %v261
      %v449 = vunpack.c.h.b16 %v261
      %v450 = vunpack.c.l.b16 %v262
      %v451 = vunpack.c.l.b16 %v263
      %v452 = vunpack.c.h.b16 %v263
      %v453 = vunpack.c.l.b16 %v264
      %v454 = vunpack.c.l.b16 %v265
      %v455 = vunpack.c.h.b16 %v265
      %v456 = vunpack.c.l.b16 %v266
      %v457 = vunpack.c.l.b16 %v267
      %v458 = vunpack.c.h.b16 %v267
      %v459 = vunpack.c.l.b16 %v268
      %v460 = vunpack.c.l.b16 %v269
      %v461 = vunpack.c.h.b16 %v269
      %v462 = vunpack.c.l.b16 %v270
      %v463 = vunpack.c.l.b16 %v271
      %v464 = vunpack.c.h.b16 %v271
      %v465 = vunpack.c.l.b16 %v272
      %v466 = vunpack.c.l.b16 %v273
      %v467 = vunpack.c.h.b16 %v273
      %v468 = vunpack.c.l.b16 %v274
      %v469 = vunpack.c.l.b16 %v275
      %v470 = vunpack.c.h.b16 %v275
      %v471 = vunpack.c.l.b16 %v276
      %v472 = vunpack.c.l.b16 %v277
      %v473 = vunpack.c.h.b16 %v277
      %v474 = vunpack.c.l.b16 %v278
      %v475 = vunpack.c.l.b16 %v279
      %v476 = vunpack.c.h.b16 %v279
      %v477 = vunpack.c.l.b16 %v280
      %v478 = vunpack.c.l.b16 %v281
      %v479 = vunpack.c.h.b16 %v281
      %v480 = vunpack.c.l.b16 %v282
      %v481 = vunpack.c.l.b16 %v283
      %v482 = vunpack.c.h.b16 %v283
      %v483 = vunpack.c.l.b16 %v284
      %v484 = vunpack.c.l.b16 %v285
      %v485 = vunpack.c.h.b16 %v285
      %v486 = vunpack.c.l.b16 %v286
      %v487 = vunpack.c.l.b16 %v287
      %v488 = vunpack.c.h.b16 %v287
      %v489 = vunpack.c.l.b16 %v288
      %v490 = vunpack.c.l.b16 %v289
      %v491 = vunpack.c.h.b16 %v289
      %v492 = vunpack.c.l.b16 %v290
      %v493 = vunpack.c.l.b16 %v291
      %v494 = vunpack.c.h.b16 %v291
      %v495 = vunpack.c.l.b16 %v292
      %v496 = vpack.c.b16 %v403, %v400
      %v497 = vpack.c.b16 %v404, %v401
      %v498 = vpack.c.b16 %v405, %v402
      %v499 = vpack.c.b16 %v409, %v406
      %v500 = vpack.c.b16 %v410, %v407
      %v501 = vpack.c.b16 %v411, %v408
      %v502 = vpack.c.b16 %v415, %v412
      %v503 = vpack.c.b16 %v416, %v413
      %v504 = vpack.c.b16 %v417, %v414
      %v505 = vpack.c.b16 %v421, %v418
      %v506 = vpack.c.b16 %v422, %v419
      %v507 = vpack.c.b16 %v423, %v420
      %v508 = vpack.c.b16 %v427, %v424
      %v509 = vpack.c.b16 %v428, %v425
      %v510 = vpack.c.b16 %v429, %v426
      %v511 = vpack.c.b16 %v433, %v430
      %v512 = vpack.c.b16 %v434, %v431
      %v513 = vpack.c.b16 %v435, %v432
      %v514 = vpack.c.b16 %v439, %v436
      %v515 = vpack.c.b16 %v440, %v437
      %v516 = vpack.c.b16 %v441, %v438
      %v517 = vpack.c.b16 %v445, %v442
      %v518 = vpack.c.b16 %v446, %v443
      %v519 = vpack.c.b16 %v447, %v444
      %v520 = vpack.c.b16 %v451, %v448
      %v521 = vpack.c.b16 %v452, %v449
      %v522 = vpack.c.b16 %v453, %v450
      %v523 = vpack.c.b16 %v457, %v454
      %v524 = vpack.c.b16 %v458, %v455
      %v525 = vpack.c.b16 %v459, %v456
      %v526 = vpack.c.b16 %v463, %v460
      %v527 = vpack.c.b16 %v464, %v461
      %v528 = vpack.c.b16 %v465, %v462
      %v529 = vpack.c.b16 %v469, %v466
      %v530 = vpack.c.b16 %v470, %v467
      %v531 = vpack.c.b16 %v471, %v468
      %v532 = vpack.c.b16 %v475, %v472
      %v533 = vpack.c.b16 %v476, %v473
      %v534 = vpack.c.b16 %v477, %v474
      %v535 = vpack.c.b16 %v481, %v478
      %v536 = vpack.c.b16 %v482, %v479
      %v537 = vpack.c.b16 %v483, %v480
      %v538 = vpack.c.b16 %v487, %v484
      %v539 = vpack.c.b16 %v488, %v485
      %v540 = vpack.c.b16 %v489, %v486
      %v541 = vpack.c.b16 %v493, %v490
      %v542 = vpack.c.b16 %v494, %v491
      %v543 = vpack.c.b16 %v495, %v492
      %v612 = vunpack.c.l.b16 %v293
      %v613 = vunpack.c.l.b16 %v294
      %v614 = vunpack.c.l.b16 %v295
      %v615 = vunpack.c.l.b16 %v296
      %v616 = vunpack.c.l.b16 %v297
      %v617 = vunpack.c.l.b16 %v298
      %v618 = vunpack.c.l.b16 %v299
      %v619 = vunpack.c.l.b16 %v300
      %v620 = vunpack.c.l.b16 %v301
      %v621 = vunpack.c.l.b16 %v302
      %v622 = vunpack.c.l.b16 %v303
      %v623 = vunpack.c.l.b16 %v304
      %v624 = vunpack.c.l.b16 %v305
      %v625 = vunpack.c.l.b16 %v306
      %v626 = vunpack.c.l.b16 %v307
      %v627 = vunpack.c.l.b16 %v308
      %v628 = vunpack.c.l.b16 %v309
      %v629 = vunpack.c.l.b16 %v310
      %v630 = vunpack.c.l.b16 %v311
      %v631 = vunpack.c.l.b16 %v312
      %v632 = vunpack.c.l.b16 %v313
      %v633 = vunpack.c.l.b16 %v314
      %v634 = vunpack.c.l.b16 %v315
      %v635 = vunpack.c.l.b16 %v316
      %v636 = vunpack.c.l.b16 %v317
      %v637 = vunpack.c.l.b16 %v318
      %v638 = vunpack.c.l.b16 %v319
      %v639 = vunpack.c.l.b16 %v320
      %v640 = vunpack.c.l.b16 %v321
      %v641 = vunpack.c.l.b16 %v322
      %v642 = vunpack.c.l.b16 %v323
      %v643 = vunpack.c.l.b16 %v324
      %v644 = vunpack.c.l.b16 %v325
      %v645 = vunpack.c.l.b16 %v326
      %v646 = vunpack.c.l.b16 %v327
      %v647 = vunpack.c.l.b16 %v328
      %v648 = vpack.c.b16 %v613, %v612
      %v649 = vpack.c.b16 %v615, %v614
      %v650 = vpack.c.b16 %v617, %v616
      %v651 = vpack.c.b16 %v619, %v618
      %v652 = vpack.c.b16 %v621, %v620
      %v653 = vpack.c.b16 %v623, %v622
      %v654 = vpack.c.b16 %v625, %v624
      %v655 = vpack.c.b16 %v627, %v626
      %v656 = vpack.c.b16 %v629, %v628
      %v657 = vpack.c.b16 %v631, %v630
      %v658 = vpack.c.b16 %v633, %v632
      %v659 = vpack.c.b16 %v635, %v634
      %v660 = vpack.c.b16 %v637, %v636
      %v661 = vpack.c.b16 %v639, %v638
      %v662 = vpack.c.b16 %v641, %v640
      %v663 = vpack.c.b16 %v643, %v642
      %v664 = vpack.c.b16 %v645, %v644
      %v665 = vpack.c.b16 %v647, %v646
      %vm684 = vcmask 261120
      %v686 = vsel %vm684, %v498, 0
      %v689 = vsel %vm684, %v501, 0
      %v692 = vsel %vm684, %v504, 0
      %v695 = vsel %vm684, %v507, 0
      %v698 = vsel %vm684, %v510, 0
      %v701 = vsel %vm684, %v513, 0
      %v704 = vsel %vm684, %v516, 0
      %v707 = vsel %vm684, %v519, 0
      %v710 = vsel %vm684, %v522, 0
      %v713 = vsel %vm684, %v525, 0
      %v716 = vsel %vm684, %v528, 0
      %v719 = vsel %vm684, %v531, 0
      %v722 = vsel %vm684, %v534, 0
      %v725 = vsel %vm684, %v537, 0
      %v728 = vsel %vm684, %v540, 0
      %v731 = vsel %vm684, %v543, 0
      %733 = vmatprep.subr.bf16.mxu0 0
      %734 = vmatpush1.bf16.msra.mxu0 %v648
      %735 = vmatprep.subr.bf16.mxu0 0
      %736 = vmatpush1.bf16.msra.mxu0 %v649
      %737 = vmatprep.subr.bf16.mxu0 0
      %738 = vmatpush1.bf16.msra.mxu0 %v650
      %739 = vmatprep.subr.bf16.mxu0 0
      %740 = vmatpush1.bf16.msra.mxu0 %v651
      %741 = vmatprep.subr.bf16.mxu0 0
      %742 = vmatpush1.bf16.msra.mxu0 %v652
      %743 = vmatprep.subr.bf16.mxu0 0
      %744 = vmatpush1.bf16.msra.mxu0 %v653
      %745 = vmatprep.subr.bf16.mxu0 0
      %746 = vmatpush1.bf16.msra.mxu0 %v654
      %747 = vmatprep.subr.bf16.mxu0 0
      %748 = vmatpush1.bf16.msra.mxu0 %v655
      %749 = vmatprep.subr.bf16.mxu0 0
      %750 = vmatpush1.bf16.msra.mxu0 %v656
      %751 = vmatprep.subr.bf16.mxu0 0
      %752 = vmatpush1.bf16.msra.mxu0 %v657
      %753 = vmatprep.subr.bf16.mxu0 0
      %754 = vmatpush1.bf16.msra.mxu0 %v658
      %755 = vmatprep.subr.bf16.mxu0 0
      %756 = vmatpush1.bf16.msra.mxu0 %v659
      %757 = vmatprep.subr.bf16.mxu0 0
      %758 = vmatpush1.bf16.msra.mxu0 %v660
      %759 = vmatprep.subr.bf16.mxu0 0
      %760 = vmatpush1.bf16.msra.mxu0 %v661
      %761 = vmatprep.subr.bf16.mxu0 0
      %762 = vmatpush1.bf16.msra.mxu0 %v662
      %763 = vmatprep.subr.bf16.mxu0 0
      %764 = vmatpush1.bf16.msra.mxu0 %v663
      %765 = vmatprep.mubr.bf16.mxu0 %v497
      %766 = vmatmul.mubr.bf16.gmra.mrb[0].mxu0 %v496
      %v767 = vpop.f32.mrb[0].mxu0
      %v768 = vadd.f32 %v334, %v767
      %v769 = vpop.f32.mrb[0].mxu0
      %v770 = vpop.f32.mrb[0].mxu0
      %v771 = vadd.f32 %v334, %v770
      %v772 = vpop.f32.mrb[0].mxu0
      %773 = vmatprep.mubr.bf16.mxu0 %v500
      %774 = vmatmul.mubr.bf16.gmra.mrb[0].mxu0 %v499
      %v775 = vpop.f32.mrb[0].mxu0
      %v776 = vadd.f32 %v334, %v775
      %v777 = vpop.f32.mrb[0].mxu0
      %v778 = vpop.f32.mrb[0].mxu0
      %v779 = vadd.f32 %v334, %v778
      %v780 = vpop.f32.mrb[0].mxu0
      %781 = vmatprep.mubr.bf16.mxu0 %v503
      %782 = vmatmul.mubr.bf16.gmra.mrb[0].mxu0 %v502
      %v783 = vpop.f32.mrb[0].mxu0
      %v784 = vadd.f32 %v334, %v783
      %v785 = vpop.f32.mrb[0].mxu0
      %v786 = vpop.f32.mrb[0].mxu0
      %v787 = vadd.f32 %v334, %v786
      %v788 = vpop.f32.mrb[0].mxu0
      %789 = vmatprep.mubr.bf16.mxu0 %v506
      %790 = vmatmul.mubr.bf16.gmra.mrb[0].mxu0 %v505
      %v791 = vpop.f32.mrb[0].mxu0
      %v792 = vadd.f32 %v334, %v791
      %v793 = vpop.f32.mrb[0].mxu0
      %v794 = vpop.f32.mrb[0].mxu0
      %v795 = vadd.f32 %v334, %v794
      %v796 = vpop.f32.mrb[0].mxu0
      %797 = vmatprep.mubr.bf16.mxu0 %v509
      %798 = vmatmul.mubr.bf16.gmra.mrb[0].mxu0 %v508
      %v799 = vpop.f32.mrb[0].mxu0
      %v800 = vadd.f32 %v334, %v799
      %v801 = vpop.f32.mrb[0].mxu0
      %v802 = vpop.f32.mrb[0].mxu0
      %v803 = vadd.f32 %v334, %v802
      %v804 = vpop.f32.mrb[0].mxu0
      %805 = vmatprep.mubr.bf16.mxu0 %v512
      %806 = vmatmul.mubr.bf16.gmra.mrb[0].mxu0 %v511
      %v807 = vpop.f32.mrb[0].mxu0
      %v808 = vadd.f32 %v334, %v807
      %v809 = vpop.f32.mrb[0].mxu0
      %v810 = vpop.f32.mrb[0].mxu0
      %v811 = vadd.f32 %v334, %v810
      %v812 = vpop.f32.mrb[0].mxu0
      %813 = vmatprep.mubr.bf16.mxu0 %v515
      %814 = vmatmul.mubr.bf16.gmra.mrb[0].mxu0 %v514
      %v815 = vpop.f32.mrb[0].mxu0
      %v816 = vadd.f32 %v334, %v815
      %v817 = vpop.f32.mrb[0].mxu0
      %v818 = vpop.f32.mrb[0].mxu0
      %v819 = vadd.f32 %v334, %v818
      %v820 = vpop.f32.mrb[0].mxu0
      %821 = vmatprep.mubr.bf16.mxu0 %v518
      %822 = vmatmul.mubr.bf16.gmra.mrb[0].mxu0 %v517
      %v823 = vpop.f32.mrb[0].mxu0
      %v824 = vadd.f32 %v334, %v823
      %v825 = vpop.f32.mrb[0].mxu0
      %v826 = vpop.f32.mrb[0].mxu0
      %v827 = vadd.f32 %v334, %v826
      %v828 = vpop.f32.mrb[0].mxu0
      %829 = vmatprep.mubr.bf16.mxu0 %v521
      %830 = vmatmul.mubr.bf16.gmra.mrb[0].mxu0 %v520
      %v831 = vpop.f32.mrb[0].mxu0
      %v832 = vadd.f32 %v334, %v831
      %v833 = vpop.f32.mrb[0].mxu0
      %v834 = vpop.f32.mrb[0].mxu0
      %v835 = vadd.f32 %v334, %v834
      %v836 = vpop.f32.mrb[0].mxu0
      %837 = vmatprep.mubr.bf16.mxu0 %v524
      %838 = vmatmul.mubr.bf16.gmra.mrb[0].mxu0 %v523
      %v839 = vpop.f32.mrb[0].mxu0
      %v840 = vadd.f32 %v334, %v839
      %v841 = vpop.f32.mrb[0].mxu0
      %v842 = vpop.f32.mrb[0].mxu0
      %v843 = vadd.f32 %v334, %v842
      %v844 = vpop.f32.mrb[0].mxu0
      %845 = vmatprep.mubr.bf16.mxu0 %v527
      %846 = vmatmul.mubr.bf16.gmra.mrb[0].mxu0 %v526
      %v847 = vpop.f32.mrb[0].mxu0
      %v848 = vadd.f32 %v334, %v847
      %v849 = vpop.f32.mrb[0].mxu0
      %v850 = vpop.f32.mrb[0].mxu0
      %v851 = vadd.f32 %v334, %v850
      %v852 = vpop.f32.mrb[0].mxu0
      %853 = vmatprep.mubr.bf16.mxu0 %v530
      %854 = vmatmul.mubr.bf16.gmra.mrb[0].mxu0 %v529
      %v855 = vpop.f32.mrb[0].mxu0
      %v856 = vadd.f32 %v334, %v855
      %v857 = vpop.f32.mrb[0].mxu0
      %v858 = vpop.f32.mrb[0].mxu0
      %v859 = vadd.f32 %v334, %v858
      %v860 = vpop.f32.mrb[0].mxu0
      %861 = vmatprep.mubr.bf16.mxu0 %v533
      %862 = vmatmul.mubr.bf16.gmra.mrb[0].mxu0 %v532
      %v863 = vpop.f32.mrb[0].mxu0
      %v864 = vadd.f32 %v334, %v863
      %v865 = vpop.f32.mrb[0].mxu0
      %v866 = vpop.f32.mrb[0].mxu0
      %v867 = vadd.f32 %v334, %v866
      %v868 = vpop.f32.mrb[0].mxu0
      %869 = vmatprep.mubr.bf16.mxu0 %v536
      %870 = vmatmul.mubr.bf16.gmra.mrb[0].mxu0 %v535
      %v871 = vpop.f32.mrb[0].mxu0
      %v872 = vadd.f32 %v334, %v871
      %v873 = vpop.f32.mrb[0].mxu0
      %v874 = vpop.f32.mrb[0].mxu0
      %v875 = vadd.f32 %v334, %v874
      %v876 = vpop.f32.mrb[0].mxu0
      %877 = vmatprep.mubr.bf16.mxu0 %v539
      %878 = vmatmul.mubr.bf16.gmra.mrb[0].mxu0 %v538
      %v879 = vpop.f32.mrb[0].mxu0
      %v880 = vadd.f32 %v334, %v879
      %v881 = vpop.f32.mrb[0].mxu0
      %v882 = vpop.f32.mrb[0].mxu0
      %v883 = vadd.f32 %v334, %v882
      %v884 = vpop.f32.mrb[0].mxu0
      %885 = vmatprep.mubr.bf16.mxu0 %v542
      %886 = vmatmul.mubr.bf16.gmra.mrb[0].mxu0 %v541
      %v887 = vpop.f32.mrb[0].mxu0
      %v888 = vadd.f32 %v334, %v887
      %v889 = vpop.f32.mrb[0].mxu0
      %v890 = vpop.f32.mrb[0].mxu0
      %v891 = vadd.f32 %v334, %v890
      %v892 = vpop.f32.mrb[0].mxu0
      %893 = vdwg.mxu0
      %894 = vmatprep.subr.bf16.mxu0 0
      %895 = vmatpush1.bf16.msra.mxu0 %v664
      %896 = vmatprep.subr.bf16.mxu0 0
      %897 = vmatpush1.bf16.msra.mxu0 %v665
      %898 = vmatprep.subr.bf16.mxu0 0
      %899 = vmatpush1.bf16.msra.mxu0 0
      %900 = vmatprep.subr.bf16.mxu0 0
      %901 = vmatpush1.bf16.msra.mxu0 0
      %902 = vmatprep.subr.bf16.mxu0 0
      %903 = vmatpush1.bf16.msra.mxu0 0
      %904 = vmatprep.subr.bf16.mxu0 0
      %905 = vmatpush1.bf16.msra.mxu0 0
      %906 = vmatprep.subr.bf16.mxu0 0
      %907 = vmatpush1.bf16.msra.mxu0 0
      %908 = vmatprep.subr.bf16.mxu0 0
      %909 = vmatpush1.bf16.msra.mxu0 0
      %910 = vmatprep.subr.bf16.mxu0 0
      %911 = vmatpush1.bf16.msra.mxu0 0
      %912 = vmatprep.subr.bf16.mxu0 0
      %913 = vmatpush1.bf16.msra.mxu0 0
      %914 = vmatprep.subr.bf16.mxu0 0
      %915 = vmatpush1.bf16.msra.mxu0 0
      %916 = vmatprep.subr.bf16.mxu0 0
      %917 = vmatpush1.bf16.msra.mxu0 0
      %918 = vmatprep.subr.bf16.mxu0 0
      %919 = vmatpush1.bf16.msra.mxu0 0
      %920 = vmatprep.subr.bf16.mxu0 0
      %921 = vmatpush1.bf16.msra.mxu0 0
      %922 = vmatprep.subr.bf16.mxu0 0
      %923 = vmatpush1.bf16.msra.mxu0 0
      %924 = vmatprep.subr.bf16.mxu0 0
      %925 = vmatpush1.bf16.msra.mxu0 0
      %926 = vmatprep.mubr.bf16.mxu0 0
      %927 = vmatmul.mubr.bf16.gmra.mrb[0].mxu0 %v686
      %v928 = vpop.f32.mrb[0].mxu0
      %v929 = vadd.f32 %v768, %v928
      %v930 = vpop.f32.mrb[0].mxu0
      %v931 = vpop.f32.mrb[0].mxu0
      %v932 = vadd.f32 %v771, %v931
      %v933 = vpop.f32.mrb[0].mxu0
      %934 = vmatprep.mubr.bf16.mxu0 0
      %935 = vmatmul.mubr.bf16.gmra.mrb[0].mxu0 %v689
      %v936 = vpop.f32.mrb[0].mxu0
      %v937 = vadd.f32 %v776, %v936
      %v938 = vpop.f32.mrb[0].mxu0
      %v939 = vpop.f32.mrb[0].mxu0
      %v940 = vadd.f32 %v779, %v939
      %v941 = vpop.f32.mrb[0].mxu0
      %942 = vmatprep.mubr.bf16.mxu0 0
      %943 = vmatmul.mubr.bf16.gmra.mrb[0].mxu0 %v692
      %v944 = vpop.f32.mrb[0].mxu0
      %v945 = vadd.f32 %v784, %v944
      %v946 = vpop.f32.mrb[0].mxu0
      %v947 = vpop.f32.mrb[0].mxu0
      %v948 = vadd.f32 %v787, %v947
      %v949 = vpop.f32.mrb[0].mxu0
      %950 = vmatprep.mubr.bf16.mxu0 0
      %951 = vmatmul.mubr.bf16.gmra.mrb[0].mxu0 %v695
      %v952 = vpop.f32.mrb[0].mxu0
      %v953 = vadd.f32 %v792, %v952
      %v954 = vpop.f32.mrb[0].mxu0
      %v955 = vpop.f32.mrb[0].mxu0
      %v956 = vadd.f32 %v795, %v955
      %v957 = vpop.f32.mrb[0].mxu0
      %958 = vmatprep.mubr.bf16.mxu0 0
      %959 = vmatmul.mubr.bf16.gmra.mrb[0].mxu0 %v698
      %v960 = vpop.f32.mrb[0].mxu0
      %v961 = vadd.f32 %v800, %v960
      %v962 = vpop.f32.mrb[0].mxu0
      %v963 = vpop.f32.mrb[0].mxu0
      %v964 = vadd.f32 %v803, %v963
      %v965 = vpop.f32.mrb[0].mxu0
      %966 = vmatprep.mubr.bf16.mxu0 0
      %967 = vmatmul.mubr.bf16.gmra.mrb[0].mxu0 %v701
      %v968 = vpop.f32.mrb[0].mxu0
      %v969 = vadd.f32 %v808, %v968
      %v970 = vpop.f32.mrb[0].mxu0
      %v971 = vpop.f32.mrb[0].mxu0
      %v972 = vadd.f32 %v811, %v971
      %v973 = vpop.f32.mrb[0].mxu0
      %974 = vmatprep.mubr.bf16.mxu0 0
      %975 = vmatmul.mubr.bf16.gmra.mrb[0].mxu0 %v704
      %v976 = vpop.f32.mrb[0].mxu0
      %v977 = vadd.f32 %v816, %v976
      %v978 = vpop.f32.mrb[0].mxu0
      %v979 = vpop.f32.mrb[0].mxu0
      %v980 = vadd.f32 %v819, %v979
      %v981 = vpop.f32.mrb[0].mxu0
      %982 = vmatprep.mubr.bf16.mxu0 0
      %983 = vmatmul.mubr.bf16.gmra.mrb[0].mxu0 %v707
      %v984 = vpop.f32.mrb[0].mxu0
      %v985 = vadd.f32 %v824, %v984
      %v986 = vpop.f32.mrb[0].mxu0
      %v987 = vpop.f32.mrb[0].mxu0
      %v988 = vadd.f32 %v827, %v987
      %v989 = vpop.f32.mrb[0].mxu0
      %990 = vmatprep.mubr.bf16.mxu0 0
      %991 = vmatmul.mubr.bf16.gmra.mrb[0].mxu0 %v710
      %v992 = vpop.f32.mrb[0].mxu0
      %v993 = vadd.f32 %v832, %v992
      %v994 = vpop.f32.mrb[0].mxu0
      %v995 = vpop.f32.mrb[0].mxu0
      %v996 = vadd.f32 %v835, %v995
      %v997 = vpop.f32.mrb[0].mxu0
      %998 = vmatprep.mubr.bf16.mxu0 0
      %999 = vmatmul.mubr.bf16.gmra.mrb[0].mxu0 %v713
      %v1000 = vpop.f32.mrb[0].mxu0
      %v1001 = vadd.f32 %v840, %v1000
      %v1002 = vpop.f32.mrb[0].mxu0
      %v1003 = vpop.f32.mrb[0].mxu0
      %v1004 = vadd.f32 %v843, %v1003
      %v1005 = vpop.f32.mrb[0].mxu0
      %1006 = vmatprep.mubr.bf16.mxu0 0
      %1007 = vmatmul.mubr.bf16.gmra.mrb[0].mxu0 %v716
      %v1008 = vpop.f32.mrb[0].mxu0
      %v1009 = vadd.f32 %v848, %v1008
      %v1010 = vpop.f32.mrb[0].mxu0
      %v1011 = vpop.f32.mrb[0].mxu0
      %v1012 = vadd.f32 %v851, %v1011
      %v1013 = vpop.f32.mrb[0].mxu0
      %1014 = vmatprep.mubr.bf16.mxu0 0
      %1015 = vmatmul.mubr.bf16.gmra.mrb[0].mxu0 %v719
      %v1016 = vpop.f32.mrb[0].mxu0
      %v1017 = vadd.f32 %v856, %v1016
      %v1018 = vpop.f32.mrb[0].mxu0
      %v1019 = vpop.f32.mrb[0].mxu0
      %v1020 = vadd.f32 %v859, %v1019
      %v1021 = vpop.f32.mrb[0].mxu0
      %1022 = vmatprep.mubr.bf16.mxu0 0
      %1023 = vmatmul.mubr.bf16.gmra.mrb[0].mxu0 %v722
      %v1024 = vpop.f32.mrb[0].mxu0
      %v1025 = vadd.f32 %v864, %v1024
      %v1026 = vpop.f32.mrb[0].mxu0
      %v1027 = vpop.f32.mrb[0].mxu0
      %v1028 = vadd.f32 %v867, %v1027
      %v1029 = vpop.f32.mrb[0].mxu0
      %1030 = vmatprep.mubr.bf16.mxu0 0
      %1031 = vmatmul.mubr.bf16.gmra.mrb[0].mxu0 %v725
      %v1032 = vpop.f32.mrb[0].mxu0
      %v1033 = vadd.f32 %v872, %v1032
      %v1034 = vpop.f32.mrb[0].mxu0
      %v1035 = vpop.f32.mrb[0].mxu0
      %v1036 = vadd.f32 %v875, %v1035
      %v1037 = vpop.f32.mrb[0].mxu0
      %1038 = vmatprep.mubr.bf16.mxu0 0
      %1039 = vmatmul.mubr.bf16.gmra.mrb[0].mxu0 %v728
      %v1040 = vpop.f32.mrb[0].mxu0
      %v1041 = vadd.f32 %v880, %v1040
      %v1042 = vpop.f32.mrb[0].mxu0
      %v1043 = vpop.f32.mrb[0].mxu0
      %v1044 = vadd.f32 %v883, %v1043
      %v1045 = vpop.f32.mrb[0].mxu0
      %1046 = vmatprep.mubr.bf16.mxu0 0
      %1047 = vmatmul.mubr.bf16.gmra.mrb[0].mxu0 %v731
      %v1048 = vpop.f32.mrb[0].mxu0
      %v1049 = vadd.f32 %v888, %v1048
      %v1050 = vpop.f32.mrb[0].mxu0
      %v1051 = vpop.f32.mrb[0].mxu0
      %v1052 = vadd.f32 %v891, %v1051
      %v1053 = vpop.f32.mrb[0].mxu0
      %1054 = vdwg.mxu0
      %v1055 = vmax.f32 %v929, 0.0
      %v1056 = vmax.f32 %v932, 0.0
      %v1057 = vmax.f32 %v937, 0.0
      %v1058 = vmax.f32 %v940, 0.0
      %v1059 = vmax.f32 %v945, 0.0
      %v1060 = vmax.f32 %v948, 0.0
      %v1061 = vmax.f32 %v953, 0.0
      %v1062 = vmax.f32 %v956, 0.0
      %v1063 = vmax.f32 %v961, 0.0
      %v1064 = vmax.f32 %v964, 0.0
      %v1065 = vmax.f32 %v969, 0.0
      %v1066 = vmax.f32 %v972, 0.0
      %v1067 = vmax.f32 %v977, 0.0
      %v1068 = vmax.f32 %v980, 0.0
      %v1069 = vmax.f32 %v985, 0.0
      %v1070 = vmax.f32 %v988, 0.0
      %v1071 = vmax.f32 %v993, 0.0
      %v1072 = vmax.f32 %v996, 0.0
      %v1073 = vmax.f32 %v1001, 0.0
      %v1074 = vmax.f32 %v1004, 0.0
      %v1075 = vmax.f32 %v1009, 0.0
      %v1076 = vmax.f32 %v1012, 0.0
      %v1077 = vmax.f32 %v1017, 0.0
      %v1078 = vmax.f32 %v1020, 0.0
      %v1079 = vmax.f32 %v1025, 0.0
      %v1080 = vmax.f32 %v1028, 0.0
      %v1081 = vmax.f32 %v1033, 0.0
      %v1082 = vmax.f32 %v1036, 0.0
      %v1083 = vmax.f32 %v1041, 0.0
      %v1084 = vmax.f32 %v1044, 0.0
      %v1085 = vmax.f32 %v1049, 0.0
      %v1086 = vmax.f32 %v1052, 0.0
      %v1087 = vpack.c.bf16 %v1056, %v1055
      %v1088 = vpack.c.bf16 %v1058, %v1057
      %v1089 = vpack.c.bf16 %v1060, %v1059
      %v1090 = vpack.c.bf16 %v1062, %v1061
      %v1091 = vpack.c.bf16 %v1064, %v1063
      %v1092 = vpack.c.bf16 %v1066, %v1065
      %v1093 = vpack.c.bf16 %v1068, %v1067
      %v1094 = vpack.c.bf16 %v1070, %v1069
      %v1095 = vpack.c.bf16 %v1072, %v1071
      %v1096 = vpack.c.bf16 %v1074, %v1073
      %v1097 = vpack.c.bf16 %v1076, %v1075
      %v1098 = vpack.c.bf16 %v1078, %v1077
      %v1099 = vpack.c.bf16 %v1080, %v1079
      %v1100 = vpack.c.bf16 %v1082, %v1081
      %v1101 = vpack.c.bf16 %v1084, %v1083
      %v1102 = vpack.c.bf16 %v1086, %v1085
      %v1119 = vunpack.c.l.b16 %v1087
      %v1120 = vunpack.c.h.b16 %v1087
      %v1121 = vunpack.c.l.b16 %v1088
      %v1122 = vunpack.c.h.b16 %v1088
      %v1123 = vunpack.c.l.b16 %v1089
      %v1124 = vunpack.c.h.b16 %v1089
      %v1125 = vunpack.c.l.b16 %v1090
      %v1126 = vunpack.c.h.b16 %v1090
      %v1127 = vunpack.c.l.b16 %v1091
      %v1128 = vunpack.c.h.b16 %v1091
      %v1129 = vunpack.c.l.b16 %v1092
      %v1130 = vunpack.c.h.b16 %v1092
      %v1131 = vunpack.c.l.b16 %v1093
      %v1132 = vunpack.c.h.b16 %v1093
      %v1133 = vunpack.c.l.b16 %v1094
      %v1134 = vunpack.c.h.b16 %v1094
      %v1135 = vunpack.c.l.b16 %v1095
      %v1136 = vunpack.c.h.b16 %v1095
      %v1137 = vunpack.c.l.b16 %v1096
      %v1138 = vunpack.c.h.b16 %v1096
      %v1139 = vunpack.c.l.b16 %v1097
      %v1140 = vunpack.c.h.b16 %v1097
      %v1141 = vunpack.c.l.b16 %v1098
      %v1142 = vunpack.c.h.b16 %v1098
      %v1143 = vunpack.c.l.b16 %v1099
      %v1144 = vunpack.c.h.b16 %v1099
      %v1145 = vunpack.c.l.b16 %v1100
      %v1146 = vunpack.c.h.b16 %v1100
      %v1147 = vunpack.c.l.b16 %v1101
      %v1148 = vunpack.c.h.b16 %v1101
      %v1149 = vunpack.c.l.b16 %v1102
      %v1150 = vunpack.c.h.b16 %v1102
      %v1151 = vpack.c.b16 %v1119, %v1119
      %v1152 = vpack.c.b16 %v1120, %v1120
      %v1153 = vpack.c.b16 %v1121, %v1121
      %v1154 = vpack.c.b16 %v1122, %v1122
      %v1155 = vpack.c.b16 %v1123, %v1123
      %v1156 = vpack.c.b16 %v1124, %v1124
      %v1157 = vpack.c.b16 %v1125, %v1125
      %v1158 = vpack.c.b16 %v1126, %v1126
      %v1159 = vpack.c.b16 %v1127, %v1127
      %v1160 = vpack.c.b16 %v1128, %v1128
      %v1161 = vpack.c.b16 %v1129, %v1129
      %v1162 = vpack.c.b16 %v1130, %v1130
      %v1163 = vpack.c.b16 %v1131, %v1131
      %v1164 = vpack.c.b16 %v1132, %v1132
      %v1165 = vpack.c.b16 %v1133, %v1133
      %v1166 = vpack.c.b16 %v1134, %v1134
      %v1167 = vpack.c.b16 %v1135, %v1135
      %v1168 = vpack.c.b16 %v1136, %v1136
      %v1169 = vpack.c.b16 %v1137, %v1137
      %v1170 = vpack.c.b16 %v1138, %v1138
      %v1171 = vpack.c.b16 %v1139, %v1139
      %v1172 = vpack.c.b16 %v1140, %v1140
      %v1173 = vpack.c.b16 %v1141, %v1141
      %v1174 = vpack.c.b16 %v1142, %v1142
      %v1175 = vpack.c.b16 %v1143, %v1143
      %v1176 = vpack.c.b16 %v1144, %v1144
      %v1177 = vpack.c.b16 %v1145, %v1145
      %v1178 = vpack.c.b16 %v1146, %v1146
      %v1179 = vpack.c.b16 %v1147, %v1147
      %v1180 = vpack.c.b16 %v1148, %v1148
      %v1181 = vpack.c.b16 %v1149, %v1149
      %v1182 = vpack.c.b16 %v1150, %v1150
      %1215 = vst [vmem:[%s226] sm:$0xf] %v1151
      %1216 = vst [vmem:[%s226 + $0x4] sm:$0xf] %v1152
      %1217 = vst [vmem:[%s226 + $0x8] sm:$0xf] %v1153
      %1218 = vst [vmem:[%s226 + $0xc] sm:$0xf] %v1154
      %1219 = vst [vmem:[%s226 + $0x10] sm:$0xf] %v1155
      %1220 = vst [vmem:[%s226 + $0x14] sm:$0xf] %v1156
      %1221 = vst [vmem:[%s226 + $0x18] sm:$0xf] %v1157
      %1222 = vst [vmem:[%s226 + $0x1c] sm:$0xf] %v1158
      %1223 = vst [vmem:[%s226 + $0x20] sm:$0xf] %v1159
      %1224 = vst [vmem:[%s226 + $0x24] sm:$0xf] %v1160
      %1225 = vst [vmem:[%s226 + $0x28] sm:$0xf] %v1161
      %1226 = vst [vmem:[%s226 + $0x2c] sm:$0xf] %v1162
      %1227 = vst [vmem:[%s226 + $0x30] sm:$0xf] %v1163
      %1228 = vst [vmem:[%s226 + $0x34] sm:$0xf] %v1164
      %1229 = vst [vmem:[%s226 + $0x38] sm:$0xf] %v1165
      %1230 = vst [vmem:[%s226 + $0x3c] sm:$0xf] %v1166
      %1231 = vst [vmem:[%s226 + $0x40] sm:$0xf] %v1167
      %1232 = vst [vmem:[%s226 + $0x44] sm:$0xf] %v1168
      %1233 = vst [vmem:[%s226 + $0x48] sm:$0xf] %v1169
      %1234 = vst [vmem:[%s226 + $0x4c] sm:$0xf] %v1170
      %1235 = vst [vmem:[%s226 + $0x50] sm:$0xf] %v1171
      %1236 = vst [vmem:[%s226 + $0x54] sm:$0xf] %v1172
      %1237 = vst [vmem:[%s226 + $0x58] sm:$0xf] %v1173
      %1238 = vst [vmem:[%s226 + $0x5c] sm:$0xf] %v1174
      %1239 = vst [vmem:[%s226 + $0x60] sm:$0xf] %v1175
      %1240 = vst [vmem:[%s226 + $0x64] sm:$0xf] %v1176
      %1241 = vst [vmem:[%s226 + $0x68] sm:$0xf] %v1177
      %1242 = vst [vmem:[%s226 + $0x6c] sm:$0xf] %v1178
      %1243 = vst [vmem:[%s226 + $0x70] sm:$0xf] %v1179
      %1244 = vst [vmem:[%s226 + $0x74] sm:$0xf] %v1180
      %1245 = vst [vmem:[%s226 + $0x78] sm:$0xf] %v1181
      %1246 = vst [vmem:[%s226 + $0x7c] sm:$0xf] %v1182
      %s1247 = smul.u32 32, %s18
      %p1248 = scmp.lt.s32.totalorder %s1247, 63
      %s1249 = scalar_select %p1248, %s1247, 63
      %p1250 = scmp.lt.s32.totalorder %s19, 0
      %s1251 = scalar_select %p1250, %s19, 0
      %s1252 = sadd.s32 %s1251, %s1249
      %s1253 = smul.addr %s1252, 4
      %s1254 = scalar_lea.vmem %s3, %s1253
      // Predicated region
      $region33: #{unet_forward.22} parent=31 // pred_check
        %p1255 = pneg %p124
      $region34: #{unet_forward.22} parent=31 // pred_check_branch
        %1257 = sbr.rel (%p1255) target = $region36
      $region35: #{unet_forward.22} parent=31 // pred_region
        %s1258 = smul.u32 32, %s18
      $region36: #{unet_forward.22} parent=31 // pred_fallthru
        _
    $region32: #{unet_forward.22} parent=5 // pred_fallthru
      _
    %p1259 = scmp.le.s32.totalorder 2, %s9
    // Predicated region
    $region37: #{unet_forward.22} parent=5 // pred_check
      %p1260 = pneg %p1259
    $region38: #{unet_forward.22} parent=5 // pred_check_branch
      %1262 = sbr.rel (%p1260) target = $region40
    $region39: #{unet_forward.22} parent=5 // pred_region
      %s1263 = ssub.s32 %s9, 2
      // Predicated region
      $region41: #{unet_forward.22} parent=39 // pred_check
        %p1264 = pneg %p130
      $region42: #{unet_forward.22} parent=39 // pred_check_branch
        %1266 = sbr.rel (%p1264) target = $region44
      $region43: #{unet_forward.22} parent=39 // pred_region
        %s1267 = smul.u32 32, %s20
        %p1268 = scmp.lt.s32.totalorder %s1267, 63
        %s1269 = scalar_select %p1268, %s1267, 63
        %p1270 = scmp.lt.s32.totalorder %s21, 0
        %s1271 = scalar_select %p1270, %s21, 0
        %s1272 = sadd.s32 %s1271, %s1269
        %s1273 = smul.addr %s1272, 4
        %s1274 = scalar_lea.vmem %s3, %s1273
      $region44: #{unet_forward.22} parent=39 // pred_fallthru
        _
    $region40: #{unet_forward.22} parent=5 // pred_fallthru
      _
  $region6: #{unet_forward.22} parent=0 // loop_footer
    %s13 = sadd.s32 1, %s9
  $region7: #{unet_forward.22} parent=0 // loop_footer_branch
    %8 = sbr.rel target = $region3
  $region8: #{unet_forward.22} parent=0 // loop_exit
    _

// kernel: unet_forward.23
$region0: #{unet_forward.23}
  #allocation0 [shape = 'u32[]', space=smem, size = 0x4, offset = 0x4, fixed_abs, tag = 'smem constant byte address 0x4 - core index']
  #allocation1 [shape = 'u32[144,128]{1,0:T(1,128)}', space=vmem, size = 0x12000, scoped, tag = 'internal scratch']
  %s0 = inlined_call_operand.vmem [shape: bf16[2048,144], index: 0, kind: input, shape index: {}]
  %s1 = inlined_call_operand.vmem [shape: bf16[144,128], index: 1, kind: input, shape index: {}]
  %s2 = inlined_call_operand.vmem [shape: f32[1,128], index: 2, kind: input, shape index: {}]
  %s3 = inlined_call_operand.vmem [shape: f32[2048,128], index: 3, kind: output, shape index: {}]
  %s4 = sld [smem:[#allocation0]]
  $region45: #{unet_forward.23} parent=0
    _
  %s6 = ssub.s32 1, %s4
  %s7 = scalar_select 0, %s6, %s4
  loop: start=0, step=1, limit=10
  $region2: #{unet_forward.23} parent=0 // loop_pre_header
    _
  $region3: #{unet_forward.23} parent=0 // loop_header
    %s9 = sphi 0, %s13
    %p10 = scmp.ge.s32.totalorder %s9, 10
    %s16 = sphi 0, %s28
    %s17 = sphi 0, %s24
    %s18 = sphi 0, %s16
    %s19 = sphi 0, %s17
    %s20 = sphi 0, %s18
    %s21 = sphi 0, %s19
    %s31 = sphi 0, %s33
    %s34 = sphi 0, %s31
    %s35 = sphi 0, %s34
    %s51 = sphi 0, %s35
    %s57 = sphi 0, %s59
    %s60 = sphi 0, %s57
    %s61 = sphi 0, %s60
    %s77 = sphi 0, %s61
    %s83 = sphi 0, %s85
    %s86 = sphi 0, %s83
    %s87 = sphi 0, %s86
    %s103 = sphi 0, %s87
    %s111 = sphi 0, %s113
    %s114 = sphi 0, %s111
    %s115 = sphi 0, %s114
    %s131 = sphi 0, %s115
  $region4: #{unet_forward.23} parent=0 // loop_header_branch
    %12 = sbr.rel (%p10) target = $region8
  $region5: #{unet_forward.23} parent=0 // loop_body
    %s14 = ssub.s32 %s9, 1
    %s15 = ssub.s32 %s9, 2
    %s22 = sadd.s32 1, %s17
    %p23 = scmp.ge.s32.totalorder %s22, 1
    %s24 = scalar_select %p23, 0, %s22
    %s25 = sadd.s32 1, %s16
    %s26 = scalar_select %p23, %s25, %s16
    %p27 = scmp.ge.s32.totalorder %s26, 8
    %s28 = scalar_select %p27, 0, %s26
    %s29 = ssub.s32 %s16, %s28
    %p30 = scmp.eq.s32.totalorder %s29, 0
    %s32 = sadd.s32 %s31, 1
    %s33 = scalar_select %p30, %s31, %s32
    %p36 = pneg %p30
    %p37 = scmp.eq.s32.totalorder %s9, 7
    %p38 = por %p36, %p37
    %p39 = scmp.ne.s32.totalorder %s31, %s34
    %p40 = scmp.eq.s32.totalorder %s9, 0
    %p41 = por %p39, %p40
    %p42 = scmp.ne.s32.totalorder %s31, %s34
    %p43 = scmp.eq.s32.totalorder %s14, 7
    %p44 = por %p42, %p43
    %p45 = scmp.ne.s32.totalorder %s34, %s35
    %p46 = scmp.eq.s32.totalorder %s14, 0
    %p47 = por %p45, %p46
    %p48 = scmp.ne.s32.totalorder %s34, %s35
    %p49 = scmp.eq.s32.totalorder %s15, 7
    %p50 = por %p48, %p49
    %p52 = scmp.ne.s32.totalorder %s35, %s51
    %p53 = scmp.eq.s32.totalorder %s15, 0
    %p54 = por %p52, %p53
    %s55 = ssub.s32 %s17, %s24
    %p56 = scmp.eq.s32.totalorder %s55, 0
    %s58 = sadd.s32 %s57, 1
    %s59 = scalar_select %p56, %s57, %s58
    %p62 = pneg %p56
    %p63 = scmp.eq.s32.totalorder %s9, 7
    %p64 = por %p62, %p63
    %p65 = scmp.ne.s32.totalorder %s57, %s60
    %p66 = scmp.eq.s32.totalorder %s9, 0
    %p67 = por %p65, %p66
    %p68 = scmp.ne.s32.totalorder %s57, %s60
    %p69 = scmp.eq.s32.totalorder %s14, 7
    %p70 = por %p68, %p69
    %p71 = scmp.ne.s32.totalorder %s60, %s61
    %p72 = scmp.eq.s32.totalorder %s14, 0
    %p73 = por %p71, %p72
    %p74 = scmp.ne.s32.totalorder %s60, %s61
    %p75 = scmp.eq.s32.totalorder %s15, 7
    %p76 = por %p74, %p75
    %p78 = scmp.ne.s32.totalorder %s61, %s77
    %p79 = scmp.eq.s32.totalorder %s15, 0
    %p80 = por %p78, %p79
    %s81 = ssub.s32 %s17, %s24
    %p82 = scmp.eq.s32.totalorder %s81, 0
    %s84 = sadd.s32 %s83, 1
    %s85 = scalar_select %p82, %s83, %s84
    %p88 = pneg %p82
    %p89 = scmp.eq.s32.totalorder %s9, 7
    %p90 = por %p88, %p89
    %p91 = scmp.ne.s32.totalorder %s83, %s86
    %p92 = scmp.eq.s32.totalorder %s9, 0
    %p93 = por %p91, %p92
    %p94 = scmp.ne.s32.totalorder %s83, %s86
    %p95 = scmp.eq.s32.totalorder %s14, 7
    %p96 = por %p94, %p95
    %p97 = scmp.ne.s32.totalorder %s86, %s87
    %p98 = scmp.eq.s32.totalorder %s14, 0
    %p99 = por %p97, %p98
    %p100 = scmp.ne.s32.totalorder %s86, %s87
    %p101 = scmp.eq.s32.totalorder %s15, 7
    %p102 = por %p100, %p101
    %p104 = scmp.ne.s32.totalorder %s87, %s103
    %p105 = scmp.eq.s32.totalorder %s15, 0
    %p106 = por %p104, %p105
    %s107 = ssub.s32 %s16, %s28
    %s108 = ssub.s32 %s17, %s24
    %s109 = sor.u32 %s107, %s108
    %p110 = scmp.eq.s32.totalorder %s109, 0
    %s112 = sadd.s32 %s111, 1
    %s113 = scalar_select %p110, %s111, %s112
    %p116 = pneg %p110
    %p117 = scmp.eq.s32.totalorder %s9, 7
    %p118 = por %p116, %p117
    %p119 = scmp.ne.s32.totalorder %s111, %s114
    %p120 = scmp.eq.s32.totalorder %s9, 0
    %p121 = por %p119, %p120
    %p122 = scmp.ne.s32.totalorder %s111, %s114
    %p123 = scmp.eq.s32.totalorder %s14, 7
    %p124 = por %p122, %p123
    %p125 = scmp.ne.s32.totalorder %s114, %s115
    %p126 = scmp.eq.s32.totalorder %s14, 0
    %p127 = por %p125, %p126
    %p128 = scmp.ne.s32.totalorder %s114, %s115
    %p129 = scmp.eq.s32.totalorder %s15, 7
    %p130 = por %p128, %p129
    %p132 = scmp.ne.s32.totalorder %s115, %s131
    %p133 = scmp.eq.s32.totalorder %s15, 0
    %p134 = por %p132, %p133
    %p135 = scmp.le.s32.totalorder 1, %s9
    %p136 = scmp.lt.s32.totalorder %s9, 9
    %p137 = pnand %p135, %p136
    %p138 = pneg %p137
    // Predicated region
    $region9: #{unet_forward.23} parent=5 // pred_check
      _
    $region10: #{unet_forward.23} parent=5 // pred_check_branch
      %140 = sbr.rel (%p137) target = $region12
    $region11: #{unet_forward.23} parent=5 // pred_region
      %s141 = ssub.s32 %s9, 1
      // Predicated region
      $region13: #{unet_forward.23} parent=11 // pred_check
        %p142 = pneg %p73
      $region14: #{unet_forward.23} parent=11 // pred_check_branch
        %144 = sbr.rel (%p142) target = $region16
      $region15: #{unet_forward.23} parent=11 // pred_region
        %p145 = scmp.lt.s32.totalorder %s19, 0
        %s146 = scalar_select %p145, %s19, 0
        %s147 = smul.addr %s146, 4
        %s148 = scalar_lea.vmem %s1, %s147
      $region16: #{unet_forward.23} parent=11 // pred_fallthru
        _
      // Predicated region
      $region17: #{unet_forward.23} parent=11 // pred_check
        %p149 = pneg %p99
      $region18: #{unet_forward.23} parent=11 // pred_check_branch
        %151 = sbr.rel (%p149) target = $region20
      $region19: #{unet_forward.23} parent=11 // pred_region
        %p152 = scmp.lt.s32.totalorder %s19, 0
        %s153 = scalar_select %p152, %s19, 0
        %s154 = scalar_lea.vmem %s2, %s153
      $region20: #{unet_forward.23} parent=11 // pred_fallthru
        _
    $region12: #{unet_forward.23} parent=5 // pred_fallthru
      _
    %p155 = scmp.lt.s32.totalorder %s9, 8
    // Predicated region
    $region21: #{unet_forward.23} parent=5 // pred_check
      %p156 = pneg %p155
    $region22: #{unet_forward.23} parent=5 // pred_check_branch
      %158 = sbr.rel (%p156) target = $region24
    $region23: #{unet_forward.23} parent=5 // pred_region
      // Predicated region
      $region25: #{unet_forward.23} parent=23 // pred_check
        %p159 = pneg %p41
      $region26: #{unet_forward.23} parent=23 // pred_check_branch
        %161 = sbr.rel (%p159) target = $region28
      $region27: #{unet_forward.23} parent=23 // pred_region
        %s162 = smul.u32 32, %s16
        %p163 = scmp.lt.s32.totalorder %s162, 255
        %s164 = scalar_select %p163, %s162, 255
        %s165 = smul.addr %s164, 2
        %s166 = smul.addr %s165, 4
        %s167 = scalar_lea.vmem %s0, %s166
        %s168 = smul.u32 32, %s16
      $region28: #{unet_forward.23} parent=23 // pred_fallthru
        _
    $region24: #{unet_forward.23} parent=5 // pred_fallthru
      _
    %p169 = scmp.le.s32.totalorder 1, %s9
    %p170 = scmp.lt.s32.totalorder %s9, 9
    %p171 = pnand %p169, %p170
    %p172 = pneg %p171
    // Predicated region
    $region29: #{unet_forward.23} parent=5 // pred_check
      _
    $region30: #{unet_forward.23} parent=5 // pred_check_branch
      %174 = sbr.rel (%p171) target = $region32
    $region31: #{unet_forward.23} parent=5 // pred_region
      %s175 = ssub.s32 %s9, 1
      %s176 = smul.u32 32, %s18
      %p177 = scmp.lt.s32.totalorder %s176, 255
      %s178 = scalar_select %p177, %s176, 255
      %s179 = smul.addr %s178, 2
      %s180 = smul.addr %s179, 4
      %s181 = scalar_lea.vmem %s0, %s180
      %p182 = pneg %p47
      %p183 = pneg %p44
      %p184 = scmp.lt.s32.totalorder %s19, 0
      %s185 = scalar_select %p184, %s19, 0
      %s186 = smul.addr %s185, 4
      %s187 = scalar_lea.vmem %s1, %s186
      %p188 = pneg %p73
      %p189 = pneg %p70
      %p190 = scmp.lt.s32.totalorder %s19, 0
      %s191 = scalar_select %p190, %s19, 0
      %s192 = scalar_lea.vmem %s2, %s191
      %p193 = pneg %p99
      %p194 = pneg %p96
      %p195 = pneg %p127
      %p196 = pneg %p124
      %s197 = smul.u32 32, %s18
      %p198 = scmp.lt.s32.totalorder %s197, 255
      %s199 = scalar_select %p198, %s197, 255
      %p200 = scmp.lt.s32.totalorder %s19, 0
      %s201 = scalar_select %p200, %s19, 0
      %s202 = sadd.s32 %s201, %s199
      %s203 = smul.addr %s202, 8
      %s204 = scalar_lea.vmem %s3, %s203
      %s205 = smul.u32 32, %s18
      %p206 = scmp.lt.s32.totalorder %s205, 255
      %s207 = scalar_select %p206, %s205, 255
      %s208 = smul.addr %s207, 2
      %s209 = smul.addr %s208, 4
      %s210 = scalar_lea.vmem %s0, %s209
      %s211 = smul.u32 32, %s18
      %p212 = scmp.lt.s32.totalorder %s19, 0
      %s213 = scalar_select %p212, %s19, 0
      %s214 = smul.addr %s213, 4
      %s215 = scalar_lea.vmem %s1, %s214
      %p216 = scmp.lt.s32.totalorder %s19, 0
      %s217 = scalar_select %p216, %s19, 0
      %s218 = scalar_lea.vmem %s2, %s217
      %s219 = smul.u32 32, %s18
      %p220 = scmp.lt.s32.totalorder %s219, 255
      %s221 = scalar_select %p220, %s219, 255
      %p222 = scmp.lt.s32.totalorder %s19, 0
      %s223 = scalar_select %p222, %s19, 0
      %s224 = sadd.s32 %s223, %s221
      %s225 = smul.addr %s224, 8
      %s226 = scalar_lea.vmem %s3, %s225
      %s227 = smul.u32 32, %s18
      %v229 = vld [vmem:[%s210] sm:$0xff]
      %v230 = vld [vmem:[%s210 + $0x8] sm:$0xff]
      %v231 = vld [vmem:[%s210 + $0x10] sm:$0xff]
      %v232 = vld [vmem:[%s210 + $0x18] sm:$0xff]
      %v233 = vld [vmem:[%s210 + $0x20] sm:$0xff]
      %v234 = vld [vmem:[%s210 + $0x28] sm:$0xff]
      %v235 = vld [vmem:[%s210 + $0x30] sm:$0xff]
      %v236 = vld [vmem:[%s210 + $0x38] sm:$0xff]
      %v237 = vld [vmem:[%s210 + $0x40] sm:$0xff]
      %v238 = vld [vmem:[%s210 + $0x48] sm:$0xff]
      %v239 = vld [vmem:[%s210 + $0x50] sm:$0xff]
      %v240 = vld [vmem:[%s210 + $0x58] sm:$0xff]
      %v241 = vld [vmem:[%s210 + $0x60] sm:$0xff]
      %v242 = vld [vmem:[%s210 + $0x68] sm:$0xff]
      %v243 = vld [vmem:[%s210 + $0x70] sm:$0xff]
      %v244 = vld [vmem:[%s210 + $0x78] sm:$0xff]
      %v245 = vld [vmem:[%s210 + $0x80] sm:$0xff]
      %v246 = vld [vmem:[%s210 + $0x88] sm:$0xff]
      %v247 = vld [vmem:[%s210 + $0x90] sm:$0xff]
      %v248 = vld [vmem:[%s210 + $0x98] sm:$0xff]
      %v249 = vld [vmem:[%s210 + $0xa0] sm:$0xff]
      %v250 = vld [vmem:[%s210 + $0xa8] sm:$0xff]
      %v251 = vld [vmem:[%s210 + $0xb0] sm:$0xff]
      %v252 = vld [vmem:[%s210 + $0xb8] sm:$0xff]
      %v253 = vld [vmem:[%s210 + $0xc0] sm:$0xff]
      %v254 = vld [vmem:[%s210 + $0xc8] sm:$0xff]
      %v255 = vld [vmem:[%s210 + $0xd0] sm:$0xff]
      %v256 = vld [vmem:[%s210 + $0xd8] sm:$0xff]
      %v257 = vld [vmem:[%s210 + $0xe0] sm:$0xff]
      %v258 = vld [vmem:[%s210 + $0xe8] sm:$0xff]
      %v259 = vld [vmem:[%s210 + $0xf0] sm:$0xff]
      %v260 = vld [vmem:[%s210 + $0xf8] sm:$0xff]
      %v261 = vld [vmem:[%s215] sm:$0xf]
      %v262 = vld [vmem:[%s215 + $0x4] sm:$0xf]
      %v263 = vld [vmem:[%s215 + $0x8] sm:$0xf]
      %v264 = vld [vmem:[%s215 + $0xc] sm:$0xf]
      %v265 = vld [vmem:[%s215 + $0x10] sm:$0xf]
      %v266 = vld [vmem:[%s215 + $0x14] sm:$0xf]
      %v267 = vld [vmem:[%s215 + $0x18] sm:$0xf]
      %v268 = vld [vmem:[%s215 + $0x1c] sm:$0xf]
      %v269 = vld [vmem:[%s215 + $0x20] sm:$0xf]
      %v270 = vld [vmem:[%s215 + $0x24] sm:$0xf]
      %v271 = vld [vmem:[%s215 + $0x28] sm:$0xf]
      %v272 = vld [vmem:[%s215 + $0x2c] sm:$0xf]
      %v273 = vld [vmem:[%s215 + $0x30] sm:$0xf]
      %v274 = vld [vmem:[%s215 + $0x34] sm:$0xf]
      %v275 = vld [vmem:[%s215 + $0x38] sm:$0xf]
      %v276 = vld [vmem:[%s215 + $0x3c] sm:$0xf]
      %v277 = vld [vmem:[%s215 + $0x40] sm:$0xf]
      %v278 = vld [vmem:[%s215 + $0x44] sm:$0xf]
      %v279 = vld [vmem:[%s218] sm:$0x1]
      %v281 = vlaneseq
      %v282 = vshrl.u32 %v281, 7
      %v283 = vsub.s32 0, %v282
      %v284 = vrot.slane %v279, %v283
      %v318 = vunpack.c.l.b16 %v229
      %v319 = vunpack.c.h.b16 %v229
      %v320 = vunpack.c.l.b16 %v230
      %v321 = vunpack.c.h.b16 %v230
      %v322 = vunpack.c.l.b16 %v231
      %v323 = vunpack.c.h.b16 %v231
      %v324 = vunpack.c.l.b16 %v232
      %v325 = vunpack.c.h.b16 %v232
      %v326 = vunpack.c.l.b16 %v233
      %v327 = vunpack.c.h.b16 %v233
      %v328 = vunpack.c.l.b16 %v234
      %v329 = vunpack.c.h.b16 %v234
      %v330 = vunpack.c.l.b16 %v235
      %v331 = vunpack.c.h.b16 %v235
      %v332 = vunpack.c.l.b16 %v236
      %v333 = vunpack.c.h.b16 %v236
      %v334 = vunpack.c.l.b16 %v237
      %v335 = vunpack.c.h.b16 %v237
      %v336 = vunpack.c.l.b16 %v238
      %v337 = vunpack.c.h.b16 %v238
      %v338 = vunpack.c.l.b16 %v239
      %v339 = vunpack.c.h.b16 %v239
      %v340 = vunpack.c.l.b16 %v240
      %v341 = vunpack.c.h.b16 %v240
      %v342 = vunpack.c.l.b16 %v241
      %v343 = vunpack.c.h.b16 %v241
      %v344 = vunpack.c.l.b16 %v242
      %v345 = vunpack.c.h.b16 %v242
      %v346 = vunpack.c.l.b16 %v243
      %v347 = vunpack.c.h.b16 %v243
      %v348 = vunpack.c.l.b16 %v244
      %v349 = vunpack.c.h.b16 %v244
      %v350 = vunpack.c.l.b16 %v245
      %v351 = vunpack.c.h.b16 %v245
      %v352 = vunpack.c.l.b16 %v246
      %v353 = vunpack.c.h.b16 %v246
      %v354 = vunpack.c.l.b16 %v247
      %v355 = vunpack.c.h.b16 %v247
      %v356 = vunpack.c.l.b16 %v248
      %v357 = vunpack.c.h.b16 %v248
      %v358 = vunpack.c.l.b16 %v249
      %v359 = vunpack.c.h.b16 %v249
      %v360 = vunpack.c.l.b16 %v250
      %v361 = vunpack.c.h.b16 %v250
      %v362 = vunpack.c.l.b16 %v251
      %v363 = vunpack.c.h.b16 %v251
      %v364 = vunpack.c.l.b16 %v252
      %v365 = vunpack.c.h.b16 %v252
      %v366 = vunpack.c.l.b16 %v253
      %v367 = vunpack.c.h.b16 %v253
      %v368 = vunpack.c.l.b16 %v254
      %v369 = vunpack.c.h.b16 %v254
      %v370 = vunpack.c.l.b16 %v255
      %v371 = vunpack.c.h.b16 %v255
      %v372 = vunpack.c.l.b16 %v256
      %v373 = vunpack.c.h.b16 %v256
      %v374 = vunpack.c.l.b16 %v257
      %v375 = vunpack.c.h.b16 %v257
      %v376 = vunpack.c.l.b16 %v258
      %v377 = vunpack.c.h.b16 %v258
      %v378 = vunpack.c.l.b16 %v259
      %v379 = vunpack.c.h.b16 %v259
      %v380 = vunpack.c.l.b16 %v260
      %v381 = vunpack.c.h.b16 %v260
      %v382 = vpack.c.b16 %v320, %v318
      %v383 = vpack.c.b16 %v321, %v319
      %v384 = vpack.c.b16 %v324, %v322
      %v385 = vpack.c.b16 %v325, %v323
      %v386 = vpack.c.b16 %v328, %v326
      %v387 = vpack.c.b16 %v329, %v327
      %v388 = vpack.c.b16 %v332, %v330
      %v389 = vpack.c.b16 %v333, %v331
      %v390 = vpack.c.b16 %v336, %v334
      %v391 = vpack.c.b16 %v337, %v335
      %v392 = vpack.c.b16 %v340, %v338
      %v393 = vpack.c.b16 %v341, %v339
      %v394 = vpack.c.b16 %v344, %v342
      %v395 = vpack.c.b16 %v345, %v343
      %v396 = vpack.c.b16 %v348, %v346
      %v397 = vpack.c.b16 %v349, %v347
      %v398 = vpack.c.b16 %v352, %v350
      %v399 = vpack.c.b16 %v353, %v351
      %v400 = vpack.c.b16 %v356, %v354
      %v401 = vpack.c.b16 %v357, %v355
      %v402 = vpack.c.b16 %v360, %v358
      %v403 = vpack.c.b16 %v361, %v359
      %v404 = vpack.c.b16 %v364, %v362
      %v405 = vpack.c.b16 %v365, %v363
      %v406 = vpack.c.b16 %v368, %v366
      %v407 = vpack.c.b16 %v369, %v367
      %v408 = vpack.c.b16 %v372, %v370
      %v409 = vpack.c.b16 %v373, %v371
      %v410 = vpack.c.b16 %v376, %v374
      %v411 = vpack.c.b16 %v377, %v375
      %v412 = vpack.c.b16 %v380, %v378
      %v413 = vpack.c.b16 %v381, %v379
      %v448 = vunpack.c.l.b16 %v261
      %v449 = vunpack.c.l.b16 %v262
      %v450 = vunpack.c.l.b16 %v263
      %v451 = vunpack.c.l.b16 %v264
      %v452 = vunpack.c.l.b16 %v265
      %v453 = vunpack.c.l.b16 %v266
      %v454 = vunpack.c.l.b16 %v267
      %v455 = vunpack.c.l.b16 %v268
      %v456 = vunpack.c.l.b16 %v269
      %v457 = vunpack.c.l.b16 %v270
      %v458 = vunpack.c.l.b16 %v271
      %v459 = vunpack.c.l.b16 %v272
      %v460 = vunpack.c.l.b16 %v273
      %v461 = vunpack.c.l.b16 %v274
      %v462 = vunpack.c.l.b16 %v275
      %v463 = vunpack.c.l.b16 %v276
      %v464 = vunpack.c.l.b16 %v277
      %v465 = vunpack.c.l.b16 %v278
      %v466 = vpack.c.b16 %v449, %v448
      %v467 = vpack.c.b16 %v451, %v450
      %v468 = vpack.c.b16 %v453, %v452
      %v469 = vpack.c.b16 %v455, %v454
      %v470 = vpack.c.b16 %v457, %v456
      %v471 = vpack.c.b16 %v459, %v458
      %v472 = vpack.c.b16 %v461, %v460
      %v473 = vpack.c.b16 %v463, %v462
      %v474 = vpack.c.b16 %v465, %v464
      %vm484 = vcmask 130048
      %v486 = vsel %vm484, %v383, 0
      %v489 = vsel %vm484, %v385, 0
      %v492 = vsel %vm484, %v387, 0
      %v495 = vsel %vm484, %v389, 0
      %v498 = vsel %vm484, %v391, 0
      %v501 = vsel %vm484, %v393, 0
      %v504 = vsel %vm484, %v395, 0
      %v507 = vsel %vm484, %v397, 0
      %v510 = vsel %vm484, %v399, 0
      %v513 = vsel %vm484, %v401, 0
      %v516 = vsel %vm484, %v403, 0
      %v519 = vsel %vm484, %v405, 0
      %v522 = vsel %vm484, %v407, 0
      %v525 = vsel %vm484, %v409, 0
      %v528 = vsel %vm484, %v411, 0
      %v531 = vsel %vm484, %v413, 0
      %533 = vmatprep.subr.bf16.mxu0 0
      %534 = vmatpush1.bf16.msra.mxu0 %v466
      %535 = vmatprep.subr.bf16.mxu0 0
      %536 = vmatpush1.bf16.msra.mxu0 %v467
      %537 = vmatprep.subr.bf16.mxu0 0
      %538 = vmatpush1.bf16.msra.mxu0 %v468
      %539 = vmatprep.subr.bf16.mxu0 0
      %540 = vmatpush1.bf16.msra.mxu0 %v469
      %541 = vmatprep.subr.bf16.mxu0 0
      %542 = vmatpush1.bf16.msra.mxu0 %v470
      %543 = vmatprep.subr.bf16.mxu0 0
      %544 = vmatpush1.bf16.msra.mxu0 %v471
      %545 = vmatprep.subr.bf16.mxu0 0
      %546 = vmatpush1.bf16.msra.mxu0 %v472
      %547 = vmatprep.subr.bf16.mxu0 0
      %548 = vmatpush1.bf16.msra.mxu0 %v473
      %549 = vmatprep.subr.bf16.mxu0 0
      %550 = vmatpush1.bf16.msra.mxu0 %v474
      %551 = vmatprep.subr.bf16.mxu0 0
      %552 = vmatpush1.bf16.msra.mxu0 0
      %553 = vmatprep.subr.bf16.mxu0 0
      %554 = vmatpush1.bf16.msra.mxu0 0
      %555 = vmatprep.subr.bf16.mxu0 0
      %556 = vmatpush1.bf16.msra.mxu0 0
      %557 = vmatprep.subr.bf16.mxu0 0
      %558 = vmatpush1.bf16.msra.mxu0 0
      %559 = vmatprep.subr.bf16.mxu0 0
      %560 = vmatpush1.bf16.msra.mxu0 0
      %561 = vmatprep.subr.bf16.mxu0 0
      %562 = vmatpush1.bf16.msra.mxu0 0
      %563 = vmatprep.subr.bf16.mxu0 0
      %564 = vmatpush1.bf16.msra.mxu0 0
      %565 = vmatprep.mubr.bf16.mxu0 %v486
      %566 = vmatmul.mubr.bf16.gmra.mrb[0].mxu0 %v382
      %v567 = vpop.f32.mrb[0].mxu0
      %v568 = vadd.f32 %v284, %v567
      %v569 = vpop.f32.mrb[0].mxu0
      %v570 = vpop.f32.mrb[0].mxu0
      %v571 = vadd.f32 %v284, %v570
      %v572 = vpop.f32.mrb[0].mxu0
      %573 = vmatprep.mubr.bf16.mxu0 %v489
      %574 = vmatmul.mubr.bf16.gmra.mrb[0].mxu0 %v384
      %v575 = vpop.f32.mrb[0].mxu0
      %v576 = vadd.f32 %v284, %v575
      %v577 = vpop.f32.mrb[0].mxu0
      %v578 = vpop.f32.mrb[0].mxu0
      %v579 = vadd.f32 %v284, %v578
      %v580 = vpop.f32.mrb[0].mxu0
      %581 = vmatprep.mubr.bf16.mxu0 %v492
      %582 = vmatmul.mubr.bf16.gmra.mrb[0].mxu0 %v386
      %v583 = vpop.f32.mrb[0].mxu0
      %v584 = vadd.f32 %v284, %v583
      %v585 = vpop.f32.mrb[0].mxu0
      %v586 = vpop.f32.mrb[0].mxu0
      %v587 = vadd.f32 %v284, %v586
      %v588 = vpop.f32.mrb[0].mxu0
      %589 = vmatprep.mubr.bf16.mxu0 %v495
      %590 = vmatmul.mubr.bf16.gmra.mrb[0].mxu0 %v388
      %v591 = vpop.f32.mrb[0].mxu0
      %v592 = vadd.f32 %v284, %v591
      %v593 = vpop.f32.mrb[0].mxu0
      %v594 = vpop.f32.mrb[0].mxu0
      %v595 = vadd.f32 %v284, %v594
      %v596 = vpop.f32.mrb[0].mxu0
      %597 = vmatprep.mubr.bf16.mxu0 %v498
      %598 = vmatmul.mubr.bf16.gmra.mrb[0].mxu0 %v390
      %v599 = vpop.f32.mrb[0].mxu0
      %v600 = vadd.f32 %v284, %v599
      %v601 = vpop.f32.mrb[0].mxu0
      %v602 = vpop.f32.mrb[0].mxu0
      %v603 = vadd.f32 %v284, %v602
      %v604 = vpop.f32.mrb[0].mxu0
      %605 = vmatprep.mubr.bf16.mxu0 %v501
      %606 = vmatmul.mubr.bf16.gmra.mrb[0].mxu0 %v392
      %v607 = vpop.f32.mrb[0].mxu0
      %v608 = vadd.f32 %v284, %v607
      %v609 = vpop.f32.mrb[0].mxu0
      %v610 = vpop.f32.mrb[0].mxu0
      %v611 = vadd.f32 %v284, %v610
      %v612 = vpop.f32.mrb[0].mxu0
      %613 = vmatprep.mubr.bf16.mxu0 %v504
      %614 = vmatmul.mubr.bf16.gmra.mrb[0].mxu0 %v394
      %v615 = vpop.f32.mrb[0].mxu0
      %v616 = vadd.f32 %v284, %v615
      %v617 = vpop.f32.mrb[0].mxu0
      %v618 = vpop.f32.mrb[0].mxu0
      %v619 = vadd.f32 %v284, %v618
      %v620 = vpop.f32.mrb[0].mxu0
      %621 = vmatprep.mubr.bf16.mxu0 %v507
      %622 = vmatmul.mubr.bf16.gmra.mrb[0].mxu0 %v396
      %v623 = vpop.f32.mrb[0].mxu0
      %v624 = vadd.f32 %v284, %v623
      %v625 = vpop.f32.mrb[0].mxu0
      %v626 = vpop.f32.mrb[0].mxu0
      %v627 = vadd.f32 %v284, %v626
      %v628 = vpop.f32.mrb[0].mxu0
      %629 = vmatprep.mubr.bf16.mxu0 %v510
      %630 = vmatmul.mubr.bf16.gmra.mrb[0].mxu0 %v398
      %v631 = vpop.f32.mrb[0].mxu0
      %v632 = vadd.f32 %v284, %v631
      %v633 = vpop.f32.mrb[0].mxu0
      %v634 = vpop.f32.mrb[0].mxu0
      %v635 = vadd.f32 %v284, %v634
      %v636 = vpop.f32.mrb[0].mxu0
      %637 = vmatprep.mubr.bf16.mxu0 %v513
      %638 = vmatmul.mubr.bf16.gmra.mrb[0].mxu0 %v400
      %v639 = vpop.f32.mrb[0].mxu0
      %v640 = vadd.f32 %v284, %v639
      %v641 = vpop.f32.mrb[0].mxu0
      %v642 = vpop.f32.mrb[0].mxu0
      %v643 = vadd.f32 %v284, %v642
      %v644 = vpop.f32.mrb[0].mxu0
      %645 = vmatprep.mubr.bf16.mxu0 %v516
      %646 = vmatmul.mubr.bf16.gmra.mrb[0].mxu0 %v402
      %v647 = vpop.f32.mrb[0].mxu0
      %v648 = vadd.f32 %v284, %v647
      %v649 = vpop.f32.mrb[0].mxu0
      %v650 = vpop.f32.mrb[0].mxu0
      %v651 = vadd.f32 %v284, %v650
      %v652 = vpop.f32.mrb[0].mxu0
      %653 = vmatprep.mubr.bf16.mxu0 %v519
      %654 = vmatmul.mubr.bf16.gmra.mrb[0].mxu0 %v404
      %v655 = vpop.f32.mrb[0].mxu0
      %v656 = vadd.f32 %v284, %v655
      %v657 = vpop.f32.mrb[0].mxu0
      %v658 = vpop.f32.mrb[0].mxu0
      %v659 = vadd.f32 %v284, %v658
      %v660 = vpop.f32.mrb[0].mxu0
      %661 = vmatprep.mubr.bf16.mxu0 %v522
      %662 = vmatmul.mubr.bf16.gmra.mrb[0].mxu0 %v406
      %v663 = vpop.f32.mrb[0].mxu0
      %v664 = vadd.f32 %v284, %v663
      %v665 = vpop.f32.mrb[0].mxu0
      %v666 = vpop.f32.mrb[0].mxu0
      %v667 = vadd.f32 %v284, %v666
      %v668 = vpop.f32.mrb[0].mxu0
      %669 = vmatprep.mubr.bf16.mxu0 %v525
      %670 = vmatmul.mubr.bf16.gmra.mrb[0].mxu0 %v408
      %v671 = vpop.f32.mrb[0].mxu0
      %v672 = vadd.f32 %v284, %v671
      %v673 = vpop.f32.mrb[0].mxu0
      %v674 = vpop.f32.mrb[0].mxu0
      %v675 = vadd.f32 %v284, %v674
      %v676 = vpop.f32.mrb[0].mxu0
      %677 = vmatprep.mubr.bf16.mxu0 %v528
      %678 = vmatmul.mubr.bf16.gmra.mrb[0].mxu0 %v410
      %v679 = vpop.f32.mrb[0].mxu0
      %v680 = vadd.f32 %v284, %v679
      %v681 = vpop.f32.mrb[0].mxu0
      %v682 = vpop.f32.mrb[0].mxu0
      %v683 = vadd.f32 %v284, %v682
      %v684 = vpop.f32.mrb[0].mxu0
      %685 = vmatprep.mubr.bf16.mxu0 %v531
      %686 = vmatmul.mubr.bf16.gmra.mrb[0].mxu0 %v412
      %v687 = vpop.f32.mrb[0].mxu0
      %v688 = vadd.f32 %v284, %v687
      %v689 = vpop.f32.mrb[0].mxu0
      %v690 = vpop.f32.mrb[0].mxu0
      %v691 = vadd.f32 %v284, %v690
      %v692 = vpop.f32.mrb[0].mxu0
      %693 = vdwg.mxu0
      %v694 = vtanh.pop %v568
      %v695 = vtanh.pop %v571
      %v696 = vtanh.pop %v576
      %v697 = vtanh.pop %v579
      %v698 = vtanh.pop %v584
      %v699 = vtanh.pop %v587
      %v700 = vtanh.pop %v592
      %v701 = vtanh.pop %v595
      %v702 = vtanh.pop %v600
      %v703 = vtanh.pop %v603
      %v704 = vtanh.pop %v608
      %v705 = vtanh.pop %v611
      %v706 = vtanh.pop %v616
      %v707 = vtanh.pop %v619
      %v708 = vtanh.pop %v624
      %v709 = vtanh.pop %v627
      %v710 = vtanh.pop %v632
      %v711 = vtanh.pop %v635
      %v712 = vtanh.pop %v640
      %v713 = vtanh.pop %v643
      %v714 = vtanh.pop %v648
      %v715 = vtanh.pop %v651
      %v716 = vtanh.pop %v656
      %v717 = vtanh.pop %v659
      %v718 = vtanh.pop %v664
      %v719 = vtanh.pop %v667
      %v720 = vtanh.pop %v672
      %v721 = vtanh.pop %v675
      %v722 = vtanh.pop %v680
      %v723 = vtanh.pop %v683
      %v724 = vtanh.pop %v688
      %v725 = vtanh.pop %v691
      %726 = vst [vmem:[%s226] sm:$0xff] %v694
      %727 = vst [vmem:[%s226 + $0x8] sm:$0xff] %v695
      %728 = vst [vmem:[%s226 + $0x10] sm:$0xff] %v696
      %729 = vst [vmem:[%s226 + $0x18] sm:$0xff] %v697
      %730 = vst [vmem:[%s226 + $0x20] sm:$0xff] %v698
      %731 = vst [vmem:[%s226 + $0x28] sm:$0xff] %v699
      %732 = vst [vmem:[%s226 + $0x30] sm:$0xff] %v700
      %733 = vst [vmem:[%s226 + $0x38] sm:$0xff] %v701
      %734 = vst [vmem:[%s226 + $0x40] sm:$0xff] %v702
      %735 = vst [vmem:[%s226 + $0x48] sm:$0xff] %v703
      %736 = vst [vmem:[%s226 + $0x50] sm:$0xff] %v704
      %737 = vst [vmem:[%s226 + $0x58] sm:$0xff] %v705
      %738 = vst [vmem:[%s226 + $0x60] sm:$0xff] %v706
      %739 = vst [vmem:[%s226 + $0x68] sm:$0xff] %v707
      %740 = vst [vmem:[%s226 + $0x70] sm:$0xff] %v708
      %741 = vst [vmem:[%s226 + $0x78] sm:$0xff] %v709
      %742 = vst [vmem:[%s226 + $0x80] sm:$0xff] %v710
      %743 = vst [vmem:[%s226 + $0x88] sm:$0xff] %v711
      %744 = vst [vmem:[%s226 + $0x90] sm:$0xff] %v712
      %745 = vst [vmem:[%s226 + $0x98] sm:$0xff] %v713
      %746 = vst [vmem:[%s226 + $0xa0] sm:$0xff] %v714
      %747 = vst [vmem:[%s226 + $0xa8] sm:$0xff] %v715
      %748 = vst [vmem:[%s226 + $0xb0] sm:$0xff] %v716
      %749 = vst [vmem:[%s226 + $0xb8] sm:$0xff] %v717
      %750 = vst [vmem:[%s226 + $0xc0] sm:$0xff] %v718
      %751 = vst [vmem:[%s226 + $0xc8] sm:$0xff] %v719
      %752 = vst [vmem:[%s226 + $0xd0] sm:$0xff] %v720
      %753 = vst [vmem:[%s226 + $0xd8] sm:$0xff] %v721
      %754 = vst [vmem:[%s226 + $0xe0] sm:$0xff] %v722
      %755 = vst [vmem:[%s226 + $0xe8] sm:$0xff] %v723
      %756 = vst [vmem:[%s226 + $0xf0] sm:$0xff] %v724
      %757 = vst [vmem:[%s226 + $0xf8] sm:$0xff] %v725
      %s758 = smul.u32 32, %s18
      %p759 = scmp.lt.s32.totalorder %s758, 255
      %s760 = scalar_select %p759, %s758, 255
      %p761 = scmp.lt.s32.totalorder %s19, 0
      %s762 = scalar_select %p761, %s19, 0
      %s763 = sadd.s32 %s762, %s760
      %s764 = smul.addr %s763, 8
      %s765 = scalar_lea.vmem %s3, %s764
      // Predicated region
      $region33: #{unet_forward.23} parent=31 // pred_check
        %p766 = pneg %p124
      $region34: #{unet_forward.23} parent=31 // pred_check_branch
        %768 = sbr.rel (%p766) target = $region36
      $region35: #{unet_forward.23} parent=31 // pred_region
        %s769 = smul.u32 32, %s18
      $region36: #{unet_forward.23} parent=31 // pred_fallthru
        _
    $region32: #{unet_forward.23} parent=5 // pred_fallthru
      _
    %p770 = scmp.le.s32.totalorder 2, %s9
    // Predicated region
    $region37: #{unet_forward.23} parent=5 // pred_check
      %p771 = pneg %p770
    $region38: #{unet_forward.23} parent=5 // pred_check_branch
      %773 = sbr.rel (%p771) target = $region40
    $region39: #{unet_forward.23} parent=5 // pred_region
      %s774 = ssub.s32 %s9, 2
      // Predicated region
      $region41: #{unet_forward.23} parent=39 // pred_check
        %p775 = pneg %p130
      $region42: #{unet_forward.23} parent=39 // pred_check_branch
        %777 = sbr.rel (%p775) target = $region44
      $region43: #{unet_forward.23} parent=39 // pred_region
        %s778 = smul.u32 32, %s20
        %p779 = scmp.lt.s32.totalorder %s778, 255
        %s780 = scalar_select %p779, %s778, 255
        %p781 = scmp.lt.s32.totalorder %s21, 0
        %s782 = scalar_select %p781, %s21, 0
        %s783 = sadd.s32 %s782, %s780
        %s784 = smul.addr %s783, 8
        %s785 = scalar_lea.vmem %s3, %s784
      $region44: #{unet_forward.23} parent=39 // pred_fallthru
        _
    $region40: #{unet_forward.23} parent=5 // pred_fallthru
      _
  $region6: #{unet_forward.23} parent=0 // loop_footer
    %s13 = sadd.s32 1, %s9
  $region7: #{unet_forward.23} parent=0 // loop_footer_branch
    %8 = sbr.rel target = $region3
  $region8: #{unet_forward.23} parent=0 // loop_exit
    _

</llo_original>
